<compile_context>
chip_gen: v5e
topology: v5e:2x2
jax: 0.10.0
libtpu: 0.0.40
codegen_flags: <defaults>
</compile_context>

<pallas_src>
from functools import partial

import numpy as np
import jax
import jax.numpy as jnp
from jax import lax
from jax.experimental import pallas as pl
from jax.experimental.pallas import tpu as pltpu


# ----------------------------------------------------------------------------
# Pallas kernels
# ----------------------------------------------------------------------------
def _conv1x1_fused_kernel(x_ref, w_ref, shift_ref, floor_ref, o_ref):
    # x_ref: (1, T, Cin); w_ref: (Cin, Cout) already in compute dtype;
    # shift/floor: (1, Cout) f32; o_ref: (1, T, Cout).
    # floor == 0 for lanes that take shift+ReLU here, -inf for lanes whose
    # shift+ReLU is deferred (branch-4 pre-pool block).
    y = jnp.dot(x_ref[0].astype(w_ref.dtype), w_ref[...],
                preferred_element_type=jnp.float32)
    o_ref[0] = jnp.maximum(y + shift_ref[...], floor_ref[...]).astype(o_ref.dtype)


def _conv3x3_kernel(x_ref, w_ref, shift_ref, o_ref, *, H, W):
    # kn2row/im2col: build the stacked (H*W, 9*Cin) lhs once and run ONE
    # large-K matmul on the MXU.  Zero halo + taps built in VMEM, in the
    # compute dtype (cast x first so every temporary is narrow).
    Cin = x_ref.shape[-1]
    cdt = w_ref.dtype                                     # compute dtype
    x = x_ref[0].astype(cdt)
    zr = jnp.zeros((1, W, Cin), cdt)
    xv = jnp.concatenate([zr, x, zr], axis=0)             # (H+2, W, Cin)
    zc = jnp.zeros((H + 2, 1, Cin), cdt)
    xp = jnp.concatenate([zc, xv, zc], axis=1)            # (H+2, W+2, Cin)
    taps = [xp[dy:dy + H, dx:dx + W, :] for dy in range(3) for dx in range(3)]
    xcol = jnp.concatenate(taps, axis=-1).reshape(H * W, 9 * Cin)
    y = jnp.dot(xcol, w_ref[...], preferred_element_type=jnp.float32)
    o_ref[0] = jnp.maximum(y + shift_ref[...], 0.0).astype(o_ref.dtype)


def _avgpool_relu_kernel(x_ref, shift_ref, o_ref, *, H, W):
    # Branch-4: its 1x1 conv (with BN scale and the avg-pool 1/9) is already
    # folded into the fused 1x1 stage, so this kernel is only the separable
    # 3x3 sum (count_include_pad=True via the zero halo) + shift + ReLU.
    Cin = x_ref.shape[-1]
    x = x_ref[0].astype(jnp.float32)
    zr = jnp.zeros((1, W, Cin), jnp.float32)
    xv = jnp.concatenate([zr, x, zr], axis=0)             # (H+2, W, Cin)
    rows = xv[0:H] + xv[1:H + 1] + xv[2:H + 2]            # (H, W, Cin)
    zc = jnp.zeros((H, 1, Cin), jnp.float32)
    rp = jnp.concatenate([zc, rows, zc], axis=1)          # (H, W+2, Cin)
    pooled = rp[:, 0:W] + rp[:, 1:W + 1] + rp[:, 2:W + 2] # (H, W, Cin)
    o_ref[0] = jnp.maximum(pooled.reshape(H * W, Cin) + shift_ref[...],
                           0.0).astype(o_ref.dtype)


# ----------------------------------------------------------------------------
# pallas_call wrappers
# ----------------------------------------------------------------------------
def _row_tile(hw, max_tile=1024):
    if hw <= max_tile:
        return hw
    for t in range(max_tile - max_tile % 8, 7, -8):
        if hw % t == 0:
            return t
    return hw   # TODO(synk): pad HW so at least 2 tiles/image exist (v7x)


def _compiler_params(semantics, est_bytes):
    # Explicit VMEM budget: estimate * margin, never below the default scoped
    # limits, capped well under physical VMEM on all chips we target.
    limit = int(min(max(int(est_bytes * 1.5) + (2 << 20), 32 << 20), 112 << 20))
    return pltpu.CompilerParams(dimension_semantics=semantics,
                                vmem_limit_bytes=limit)


def conv1x1_fused(x_flat, w, shift, floor, *, out_dtype):
    # One call for every 1x1 conv reading the same input; Cout multiple of 128.
    N, HW, Cin = x_flat.shape
    Cout = w.shape[1]
    t = _row_tile(HW)
    assert HW % t == 0, (HW, t)
    est = (2 * t * Cin * x_flat.dtype.itemsize
           + 2 * t * Cout * np.dtype(out_dtype).itemsize
           + 2 * Cin * Cout * w.dtype.itemsize
           + t * Cout * 4)
    return pl.pallas_call(
        _conv1x1_fused_kernel,
        out_shape=jax.ShapeDtypeStruct((N, HW, Cout), out_dtype),
        grid=(N, HW // t),
        in_specs=[
            pl.BlockSpec((1, t, Cin), lambda n, s: (n, s, 0)),
            pl.BlockSpec((Cin, Cout), lambda n, s: (0, 0)),
            pl.BlockSpec((1, Cout), lambda n, s: (0, 0)),
            pl.BlockSpec((1, Cout), lambda n, s: (0, 0)),
        ],
        out_specs=pl.BlockSpec((1, t, Cout), lambda n, s: (n, s, 0)),
        compiler_params=_compiler_params(("parallel", "parallel"), est),
    )(x_flat, w, shift, floor)


def conv3x3(x_spatial, group, w, shift, *, out_dtype):
    # x_spatial: (N, H, W, Ctot); the conv input is the 128-wide channel block
    # `group` -- picked directly by the BlockSpec (no XLA slice pass).
    N, H, W, _ = x_spatial.shape
    Cout = w.shape[1]
    Cin = w.shape[0] // 9
    cd_sz = w.dtype.itemsize
    est = (2 * H * W * Cin * x_spatial.dtype.itemsize       # in, double-buffer
           + 2 * H * W * Cout * np.dtype(out_dtype).itemsize  # out, 2 buffers
           + 2 * 9 * Cin * Cout * cd_sz                     # weight (resident)
           + (H + 2) * (W + 2) * Cin * cd_sz                # padded halo temp
           + H * W * 9 * Cin * cd_sz                        # im2col temp
           + H * W * Cout * 4)                              # f32 accumulator
    return pl.pallas_call(
        partial(_conv3x3_kernel, H=H, W=W),
        out_shape=jax.ShapeDtypeStruct((N, H * W, Cout), out_dtype),
        grid=(N,),
        in_specs=[
            pl.BlockSpec((1, H, W, Cin), lambda n: (n, 0, 0, group)),
            pl.BlockSpec((9 * Cin, Cout), lambda n: (0, 0)),
            pl.BlockSpec((1, Cout), lambda n: (0, 0)),
        ],
        out_specs=pl.BlockSpec((1, H * W, Cout), lambda n: (n, 0, 0)),
        compiler_params=_compiler_params(("parallel",), est),
    )(x_spatial, w, shift)


def avgpool_relu(x_spatial, group, shift, *, out_dtype=jnp.float32):
    # Separable 3x3 average-pool (1/9 already folded upstream) + shift + ReLU
    # over one 128-lane channel block of x_spatial.
    N, H, W, _ = x_spatial.shape
    Cin = shift.shape[1]
    est = (2 * H * W * Cin * x_spatial.dtype.itemsize
           + 2 * H * W * Cin * np.dtype(out_dtype).itemsize
           + 3 * (H + 2) * (W + 2) * Cin * 4)
    return pl.pallas_call(
        partial(_avgpool_relu_kernel, H=H, W=W),
        out_shape=jax.ShapeDtypeStruct((N, H * W, Cin), out_dtype),
        grid=(N,),
        in_specs=[
            pl.BlockSpec((1, H, W, Cin), lambda n: (n, 0, 0, group)),
            pl.BlockSpec((1, Cin), lambda n: (0, 0)),
        ],
        out_specs=pl.BlockSpec((1, H * W, Cin), lambda n: (n, 0, 0)),
        compiler_params=_compiler_params(("parallel",), est),
    )(x_spatial, shift)


# ----------------------------------------------------------------------------
# Parameter construction (deterministic) + BN folding / channel padding
# ----------------------------------------------------------------------------
def make_basic_conv_params(key, cin, cout, ksize):
    kw, kg, kb, km, kv = jax.random.split(key, 5)
    w = jax.random.normal(kw, (cout, cin, ksize, ksize), jnp.float32)  # OIHW
    gamma = jax.random.uniform(kg, (cout,), jnp.float32, 0.5, 1.5)
    beta = 0.1 * jax.random.normal(kb, (cout,), jnp.float32)
    mean = 0.1 * jax.random.normal(km, (cout,), jnp.float32)
    var = jax.random.uniform(kv, (cout,), jnp.float32, 0.5, 1.5)
    scale = gamma / jnp.sqrt(var + 1e-3)   # BatchNorm2d(eps=0.001), inference
    shift = beta - mean * scale
    return {"w": w, "scale": scale, "shift": shift}


def make_inception_a_params(key, in_channels):
    keys = jax.random.split(key, 7)
    return {
        "b1":   make_basic_conv_params(keys[0], in_channels, 96, 1),
        "b2_1": make_basic_conv_params(keys[1], in_channels, 64, 1),
        "b2_2": make_basic_conv_params(keys[2], 64, 96, 3),
        "b3_1": make_basic_conv_params(keys[3], in_channels, 64, 1),
        "b3_2": make_basic_conv_params(keys[4], 64, 96, 3),
        "b3_3": make_basic_conv_params(keys[5], 96, 96, 3),
        "b4":   make_basic_conv_params(keys[6], in_channels, 96, 1),
    }


def _fold1x1(p, cout_pad):
    cout, cin = p["w"].shape[0], p["w"].shape[1]
    wk = p["w"].reshape(cout, cin).T * p["scale"][None, :]        # (Cin, Cout)
    wk = jnp.pad(wk, ((0, 0), (0, cout_pad - cout)))
    sh = jnp.pad(p["shift"], (0, cout_pad - cout)).reshape(1, cout_pad)
    return wk, sh


def _fold3x3(p, cin_pad, cout_pad):
    cout, cin = p["w"].shape[0], p["w"].shape[1]
    w = jnp.transpose(p["w"], (2, 3, 1, 0)) * p["scale"][None, None, None, :]
    w = jnp.pad(w, ((0, 0), (0, 0), (0, cin_pad - cin), (0, cout_pad - cout)))
    wk = w.reshape(9 * cin_pad, cout_pad)                         # (9*Cin, Cout)
    sh = jnp.pad(p["shift"], (0, cout_pad - cout)).reshape(1, cout_pad)
    return wk, sh


def prepare_kernel_params(params, compute_dtype=jnp.float32):
    """BN-fold, 128-pad, transpose and pre-cast weights.  Call ONCE and cache;
    only the pallas_calls belong in the per-step forward."""
    w1, s1 = _fold1x1(params["b1"], 128)     # fused lanes [  0, 128)
    w2, s2 = _fold1x1(params["b2_1"], 128)   # fused lanes [128, 256)
    w3, s3 = _fold1x1(params["b3_1"], 128)   # fused lanes [256, 384)
    w4, s4 = _fold1x1(params["b4"], 128)     # fused lanes [384, 512) pre-pool
    zeros = jnp.zeros((1, 128), jnp.float32)
    ninf = jnp.full((1, 128), -jnp.inf, jnp.float32)
    kp = {
        # branch-4's 1x1 commutes with the avg-pool -> fold it (and the 1/9)
        # into the fused matmul; its shift+ReLU is deferred to the pool kernel.
        "fused_w": jnp.concatenate([w1, w2, w3, w4 * (1.0 / 9.0)],
                                   axis=1).astype(compute_dtype),   # (Cin, 512)
        "fused_s": jnp.concatenate([s1, s2, s3, jnp.zeros_like(s4)], axis=1),
        "fused_floor": jnp.concatenate([zeros, zeros, zeros, ninf], axis=1),
        "b4_s": s4,
    }
    for name in ("b2_2", "b3_2", "b3_3"):
        wk, sk = _fold3x3(params[name], 128, 128)
        kp[name + "_w"] = wk.astype(compute_dtype)
        kp[name + "_s"] = sk
    return kp


# ----------------------------------------------------------------------------
# InceptionA forward (Pallas kernels do the conv/pool/BN/ReLU hot paths)
# ----------------------------------------------------------------------------
@jax.jit
def inception_a_forward(x_nchw, kp):
    # Compute dtype (f32 or bf16) is carried by the pre-cast weights in kp.
    # bf16 is recommended on v5e/v6e/v7x (MXU is bf16-native everywhere);
    # accumulation stays f32 via preferred_element_type.
    N, C, H, W = x_nchw.shape
    cd = kp["fused_w"].dtype

    x = jnp.transpose(x_nchw, (0, 2, 3, 1)).astype(jnp.float32)   # NHWC
    x_flat = x.reshape(N, H * W, C)                               # free reshape

    # Fused 1x1 stage: b1 / b2_1 / b3_1 / b4(pre-pool) share ONE read of x.
    fused = conv1x1_fused(x_flat, kp["fused_w"], kp["fused_s"],
                          kp["fused_floor"], out_dtype=cd)        # (N, HW, 512)
    fused_sp = fused.reshape(N, H, W, 512)                        # free reshape

    # branch2: 3x3(pad1) over fused channel block 1
    x2 = conv3x3(fused_sp, 1, kp["b2_2_w"], kp["b2_2_s"],
                 out_dtype=jnp.float32)                           # (N, HW, 128)

    # branch3: 3x3(pad1) -> 3x3(pad1) over fused channel block 2
    t3 = conv3x3(fused_sp, 2, kp["b3_2_w"], kp["b3_2_s"], out_dtype=cd)
    x3 = conv3x3(t3.reshape(N, H, W, 128), 0, kp["b3_3_w"], kp["b3_3_s"],
                 out_dtype=jnp.float32)                           # (N, HW, 128)

    # branch4: separable AvgPool(3, s=1, p=1, count_include_pad) + shift + ReLU
    # over fused channel block 3 (the 1x1 already happened in the fused stage).
    x4 = avgpool_relu(fused_sp, 3, kp["b4_s"])                    # (N, HW, 128)

    # TODO(synk): lane-dense Pallas epilogue for the 96-wide compaction + NCHW
    #             transpose (96 is not a multiple of 128 -> masked copies here).
    out = jnp.concatenate([fused[:, :, 0:96].astype(jnp.float32),
                           x2[:, :, 0:96], x3[:, :, 0:96],
                           x4[:, :, 0:96]], axis=-1)
    return jnp.transpose(out.reshape(N, H, W, 384), (0, 3, 1, 2))  # NCHW


# ----------------------------------------------------------------------------
# Pure-JAX reference (independent of BN folding / padding / commuting tricks)
# ----------------------------------------------------------------------------
def _ref_bcv(x_nhwc, p, padding):
    w_hwio = jnp.transpose(p["w"], (2, 3, 1, 0))
    y = lax.conv_general_dilated(
        x_nhwc, w_hwio, window_strides=(1, 1),
        padding=[(padding, padding), (padding, padding)],
        dimension_numbers=("NHWC", "HWIO", "NHWC"))
    y = y * p["scale"].reshape(1, 1, 1, -1) + p["shift"].reshape(1, 1, 1, -1)
    return jnp.maximum(y, 0.0)


def inception_a_reference(x_nchw, params):
    x = jnp.transpose(x_nchw, (0, 2, 3, 1)).astype(jnp.float32)
    x1 = _ref_bcv(x, params["b1"], 0)
    x2 = _ref_bcv(_ref_bcv(x, params["b2_1"], 0), params["b2_2"], 1)
    x3 = _ref_bcv(_ref_bcv(_ref_bcv(x, params["b3_1"], 0), params["b3_2"], 1),
                  params["b3_3"], 1)
    xp = jnp.pad(x, ((0, 0), (1, 1), (1, 1), (0, 0)))
    pooled = lax.reduce_window(xp, 0.0, lax.add, (1, 3, 3, 1),
                               (1, 1, 1, 1), "VALID") / 9.0
    x4 = _ref_bcv(pooled, params["b4"], 0)
    out = jnp.concatenate([x1, x2, x3, x4], axis=-1)
    return jnp.transpose(out, (0, 3, 1, 2))


# ----------------------------------------------------------------------------
if __name__ == "__main__":
    key = jax.random.PRNGKey(0)
    k_x, k_p = jax.random.split(key)

    N, C, H, W = 2, 4, 16, 16
    x = jax.random.normal(k_x, (N, C, H, W), jnp.float32)
    params = make_inception_a_params(k_p, C)

    ref = jax.block_until_ready(inception_a_reference(x, params))

    # f32 MXU path (exact-ish check).  prepare_kernel_params is hoisted out of
    # the forward and would be cached across steps in real use.
    kp_f32 = prepare_kernel_params(params, jnp.float32)
    out = jax.block_until_ready(inception_a_forward(x, kp_f32))
    assert out.shape == (N, 384, H, W), out.shape
    assert jnp.allclose(out, ref, rtol=1e-3, atol=1e-3), \
        float(jnp.max(jnp.abs(out - ref)))

    # bf16 MXU path (recommended on v5e/v6e/v7x); f32 accumulation, loose check.
    kp_bf16 = prepare_kernel_params(params, jnp.bfloat16)
    out_bf16 = jax.block_until_ready(inception_a_forward(x, kp_bf16))
    assert out_bf16.shape == (N, 384, H, W), out_bf16.shape
    rel = jnp.linalg.norm(out_bf16 - ref) / (jnp.linalg.norm(ref) + 1e-6)
    assert bool(jnp.isfinite(rel)) and float(rel) < 0.1, float(rel)

    print("KERNEL_OK")
</pallas_src>

<mosaic_0001>
module attributes {stable_mosaic.version = 11 : i64} {
  func.func @_conv3x3_kernel(%arg0: i32, %arg1: memref<1x16x16x128xf32, #tpu.memory_space<vmem>>, %arg2: memref<1152x128xf32, #tpu.memory_space<vmem>>, %arg3: memref<1x128xf32, #tpu.memory_space<vmem>>, %arg4: memref<1x256x128xf32, #tpu.memory_space<vmem>>) attributes {dimension_semantics = [#tpu.dimension_semantics<parallel>], iteration_bounds = array<i64: 2>, scalar_prefetch = 0 : i64, scratch_operands = 0 : i64, tpu.core_type = #tpu.core_type<tc>, window_params = [{transform_indices = @transform_0, window_bounds = array<i64: 1, 16, 16, 128>}, {pipeline_mode = #tpu.pipeline_mode<synchronous>, transform_indices = @transform_1, window_bounds = array<i64: 1152, 128>}, {pipeline_mode = #tpu.pipeline_mode<synchronous>, transform_indices = @transform_2, window_bounds = array<i64: 1, 128>}, {transform_indices = @transform_3, window_bounds = array<i64: 1, 256, 128>}]} {
    %c0 = arith.constant 0 : index
    %c0_0 = arith.constant 0 : index
    %c0_1 = arith.constant 0 : index
    %c0_2 = arith.constant 0 : index
    %0 = vector.load %arg1[%c0, %c0_0, %c0_1, %c0_2] : memref<1x16x16x128xf32, #tpu.memory_space<vmem>>, vector<1x16x16x128xf32>
    %1 = vector.shape_cast %0 : vector<1x16x16x128xf32> to vector<16x16x128xf32>
    %cst = arith.constant 0.000000e+00 : f32
    %2 = vector.broadcast %cst : f32 to vector<1x16x128xf32>
    %3 = tpu.concatenate %2, %1, %2 in 0 : vector<1x16x128xf32>, vector<16x16x128xf32>, vector<1x16x128xf32> -> vector<18x16x128xf32>
    %cst_3 = arith.constant 0.000000e+00 : f32
    %4 = vector.broadcast %cst_3 : f32 to vector<18x1x128xf32>
    %5 = tpu.concatenate %4, %3, %4 in 1 : vector<18x1x128xf32>, vector<18x16x128xf32>, vector<18x1x128xf32> -> vector<18x18x128xf32>
    %6 = vector.extract_strided_slice %5 {offsets = [0, 0, 0], sizes = [16, 16, 128], strides = [1, 1, 1]} : vector<18x18x128xf32> to vector<16x16x128xf32>
    %7 = vector.extract_strided_slice %5 {offsets = [0, 1, 0], sizes = [16, 16, 128], strides = [1, 1, 1]} : vector<18x18x128xf32> to vector<16x16x128xf32>
    %8 = vector.extract_strided_slice %5 {offsets = [0, 2, 0], sizes = [16, 16, 128], strides = [1, 1, 1]} : vector<18x18x128xf32> to vector<16x16x128xf32>
    %9 = vector.extract_strided_slice %5 {offsets = [1, 0, 0], sizes = [16, 16, 128], strides = [1, 1, 1]} : vector<18x18x128xf32> to vector<16x16x128xf32>
    %10 = vector.extract_strided_slice %5 {offsets = [1, 1, 0], sizes = [16, 16, 128], strides = [1, 1, 1]} : vector<18x18x128xf32> to vector<16x16x128xf32>
    %11 = vector.extract_strided_slice %5 {offsets = [1, 2, 0], sizes = [16, 16, 128], strides = [1, 1, 1]} : vector<18x18x128xf32> to vector<16x16x128xf32>
    %12 = vector.extract_strided_slice %5 {offsets = [2, 0, 0], sizes = [16, 16, 128], strides = [1, 1, 1]} : vector<18x18x128xf32> to vector<16x16x128xf32>
    %13 = vector.extract_strided_slice %5 {offsets = [2, 1, 0], sizes = [16, 16, 128], strides = [1, 1, 1]} : vector<18x18x128xf32> to vector<16x16x128xf32>
    %14 = vector.extract_strided_slice %5 {offsets = [2, 2, 0], sizes = [16, 16, 128], strides = [1, 1, 1]} : vector<18x18x128xf32> to vector<16x16x128xf32>
    %15 = tpu.concatenate %6, %7, %8, %9, %10, %11, %12, %13, %14 in 2 : vector<16x16x128xf32>, vector<16x16x128xf32>, vector<16x16x128xf32>, vector<16x16x128xf32>, vector<16x16x128xf32>, vector<16x16x128xf32>, vector<16x16x128xf32>, vector<16x16x128xf32>, vector<16x16x128xf32> -> vector<16x16x1152xf32>
    %16 = vector.shape_cast %15 : vector<16x16x1152xf32> to vector<256x1152xf32>
    %c0_4 = arith.constant 0 : index
    %c0_5 = arith.constant 0 : index
    %17 = vector.load %arg2[%c0_4, %c0_5] : memref<1152x128xf32, #tpu.memory_space<vmem>>, vector<1152x128xf32>
    %cst_6 = arith.constant dense<0.000000e+00> : vector<256x128xf32>
    %18 = tpu.matmul %16, %17, %cst_6 {dimension_numbers = #tpu.dot_dimension_numbers<[1], [0], [0], [1], [0, 0, 1, 1], [], []>} : vector<256x1152xf32>, vector<1152x128xf32>, vector<256x128xf32> -> vector<256x128xf32>
    %c0_7 = arith.constant 0 : index
    %c0_8 = arith.constant 0 : index
    %19 = vector.load %arg3[%c0_7, %c0_8] : memref<1x128xf32, #tpu.memory_space<vmem>>, vector<1x128xf32>
    %20 = vector.broadcast %19 : vector<1x128xf32> to vector<256x128xf32>
    %21 = arith.addf %18, %20 : vector<256x128xf32>
    %cst_9 = arith.constant 0.000000e+00 : f32
    %22 = vector.broadcast %cst_9 : f32 to vector<256x128xf32>
    %23 = arith.maximumf %21, %22 : vector<256x128xf32>
    %c0_10 = arith.constant 0 : index
    %c0_11 = arith.constant 0 : index
    %c0_12 = arith.constant 0 : index
    %24 = vector.load %arg4[%c0_10, %c0_11, %c0_12] : memref<1x256x128xf32, #tpu.memory_space<vmem>>, vector<1x256x128xf32>
    %25 = vector.shape_cast %24 : vector<1x256x128xf32> to vector<256x128xf32>
    %26 = vector.shape_cast %23 : vector<256x128xf32> to vector<1x256x128xf32>
    tpu.vector_store %arg4[%c0_10, %c0_11, %c0_12], %26 {strides = array<i32>} : memref<1x256x128xf32, #tpu.memory_space<vmem>>, vector<1x256x128xf32>,
    return
  }
  func.func @transform_0(%arg0: i32) -> (i32, i32, i32, i32) {
    %c0_i32 = arith.constant 0 : i32
    %c0_i32_0 = arith.constant 0 : i32
    %c2_i32 = arith.constant 2 : i32
    %c0_i32_1 = arith.constant 0 : i32
    return %arg0, %c0_i32, %c0_i32_0, %c2_i32 : i32, i32, i32, i32
  }
  func.func @transform_1(%arg0: i32) -> (i32, i32) {
    %c0_i32 = arith.constant 0 : i32
    %c0_i32_0 = arith.constant 0 : i32
    %c0_i32_1 = arith.constant 0 : i32
    return %c0_i32, %c0_i32_0 : i32, i32
  }
  func.func @transform_2(%arg0: i32) -> (i32, i32) {
    %c0_i32 = arith.constant 0 : i32
    %c0_i32_0 = arith.constant 0 : i32
    %c0_i32_1 = arith.constant 0 : i32
    return %c0_i32, %c0_i32_0 : i32, i32
  }
  func.func @transform_3(%arg0: i32) -> (i32, i32, i32) {
    %c0_i32 = arith.constant 0 : i32
    %c0_i32_0 = arith.constant 0 : i32
    %c0_i32_1 = arith.constant 0 : i32
    return %arg0, %c0_i32, %c0_i32_0 : i32, i32, i32
  }
}

module attributes {stable_mosaic.version = 11 : i64} {
  func.func @_conv1x1_fused_kernel(%arg0: i32, %arg1: i32, %arg2: memref<1x256x4xf32, #tpu.memory_space<vmem>>, %arg3: memref<4x512xf32, #tpu.memory_space<vmem>>, %arg4: memref<1x512xf32, #tpu.memory_space<vmem>>, %arg5: memref<1x512xf32, #tpu.memory_space<vmem>>, %arg6: memref<1x256x512xf32, #tpu.memory_space<vmem>>) attributes {dimension_semantics = [#tpu.dimension_semantics<parallel>, #tpu.dimension_semantics<parallel>], iteration_bounds = array<i64: 2, 1>, scalar_prefetch = 0 : i64, scratch_operands = 0 : i64, tpu.core_type = #tpu.core_type<tc>, window_params = [{transform_indices = @transform_0, window_bounds = array<i64: 1, 256, 4>}, {pipeline_mode = #tpu.pipeline_mode<synchronous>, transform_indices = @transform_1, window_bounds = array<i64: 4, 512>}, {pipeline_mode = #tpu.pipeline_mode<synchronous>, transform_indices = @transform_2, window_bounds = array<i64: 1, 512>}, {pipeline_mode = #tpu.pipeline_mode<synchronous>, transform_indices = @transform_3, window_bounds = array<i64: 1, 512>}, {transform_indices = @transform_4, window_bounds = array<i64: 1, 256, 512>}]} {
    %c0 = arith.constant 0 : index
    %c0_0 = arith.constant 0 : index
    %c0_1 = arith.constant 0 : index
    %0 = vector.load %arg2[%c0, %c0_0, %c0_1] : memref<1x256x4xf32, #tpu.memory_space<vmem>>, vector<1x256x4xf32>
    %1 = vector.shape_cast %0 : vector<1x256x4xf32> to vector<256x4xf32>
    %c0_2 = arith.constant 0 : index
    %c0_3 = arith.constant 0 : index
    %2 = vector.load %arg3[%c0_2, %c0_3] : memref<4x512xf32, #tpu.memory_space<vmem>>, vector<4x512xf32>
    %cst = arith.constant dense<0.000000e+00> : vector<256x512xf32>
    %3 = tpu.matmul %1, %2, %cst {dimension_numbers = #tpu.dot_dimension_numbers<[1], [0], [0], [1], [0, 0, 1, 1], [], []>} : vector<256x4xf32>, vector<4x512xf32>, vector<256x512xf32> -> vector<256x512xf32>
    %c0_4 = arith.constant 0 : index
    %c0_5 = arith.constant 0 : index
    %4 = vector.load %arg4[%c0_4, %c0_5] : memref<1x512xf32, #tpu.memory_space<vmem>>, vector<1x512xf32>
    %5 = vector.broadcast %4 : vector<1x512xf32> to vector<256x512xf32>
    %6 = arith.addf %3, %5 : vector<256x512xf32>
    %c0_6 = arith.constant 0 : index
    %c0_7 = arith.constant 0 : index
    %7 = vector.load %arg5[%c0_6, %c0_7] : memref<1x512xf32, #tpu.memory_space<vmem>>, vector<1x512xf32>
    %8 = vector.broadcast %7 : vector<1x512xf32> to vector<256x512xf32>
    %9 = arith.maximumf %6, %8 : vector<256x512xf32>
    %c0_8 = arith.constant 0 : index
    %c0_9 = arith.constant 0 : index
    %c0_10 = arith.constant 0 : index
    %10 = vector.load %arg6[%c0_8, %c0_9, %c0_10] : memref<1x256x512xf32, #tpu.memory_space<vmem>>, vector<1x256x512xf32>
    %11 = vector.shape_cast %10 : vector<1x256x512xf32> to vector<256x512xf32>
    %12 = vector.shape_cast %9 : vector<256x512xf32> to vector<1x256x512xf32>
    tpu.vector_store %arg6[%c0_8, %c0_9, %c0_10], %12 {strides = array<i32>} : memref<1x256x512xf32, #tpu.memory_space<vmem>>, vector<1x256x512xf32>,
    return
  }
  func.func @transform_0(%arg0: i32, %arg1: i32) -> (i32, i32, i32) {
    %c0_i32 = arith.constant 0 : i32
    %c0_i32_0 = arith.constant 0 : i32
    return %arg0, %arg1, %c0_i32 : i32, i32, i32
  }
  func.func @transform_1(%arg0: i32, %arg1: i32) -> (i32, i32) {
    %c0_i32 = arith.constant 0 : i32
    %c0_i32_0 = arith.constant 0 : i32
    %c0_i32_1 = arith.constant 0 : i32
    return %c0_i32, %c0_i32_0 : i32, i32
  }
  func.func @transform_2(%arg0: i32, %arg1: i32) -> (i32, i32) {
    %c0_i32 = arith.constant 0 : i32
    %c0_i32_0 = arith.constant 0 : i32
    %c0_i32_1 = arith.constant 0 : i32
    return %c0_i32, %c0_i32_0 : i32, i32
  }
  func.func @transform_3(%arg0: i32, %arg1: i32) -> (i32, i32) {
    %c0_i32 = arith.constant 0 : i32
    %c0_i32_0 = arith.constant 0 : i32
    %c0_i32_1 = arith.constant 0 : i32
    return %c0_i32, %c0_i32_0 : i32, i32
  }
  func.func @transform_4(%arg0: i32, %arg1: i32) -> (i32, i32, i32) {
    %c0_i32 = arith.constant 0 : i32
    %c0_i32_0 = arith.constant 0 : i32
    return %arg0, %arg1, %c0_i32 : i32, i32, i32
  }
}

module attributes {stable_mosaic.version = 11 : i64} {
  func.func @_avgpool_relu_kernel(%arg0: i32, %arg1: memref<1x16x16x128xf32, #tpu.memory_space<vmem>>, %arg2: memref<1x128xf32, #tpu.memory_space<vmem>>, %arg3: memref<1x256x128xf32, #tpu.memory_space<vmem>>) attributes {dimension_semantics = [#tpu.dimension_semantics<parallel>], iteration_bounds = array<i64: 2>, scalar_prefetch = 0 : i64, scratch_operands = 0 : i64, tpu.core_type = #tpu.core_type<tc>, window_params = [{transform_indices = @transform_0, window_bounds = array<i64: 1, 16, 16, 128>}, {pipeline_mode = #tpu.pipeline_mode<synchronous>, transform_indices = @transform_1, window_bounds = array<i64: 1, 128>}, {transform_indices = @transform_2, window_bounds = array<i64: 1, 256, 128>}]} {
    %c0 = arith.constant 0 : index
    %c0_0 = arith.constant 0 : index
    %c0_1 = arith.constant 0 : index
    %c0_2 = arith.constant 0 : index
    %0 = vector.load %arg1[%c0, %c0_0, %c0_1, %c0_2] : memref<1x16x16x128xf32, #tpu.memory_space<vmem>>, vector<1x16x16x128xf32>
    %1 = vector.shape_cast %0 : vector<1x16x16x128xf32> to vector<16x16x128xf32>
    %cst = arith.constant 0.000000e+00 : f32
    %2 = vector.broadcast %cst : f32 to vector<1x16x128xf32>
    %3 = tpu.concatenate %2, %1, %2 in 0 : vector<1x16x128xf32>, vector<16x16x128xf32>, vector<1x16x128xf32> -> vector<18x16x128xf32>
    %4 = vector.extract_strided_slice %3 {offsets = [0, 0, 0], sizes = [16, 16, 128], strides = [1, 1, 1]} : vector<18x16x128xf32> to vector<16x16x128xf32>
    %5 = vector.extract_strided_slice %3 {offsets = [1, 0, 0], sizes = [16, 16, 128], strides = [1, 1, 1]} : vector<18x16x128xf32> to vector<16x16x128xf32>
    %6 = arith.addf %4, %5 : vector<16x16x128xf32>
    %7 = vector.extract_strided_slice %3 {offsets = [2, 0, 0], sizes = [16, 16, 128], strides = [1, 1, 1]} : vector<18x16x128xf32> to vector<16x16x128xf32>
    %8 = arith.addf %6, %7 : vector<16x16x128xf32>
    %cst_3 = arith.constant 0.000000e+00 : f32
    %9 = vector.broadcast %cst_3 : f32 to vector<16x1x128xf32>
    %10 = tpu.concatenate %9, %8, %9 in 1 : vector<16x1x128xf32>, vector<16x16x128xf32>, vector<16x1x128xf32> -> vector<16x18x128xf32>
    %11 = vector.extract_strided_slice %10 {offsets = [0, 0, 0], sizes = [16, 16, 128], strides = [1, 1, 1]} : vector<16x18x128xf32> to vector<16x16x128xf32>
    %12 = vector.extract_strided_slice %10 {offsets = [0, 1, 0], sizes = [16, 16, 128], strides = [1, 1, 1]} : vector<16x18x128xf32> to vector<16x16x128xf32>
    %13 = arith.addf %11, %12 : vector<16x16x128xf32>
    %14 = vector.extract_strided_slice %10 {offsets = [0, 2, 0], sizes = [16, 16, 128], strides = [1, 1, 1]} : vector<16x18x128xf32> to vector<16x16x128xf32>
    %15 = arith.addf %13, %14 : vector<16x16x128xf32>
    %16 = vector.shape_cast %15 : vector<16x16x128xf32> to vector<256x128xf32>
    %c0_4 = arith.constant 0 : index
    %c0_5 = arith.constant 0 : index
    %17 = vector.load %arg2[%c0_4, %c0_5] : memref<1x128xf32, #tpu.memory_space<vmem>>, vector<1x128xf32>
    %18 = vector.broadcast %17 : vector<1x128xf32> to vector<256x128xf32>
    %19 = arith.addf %16, %18 : vector<256x128xf32>
    %cst_6 = arith.constant 0.000000e+00 : f32
    %20 = vector.broadcast %cst_6 : f32 to vector<256x128xf32>
    %21 = arith.maximumf %19, %20 : vector<256x128xf32>
    %c0_7 = arith.constant 0 : index
    %c0_8 = arith.constant 0 : index
    %c0_9 = arith.constant 0 : index
    %22 = vector.load %arg3[%c0_7, %c0_8, %c0_9] : memref<1x256x128xf32, #tpu.memory_space<vmem>>, vector<1x256x128xf32>
    %23 = vector.shape_cast %22 : vector<1x256x128xf32> to vector<256x128xf32>
    %24 = vector.shape_cast %21 : vector<256x128xf32> to vector<1x256x128xf32>
    tpu.vector_store %arg3[%c0_7, %c0_8, %c0_9], %24 {strides = array<i32>} : memref<1x256x128xf32, #tpu.memory_space<vmem>>, vector<1x256x128xf32>,
    return
  }
  func.func @transform_0(%arg0: i32) -> (i32, i32, i32, i32) {
    %c0_i32 = arith.constant 0 : i32
    %c0_i32_0 = arith.constant 0 : i32
    %c3_i32 = arith.constant 3 : i32
    %c0_i32_1 = arith.constant 0 : i32
    return %arg0, %c0_i32, %c0_i32_0, %c3_i32 : i32, i32, i32, i32
  }
  func.func @transform_1(%arg0: i32) -> (i32, i32) {
    %c0_i32 = arith.constant 0 : i32
    %c0_i32_0 = arith.constant 0 : i32
    %c0_i32_1 = arith.constant 0 : i32
    return %c0_i32, %c0_i32_0 : i32, i32
  }
  func.func @transform_2(%arg0: i32) -> (i32, i32, i32) {
    %c0_i32 = arith.constant 0 : i32
    %c0_i32_0 = arith.constant 0 : i32
    %c0_i32_1 = arith.constant 0 : i32
    return %arg0, %c0_i32, %c0_i32_0 : i32, i32, i32
  }
}

module attributes {stable_mosaic.version = 11 : i64} {
  func.func @_conv3x3_kernel(%arg0: i32, %arg1: memref<1x16x16x128xf32, #tpu.memory_space<vmem>>, %arg2: memref<1152x128xf32, #tpu.memory_space<vmem>>, %arg3: memref<1x128xf32, #tpu.memory_space<vmem>>, %arg4: memref<1x256x128xf32, #tpu.memory_space<vmem>>) attributes {dimension_semantics = [#tpu.dimension_semantics<parallel>], iteration_bounds = array<i64: 2>, scalar_prefetch = 0 : i64, scratch_operands = 0 : i64, tpu.core_type = #tpu.core_type<tc>, window_params = [{transform_indices = @transform_0, window_bounds = array<i64: 1, 16, 16, 128>}, {pipeline_mode = #tpu.pipeline_mode<synchronous>, transform_indices = @transform_1, window_bounds = array<i64: 1152, 128>}, {pipeline_mode = #tpu.pipeline_mode<synchronous>, transform_indices = @transform_2, window_bounds = array<i64: 1, 128>}, {transform_indices = @transform_3, window_bounds = array<i64: 1, 256, 128>}]} {
    %c0 = arith.constant 0 : index
    %c0_0 = arith.constant 0 : index
    %c0_1 = arith.constant 0 : index
    %c0_2 = arith.constant 0 : index
    %0 = vector.load %arg1[%c0, %c0_0, %c0_1, %c0_2] : memref<1x16x16x128xf32, #tpu.memory_space<vmem>>, vector<1x16x16x128xf32>
    %1 = vector.shape_cast %0 : vector<1x16x16x128xf32> to vector<16x16x128xf32>
    %cst = arith.constant 0.000000e+00 : f32
    %2 = vector.broadcast %cst : f32 to vector<1x16x128xf32>
    %3 = tpu.concatenate %2, %1, %2 in 0 : vector<1x16x128xf32>, vector<16x16x128xf32>, vector<1x16x128xf32> -> vector<18x16x128xf32>
    %cst_3 = arith.constant 0.000000e+00 : f32
    %4 = vector.broadcast %cst_3 : f32 to vector<18x1x128xf32>
    %5 = tpu.concatenate %4, %3, %4 in 1 : vector<18x1x128xf32>, vector<18x16x128xf32>, vector<18x1x128xf32> -> vector<18x18x128xf32>
    %6 = vector.extract_strided_slice %5 {offsets = [0, 0, 0], sizes = [16, 16, 128], strides = [1, 1, 1]} : vector<18x18x128xf32> to vector<16x16x128xf32>
    %7 = vector.extract_strided_slice %5 {offsets = [0, 1, 0], sizes = [16, 16, 128], strides = [1, 1, 1]} : vector<18x18x128xf32> to vector<16x16x128xf32>
    %8 = vector.extract_strided_slice %5 {offsets = [0, 2, 0], sizes = [16, 16, 128], strides = [1, 1, 1]} : vector<18x18x128xf32> to vector<16x16x128xf32>
    %9 = vector.extract_strided_slice %5 {offsets = [1, 0, 0], sizes = [16, 16, 128], strides = [1, 1, 1]} : vector<18x18x128xf32> to vector<16x16x128xf32>
    %10 = vector.extract_strided_slice %5 {offsets = [1, 1, 0], sizes = [16, 16, 128], strides = [1, 1, 1]} : vector<18x18x128xf32> to vector<16x16x128xf32>
    %11 = vector.extract_strided_slice %5 {offsets = [1, 2, 0], sizes = [16, 16, 128], strides = [1, 1, 1]} : vector<18x18x128xf32> to vector<16x16x128xf32>
    %12 = vector.extract_strided_slice %5 {offsets = [2, 0, 0], sizes = [16, 16, 128], strides = [1, 1, 1]} : vector<18x18x128xf32> to vector<16x16x128xf32>
    %13 = vector.extract_strided_slice %5 {offsets = [2, 1, 0], sizes = [16, 16, 128], strides = [1, 1, 1]} : vector<18x18x128xf32> to vector<16x16x128xf32>
    %14 = vector.extract_strided_slice %5 {offsets = [2, 2, 0], sizes = [16, 16, 128], strides = [1, 1, 1]} : vector<18x18x128xf32> to vector<16x16x128xf32>
    %15 = tpu.concatenate %6, %7, %8, %9, %10, %11, %12, %13, %14 in 2 : vector<16x16x128xf32>, vector<16x16x128xf32>, vector<16x16x128xf32>, vector<16x16x128xf32>, vector<16x16x128xf32>, vector<16x16x128xf32>, vector<16x16x128xf32>, vector<16x16x128xf32>, vector<16x16x128xf32> -> vector<16x16x1152xf32>
    %16 = vector.shape_cast %15 : vector<16x16x1152xf32> to vector<256x1152xf32>
    %c0_4 = arith.constant 0 : index
    %c0_5 = arith.constant 0 : index
    %17 = vector.load %arg2[%c0_4, %c0_5] : memref<1152x128xf32, #tpu.memory_space<vmem>>, vector<1152x128xf32>
    %cst_6 = arith.constant dense<0.000000e+00> : vector<256x128xf32>
    %18 = tpu.matmul %16, %17, %cst_6 {dimension_numbers = #tpu.dot_dimension_numbers<[1], [0], [0], [1], [0, 0, 1, 1], [], []>} : vector<256x1152xf32>, vector<1152x128xf32>, vector<256x128xf32> -> vector<256x128xf32>
    %c0_7 = arith.constant 0 : index
    %c0_8 = arith.constant 0 : index
    %19 = vector.load %arg3[%c0_7, %c0_8] : memref<1x128xf32, #tpu.memory_space<vmem>>, vector<1x128xf32>
    %20 = vector.broadcast %19 : vector<1x128xf32> to vector<256x128xf32>
    %21 = arith.addf %18, %20 : vector<256x128xf32>
    %cst_9 = arith.constant 0.000000e+00 : f32
    %22 = vector.broadcast %cst_9 : f32 to vector<256x128xf32>
    %23 = arith.maximumf %21, %22 : vector<256x128xf32>
    %c0_10 = arith.constant 0 : index
    %c0_11 = arith.constant 0 : index
    %c0_12 = arith.constant 0 : index
    %24 = vector.load %arg4[%c0_10, %c0_11, %c0_12] : memref<1x256x128xf32, #tpu.memory_space<vmem>>, vector<1x256x128xf32>
    %25 = vector.shape_cast %24 : vector<1x256x128xf32> to vector<256x128xf32>
    %26 = vector.shape_cast %23 : vector<256x128xf32> to vector<1x256x128xf32>
    tpu.vector_store %arg4[%c0_10, %c0_11, %c0_12], %26 {strides = array<i32>} : memref<1x256x128xf32, #tpu.memory_space<vmem>>, vector<1x256x128xf32>,
    return
  }
  func.func @transform_0(%arg0: i32) -> (i32, i32, i32, i32) {
    %c0_i32 = arith.constant 0 : i32
    %c0_i32_0 = arith.constant 0 : i32
    %c0_i32_1 = arith.constant 0 : i32
    %c0_i32_2 = arith.constant 0 : i32
    return %arg0, %c0_i32, %c0_i32_0, %c0_i32_1 : i32, i32, i32, i32
  }
  func.func @transform_1(%arg0: i32) -> (i32, i32) {
    %c0_i32 = arith.constant 0 : i32
    %c0_i32_0 = arith.constant 0 : i32
    %c0_i32_1 = arith.constant 0 : i32
    return %c0_i32, %c0_i32_0 : i32, i32
  }
  func.func @transform_2(%arg0: i32) -> (i32, i32) {
    %c0_i32 = arith.constant 0 : i32
    %c0_i32_0 = arith.constant 0 : i32
    %c0_i32_1 = arith.constant 0 : i32
    return %c0_i32, %c0_i32_0 : i32, i32
  }
  func.func @transform_3(%arg0: i32) -> (i32, i32, i32) {
    %c0_i32 = arith.constant 0 : i32
    %c0_i32_0 = arith.constant 0 : i32
    %c0_i32_1 = arith.constant 0 : i32
    return %arg0, %c0_i32, %c0_i32_0 : i32, i32, i32
  }
}

module attributes {stable_mosaic.version = 11 : i64} {
  func.func @_conv3x3_kernel(%arg0: i32, %arg1: memref<1x16x16x128xf32, #tpu.memory_space<vmem>>, %arg2: memref<1152x128xf32, #tpu.memory_space<vmem>>, %arg3: memref<1x128xf32, #tpu.memory_space<vmem>>, %arg4: memref<1x256x128xf32, #tpu.memory_space<vmem>>) attributes {dimension_semantics = [#tpu.dimension_semantics<parallel>], iteration_bounds = array<i64: 2>, scalar_prefetch = 0 : i64, scratch_operands = 0 : i64, tpu.core_type = #tpu.core_type<tc>, window_params = [{transform_indices = @transform_0, window_bounds = array<i64: 1, 16, 16, 128>}, {pipeline_mode = #tpu.pipeline_mode<synchronous>, transform_indices = @transform_1, window_bounds = array<i64: 1152, 128>}, {pipeline_mode = #tpu.pipeline_mode<synchronous>, transform_indices = @transform_2, window_bounds = array<i64: 1, 128>}, {transform_indices = @transform_3, window_bounds = array<i64: 1, 256, 128>}]} {
    %c0 = arith.constant 0 : index
    %c0_0 = arith.constant 0 : index
    %c0_1 = arith.constant 0 : index
    %c0_2 = arith.constant 0 : index
    %0 = vector.load %arg1[%c0, %c0_0, %c0_1, %c0_2] : memref<1x16x16x128xf32, #tpu.memory_space<vmem>>, vector<1x16x16x128xf32>
    %1 = vector.shape_cast %0 : vector<1x16x16x128xf32> to vector<16x16x128xf32>
    %cst = arith.constant 0.000000e+00 : f32
    %2 = vector.broadcast %cst : f32 to vector<1x16x128xf32>
    %3 = tpu.concatenate %2, %1, %2 in 0 : vector<1x16x128xf32>, vector<16x16x128xf32>, vector<1x16x128xf32> -> vector<18x16x128xf32>
    %cst_3 = arith.constant 0.000000e+00 : f32
    %4 = vector.broadcast %cst_3 : f32 to vector<18x1x128xf32>
    %5 = tpu.concatenate %4, %3, %4 in 1 : vector<18x1x128xf32>, vector<18x16x128xf32>, vector<18x1x128xf32> -> vector<18x18x128xf32>
    %6 = vector.extract_strided_slice %5 {offsets = [0, 0, 0], sizes = [16, 16, 128], strides = [1, 1, 1]} : vector<18x18x128xf32> to vector<16x16x128xf32>
    %7 = vector.extract_strided_slice %5 {offsets = [0, 1, 0], sizes = [16, 16, 128], strides = [1, 1, 1]} : vector<18x18x128xf32> to vector<16x16x128xf32>
    %8 = vector.extract_strided_slice %5 {offsets = [0, 2, 0], sizes = [16, 16, 128], strides = [1, 1, 1]} : vector<18x18x128xf32> to vector<16x16x128xf32>
    %9 = vector.extract_strided_slice %5 {offsets = [1, 0, 0], sizes = [16, 16, 128], strides = [1, 1, 1]} : vector<18x18x128xf32> to vector<16x16x128xf32>
    %10 = vector.extract_strided_slice %5 {offsets = [1, 1, 0], sizes = [16, 16, 128], strides = [1, 1, 1]} : vector<18x18x128xf32> to vector<16x16x128xf32>
    %11 = vector.extract_strided_slice %5 {offsets = [1, 2, 0], sizes = [16, 16, 128], strides = [1, 1, 1]} : vector<18x18x128xf32> to vector<16x16x128xf32>
    %12 = vector.extract_strided_slice %5 {offsets = [2, 0, 0], sizes = [16, 16, 128], strides = [1, 1, 1]} : vector<18x18x128xf32> to vector<16x16x128xf32>
    %13 = vector.extract_strided_slice %5 {offsets = [2, 1, 0], sizes = [16, 16, 128], strides = [1, 1, 1]} : vector<18x18x128xf32> to vector<16x16x128xf32>
    %14 = vector.extract_strided_slice %5 {offsets = [2, 2, 0], sizes = [16, 16, 128], strides = [1, 1, 1]} : vector<18x18x128xf32> to vector<16x16x128xf32>
    %15 = tpu.concatenate %6, %7, %8, %9, %10, %11, %12, %13, %14 in 2 : vector<16x16x128xf32>, vector<16x16x128xf32>, vector<16x16x128xf32>, vector<16x16x128xf32>, vector<16x16x128xf32>, vector<16x16x128xf32>, vector<16x16x128xf32>, vector<16x16x128xf32>, vector<16x16x128xf32> -> vector<16x16x1152xf32>
    %16 = vector.shape_cast %15 : vector<16x16x1152xf32> to vector<256x1152xf32>
    %c0_4 = arith.constant 0 : index
    %c0_5 = arith.constant 0 : index
    %17 = vector.load %arg2[%c0_4, %c0_5] : memref<1152x128xf32, #tpu.memory_space<vmem>>, vector<1152x128xf32>
    %cst_6 = arith.constant dense<0.000000e+00> : vector<256x128xf32>
    %18 = tpu.matmul %16, %17, %cst_6 {dimension_numbers = #tpu.dot_dimension_numbers<[1], [0], [0], [1], [0, 0, 1, 1], [], []>} : vector<256x1152xf32>, vector<1152x128xf32>, vector<256x128xf32> -> vector<256x128xf32>
    %c0_7 = arith.constant 0 : index
    %c0_8 = arith.constant 0 : index
    %19 = vector.load %arg3[%c0_7, %c0_8] : memref<1x128xf32, #tpu.memory_space<vmem>>, vector<1x128xf32>
    %20 = vector.broadcast %19 : vector<1x128xf32> to vector<256x128xf32>
    %21 = arith.addf %18, %20 : vector<256x128xf32>
    %cst_9 = arith.constant 0.000000e+00 : f32
    %22 = vector.broadcast %cst_9 : f32 to vector<256x128xf32>
    %23 = arith.maximumf %21, %22 : vector<256x128xf32>
    %c0_10 = arith.constant 0 : index
    %c0_11 = arith.constant 0 : index
    %c0_12 = arith.constant 0 : index
    %24 = vector.load %arg4[%c0_10, %c0_11, %c0_12] : memref<1x256x128xf32, #tpu.memory_space<vmem>>, vector<1x256x128xf32>
    %25 = vector.shape_cast %24 : vector<1x256x128xf32> to vector<256x128xf32>
    %26 = vector.shape_cast %23 : vector<256x128xf32> to vector<1x256x128xf32>
    tpu.vector_store %arg4[%c0_10, %c0_11, %c0_12], %26 {strides = array<i32>} : memref<1x256x128xf32, #tpu.memory_space<vmem>>, vector<1x256x128xf32>,
    return
  }
  func.func @transform_0(%arg0: i32) -> (i32, i32, i32, i32) {
    %c0_i32 = arith.constant 0 : i32
    %c0_i32_0 = arith.constant 0 : i32
    %c1_i32 = arith.constant 1 : i32
    %c0_i32_1 = arith.constant 0 : i32
    return %arg0, %c0_i32, %c0_i32_0, %c1_i32 : i32, i32, i32, i32
  }
  func.func @transform_1(%arg0: i32) -> (i32, i32) {
    %c0_i32 = arith.constant 0 : i32
    %c0_i32_0 = arith.constant 0 : i32
    %c0_i32_1 = arith.constant 0 : i32
    return %c0_i32, %c0_i32_0 : i32, i32
  }
  func.func @transform_2(%arg0: i32) -> (i32, i32) {
    %c0_i32 = arith.constant 0 : i32
    %c0_i32_0 = arith.constant 0 : i32
    %c0_i32_1 = arith.constant 0 : i32
    return %c0_i32, %c0_i32_0 : i32, i32
  }
  func.func @transform_3(%arg0: i32) -> (i32, i32, i32) {
    %c0_i32 = arith.constant 0 : i32
    %c0_i32_0 = arith.constant 0 : i32
    %c0_i32_1 = arith.constant 0 : i32
    return %arg0, %c0_i32, %c0_i32_0 : i32, i32, i32
  }
}

</mosaic_0001>

<llo_original>
// kernel: inception_a_forward.9
$region0: #{inception_a_forward.9}
  #allocation0 [shape = 'u32[]', space=smem, size = 0x4, offset = 0x4, fixed_abs, tag = 'smem constant byte address 0x4 - core index']
  #allocation1 [shape = 'u32[72,128]{1,0:T(1,128)}', space=vmem, size = 0x9000, scoped, tag = 'internal scratch']
  %s0 = inlined_call_operand.vmem [shape: f32[2,16,16,512], index: 0, kind: input, shape index: {}]
  %s1 = inlined_call_operand.vmem [shape: f32[1,128], index: 1, kind: input, shape index: {}]
  %s2 = inlined_call_operand.vmem [shape: f32[2,256,128], index: 2, kind: output, shape index: {}]
  %s3 = sld [smem:[#allocation0]]
  $region79: #{inception_a_forward.9} parent=0
    _
  %s5 = ssub.s32 1, %s3
  %s6 = scalar_select 0, %s5, %s3
  $region1: #{inception_a_forward.9} parent=0
    #allocation2 [shape = 'u8[262144]{0}', space=vmem, size = 0x40000, scoped, tag = 'input window, operand 0']
    loop: start=0, step=1, limit=4
    $region2: #{inception_a_forward.9} parent=1 // loop_pre_header
      _
    $region3: #{inception_a_forward.9} parent=1 // loop_header
      %s8 = sphi 0, %s12
      %p9 = scmp.ge.s32.totalorder %s8, 4
      %s18 = sphi 0, %s20
      %s21 = sphi 0, %s18
      %s22 = sphi 0, %s21
      %s38 = sphi 0, %s22
      %s42 = sphi 0, %s42
      %s44 = sphi 0, %s42
      %s45 = sphi 0, %s44
      %s59 = sphi 0, %s45
      %s65 = sphi 0, %s67
      %s68 = sphi 0, %s65
      %s69 = sphi 0, %s68
      %s85 = sphi 0, %s69
    $region4: #{inception_a_forward.9} parent=1 // loop_header_branch
      %11 = sbr.rel (%p9) target = $region8
    $region5: #{inception_a_forward.9} parent=1 // loop_body
      %s13 = ssub.s32 %s8, 1
      %s14 = ssub.s32 %s8, 2
      %s15 = sadd.s32 %s8, 1
      %s16 = ssub.s32 %s8, %s15
      %p17 = scmp.eq.s32.totalorder %s16, 0
      %s19 = sadd.s32 %s18, 1
      %s20 = scalar_select %p17, %s18, %s19
      %p23 = pneg %p17
      %p24 = scmp.eq.s32.totalorder %s8, 1
      %p25 = por %p23, %p24
      %p26 = scmp.ne.s32.totalorder %s18, %s21
      %p27 = scmp.eq.s32.totalorder %s8, 0
      %p28 = por %p26, %p27
      %p29 = scmp.ne.s32.totalorder %s18, %s21
      %p30 = scmp.eq.s32.totalorder %s13, 1
      %p31 = por %p29, %p30
      %p32 = scmp.ne.s32.totalorder %s21, %s22
      %p33 = scmp.eq.s32.totalorder %s13, 0
      %p34 = por %p32, %p33
      %p35 = scmp.ne.s32.totalorder %s21, %s22
      %p36 = scmp.eq.s32.totalorder %s14, 1
      %p37 = por %p35, %p36
      %p39 = scmp.ne.s32.totalorder %s22, %s38
      %p40 = scmp.eq.s32.totalorder %s14, 0
      %p41 = por %p39, %p40
      %s43 = sadd.s32 %s42, 1
      %p46 = scmp.eq.s32.totalorder %s8, 1
      %p47 = scmp.ne.s32.totalorder %s42, %s44
      %p48 = scmp.eq.s32.totalorder %s8, 0
      %p49 = por %p47, %p48
      %p50 = scmp.ne.s32.totalorder %s42, %s44
      %p51 = scmp.eq.s32.totalorder %s13, 1
      %p52 = por %p50, %p51
      %p53 = scmp.ne.s32.totalorder %s44, %s45
      %p54 = scmp.eq.s32.totalorder %s13, 0
      %p55 = por %p53, %p54
      %p56 = scmp.ne.s32.totalorder %s44, %s45
      %p57 = scmp.eq.s32.totalorder %s14, 1
      %p58 = por %p56, %p57
      %p60 = scmp.ne.s32.totalorder %s45, %s59
      %p61 = scmp.eq.s32.totalorder %s14, 0
      %p62 = por %p60, %p61
      %s63 = ssub.s32 %s8, %s15
      %p64 = scmp.eq.s32.totalorder %s63, 0
      %s66 = sadd.s32 %s65, 1
      %s67 = scalar_select %p64, %s65, %s66
      %p70 = pneg %p64
      %p71 = scmp.eq.s32.totalorder %s8, 1
      %p72 = por %p70, %p71
      %p73 = scmp.ne.s32.totalorder %s65, %s68
      %p74 = scmp.eq.s32.totalorder %s8, 0
      %p75 = por %p73, %p74
      %p76 = scmp.ne.s32.totalorder %s65, %s68
      %p77 = scmp.eq.s32.totalorder %s13, 1
      %p78 = por %p76, %p77
      %p79 = scmp.ne.s32.totalorder %s68, %s69
      %p80 = scmp.eq.s32.totalorder %s13, 0
      %p81 = por %p79, %p80
      %p82 = scmp.ne.s32.totalorder %s68, %s69
      %p83 = scmp.eq.s32.totalorder %s14, 1
      %p84 = por %p82, %p83
      %p86 = scmp.ne.s32.totalorder %s69, %s85
      %p87 = scmp.eq.s32.totalorder %s14, 0
      %p88 = por %p86, %p87
      %p89 = scmp.le.s32.totalorder 1, %s8
      %p90 = scmp.lt.s32.totalorder %s8, 3
      %p91 = pnand %p89, %p90
      %p92 = pneg %p91
      // Predicated region
      $region9: #{inception_a_forward.9} parent=5 // pred_check
        _
      $region10: #{inception_a_forward.9} parent=5 // pred_check_branch
        %94 = sbr.rel (%p91) target = $region12
      $region11: #{inception_a_forward.9} parent=5 // pred_region
        %s95 = ssub.s32 %s8, 1
        // Predicated region
        $region13: #{inception_a_forward.9} parent=11 // pred_check
          %p96 = pneg %p55
        $region14: #{inception_a_forward.9} parent=11 // pred_check_branch
          %98 = sbr.rel (%p96) target = $region16
        $region15: #{inception_a_forward.9} parent=11 // pred_region
          _
        $region16: #{inception_a_forward.9} parent=11 // pred_fallthru
          _
      $region12: #{inception_a_forward.9} parent=5 // pred_fallthru
        _
      %p99 = scmp.lt.s32.totalorder %s8, 2
      // Predicated region
      $region17: #{inception_a_forward.9} parent=5 // pred_check
        %p100 = pneg %p99
      $region18: #{inception_a_forward.9} parent=5 // pred_check_branch
        %102 = sbr.rel (%p100) target = $region20
      $region19: #{inception_a_forward.9} parent=5 // pred_region
        // Predicated region
        $region21: #{inception_a_forward.9} parent=19 // pred_check
          %p103 = pneg %p28
        $region22: #{inception_a_forward.9} parent=19 // pred_check_branch
          %105 = sbr.rel (%p103) target = $region24
        $region23: #{inception_a_forward.9} parent=19 // pred_region
          %s106 = sand.u32 %s18, 1
          %s107 = sand.u32 %s18, 1
          %s108 = smul.addr %s107, 256
          %s109 = scalar_lea.vmem [#allocation2], %s108
          %s110 = smul.addr %s8, 128
          %s111 = sadd.s32 3, %s110
          %s112 = smul.addr %s111, 8
          %s113 = scalar_lea.vmem %s0, %s112
          // Predicated region
          $region25: #{inception_a_forward.9} parent=23 // pred_check
            _
          $region26: #{inception_a_forward.9} parent=23 // pred_check_branch
            %115 = sbr.rel (0) target = $region28
          $region27: #{inception_a_forward.9} parent=23 // pred_region
            // Predicated region
            $region29: #{inception_a_forward.9} parent=27 // pred_check
              _
            $region30: #{inception_a_forward.9} parent=27 // pred_check_branch
              %117 = sbr.rel (0) target = $region32
            $region31: #{inception_a_forward.9} parent=27 // pred_region
              // Predicated region
              $region44: #{inception_a_forward.9} parent=31 // pred_check
                _
              $region45: #{inception_a_forward.9} parent=31 // pred_check_branch
                %195 = sbr.rel (0) target = $region47
              $region46: #{inception_a_forward.9} parent=31 // pred_region
                loop: start=0, step=1, limit=1
                $region48: #{inception_a_forward.9} parent=46 // loop_pre_header
                  _
                $region49: #{inception_a_forward.9} parent=46 // loop_header
                  %s197 = sphi 0, %s201
                  %p198 = scmp.ge.s32.totalorder %s197, 1
                  %s202 = sphi %s113, %s113
                  %s203 = sphi %s109, %s109
                $region50: #{inception_a_forward.9} parent=46 // loop_header_branch
                  %200 = sbr.rel (%p198) target = $region54
                $region51: #{inception_a_forward.9} parent=46 // loop_body
                  %v204 = vld [vmem:[%s202] sm:$0xff]
                  %205 = vst [vmem:[%s203] sm:$0xff] %v204
                  %v206 = vld [vmem:[%s202 + $0x20] sm:$0xff]
                  %207 = vst [vmem:[%s203 + $0x8] sm:$0xff] %v206
                  %v208 = vld [vmem:[%s202 + $0x40] sm:$0xff]
                  %209 = vst [vmem:[%s203 + $0x10] sm:$0xff] %v208
                  %v210 = vld [vmem:[%s202 + $0x60] sm:$0xff]
                  %211 = vst [vmem:[%s203 + $0x18] sm:$0xff] %v210
                  %v212 = vld [vmem:[%s202 + $0x80] sm:$0xff]
                  %213 = vst [vmem:[%s203 + $0x20] sm:$0xff] %v212
                  %v214 = vld [vmem:[%s202 + $0xa0] sm:$0xff]
                  %215 = vst [vmem:[%s203 + $0x28] sm:$0xff] %v214
                  %v216 = vld [vmem:[%s202 + $0xc0] sm:$0xff]
                  %217 = vst [vmem:[%s203 + $0x30] sm:$0xff] %v216
                  %v218 = vld [vmem:[%s202 + $0xe0] sm:$0xff]
                  %219 = vst [vmem:[%s203 + $0x38] sm:$0xff] %v218
                  %v220 = vld [vmem:[%s202 + $0x100] sm:$0xff]
                  %221 = vst [vmem:[%s203 + $0x40] sm:$0xff] %v220
                  %v222 = vld [vmem:[%s202 + $0x120] sm:$0xff]
                  %223 = vst [vmem:[%s203 + $0x48] sm:$0xff] %v222
                  %v224 = vld [vmem:[%s202 + $0x140] sm:$0xff]
                  %225 = vst [vmem:[%s203 + $0x50] sm:$0xff] %v224
                  %v226 = vld [vmem:[%s202 + $0x160] sm:$0xff]
                  %227 = vst [vmem:[%s203 + $0x58] sm:$0xff] %v226
                  %v228 = vld [vmem:[%s202 + $0x180] sm:$0xff]
                  %229 = vst [vmem:[%s203 + $0x60] sm:$0xff] %v228
                  %v230 = vld [vmem:[%s202 + $0x1a0] sm:$0xff]
                  %231 = vst [vmem:[%s203 + $0x68] sm:$0xff] %v230
                  %v232 = vld [vmem:[%s202 + $0x1c0] sm:$0xff]
                  %233 = vst [vmem:[%s203 + $0x70] sm:$0xff] %v232
                  %v234 = vld [vmem:[%s202 + $0x1e0] sm:$0xff]
                  %235 = vst [vmem:[%s203 + $0x78] sm:$0xff] %v234
                  %v236 = vld [vmem:[%s202 + $0x200] sm:$0xff]
                  %237 = vst [vmem:[%s203 + $0x80] sm:$0xff] %v236
                  %v238 = vld [vmem:[%s202 + $0x220] sm:$0xff]
                  %239 = vst [vmem:[%s203 + $0x88] sm:$0xff] %v238
                  %v240 = vld [vmem:[%s202 + $0x240] sm:$0xff]
                  %241 = vst [vmem:[%s203 + $0x90] sm:$0xff] %v240
                  %v242 = vld [vmem:[%s202 + $0x260] sm:$0xff]
                  %243 = vst [vmem:[%s203 + $0x98] sm:$0xff] %v242
                  %v244 = vld [vmem:[%s202 + $0x280] sm:$0xff]
                  %245 = vst [vmem:[%s203 + $0xa0] sm:$0xff] %v244
                  %v246 = vld [vmem:[%s202 + $0x2a0] sm:$0xff]
                  %247 = vst [vmem:[%s203 + $0xa8] sm:$0xff] %v246
                  %v248 = vld [vmem:[%s202 + $0x2c0] sm:$0xff]
                  %249 = vst [vmem:[%s203 + $0xb0] sm:$0xff] %v248
                  %v250 = vld [vmem:[%s202 + $0x2e0] sm:$0xff]
                  %251 = vst [vmem:[%s203 + $0xb8] sm:$0xff] %v250
                  %v252 = vld [vmem:[%s202 + $0x300] sm:$0xff]
                  %253 = vst [vmem:[%s203 + $0xc0] sm:$0xff] %v252
                  %v254 = vld [vmem:[%s202 + $0x320] sm:$0xff]
                  %255 = vst [vmem:[%s203 + $0xc8] sm:$0xff] %v254
                  %v256 = vld [vmem:[%s202 + $0x340] sm:$0xff]
                  %257 = vst [vmem:[%s203 + $0xd0] sm:$0xff] %v256
                  %v258 = vld [vmem:[%s202 + $0x360] sm:$0xff]
                  %259 = vst [vmem:[%s203 + $0xd8] sm:$0xff] %v258
                  %v260 = vld [vmem:[%s202 + $0x380] sm:$0xff]
                  %261 = vst [vmem:[%s203 + $0xe0] sm:$0xff] %v260
                  %v262 = vld [vmem:[%s202 + $0x3a0] sm:$0xff]
                  %263 = vst [vmem:[%s203 + $0xe8] sm:$0xff] %v262
                  %v264 = vld [vmem:[%s202 + $0x3c0] sm:$0xff]
                  %265 = vst [vmem:[%s203 + $0xf0] sm:$0xff] %v264
                  %v266 = vld [vmem:[%s202 + $0x3e0] sm:$0xff]
                  %267 = vst [vmem:[%s203 + $0xf8] sm:$0xff] %v266
                $region52: #{inception_a_forward.9} parent=46 // loop_footer
                  %s201 = sadd.s32 1, %s197
                $region53: #{inception_a_forward.9} parent=46 // loop_footer_branch
                  %196 = sbr.rel target = $region49
                $region54: #{inception_a_forward.9} parent=46 // loop_exit
                  _
              $region47: #{inception_a_forward.9} parent=31 // pred_fallthru
                _
              // Predicated region
              $region55: #{inception_a_forward.9} parent=31 // pred_check
                _
              $region56: #{inception_a_forward.9} parent=31 // pred_check_branch
                %269 = sbr.rel target = $region58
              $region57: #{inception_a_forward.9} parent=31 // pred_region
                _
              $region58: #{inception_a_forward.9} parent=31 // pred_fallthru
                _
            $region32: #{inception_a_forward.9} parent=27 // pred_fallthru
              _
            // Predicated region
            $region33: #{inception_a_forward.9} parent=27 // pred_check
              _
            $region34: #{inception_a_forward.9} parent=27 // pred_check_branch
              %119 = sbr.rel target = $region36
            $region35: #{inception_a_forward.9} parent=27 // pred_region
              %s121 = ssub.s32 256, 1
              loop: start=0, step=1, limit=1
              $region37: #{inception_a_forward.9} parent=35 // loop_pre_header
                _
              $region38: #{inception_a_forward.9} parent=35 // loop_header
                %s123 = sphi 0, %s127
                %p124 = scmp.ge.s32.totalorder %s123, 1
                %s128 = sphi %s113, %s113
                %s129 = sphi %s109, %s109
              $region39: #{inception_a_forward.9} parent=35 // loop_header_branch
                %126 = sbr.rel (%p124) target = $region43
              $region40: #{inception_a_forward.9} parent=35 // loop_body
                %v130 = vld [vmem:[%s128] sm:%s121]
                %131 = vst [vmem:[%s129] sm:%s121] %v130
                %v132 = vld [vmem:[%s128 + $0x20] sm:%s121]
                %133 = vst [vmem:[%s129 + $0x8] sm:%s121] %v132
                %v134 = vld [vmem:[%s128 + $0x40] sm:%s121]
                %135 = vst [vmem:[%s129 + $0x10] sm:%s121] %v134
                %v136 = vld [vmem:[%s128 + $0x60] sm:%s121]
                %137 = vst [vmem:[%s129 + $0x18] sm:%s121] %v136
                %v138 = vld [vmem:[%s128 + $0x80] sm:%s121]
                %139 = vst [vmem:[%s129 + $0x20] sm:%s121] %v138
                %v140 = vld [vmem:[%s128 + $0xa0] sm:%s121]
                %141 = vst [vmem:[%s129 + $0x28] sm:%s121] %v140
                %v142 = vld [vmem:[%s128 + $0xc0] sm:%s121]
                %143 = vst [vmem:[%s129 + $0x30] sm:%s121] %v142
                %v144 = vld [vmem:[%s128 + $0xe0] sm:%s121]
                %145 = vst [vmem:[%s129 + $0x38] sm:%s121] %v144
                %v146 = vld [vmem:[%s128 + $0x100] sm:%s121]
                %147 = vst [vmem:[%s129 + $0x40] sm:%s121] %v146
                %v148 = vld [vmem:[%s128 + $0x120] sm:%s121]
                %149 = vst [vmem:[%s129 + $0x48] sm:%s121] %v148
                %v150 = vld [vmem:[%s128 + $0x140] sm:%s121]
                %151 = vst [vmem:[%s129 + $0x50] sm:%s121] %v150
                %v152 = vld [vmem:[%s128 + $0x160] sm:%s121]
                %153 = vst [vmem:[%s129 + $0x58] sm:%s121] %v152
                %v154 = vld [vmem:[%s128 + $0x180] sm:%s121]
                %155 = vst [vmem:[%s129 + $0x60] sm:%s121] %v154
                %v156 = vld [vmem:[%s128 + $0x1a0] sm:%s121]
                %157 = vst [vmem:[%s129 + $0x68] sm:%s121] %v156
                %v158 = vld [vmem:[%s128 + $0x1c0] sm:%s121]
                %159 = vst [vmem:[%s129 + $0x70] sm:%s121] %v158
                %v160 = vld [vmem:[%s128 + $0x1e0] sm:%s121]
                %161 = vst [vmem:[%s129 + $0x78] sm:%s121] %v160
                %v162 = vld [vmem:[%s128 + $0x200] sm:%s121]
                %163 = vst [vmem:[%s129 + $0x80] sm:%s121] %v162
                %v164 = vld [vmem:[%s128 + $0x220] sm:%s121]
                %165 = vst [vmem:[%s129 + $0x88] sm:%s121] %v164
                %v166 = vld [vmem:[%s128 + $0x240] sm:%s121]
                %167 = vst [vmem:[%s129 + $0x90] sm:%s121] %v166
                %v168 = vld [vmem:[%s128 + $0x260] sm:%s121]
                %169 = vst [vmem:[%s129 + $0x98] sm:%s121] %v168
                %v170 = vld [vmem:[%s128 + $0x280] sm:%s121]
                %171 = vst [vmem:[%s129 + $0xa0] sm:%s121] %v170
                %v172 = vld [vmem:[%s128 + $0x2a0] sm:%s121]
                %173 = vst [vmem:[%s129 + $0xa8] sm:%s121] %v172
                %v174 = vld [vmem:[%s128 + $0x2c0] sm:%s121]
                %175 = vst [vmem:[%s129 + $0xb0] sm:%s121] %v174
                %v176 = vld [vmem:[%s128 + $0x2e0] sm:%s121]
                %177 = vst [vmem:[%s129 + $0xb8] sm:%s121] %v176
                %v178 = vld [vmem:[%s128 + $0x300] sm:%s121]
                %179 = vst [vmem:[%s129 + $0xc0] sm:%s121] %v178
                %v180 = vld [vmem:[%s128 + $0x320] sm:%s121]
                %181 = vst [vmem:[%s129 + $0xc8] sm:%s121] %v180
                %v182 = vld [vmem:[%s128 + $0x340] sm:%s121]
                %183 = vst [vmem:[%s129 + $0xd0] sm:%s121] %v182
                %v184 = vld [vmem:[%s128 + $0x360] sm:%s121]
                %185 = vst [vmem:[%s129 + $0xd8] sm:%s121] %v184
                %v186 = vld [vmem:[%s128 + $0x380] sm:%s121]
                %187 = vst [vmem:[%s129 + $0xe0] sm:%s121] %v186
                %v188 = vld [vmem:[%s128 + $0x3a0] sm:%s121]
                %189 = vst [vmem:[%s129 + $0xe8] sm:%s121] %v188
                %v190 = vld [vmem:[%s128 + $0x3c0] sm:%s121]
                %191 = vst [vmem:[%s129 + $0xf0] sm:%s121] %v190
                %v192 = vld [vmem:[%s128 + $0x3e0] sm:%s121]
                %193 = vst [vmem:[%s129 + $0xf8] sm:%s121] %v192
              $region41: #{inception_a_forward.9} parent=35 // loop_footer
                %s127 = sadd.s32 1, %s123
              $region42: #{inception_a_forward.9} parent=35 // loop_footer_branch
                %122 = sbr.rel target = $region38
              $region43: #{inception_a_forward.9} parent=35 // loop_exit
                _
            $region36: #{inception_a_forward.9} parent=27 // pred_fallthru
              _
          $region28: #{inception_a_forward.9} parent=23 // pred_fallthru
            _
          %270 = vnop
        $region24: #{inception_a_forward.9} parent=19 // pred_fallthru
          _
      $region20: #{inception_a_forward.9} parent=5 // pred_fallthru
        _
      %p271 = scmp.le.s32.totalorder 1, %s8
      %p272 = scmp.lt.s32.totalorder %s8, 3
      %p273 = pnand %p271, %p272
      %p274 = pneg %p273
      // Predicated region
      $region59: #{inception_a_forward.9} parent=5 // pred_check
        _
      $region60: #{inception_a_forward.9} parent=5 // pred_check_branch
        %276 = sbr.rel (%p273) target = $region62
      $region61: #{inception_a_forward.9} parent=5 // pred_region
        %s277 = ssub.s32 %s8, 1
        %s278 = sand.u32 %s21, 1
        %s279 = sand.u32 %s21, 1
        %s280 = smul.addr %s279, 256
        %s281 = scalar_lea.vmem [#allocation2], %s280
        // Predicated region
        $region63: #{inception_a_forward.9} parent=61 // pred_check
          %p282 = pneg %p34
        $region64: #{inception_a_forward.9} parent=61 // pred_check_branch
          %284 = sbr.rel (%p282) target = $region66
        $region65: #{inception_a_forward.9} parent=61 // pred_region
          _
        $region66: #{inception_a_forward.9} parent=61 // pred_fallthru
          _
        %s285 = sand.u32 %s21, 1
        %s286 = sand.u32 %s21, 1
        %s287 = smul.addr %s286, 256
        %s288 = scalar_lea.vmem [#allocation2], %s287
        %p289 = pneg %p34
        %p290 = pneg %p31
        %p291 = pneg %p55
        %p292 = pneg %p52
        %p293 = pneg %p81
        %p294 = pneg %p78
        %p295 = scmp.lt.s32.totalorder %s13, 1
        %s296 = scalar_select %p295, %s13, 1
        %s297 = smul.addr %s296, 32
        %s298 = smul.addr %s297, 8
        %s299 = scalar_lea.vmem %s2, %s298
        %p300 = scmp.lt.s32.totalorder %s13, 1
        %s301 = scalar_select %p300, %s13, 1
        %s302 = smul.addr %s301, 32
        %s303 = smul.addr %s302, 8
        %s304 = scalar_lea.vmem %s2, %s303
        %v305 = vld [vmem:[%s281] sm:$0xff]
        %v306 = vld [vmem:[%s281 + $0x8] sm:$0xff]
        %v307 = vld [vmem:[%s281 + $0x10] sm:$0xff]
        %v308 = vld [vmem:[%s281 + $0x18] sm:$0xff]
        %v309 = vld [vmem:[%s281 + $0x20] sm:$0xff]
        %v310 = vld [vmem:[%s281 + $0x28] sm:$0xff]
        %v311 = vld [vmem:[%s281 + $0x30] sm:$0xff]
        %v312 = vld [vmem:[%s281 + $0x38] sm:$0xff]
        %v313 = vld [vmem:[%s281 + $0x40] sm:$0xff]
        %v314 = vld [vmem:[%s281 + $0x48] sm:$0xff]
        %v315 = vld [vmem:[%s281 + $0x50] sm:$0xff]
        %v316 = vld [vmem:[%s281 + $0x58] sm:$0xff]
        %v317 = vld [vmem:[%s281 + $0x60] sm:$0xff]
        %v318 = vld [vmem:[%s281 + $0x68] sm:$0xff]
        %v319 = vld [vmem:[%s281 + $0x70] sm:$0xff]
        %v320 = vld [vmem:[%s281 + $0x78] sm:$0xff]
        %v321 = vld [vmem:[%s281 + $0x80] sm:$0xff]
        %v322 = vld [vmem:[%s281 + $0x88] sm:$0xff]
        %v323 = vld [vmem:[%s281 + $0x90] sm:$0xff]
        %v324 = vld [vmem:[%s281 + $0x98] sm:$0xff]
        %v325 = vld [vmem:[%s281 + $0xa0] sm:$0xff]
        %v326 = vld [vmem:[%s281 + $0xa8] sm:$0xff]
        %v327 = vld [vmem:[%s281 + $0xb0] sm:$0xff]
        %v328 = vld [vmem:[%s281 + $0xb8] sm:$0xff]
        %v329 = vld [vmem:[%s281 + $0xc0] sm:$0xff]
        %v330 = vld [vmem:[%s281 + $0xc8] sm:$0xff]
        %v331 = vld [vmem:[%s281 + $0xd0] sm:$0xff]
        %v332 = vld [vmem:[%s281 + $0xd8] sm:$0xff]
        %v333 = vld [vmem:[%s281 + $0xe0] sm:$0xff]
        %v334 = vld [vmem:[%s281 + $0xe8] sm:$0xff]
        %v335 = vld [vmem:[%s281 + $0xf0] sm:$0xff]
        %v336 = vld [vmem:[%s281 + $0xf8] sm:$0xff]
        %v337 = vadd.f32 %v305, 0.0
        %v338 = vadd.f32 %v306, 0.0
        %v339 = vadd.f32 %v305, %v307
        %v340 = vadd.f32 %v306, %v308
        %v341 = vadd.f32 %v307, %v309
        %v342 = vadd.f32 %v308, %v310
        %v343 = vadd.f32 %v309, %v311
        %v344 = vadd.f32 %v310, %v312
        %v345 = vadd.f32 %v311, %v313
        %v346 = vadd.f32 %v312, %v314
        %v347 = vadd.f32 %v313, %v315
        %v348 = vadd.f32 %v314, %v316
        %v349 = vadd.f32 %v315, %v317
        %v350 = vadd.f32 %v316, %v318
        %v351 = vadd.f32 %v317, %v319
        %v352 = vadd.f32 %v318, %v320
        %v353 = vadd.f32 %v319, %v321
        %v354 = vadd.f32 %v320, %v322
        %v355 = vadd.f32 %v321, %v323
        %v356 = vadd.f32 %v322, %v324
        %v357 = vadd.f32 %v323, %v325
        %v358 = vadd.f32 %v324, %v326
        %v359 = vadd.f32 %v325, %v327
        %v360 = vadd.f32 %v326, %v328
        %v361 = vadd.f32 %v327, %v329
        %v362 = vadd.f32 %v328, %v330
        %v363 = vadd.f32 %v329, %v331
        %v364 = vadd.f32 %v330, %v332
        %v365 = vadd.f32 %v331, %v333
        %v366 = vadd.f32 %v332, %v334
        %v367 = vadd.f32 %v333, %v335
        %v368 = vadd.f32 %v334, %v336
        %v369 = vadd.f32 %v337, %v307
        %v370 = vadd.f32 %v338, %v308
        %v371 = vadd.f32 %v339, %v309
        %v372 = vadd.f32 %v340, %v310
        %v373 = vadd.f32 %v341, %v311
        %v374 = vadd.f32 %v342, %v312
        %v375 = vadd.f32 %v343, %v313
        %v376 = vadd.f32 %v344, %v314
        %v377 = vadd.f32 %v345, %v315
        %v378 = vadd.f32 %v346, %v316
        %v379 = vadd.f32 %v347, %v317
        %v380 = vadd.f32 %v348, %v318
        %v381 = vadd.f32 %v349, %v319
        %v382 = vadd.f32 %v350, %v320
        %v383 = vadd.f32 %v351, %v321
        %v384 = vadd.f32 %v352, %v322
        %v385 = vadd.f32 %v353, %v323
        %v386 = vadd.f32 %v354, %v324
        %v387 = vadd.f32 %v355, %v325
        %v388 = vadd.f32 %v356, %v326
        %v389 = vadd.f32 %v357, %v327
        %v390 = vadd.f32 %v358, %v328
        %v391 = vadd.f32 %v359, %v329
        %v392 = vadd.f32 %v360, %v330
        %v393 = vadd.f32 %v361, %v331
        %v394 = vadd.f32 %v362, %v332
        %v395 = vadd.f32 %v363, %v333
        %v396 = vadd.f32 %v364, %v334
        %v397 = vadd.f32 %v365, %v335
        %v398 = vadd.f32 %v366, %v336
        %v399 = vadd.f32 %v367, 0.0
        %v400 = vadd.f32 %v368, 0.0
        %vm433 = vcmask 1040384
        %v434 = vrot.slane %v369, 7
        %v435 = vrot.slane %v370, 7
        %v436 = vsel %vm433, %v434, %v435
        %v437 = vrot.slane %v371, 7
        %v438 = vrot.slane %v372, 7
        %v439 = vsel %vm433, %v437, %v438
        %v440 = vrot.slane %v373, 7
        %v441 = vrot.slane %v374, 7
        %v442 = vsel %vm433, %v440, %v441
        %v443 = vrot.slane %v375, 7
        %v444 = vrot.slane %v376, 7
        %v445 = vsel %vm433, %v443, %v444
        %v446 = vrot.slane %v377, 7
        %v447 = vrot.slane %v378, 7
        %v448 = vsel %vm433, %v446, %v447
        %v449 = vrot.slane %v379, 7
        %v450 = vrot.slane %v380, 7
        %v451 = vsel %vm433, %v449, %v450
        %v452 = vrot.slane %v381, 7
        %v453 = vrot.slane %v382, 7
        %v454 = vsel %vm433, %v452, %v453
        %v455 = vrot.slane %v383, 7
        %v456 = vrot.slane %v384, 7
        %v457 = vsel %vm433, %v455, %v456
        %v458 = vrot.slane %v385, 7
        %v459 = vrot.slane %v386, 7
        %v460 = vsel %vm433, %v458, %v459
        %v461 = vrot.slane %v387, 7
        %v462 = vrot.slane %v388, 7
        %v463 = vsel %vm433, %v461, %v462
        %v464 = vrot.slane %v389, 7
        %v465 = vrot.slane %v390, 7
        %v466 = vsel %vm433, %v464, %v465
        %v467 = vrot.slane %v391, 7
        %v468 = vrot.slane %v392, 7
        %v469 = vsel %vm433, %v467, %v468
        %v470 = vrot.slane %v393, 7
        %v471 = vrot.slane %v394, 7
        %v472 = vsel %vm433, %v470, %v471
        %v473 = vrot.slane %v395, 7
        %v474 = vrot.slane %v396, 7
        %v475 = vsel %vm433, %v473, %v474
        %v476 = vrot.slane %v397, 7
        %v477 = vrot.slane %v398, 7
        %v478 = vsel %vm433, %v476, %v477
        %v479 = vrot.slane %v399, 7
        %v480 = vrot.slane %v400, 7
        %v481 = vsel %vm433, %v479, %v480
        %v530 = vsel %vm433, 0.0, %v434
        %v531 = vsel %vm433, 0.0, %v437
        %v532 = vsel %vm433, 0.0, %v440
        %v533 = vsel %vm433, 0.0, %v443
        %v534 = vsel %vm433, 0.0, %v446
        %v535 = vsel %vm433, 0.0, %v449
        %v536 = vsel %vm433, 0.0, %v452
        %v537 = vsel %vm433, 0.0, %v455
        %v538 = vsel %vm433, 0.0, %v458
        %v539 = vsel %vm433, 0.0, %v461
        %v540 = vsel %vm433, 0.0, %v464
        %v541 = vsel %vm433, 0.0, %v467
        %v542 = vsel %vm433, 0.0, %v470
        %v543 = vsel %vm433, 0.0, %v473
        %v544 = vsel %vm433, 0.0, %v476
        %v545 = vsel %vm433, 0.0, %v479
        %v546 = vsel %vm433, %v435, 0.0
        %v547 = vsel %vm433, %v438, 0.0
        %v548 = vsel %vm433, %v441, 0.0
        %v549 = vsel %vm433, %v444, 0.0
        %v550 = vsel %vm433, %v447, 0.0
        %v551 = vsel %vm433, %v450, 0.0
        %v552 = vsel %vm433, %v453, 0.0
        %v553 = vsel %vm433, %v456, 0.0
        %v554 = vsel %vm433, %v459, 0.0
        %v555 = vsel %vm433, %v462, 0.0
        %v556 = vsel %vm433, %v465, 0.0
        %v557 = vsel %vm433, %v468, 0.0
        %v558 = vsel %vm433, %v471, 0.0
        %v559 = vsel %vm433, %v474, 0.0
        %v560 = vsel %vm433, %v477, 0.0
        %v561 = vsel %vm433, %v480, 0.0
        %vm594 = vcmask 1046528
        %v595 = vrot.slane %v530, 1
        %v596 = vrot.slane %v436, 1
        %v597 = vsel %vm594, %v595, %v596
        %v598 = vrot.slane %v546, 1
        %v599 = vsel %vm594, %v596, %v598
        %v600 = vrot.slane %v531, 1
        %v601 = vrot.slane %v439, 1
        %v602 = vsel %vm594, %v600, %v601
        %v603 = vrot.slane %v547, 1
        %v604 = vsel %vm594, %v601, %v603
        %v605 = vrot.slane %v532, 1
        %v606 = vrot.slane %v442, 1
        %v607 = vsel %vm594, %v605, %v606
        %v608 = vrot.slane %v548, 1
        %v609 = vsel %vm594, %v606, %v608
        %v610 = vrot.slane %v533, 1
        %v611 = vrot.slane %v445, 1
        %v612 = vsel %vm594, %v610, %v611
        %v613 = vrot.slane %v549, 1
        %v614 = vsel %vm594, %v611, %v613
        %v615 = vrot.slane %v534, 1
        %v616 = vrot.slane %v448, 1
        %v617 = vsel %vm594, %v615, %v616
        %v618 = vrot.slane %v550, 1
        %v619 = vsel %vm594, %v616, %v618
        %v620 = vrot.slane %v535, 1
        %v621 = vrot.slane %v451, 1
        %v622 = vsel %vm594, %v620, %v621
        %v623 = vrot.slane %v551, 1
        %v624 = vsel %vm594, %v621, %v623
        %v625 = vrot.slane %v536, 1
        %v626 = vrot.slane %v454, 1
        %v627 = vsel %vm594, %v625, %v626
        %v628 = vrot.slane %v552, 1
        %v629 = vsel %vm594, %v626, %v628
        %v630 = vrot.slane %v537, 1
        %v631 = vrot.slane %v457, 1
        %v632 = vsel %vm594, %v630, %v631
        %v633 = vrot.slane %v553, 1
        %v634 = vsel %vm594, %v631, %v633
        %v635 = vrot.slane %v538, 1
        %v636 = vrot.slane %v460, 1
        %v637 = vsel %vm594, %v635, %v636
        %v638 = vrot.slane %v554, 1
        %v639 = vsel %vm594, %v636, %v638
        %v640 = vrot.slane %v539, 1
        %v641 = vrot.slane %v463, 1
        %v642 = vsel %vm594, %v640, %v641
        %v643 = vrot.slane %v555, 1
        %v644 = vsel %vm594, %v641, %v643
        %v645 = vrot.slane %v540, 1
        %v646 = vrot.slane %v466, 1
        %v647 = vsel %vm594, %v645, %v646
        %v648 = vrot.slane %v556, 1
        %v649 = vsel %vm594, %v646, %v648
        %v650 = vrot.slane %v541, 1
        %v651 = vrot.slane %v469, 1
        %v652 = vsel %vm594, %v650, %v651
        %v653 = vrot.slane %v557, 1
        %v654 = vsel %vm594, %v651, %v653
        %v655 = vrot.slane %v542, 1
        %v656 = vrot.slane %v472, 1
        %v657 = vsel %vm594, %v655, %v656
        %v658 = vrot.slane %v558, 1
        %v659 = vsel %vm594, %v656, %v658
        %v660 = vrot.slane %v543, 1
        %v661 = vrot.slane %v475, 1
        %v662 = vsel %vm594, %v660, %v661
        %v663 = vrot.slane %v559, 1
        %v664 = vsel %vm594, %v661, %v663
        %v665 = vrot.slane %v544, 1
        %v666 = vrot.slane %v478, 1
        %v667 = vsel %vm594, %v665, %v666
        %v668 = vrot.slane %v560, 1
        %v669 = vsel %vm594, %v666, %v668
        %v670 = vrot.slane %v545, 1
        %v671 = vrot.slane %v481, 1
        %v672 = vsel %vm594, %v670, %v671
        %v673 = vrot.slane %v561, 1
        %v674 = vsel %vm594, %v671, %v673
        %v707 = vadd.f32 %v530, %v597
        %v708 = vadd.f32 %v436, %v599
        %v709 = vadd.f32 %v531, %v602
        %v710 = vadd.f32 %v439, %v604
        %v711 = vadd.f32 %v532, %v607
        %v712 = vadd.f32 %v442, %v609
        %v713 = vadd.f32 %v533, %v612
        %v714 = vadd.f32 %v445, %v614
        %v715 = vadd.f32 %v534, %v617
        %v716 = vadd.f32 %v448, %v619
        %v717 = vadd.f32 %v535, %v622
        %v718 = vadd.f32 %v451, %v624
        %v719 = vadd.f32 %v536, %v627
        %v720 = vadd.f32 %v454, %v629
        %v721 = vadd.f32 %v537, %v632
        %v722 = vadd.f32 %v457, %v634
        %v723 = vadd.f32 %v538, %v637
        %v724 = vadd.f32 %v460, %v639
        %v725 = vadd.f32 %v539, %v642
        %v726 = vadd.f32 %v463, %v644
        %v727 = vadd.f32 %v540, %v647
        %v728 = vadd.f32 %v466, %v649
        %v729 = vadd.f32 %v541, %v652
        %v730 = vadd.f32 %v469, %v654
        %v731 = vadd.f32 %v542, %v657
        %v732 = vadd.f32 %v472, %v659
        %v733 = vadd.f32 %v543, %v662
        %v734 = vadd.f32 %v475, %v664
        %v735 = vadd.f32 %v544, %v667
        %v736 = vadd.f32 %v478, %v669
        %v737 = vadd.f32 %v545, %v672
        %v738 = vadd.f32 %v481, %v674
        %vm739 = vcmask 1045504
        %v740 = vrot.slane %v530, 2
        %v741 = vrot.slane %v436, 2
        %v742 = vsel %vm739, %v740, %v741
        %v743 = vrot.slane %v546, 2
        %v744 = vsel %vm739, %v741, %v743
        %v745 = vrot.slane %v531, 2
        %v746 = vrot.slane %v439, 2
        %v747 = vsel %vm739, %v745, %v746
        %v748 = vrot.slane %v547, 2
        %v749 = vsel %vm739, %v746, %v748
        %v750 = vrot.slane %v532, 2
        %v751 = vrot.slane %v442, 2
        %v752 = vsel %vm739, %v750, %v751
        %v753 = vrot.slane %v548, 2
        %v754 = vsel %vm739, %v751, %v753
        %v755 = vrot.slane %v533, 2
        %v756 = vrot.slane %v445, 2
        %v757 = vsel %vm739, %v755, %v756
        %v758 = vrot.slane %v549, 2
        %v759 = vsel %vm739, %v756, %v758
        %v760 = vrot.slane %v534, 2
        %v761 = vrot.slane %v448, 2
        %v762 = vsel %vm739, %v760, %v761
        %v763 = vrot.slane %v550, 2
        %v764 = vsel %vm739, %v761, %v763
        %v765 = vrot.slane %v535, 2
        %v766 = vrot.slane %v451, 2
        %v767 = vsel %vm739, %v765, %v766
        %v768 = vrot.slane %v551, 2
        %v769 = vsel %vm739, %v766, %v768
        %v770 = vrot.slane %v536, 2
        %v771 = vrot.slane %v454, 2
        %v772 = vsel %vm739, %v770, %v771
        %v773 = vrot.slane %v552, 2
        %v774 = vsel %vm739, %v771, %v773
        %v775 = vrot.slane %v537, 2
        %v776 = vrot.slane %v457, 2
        %v777 = vsel %vm739, %v775, %v776
        %v778 = vrot.slane %v553, 2
        %v779 = vsel %vm739, %v776, %v778
        %v780 = vrot.slane %v538, 2
        %v781 = vrot.slane %v460, 2
        %v782 = vsel %vm739, %v780, %v781
        %v783 = vrot.slane %v554, 2
        %v784 = vsel %vm739, %v781, %v783
        %v785 = vrot.slane %v539, 2
        %v786 = vrot.slane %v463, 2
        %v787 = vsel %vm739, %v785, %v786
        %v788 = vrot.slane %v555, 2
        %v789 = vsel %vm739, %v786, %v788
        %v790 = vrot.slane %v540, 2
        %v791 = vrot.slane %v466, 2
        %v792 = vsel %vm739, %v790, %v791
        %v793 = vrot.slane %v556, 2
        %v794 = vsel %vm739, %v791, %v793
        %v795 = vrot.slane %v541, 2
        %v796 = vrot.slane %v469, 2
        %v797 = vsel %vm739, %v795, %v796
        %v798 = vrot.slane %v557, 2
        %v799 = vsel %vm739, %v796, %v798
        %v800 = vrot.slane %v542, 2
        %v801 = vrot.slane %v472, 2
        %v802 = vsel %vm739, %v800, %v801
        %v803 = vrot.slane %v558, 2
        %v804 = vsel %vm739, %v801, %v803
        %v805 = vrot.slane %v543, 2
        %v806 = vrot.slane %v475, 2
        %v807 = vsel %vm739, %v805, %v806
        %v808 = vrot.slane %v559, 2
        %v809 = vsel %vm739, %v806, %v808
        %v810 = vrot.slane %v544, 2
        %v811 = vrot.slane %v478, 2
        %v812 = vsel %vm739, %v810, %v811
        %v813 = vrot.slane %v560, 2
        %v814 = vsel %vm739, %v811, %v813
        %v815 = vrot.slane %v545, 2
        %v816 = vrot.slane %v481, 2
        %v817 = vsel %vm739, %v815, %v816
        %v818 = vrot.slane %v561, 2
        %v819 = vsel %vm739, %v816, %v818
        %v852 = vadd.f32 %v707, %v742
        %v853 = vadd.f32 %v708, %v744
        %v854 = vadd.f32 %v709, %v747
        %v855 = vadd.f32 %v710, %v749
        %v856 = vadd.f32 %v711, %v752
        %v857 = vadd.f32 %v712, %v754
        %v858 = vadd.f32 %v713, %v757
        %v859 = vadd.f32 %v714, %v759
        %v860 = vadd.f32 %v715, %v762
        %v861 = vadd.f32 %v716, %v764
        %v862 = vadd.f32 %v717, %v767
        %v863 = vadd.f32 %v718, %v769
        %v864 = vadd.f32 %v719, %v772
        %v865 = vadd.f32 %v720, %v774
        %v866 = vadd.f32 %v721, %v777
        %v867 = vadd.f32 %v722, %v779
        %v868 = vadd.f32 %v723, %v782
        %v869 = vadd.f32 %v724, %v784
        %v870 = vadd.f32 %v725, %v787
        %v871 = vadd.f32 %v726, %v789
        %v872 = vadd.f32 %v727, %v792
        %v873 = vadd.f32 %v728, %v794
        %v874 = vadd.f32 %v729, %v797
        %v875 = vadd.f32 %v730, %v799
        %v876 = vadd.f32 %v731, %v802
        %v877 = vadd.f32 %v732, %v804
        %v878 = vadd.f32 %v733, %v807
        %v879 = vadd.f32 %v734, %v809
        %v880 = vadd.f32 %v735, %v812
        %v881 = vadd.f32 %v736, %v814
        %v882 = vadd.f32 %v737, %v817
        %v883 = vadd.f32 %v738, %v819
        %v884 = vld [vmem:[%s1] sm:$0x1]
        %v886 = vperm.slane %v884, 0
        %v888 = vadd.f32 %v852, %v886
        %v889 = vadd.f32 %v853, %v886
        %v890 = vadd.f32 %v854, %v886
        %v891 = vadd.f32 %v855, %v886
        %v892 = vadd.f32 %v856, %v886
        %v893 = vadd.f32 %v857, %v886
        %v894 = vadd.f32 %v858, %v886
        %v895 = vadd.f32 %v859, %v886
        %v896 = vadd.f32 %v860, %v886
        %v897 = vadd.f32 %v861, %v886
        %v898 = vadd.f32 %v862, %v886
        %v899 = vadd.f32 %v863, %v886
        %v900 = vadd.f32 %v864, %v886
        %v901 = vadd.f32 %v865, %v886
        %v902 = vadd.f32 %v866, %v886
        %v903 = vadd.f32 %v867, %v886
        %v904 = vadd.f32 %v868, %v886
        %v905 = vadd.f32 %v869, %v886
        %v906 = vadd.f32 %v870, %v886
        %v907 = vadd.f32 %v871, %v886
        %v908 = vadd.f32 %v872, %v886
        %v909 = vadd.f32 %v873, %v886
        %v910 = vadd.f32 %v874, %v886
        %v911 = vadd.f32 %v875, %v886
        %v912 = vadd.f32 %v876, %v886
        %v913 = vadd.f32 %v877, %v886
        %v914 = vadd.f32 %v878, %v886
        %v915 = vadd.f32 %v879, %v886
        %v916 = vadd.f32 %v880, %v886
        %v917 = vadd.f32 %v881, %v886
        %v918 = vadd.f32 %v882, %v886
        %v919 = vadd.f32 %v883, %v886
        %v920 = vmax.f32 %v888, 0.0
        %v921 = vmax.f32 %v889, 0.0
        %v922 = vmax.f32 %v890, 0.0
        %v923 = vmax.f32 %v891, 0.0
        %v924 = vmax.f32 %v892, 0.0
        %v925 = vmax.f32 %v893, 0.0
        %v926 = vmax.f32 %v894, 0.0
        %v927 = vmax.f32 %v895, 0.0
        %v928 = vmax.f32 %v896, 0.0
        %v929 = vmax.f32 %v897, 0.0
        %v930 = vmax.f32 %v898, 0.0
        %v931 = vmax.f32 %v899, 0.0
        %v932 = vmax.f32 %v900, 0.0
        %v933 = vmax.f32 %v901, 0.0
        %v934 = vmax.f32 %v902, 0.0
        %v935 = vmax.f32 %v903, 0.0
        %v936 = vmax.f32 %v904, 0.0
        %v937 = vmax.f32 %v905, 0.0
        %v938 = vmax.f32 %v906, 0.0
        %v939 = vmax.f32 %v907, 0.0
        %v940 = vmax.f32 %v908, 0.0
        %v941 = vmax.f32 %v909, 0.0
        %v942 = vmax.f32 %v910, 0.0
        %v943 = vmax.f32 %v911, 0.0
        %v944 = vmax.f32 %v912, 0.0
        %v945 = vmax.f32 %v913, 0.0
        %v946 = vmax.f32 %v914, 0.0
        %v947 = vmax.f32 %v915, 0.0
        %v948 = vmax.f32 %v916, 0.0
        %v949 = vmax.f32 %v917, 0.0
        %v950 = vmax.f32 %v918, 0.0
        %v951 = vmax.f32 %v919, 0.0
        %952 = vst [vmem:[%s304] sm:$0xff] %v920
        %953 = vst [vmem:[%s304 + $0x8] sm:$0xff] %v921
        %954 = vst [vmem:[%s304 + $0x10] sm:$0xff] %v922
        %955 = vst [vmem:[%s304 + $0x18] sm:$0xff] %v923
        %956 = vst [vmem:[%s304 + $0x20] sm:$0xff] %v924
        %957 = vst [vmem:[%s304 + $0x28] sm:$0xff] %v925
        %958 = vst [vmem:[%s304 + $0x30] sm:$0xff] %v926
        %959 = vst [vmem:[%s304 + $0x38] sm:$0xff] %v927
        %960 = vst [vmem:[%s304 + $0x40] sm:$0xff] %v928
        %961 = vst [vmem:[%s304 + $0x48] sm:$0xff] %v929
        %962 = vst [vmem:[%s304 + $0x50] sm:$0xff] %v930
        %963 = vst [vmem:[%s304 + $0x58] sm:$0xff] %v931
        %964 = vst [vmem:[%s304 + $0x60] sm:$0xff] %v932
        %965 = vst [vmem:[%s304 + $0x68] sm:$0xff] %v933
        %966 = vst [vmem:[%s304 + $0x70] sm:$0xff] %v934
        %967 = vst [vmem:[%s304 + $0x78] sm:$0xff] %v935
        %968 = vst [vmem:[%s304 + $0x80] sm:$0xff] %v936
        %969 = vst [vmem:[%s304 + $0x88] sm:$0xff] %v937
        %970 = vst [vmem:[%s304 + $0x90] sm:$0xff] %v938
        %971 = vst [vmem:[%s304 + $0x98] sm:$0xff] %v939
        %972 = vst [vmem:[%s304 + $0xa0] sm:$0xff] %v940
        %973 = vst [vmem:[%s304 + $0xa8] sm:$0xff] %v941
        %974 = vst [vmem:[%s304 + $0xb0] sm:$0xff] %v942
        %975 = vst [vmem:[%s304 + $0xb8] sm:$0xff] %v943
        %976 = vst [vmem:[%s304 + $0xc0] sm:$0xff] %v944
        %977 = vst [vmem:[%s304 + $0xc8] sm:$0xff] %v945
        %978 = vst [vmem:[%s304 + $0xd0] sm:$0xff] %v946
        %979 = vst [vmem:[%s304 + $0xd8] sm:$0xff] %v947
        %980 = vst [vmem:[%s304 + $0xe0] sm:$0xff] %v948
        %981 = vst [vmem:[%s304 + $0xe8] sm:$0xff] %v949
        %982 = vst [vmem:[%s304 + $0xf0] sm:$0xff] %v950
        %983 = vst [vmem:[%s304 + $0xf8] sm:$0xff] %v951
        %p984 = scmp.lt.s32.totalorder %s13, 1
        %s985 = scalar_select %p984, %s13, 1
        %s986 = smul.addr %s985, 32
        %s987 = smul.addr %s986, 8
        %s988 = scalar_lea.vmem %s2, %s987
        // Predicated region
        $region67: #{inception_a_forward.9} parent=61 // pred_check
          %p989 = pneg %p78
        $region68: #{inception_a_forward.9} parent=61 // pred_check_branch
          %991 = sbr.rel (%p989) target = $region70
        $region69: #{inception_a_forward.9} parent=61 // pred_region
          _
        $region70: #{inception_a_forward.9} parent=61 // pred_fallthru
          _
      $region62: #{inception_a_forward.9} parent=5 // pred_fallthru
        _
      %p992 = scmp.le.s32.totalorder 2, %s8
      // Predicated region
      $region71: #{inception_a_forward.9} parent=5 // pred_check
        %p993 = pneg %p992
      $region72: #{inception_a_forward.9} parent=5 // pred_check_branch
        %995 = sbr.rel (%p993) target = $region74
      $region73: #{inception_a_forward.9} parent=5 // pred_region
        %s996 = ssub.s32 %s8, 2
        // Predicated region
        $region75: #{inception_a_forward.9} parent=73 // pred_check
          %p997 = pneg %p84
        $region76: #{inception_a_forward.9} parent=73 // pred_check_branch
          %999 = sbr.rel (%p997) target = $region78
        $region77: #{inception_a_forward.9} parent=73 // pred_region
          %p1000 = scmp.lt.s32.totalorder %s14, 1
          %s1001 = scalar_select %p1000, %s14, 1
          %s1002 = smul.addr %s1001, 32
          %s1003 = smul.addr %s1002, 8
          %s1004 = scalar_lea.vmem %s2, %s1003
        $region78: #{inception_a_forward.9} parent=73 // pred_fallthru
          _
      $region74: #{inception_a_forward.9} parent=5 // pred_fallthru
        _
    $region6: #{inception_a_forward.9} parent=1 // loop_footer
      %s12 = sadd.s32 1, %s8
    $region7: #{inception_a_forward.9} parent=1 // loop_footer_branch
      %7 = sbr.rel target = $region3
    $region8: #{inception_a_forward.9} parent=1 // loop_exit
      _

// kernel: inception_a_forward.5
$region0: #{inception_a_forward.5}
  #allocation0 [shape = 'u32[]', space=smem, size = 0x4, offset = 0x4, fixed_abs, tag = 'smem constant byte address 0x4 - core index']
  #allocation1 [shape = 'u32[72,128]{1,0:T(1,128)}', space=vmem, size = 0x9000, scoped, tag = 'internal scratch']
  %s0 = inlined_call_operand.vmem [shape: f32[2,256,4], index: 0, kind: input, shape index: {}]
  %s1 = inlined_call_operand.vmem [shape: f32[4,512], index: 1, kind: input, shape index: {}]
  %s2 = inlined_call_operand.vmem [shape: f32[1,512], index: 2, kind: input, shape index: {}]
  %s3 = inlined_call_operand.vmem [shape: f32[1,512], index: 3, kind: input, shape index: {}]
  %s4 = inlined_call_operand.vmem [shape: f32[2,256,512], index: 4, kind: output, shape index: {}]
  %s5 = sld [smem:[#allocation0]]
  $region49: #{inception_a_forward.5} parent=0
    _
  %s7 = ssub.s32 1, %s5
  %s8 = scalar_select 0, %s7, %s5
  loop: start=0, step=1, limit=4
  $region2: #{inception_a_forward.5} parent=0 // loop_pre_header
    _
  $region3: #{inception_a_forward.5} parent=0 // loop_header
    %s10 = sphi 0, %s14
    %p11 = scmp.ge.s32.totalorder %s10, 4
    %s17 = sphi 0, %s29
    %s18 = sphi 0, %s25
    %s19 = sphi 0, %s17
    %s20 = sphi 0, %s18
    %s21 = sphi 0, %s19
    %s22 = sphi 0, %s20
    %s34 = sphi 0, %s36
    %s37 = sphi 0, %s34
    %s38 = sphi 0, %s37
    %s54 = sphi 0, %s38
    %s58 = sphi 0, %s58
    %s60 = sphi 0, %s58
    %s61 = sphi 0, %s60
    %s75 = sphi 0, %s61
    %s79 = sphi 0, %s79
    %s81 = sphi 0, %s79
    %s82 = sphi 0, %s81
    %s96 = sphi 0, %s82
    %s100 = sphi 0, %s100
    %s102 = sphi 0, %s100
    %s103 = sphi 0, %s102
    %s117 = sphi 0, %s103
    %s125 = sphi 0, %s127
    %s128 = sphi 0, %s125
    %s129 = sphi 0, %s128
    %s145 = sphi 0, %s129
  $region4: #{inception_a_forward.5} parent=0 // loop_header_branch
    %13 = sbr.rel (%p11) target = $region8
  $region5: #{inception_a_forward.5} parent=0 // loop_body
    %s15 = ssub.s32 %s10, 1
    %s16 = ssub.s32 %s10, 2
    %s23 = sadd.s32 1, %s18
    %p24 = scmp.ge.s32.totalorder %s23, 1
    %s25 = scalar_select %p24, 0, %s23
    %s26 = sadd.s32 1, %s17
    %s27 = scalar_select %p24, %s26, %s17
    %p28 = scmp.ge.s32.totalorder %s27, 2
    %s29 = scalar_select %p28, 0, %s27
    %s30 = ssub.s32 %s17, %s29
    %s31 = ssub.s32 %s18, %s25
    %s32 = sor.u32 %s30, %s31
    %p33 = scmp.eq.s32.totalorder %s32, 0
    %s35 = sadd.s32 %s34, 1
    %s36 = scalar_select %p33, %s34, %s35
    %p39 = pneg %p33
    %p40 = scmp.eq.s32.totalorder %s10, 1
    %p41 = por %p39, %p40
    %p42 = scmp.ne.s32.totalorder %s34, %s37
    %p43 = scmp.eq.s32.totalorder %s10, 0
    %p44 = por %p42, %p43
    %p45 = scmp.ne.s32.totalorder %s34, %s37
    %p46 = scmp.eq.s32.totalorder %s15, 1
    %p47 = por %p45, %p46
    %p48 = scmp.ne.s32.totalorder %s37, %s38
    %p49 = scmp.eq.s32.totalorder %s15, 0
    %p50 = por %p48, %p49
    %p51 = scmp.ne.s32.totalorder %s37, %s38
    %p52 = scmp.eq.s32.totalorder %s16, 1
    %p53 = por %p51, %p52
    %p55 = scmp.ne.s32.totalorder %s38, %s54
    %p56 = scmp.eq.s32.totalorder %s16, 0
    %p57 = por %p55, %p56
    %s59 = sadd.s32 %s58, 1
    %p62 = scmp.eq.s32.totalorder %s10, 1
    %p63 = scmp.ne.s32.totalorder %s58, %s60
    %p64 = scmp.eq.s32.totalorder %s10, 0
    %p65 = por %p63, %p64
    %p66 = scmp.ne.s32.totalorder %s58, %s60
    %p67 = scmp.eq.s32.totalorder %s15, 1
    %p68 = por %p66, %p67
    %p69 = scmp.ne.s32.totalorder %s60, %s61
    %p70 = scmp.eq.s32.totalorder %s15, 0
    %p71 = por %p69, %p70
    %p72 = scmp.ne.s32.totalorder %s60, %s61
    %p73 = scmp.eq.s32.totalorder %s16, 1
    %p74 = por %p72, %p73
    %p76 = scmp.ne.s32.totalorder %s61, %s75
    %p77 = scmp.eq.s32.totalorder %s16, 0
    %p78 = por %p76, %p77
    %s80 = sadd.s32 %s79, 1
    %p83 = scmp.eq.s32.totalorder %s10, 1
    %p84 = scmp.ne.s32.totalorder %s79, %s81
    %p85 = scmp.eq.s32.totalorder %s10, 0
    %p86 = por %p84, %p85
    %p87 = scmp.ne.s32.totalorder %s79, %s81
    %p88 = scmp.eq.s32.totalorder %s15, 1
    %p89 = por %p87, %p88
    %p90 = scmp.ne.s32.totalorder %s81, %s82
    %p91 = scmp.eq.s32.totalorder %s15, 0
    %p92 = por %p90, %p91
    %p93 = scmp.ne.s32.totalorder %s81, %s82
    %p94 = scmp.eq.s32.totalorder %s16, 1
    %p95 = por %p93, %p94
    %p97 = scmp.ne.s32.totalorder %s82, %s96
    %p98 = scmp.eq.s32.totalorder %s16, 0
    %p99 = por %p97, %p98
    %s101 = sadd.s32 %s100, 1
    %p104 = scmp.eq.s32.totalorder %s10, 1
    %p105 = scmp.ne.s32.totalorder %s100, %s102
    %p106 = scmp.eq.s32.totalorder %s10, 0
    %p107 = por %p105, %p106
    %p108 = scmp.ne.s32.totalorder %s100, %s102
    %p109 = scmp.eq.s32.totalorder %s15, 1
    %p110 = por %p108, %p109
    %p111 = scmp.ne.s32.totalorder %s102, %s103
    %p112 = scmp.eq.s32.totalorder %s15, 0
    %p113 = por %p111, %p112
    %p114 = scmp.ne.s32.totalorder %s102, %s103
    %p115 = scmp.eq.s32.totalorder %s16, 1
    %p116 = por %p114, %p115
    %p118 = scmp.ne.s32.totalorder %s103, %s117
    %p119 = scmp.eq.s32.totalorder %s16, 0
    %p120 = por %p118, %p119
    %s121 = ssub.s32 %s17, %s29
    %s122 = ssub.s32 %s18, %s25
    %s123 = sor.u32 %s121, %s122
    %p124 = scmp.eq.s32.totalorder %s123, 0
    %s126 = sadd.s32 %s125, 1
    %s127 = scalar_select %p124, %s125, %s126
    %p130 = pneg %p124
    %p131 = scmp.eq.s32.totalorder %s10, 1
    %p132 = por %p130, %p131
    %p133 = scmp.ne.s32.totalorder %s125, %s128
    %p134 = scmp.eq.s32.totalorder %s10, 0
    %p135 = por %p133, %p134
    %p136 = scmp.ne.s32.totalorder %s125, %s128
    %p137 = scmp.eq.s32.totalorder %s15, 1
    %p138 = por %p136, %p137
    %p139 = scmp.ne.s32.totalorder %s128, %s129
    %p140 = scmp.eq.s32.totalorder %s15, 0
    %p141 = por %p139, %p140
    %p142 = scmp.ne.s32.totalorder %s128, %s129
    %p143 = scmp.eq.s32.totalorder %s16, 1
    %p144 = por %p142, %p143
    %p146 = scmp.ne.s32.totalorder %s129, %s145
    %p147 = scmp.eq.s32.totalorder %s16, 0
    %p148 = por %p146, %p147
    %p149 = scmp.le.s32.totalorder 1, %s10
    %p150 = scmp.lt.s32.totalorder %s10, 3
    %p151 = pnand %p149, %p150
    %p152 = pneg %p151
    // Predicated region
    $region9: #{inception_a_forward.5} parent=5 // pred_check
      _
    $region10: #{inception_a_forward.5} parent=5 // pred_check_branch
      %154 = sbr.rel (%p151) target = $region12
    $region11: #{inception_a_forward.5} parent=5 // pred_region
      %s155 = ssub.s32 %s10, 1
      // Predicated region
      $region13: #{inception_a_forward.5} parent=11 // pred_check
        %p156 = pneg %p71
      $region14: #{inception_a_forward.5} parent=11 // pred_check_branch
        %158 = sbr.rel (%p156) target = $region16
      $region15: #{inception_a_forward.5} parent=11 // pred_region
        _
      $region16: #{inception_a_forward.5} parent=11 // pred_fallthru
        _
      // Predicated region
      $region17: #{inception_a_forward.5} parent=11 // pred_check
        %p159 = pneg %p92
      $region18: #{inception_a_forward.5} parent=11 // pred_check_branch
        %161 = sbr.rel (%p159) target = $region20
      $region19: #{inception_a_forward.5} parent=11 // pred_region
        _
      $region20: #{inception_a_forward.5} parent=11 // pred_fallthru
        _
      // Predicated region
      $region21: #{inception_a_forward.5} parent=11 // pred_check
        %p162 = pneg %p113
      $region22: #{inception_a_forward.5} parent=11 // pred_check_branch
        %164 = sbr.rel (%p162) target = $region24
      $region23: #{inception_a_forward.5} parent=11 // pred_region
        _
      $region24: #{inception_a_forward.5} parent=11 // pred_fallthru
        _
    $region12: #{inception_a_forward.5} parent=5 // pred_fallthru
      _
    %p165 = scmp.lt.s32.totalorder %s10, 2
    // Predicated region
    $region25: #{inception_a_forward.5} parent=5 // pred_check
      %p166 = pneg %p165
    $region26: #{inception_a_forward.5} parent=5 // pred_check_branch
      %168 = sbr.rel (%p166) target = $region28
    $region27: #{inception_a_forward.5} parent=5 // pred_region
      // Predicated region
      $region29: #{inception_a_forward.5} parent=27 // pred_check
        %p169 = pneg %p44
      $region30: #{inception_a_forward.5} parent=27 // pred_check_branch
        %171 = sbr.rel (%p169) target = $region32
      $region31: #{inception_a_forward.5} parent=27 // pred_region
        %s172 = smul.u32 32, %s18
        %p173 = scmp.lt.s32.totalorder %s17, 1
        %s174 = scalar_select %p173, %s17, 1
        %p175 = scmp.lt.s32.totalorder %s172, 31
        %s176 = scalar_select %p175, %s172, 31
        %s177 = smul.addr %s174, 32
        %s178 = sadd.s32 %s176, %s177
        %s179 = smul.addr %s178, 8
        %s180 = scalar_lea.vmem %s0, %s179
        %s181 = smul.u32 32, %s18
      $region32: #{inception_a_forward.5} parent=27 // pred_fallthru
        _
    $region28: #{inception_a_forward.5} parent=5 // pred_fallthru
      _
    %p182 = scmp.le.s32.totalorder 1, %s10
    %p183 = scmp.lt.s32.totalorder %s10, 3
    %p184 = pnand %p182, %p183
    %p185 = pneg %p184
    // Predicated region
    $region33: #{inception_a_forward.5} parent=5 // pred_check
      _
    $region34: #{inception_a_forward.5} parent=5 // pred_check_branch
      %187 = sbr.rel (%p184) target = $region36
    $region35: #{inception_a_forward.5} parent=5 // pred_region
      %s188 = ssub.s32 %s10, 1
      %s189 = smul.u32 32, %s20
      %p190 = scmp.lt.s32.totalorder %s19, 1
      %s191 = scalar_select %p190, %s19, 1
      %p192 = scmp.lt.s32.totalorder %s189, 31
      %s193 = scalar_select %p192, %s189, 31
      %s194 = smul.addr %s191, 32
      %s195 = sadd.s32 %s193, %s194
      %s196 = smul.addr %s195, 8
      %s197 = scalar_lea.vmem %s0, %s196
      %p198 = pneg %p50
      %p199 = pneg %p47
      %p200 = pneg %p71
      %p201 = pneg %p68
      %p202 = pneg %p92
      %p203 = pneg %p89
      %p204 = pneg %p113
      %p205 = pneg %p110
      %p206 = pneg %p141
      %p207 = pneg %p138
      %s208 = smul.u32 32, %s20
      %p209 = scmp.lt.s32.totalorder %s19, 1
      %s210 = scalar_select %p209, %s19, 1
      %p211 = scmp.lt.s32.totalorder %s208, 31
      %s212 = scalar_select %p211, %s208, 31
      %s213 = smul.addr %s212, 4
      %s214 = smul.addr %s210, 128
      %s215 = sadd.s32 %s213, %s214
      %s216 = smul.addr %s215, 8
      %s217 = scalar_lea.vmem %s4, %s216
      %s218 = smul.u32 32, %s20
      %p219 = scmp.lt.s32.totalorder %s19, 1
      %s220 = scalar_select %p219, %s19, 1
      %p221 = scmp.lt.s32.totalorder %s218, 31
      %s222 = scalar_select %p221, %s218, 31
      %s223 = smul.addr %s220, 32
      %s224 = sadd.s32 %s222, %s223
      %s225 = smul.addr %s224, 8
      %s226 = scalar_lea.vmem %s0, %s225
      %s227 = smul.u32 32, %s20
      %s228 = smul.u32 32, %s20
      %p229 = scmp.lt.s32.totalorder %s19, 1
      %s230 = scalar_select %p229, %s19, 1
      %p231 = scmp.lt.s32.totalorder %s228, 31
      %s232 = scalar_select %p231, %s228, 31
      %s233 = smul.addr %s232, 4
      %s234 = smul.addr %s230, 128
      %s235 = sadd.s32 %s233, %s234
      %s236 = smul.addr %s235, 8
      %s237 = scalar_lea.vmem %s4, %s236
      %s238 = smul.u32 32, %s20
      %v239 = vld [vmem:[%s226] sm:$0xff]
      %v240 = vld [vmem:[%s226 + $0x8] sm:$0xff]
      %v241 = vld [vmem:[%s226 + $0x10] sm:$0xff]
      %v242 = vld [vmem:[%s226 + $0x18] sm:$0xff]
      %v243 = vld [vmem:[%s226 + $0x20] sm:$0xff]
      %v244 = vld [vmem:[%s226 + $0x28] sm:$0xff]
      %v245 = vld [vmem:[%s226 + $0x30] sm:$0xff]
      %v246 = vld [vmem:[%s226 + $0x38] sm:$0xff]
      %v247 = vld [vmem:[%s226 + $0x40] sm:$0xff]
      %v248 = vld [vmem:[%s226 + $0x48] sm:$0xff]
      %v249 = vld [vmem:[%s226 + $0x50] sm:$0xff]
      %v250 = vld [vmem:[%s226 + $0x58] sm:$0xff]
      %v251 = vld [vmem:[%s226 + $0x60] sm:$0xff]
      %v252 = vld [vmem:[%s226 + $0x68] sm:$0xff]
      %v253 = vld [vmem:[%s226 + $0x70] sm:$0xff]
      %v254 = vld [vmem:[%s226 + $0x78] sm:$0xff]
      %v255 = vld [vmem:[%s226 + $0x80] sm:$0xff]
      %v256 = vld [vmem:[%s226 + $0x88] sm:$0xff]
      %v257 = vld [vmem:[%s226 + $0x90] sm:$0xff]
      %v258 = vld [vmem:[%s226 + $0x98] sm:$0xff]
      %v259 = vld [vmem:[%s226 + $0xa0] sm:$0xff]
      %v260 = vld [vmem:[%s226 + $0xa8] sm:$0xff]
      %v261 = vld [vmem:[%s226 + $0xb0] sm:$0xff]
      %v262 = vld [vmem:[%s226 + $0xb8] sm:$0xff]
      %v263 = vld [vmem:[%s226 + $0xc0] sm:$0xff]
      %v264 = vld [vmem:[%s226 + $0xc8] sm:$0xff]
      %v265 = vld [vmem:[%s226 + $0xd0] sm:$0xff]
      %v266 = vld [vmem:[%s226 + $0xd8] sm:$0xff]
      %v267 = vld [vmem:[%s226 + $0xe0] sm:$0xff]
      %v268 = vld [vmem:[%s226 + $0xe8] sm:$0xff]
      %v269 = vld [vmem:[%s226 + $0xf0] sm:$0xff]
      %v270 = vld [vmem:[%s226 + $0xf8] sm:$0xff]
      %v271 = vld [vmem:[%s1] sm:$0xff]
      %v272 = vld [vmem:[%s1 + $0x8] sm:$0xff]
      %v273 = vld [vmem:[%s2] sm:$0xf]
      %v275 = vperm.slane %v273, 0
      %v276 = vperm.slane %v273, 1
      %v277 = vperm.slane %v273, 2
      %v278 = vperm.slane %v273, 3
      %285 = vst [vmem:[#allocation1] ss:$2 sm:$0xff] %v271
      %s286 = scalar_lea.vmem [#allocation1], 16
      %287 = vst [vmem:[%s286] ss:$2 sm:$0xff] %v272
      %v288 = vld.sshfl [vmem:[#allocation1] sm:$0xff pattern:$0x75316420]
      %v289 = vld.sshfl [vmem:[#allocation1 + $0x8] sm:$0xff pattern:$0x75316420]
      %v290 = vld.sshfl [vmem:[#allocation1 + $0x10] sm:$0xff pattern:$0x75316420]
      %v291 = vld.sshfl [vmem:[#allocation1 + $0x18] sm:$0xff pattern:$0x75316420]
      %vm292 = vcmask 31744
      %v294 = vsel %vm292, %v239, 0
      %v297 = vsel %vm292, %v240, 0
      %v300 = vsel %vm292, %v241, 0
      %v303 = vsel %vm292, %v242, 0
      %v306 = vsel %vm292, %v243, 0
      %v309 = vsel %vm292, %v244, 0
      %v312 = vsel %vm292, %v245, 0
      %v315 = vsel %vm292, %v246, 0
      %v318 = vsel %vm292, %v247, 0
      %v321 = vsel %vm292, %v248, 0
      %v324 = vsel %vm292, %v249, 0
      %v327 = vsel %vm292, %v250, 0
      %v330 = vsel %vm292, %v251, 0
      %v333 = vsel %vm292, %v252, 0
      %v336 = vsel %vm292, %v253, 0
      %v339 = vsel %vm292, %v254, 0
      %v342 = vsel %vm292, %v255, 0
      %v345 = vsel %vm292, %v256, 0
      %v348 = vsel %vm292, %v257, 0
      %v351 = vsel %vm292, %v258, 0
      %v354 = vsel %vm292, %v259, 0
      %v357 = vsel %vm292, %v260, 0
      %v360 = vsel %vm292, %v261, 0
      %v363 = vsel %vm292, %v262, 0
      %v366 = vsel %vm292, %v263, 0
      %v369 = vsel %vm292, %v264, 0
      %v372 = vsel %vm292, %v265, 0
      %v375 = vsel %vm292, %v266, 0
      %v378 = vsel %vm292, %v267, 0
      %v381 = vsel %vm292, %v268, 0
      %v384 = vsel %vm292, %v269, 0
      %v387 = vsel %vm292, %v270, 0
      %vm389 = vcmask 1043456
      %v390 = vsel %vm389, %v288, 0
      %v392 = vsel %vm389, %v289, 0
      %v394 = vsel %vm389, %v290, 0
      %v396 = vsel %vm389, %v291, 0
      %398 = vmatpush.msra.mxu0 0.0
      %399 = vmatpush.msra.mxu0 0.0
      %400 = vmatpush.msra.mxu0 0.0
      %401 = vmatpush.msra.mxu0 0.0
      %402 = vmatpush.msra.mxu0 0.0
      %403 = vmatpush.msra.mxu0 0.0
      %404 = vmatpush.msra.mxu0 0.0
      %405 = vmatpush.msra.mxu0 0.0
      %406 = vmatpush.msra.mxu0 0.0
      %407 = vmatpush.msra.mxu0 0.0
      %408 = vmatpush.msra.mxu0 0.0
      %409 = vmatpush.msra.mxu0 0.0
      %410 = vmatpush.msra.mxu0 0.0
      %411 = vmatpush.msra.mxu0 0.0
      %412 = vmatpush.msra.mxu0 0.0
      %413 = vmatpush.msra.mxu0 %v390
      %414 = vmatmul.f32.gmra.mxu0 %v294
      %v415 = vpop.f32.mrf.mxu0
      %v416 = vadd.f32 %v275, %v415
      %417 = vmatmul.f32.gmra.mxu0 %v297
      %v418 = vpop.f32.mrf.mxu0
      %v419 = vadd.f32 %v275, %v418
      %420 = vmatmul.f32.gmra.mxu0 %v300
      %v421 = vpop.f32.mrf.mxu0
      %v422 = vadd.f32 %v275, %v421
      %423 = vmatmul.f32.gmra.mxu0 %v303
      %v424 = vpop.f32.mrf.mxu0
      %v425 = vadd.f32 %v275, %v424
      %426 = vmatmul.f32.gmra.mxu0 %v306
      %v427 = vpop.f32.mrf.mxu0
      %v428 = vadd.f32 %v275, %v427
      %429 = vmatmul.f32.gmra.mxu0 %v309
      %v430 = vpop.f32.mrf.mxu0
      %v431 = vadd.f32 %v275, %v430
      %432 = vmatmul.f32.gmra.mxu0 %v312
      %v433 = vpop.f32.mrf.mxu0
      %v434 = vadd.f32 %v275, %v433
      %435 = vmatmul.f32.gmra.mxu0 %v315
      %v436 = vpop.f32.mrf.mxu0
      %v437 = vadd.f32 %v275, %v436
      %438 = vmatmul.f32.gmra.mxu0 %v318
      %v439 = vpop.f32.mrf.mxu0
      %v440 = vadd.f32 %v275, %v439
      %441 = vmatmul.f32.gmra.mxu0 %v321
      %v442 = vpop.f32.mrf.mxu0
      %v443 = vadd.f32 %v275, %v442
      %444 = vmatmul.f32.gmra.mxu0 %v324
      %v445 = vpop.f32.mrf.mxu0
      %v446 = vadd.f32 %v275, %v445
      %447 = vmatmul.f32.gmra.mxu0 %v327
      %v448 = vpop.f32.mrf.mxu0
      %v449 = vadd.f32 %v275, %v448
      %450 = vmatmul.f32.gmra.mxu0 %v330
      %v451 = vpop.f32.mrf.mxu0
      %v452 = vadd.f32 %v275, %v451
      %453 = vmatmul.f32.gmra.mxu0 %v333
      %v454 = vpop.f32.mrf.mxu0
      %v455 = vadd.f32 %v275, %v454
      %456 = vmatmul.f32.gmra.mxu0 %v336
      %v457 = vpop.f32.mrf.mxu0
      %v458 = vadd.f32 %v275, %v457
      %459 = vmatmul.f32.gmra.mxu0 %v339
      %v460 = vpop.f32.mrf.mxu0
      %v461 = vadd.f32 %v275, %v460
      %462 = vmatmul.f32.gmra.mxu0 %v342
      %v463 = vpop.f32.mrf.mxu0
      %v464 = vadd.f32 %v275, %v463
      %465 = vmatmul.f32.gmra.mxu0 %v345
      %v466 = vpop.f32.mrf.mxu0
      %v467 = vadd.f32 %v275, %v466
      %468 = vmatmul.f32.gmra.mxu0 %v348
      %v469 = vpop.f32.mrf.mxu0
      %v470 = vadd.f32 %v275, %v469
      %471 = vmatmul.f32.gmra.mxu0 %v351
      %v472 = vpop.f32.mrf.mxu0
      %v473 = vadd.f32 %v275, %v472
      %474 = vmatmul.f32.gmra.mxu0 %v354
      %v475 = vpop.f32.mrf.mxu0
      %v476 = vadd.f32 %v275, %v475
      %477 = vmatmul.f32.gmra.mxu0 %v357
      %v478 = vpop.f32.mrf.mxu0
      %v479 = vadd.f32 %v275, %v478
      %480 = vmatmul.f32.gmra.mxu0 %v360
      %v481 = vpop.f32.mrf.mxu0
      %v482 = vadd.f32 %v275, %v481
      %483 = vmatmul.f32.gmra.mxu0 %v363
      %v484 = vpop.f32.mrf.mxu0
      %v485 = vadd.f32 %v275, %v484
      %486 = vmatmul.f32.gmra.mxu0 %v366
      %v487 = vpop.f32.mrf.mxu0
      %v488 = vadd.f32 %v275, %v487
      %489 = vmatmul.f32.gmra.mxu0 %v369
      %v490 = vpop.f32.mrf.mxu0
      %v491 = vadd.f32 %v275, %v490
      %492 = vmatmul.f32.gmra.mxu0 %v372
      %v493 = vpop.f32.mrf.mxu0
      %v494 = vadd.f32 %v275, %v493
      %495 = vmatmul.f32.gmra.mxu0 %v375
      %v496 = vpop.f32.mrf.mxu0
      %v497 = vadd.f32 %v275, %v496
      %498 = vmatmul.f32.gmra.mxu0 %v378
      %v499 = vpop.f32.mrf.mxu0
      %v500 = vadd.f32 %v275, %v499
      %501 = vmatmul.f32.gmra.mxu0 %v381
      %v502 = vpop.f32.mrf.mxu0
      %v503 = vadd.f32 %v275, %v502
      %504 = vmatmul.f32.gmra.mxu0 %v384
      %v505 = vpop.f32.mrf.mxu0
      %v506 = vadd.f32 %v275, %v505
      %507 = vmatmul.f32.gmra.mxu0 %v387
      %v508 = vpop.f32.mrf.mxu0
      %v509 = vadd.f32 %v275, %v508
      %510 = vdwg.mxu0
      %511 = vmatpush.msra.mxu0 0.0
      %512 = vmatpush.msra.mxu0 0.0
      %513 = vmatpush.msra.mxu0 0.0
      %514 = vmatpush.msra.mxu0 0.0
      %515 = vmatpush.msra.mxu0 0.0
      %516 = vmatpush.msra.mxu0 0.0
      %517 = vmatpush.msra.mxu0 0.0
      %518 = vmatpush.msra.mxu0 0.0
      %519 = vmatpush.msra.mxu0 0.0
      %520 = vmatpush.msra.mxu0 0.0
      %521 = vmatpush.msra.mxu0 0.0
      %522 = vmatpush.msra.mxu0 0.0
      %523 = vmatpush.msra.mxu0 0.0
      %524 = vmatpush.msra.mxu0 0.0
      %525 = vmatpush.msra.mxu0 0.0
      %526 = vmatpush.msra.mxu0 %v392
      %527 = vmatmul.f32.gmra.mxu0 %v294
      %v528 = vpop.f32.mrf.mxu0
      %v529 = vadd.f32 %v276, %v528
      %530 = vmatmul.f32.gmra.mxu0 %v297
      %v531 = vpop.f32.mrf.mxu0
      %v532 = vadd.f32 %v276, %v531
      %533 = vmatmul.f32.gmra.mxu0 %v300
      %v534 = vpop.f32.mrf.mxu0
      %v535 = vadd.f32 %v276, %v534
      %536 = vmatmul.f32.gmra.mxu0 %v303
      %v537 = vpop.f32.mrf.mxu0
      %v538 = vadd.f32 %v276, %v537
      %539 = vmatmul.f32.gmra.mxu0 %v306
      %v540 = vpop.f32.mrf.mxu0
      %v541 = vadd.f32 %v276, %v540
      %542 = vmatmul.f32.gmra.mxu0 %v309
      %v543 = vpop.f32.mrf.mxu0
      %v544 = vadd.f32 %v276, %v543
      %545 = vmatmul.f32.gmra.mxu0 %v312
      %v546 = vpop.f32.mrf.mxu0
      %v547 = vadd.f32 %v276, %v546
      %548 = vmatmul.f32.gmra.mxu0 %v315
      %v549 = vpop.f32.mrf.mxu0
      %v550 = vadd.f32 %v276, %v549
      %551 = vmatmul.f32.gmra.mxu0 %v318
      %v552 = vpop.f32.mrf.mxu0
      %v553 = vadd.f32 %v276, %v552
      %554 = vmatmul.f32.gmra.mxu0 %v321
      %v555 = vpop.f32.mrf.mxu0
      %v556 = vadd.f32 %v276, %v555
      %557 = vmatmul.f32.gmra.mxu0 %v324
      %v558 = vpop.f32.mrf.mxu0
      %v559 = vadd.f32 %v276, %v558
      %560 = vmatmul.f32.gmra.mxu0 %v327
      %v561 = vpop.f32.mrf.mxu0
      %v562 = vadd.f32 %v276, %v561
      %563 = vmatmul.f32.gmra.mxu0 %v330
      %v564 = vpop.f32.mrf.mxu0
      %v565 = vadd.f32 %v276, %v564
      %566 = vmatmul.f32.gmra.mxu0 %v333
      %v567 = vpop.f32.mrf.mxu0
      %v568 = vadd.f32 %v276, %v567
      %569 = vmatmul.f32.gmra.mxu0 %v336
      %v570 = vpop.f32.mrf.mxu0
      %v571 = vadd.f32 %v276, %v570
      %572 = vmatmul.f32.gmra.mxu0 %v339
      %v573 = vpop.f32.mrf.mxu0
      %v574 = vadd.f32 %v276, %v573
      %575 = vmatmul.f32.gmra.mxu0 %v342
      %v576 = vpop.f32.mrf.mxu0
      %v577 = vadd.f32 %v276, %v576
      %578 = vmatmul.f32.gmra.mxu0 %v345
      %v579 = vpop.f32.mrf.mxu0
      %v580 = vadd.f32 %v276, %v579
      %581 = vmatmul.f32.gmra.mxu0 %v348
      %v582 = vpop.f32.mrf.mxu0
      %v583 = vadd.f32 %v276, %v582
      %584 = vmatmul.f32.gmra.mxu0 %v351
      %v585 = vpop.f32.mrf.mxu0
      %v586 = vadd.f32 %v276, %v585
      %587 = vmatmul.f32.gmra.mxu0 %v354
      %v588 = vpop.f32.mrf.mxu0
      %v589 = vadd.f32 %v276, %v588
      %590 = vmatmul.f32.gmra.mxu0 %v357
      %v591 = vpop.f32.mrf.mxu0
      %v592 = vadd.f32 %v276, %v591
      %593 = vmatmul.f32.gmra.mxu0 %v360
      %v594 = vpop.f32.mrf.mxu0
      %v595 = vadd.f32 %v276, %v594
      %596 = vmatmul.f32.gmra.mxu0 %v363
      %v597 = vpop.f32.mrf.mxu0
      %v598 = vadd.f32 %v276, %v597
      %599 = vmatmul.f32.gmra.mxu0 %v366
      %v600 = vpop.f32.mrf.mxu0
      %v601 = vadd.f32 %v276, %v600
      %602 = vmatmul.f32.gmra.mxu0 %v369
      %v603 = vpop.f32.mrf.mxu0
      %v604 = vadd.f32 %v276, %v603
      %605 = vmatmul.f32.gmra.mxu0 %v372
      %v606 = vpop.f32.mrf.mxu0
      %v607 = vadd.f32 %v276, %v606
      %608 = vmatmul.f32.gmra.mxu0 %v375
      %v609 = vpop.f32.mrf.mxu0
      %v610 = vadd.f32 %v276, %v609
      %611 = vmatmul.f32.gmra.mxu0 %v378
      %v612 = vpop.f32.mrf.mxu0
      %v613 = vadd.f32 %v276, %v612
      %614 = vmatmul.f32.gmra.mxu0 %v381
      %v615 = vpop.f32.mrf.mxu0
      %v616 = vadd.f32 %v276, %v615
      %617 = vmatmul.f32.gmra.mxu0 %v384
      %v618 = vpop.f32.mrf.mxu0
      %v619 = vadd.f32 %v276, %v618
      %620 = vmatmul.f32.gmra.mxu0 %v387
      %v621 = vpop.f32.mrf.mxu0
      %v622 = vadd.f32 %v276, %v621
      %623 = vdwg.mxu0
      %624 = vmatpush.msra.mxu0 0.0
      %625 = vmatpush.msra.mxu0 0.0
      %626 = vmatpush.msra.mxu0 0.0
      %627 = vmatpush.msra.mxu0 0.0
      %628 = vmatpush.msra.mxu0 0.0
      %629 = vmatpush.msra.mxu0 0.0
      %630 = vmatpush.msra.mxu0 0.0
      %631 = vmatpush.msra.mxu0 0.0
      %632 = vmatpush.msra.mxu0 0.0
      %633 = vmatpush.msra.mxu0 0.0
      %634 = vmatpush.msra.mxu0 0.0
      %635 = vmatpush.msra.mxu0 0.0
      %636 = vmatpush.msra.mxu0 0.0
      %637 = vmatpush.msra.mxu0 0.0
      %638 = vmatpush.msra.mxu0 0.0
      %639 = vmatpush.msra.mxu0 %v394
      %640 = vmatmul.f32.gmra.mxu0 %v294
      %v641 = vpop.f32.mrf.mxu0
      %v642 = vadd.f32 %v277, %v641
      %643 = vmatmul.f32.gmra.mxu0 %v297
      %v644 = vpop.f32.mrf.mxu0
      %v645 = vadd.f32 %v277, %v644
      %646 = vmatmul.f32.gmra.mxu0 %v300
      %v647 = vpop.f32.mrf.mxu0
      %v648 = vadd.f32 %v277, %v647
      %649 = vmatmul.f32.gmra.mxu0 %v303
      %v650 = vpop.f32.mrf.mxu0
      %v651 = vadd.f32 %v277, %v650
      %652 = vmatmul.f32.gmra.mxu0 %v306
      %v653 = vpop.f32.mrf.mxu0
      %v654 = vadd.f32 %v277, %v653
      %655 = vmatmul.f32.gmra.mxu0 %v309
      %v656 = vpop.f32.mrf.mxu0
      %v657 = vadd.f32 %v277, %v656
      %658 = vmatmul.f32.gmra.mxu0 %v312
      %v659 = vpop.f32.mrf.mxu0
      %v660 = vadd.f32 %v277, %v659
      %661 = vmatmul.f32.gmra.mxu0 %v315
      %v662 = vpop.f32.mrf.mxu0
      %v663 = vadd.f32 %v277, %v662
      %664 = vmatmul.f32.gmra.mxu0 %v318
      %v665 = vpop.f32.mrf.mxu0
      %v666 = vadd.f32 %v277, %v665
      %667 = vmatmul.f32.gmra.mxu0 %v321
      %v668 = vpop.f32.mrf.mxu0
      %v669 = vadd.f32 %v277, %v668
      %670 = vmatmul.f32.gmra.mxu0 %v324
      %v671 = vpop.f32.mrf.mxu0
      %v672 = vadd.f32 %v277, %v671
      %673 = vmatmul.f32.gmra.mxu0 %v327
      %v674 = vpop.f32.mrf.mxu0
      %v675 = vadd.f32 %v277, %v674
      %676 = vmatmul.f32.gmra.mxu0 %v330
      %v677 = vpop.f32.mrf.mxu0
      %v678 = vadd.f32 %v277, %v677
      %679 = vmatmul.f32.gmra.mxu0 %v333
      %v680 = vpop.f32.mrf.mxu0
      %v681 = vadd.f32 %v277, %v680
      %682 = vmatmul.f32.gmra.mxu0 %v336
      %v683 = vpop.f32.mrf.mxu0
      %v684 = vadd.f32 %v277, %v683
      %685 = vmatmul.f32.gmra.mxu0 %v339
      %v686 = vpop.f32.mrf.mxu0
      %v687 = vadd.f32 %v277, %v686
      %688 = vmatmul.f32.gmra.mxu0 %v342
      %v689 = vpop.f32.mrf.mxu0
      %v690 = vadd.f32 %v277, %v689
      %691 = vmatmul.f32.gmra.mxu0 %v345
      %v692 = vpop.f32.mrf.mxu0
      %v693 = vadd.f32 %v277, %v692
      %694 = vmatmul.f32.gmra.mxu0 %v348
      %v695 = vpop.f32.mrf.mxu0
      %v696 = vadd.f32 %v277, %v695
      %697 = vmatmul.f32.gmra.mxu0 %v351
      %v698 = vpop.f32.mrf.mxu0
      %v699 = vadd.f32 %v277, %v698
      %700 = vmatmul.f32.gmra.mxu0 %v354
      %v701 = vpop.f32.mrf.mxu0
      %v702 = vadd.f32 %v277, %v701
      %703 = vmatmul.f32.gmra.mxu0 %v357
      %v704 = vpop.f32.mrf.mxu0
      %v705 = vadd.f32 %v277, %v704
      %706 = vmatmul.f32.gmra.mxu0 %v360
      %v707 = vpop.f32.mrf.mxu0
      %v708 = vadd.f32 %v277, %v707
      %709 = vmatmul.f32.gmra.mxu0 %v363
      %v710 = vpop.f32.mrf.mxu0
      %v711 = vadd.f32 %v277, %v710
      %712 = vmatmul.f32.gmra.mxu0 %v366
      %v713 = vpop.f32.mrf.mxu0
      %v714 = vadd.f32 %v277, %v713
      %715 = vmatmul.f32.gmra.mxu0 %v369
      %v716 = vpop.f32.mrf.mxu0
      %v717 = vadd.f32 %v277, %v716
      %718 = vmatmul.f32.gmra.mxu0 %v372
      %v719 = vpop.f32.mrf.mxu0
      %v720 = vadd.f32 %v277, %v719
      %721 = vmatmul.f32.gmra.mxu0 %v375
      %v722 = vpop.f32.mrf.mxu0
      %v723 = vadd.f32 %v277, %v722
      %724 = vmatmul.f32.gmra.mxu0 %v378
      %v725 = vpop.f32.mrf.mxu0
      %v726 = vadd.f32 %v277, %v725
      %727 = vmatmul.f32.gmra.mxu0 %v381
      %v728 = vpop.f32.mrf.mxu0
      %v729 = vadd.f32 %v277, %v728
      %730 = vmatmul.f32.gmra.mxu0 %v384
      %v731 = vpop.f32.mrf.mxu0
      %v732 = vadd.f32 %v277, %v731
      %733 = vmatmul.f32.gmra.mxu0 %v387
      %v734 = vpop.f32.mrf.mxu0
      %v735 = vadd.f32 %v277, %v734
      %736 = vdwg.mxu0
      %737 = vmatpush.msra.mxu0 0.0
      %738 = vmatpush.msra.mxu0 0.0
      %739 = vmatpush.msra.mxu0 0.0
      %740 = vmatpush.msra.mxu0 0.0
      %741 = vmatpush.msra.mxu0 0.0
      %742 = vmatpush.msra.mxu0 0.0
      %743 = vmatpush.msra.mxu0 0.0
      %744 = vmatpush.msra.mxu0 0.0
      %745 = vmatpush.msra.mxu0 0.0
      %746 = vmatpush.msra.mxu0 0.0
      %747 = vmatpush.msra.mxu0 0.0
      %748 = vmatpush.msra.mxu0 0.0
      %749 = vmatpush.msra.mxu0 0.0
      %750 = vmatpush.msra.mxu0 0.0
      %751 = vmatpush.msra.mxu0 0.0
      %752 = vmatpush.msra.mxu0 %v396
      %753 = vmatmul.f32.gmra.mxu0 %v294
      %v754 = vpop.f32.mrf.mxu0
      %v755 = vadd.f32 %v278, %v754
      %756 = vmatmul.f32.gmra.mxu0 %v297
      %v757 = vpop.f32.mrf.mxu0
      %v758 = vadd.f32 %v278, %v757
      %759 = vmatmul.f32.gmra.mxu0 %v300
      %v760 = vpop.f32.mrf.mxu0
      %v761 = vadd.f32 %v278, %v760
      %762 = vmatmul.f32.gmra.mxu0 %v303
      %v763 = vpop.f32.mrf.mxu0
      %v764 = vadd.f32 %v278, %v763
      %765 = vmatmul.f32.gmra.mxu0 %v306
      %v766 = vpop.f32.mrf.mxu0
      %v767 = vadd.f32 %v278, %v766
      %768 = vmatmul.f32.gmra.mxu0 %v309
      %v769 = vpop.f32.mrf.mxu0
      %v770 = vadd.f32 %v278, %v769
      %771 = vmatmul.f32.gmra.mxu0 %v312
      %v772 = vpop.f32.mrf.mxu0
      %v773 = vadd.f32 %v278, %v772
      %774 = vmatmul.f32.gmra.mxu0 %v315
      %v775 = vpop.f32.mrf.mxu0
      %v776 = vadd.f32 %v278, %v775
      %777 = vmatmul.f32.gmra.mxu0 %v318
      %v778 = vpop.f32.mrf.mxu0
      %v779 = vadd.f32 %v278, %v778
      %780 = vmatmul.f32.gmra.mxu0 %v321
      %v781 = vpop.f32.mrf.mxu0
      %v782 = vadd.f32 %v278, %v781
      %783 = vmatmul.f32.gmra.mxu0 %v324
      %v784 = vpop.f32.mrf.mxu0
      %v785 = vadd.f32 %v278, %v784
      %786 = vmatmul.f32.gmra.mxu0 %v327
      %v787 = vpop.f32.mrf.mxu0
      %v788 = vadd.f32 %v278, %v787
      %789 = vmatmul.f32.gmra.mxu0 %v330
      %v790 = vpop.f32.mrf.mxu0
      %v791 = vadd.f32 %v278, %v790
      %792 = vmatmul.f32.gmra.mxu0 %v333
      %v793 = vpop.f32.mrf.mxu0
      %v794 = vadd.f32 %v278, %v793
      %795 = vmatmul.f32.gmra.mxu0 %v336
      %v796 = vpop.f32.mrf.mxu0
      %v797 = vadd.f32 %v278, %v796
      %798 = vmatmul.f32.gmra.mxu0 %v339
      %v799 = vpop.f32.mrf.mxu0
      %v800 = vadd.f32 %v278, %v799
      %801 = vmatmul.f32.gmra.mxu0 %v342
      %v802 = vpop.f32.mrf.mxu0
      %v803 = vadd.f32 %v278, %v802
      %804 = vmatmul.f32.gmra.mxu0 %v345
      %v805 = vpop.f32.mrf.mxu0
      %v806 = vadd.f32 %v278, %v805
      %807 = vmatmul.f32.gmra.mxu0 %v348
      %v808 = vpop.f32.mrf.mxu0
      %v809 = vadd.f32 %v278, %v808
      %810 = vmatmul.f32.gmra.mxu0 %v351
      %v811 = vpop.f32.mrf.mxu0
      %v812 = vadd.f32 %v278, %v811
      %813 = vmatmul.f32.gmra.mxu0 %v354
      %v814 = vpop.f32.mrf.mxu0
      %v815 = vadd.f32 %v278, %v814
      %816 = vmatmul.f32.gmra.mxu0 %v357
      %v817 = vpop.f32.mrf.mxu0
      %v818 = vadd.f32 %v278, %v817
      %819 = vmatmul.f32.gmra.mxu0 %v360
      %v820 = vpop.f32.mrf.mxu0
      %v821 = vadd.f32 %v278, %v820
      %822 = vmatmul.f32.gmra.mxu0 %v363
      %v823 = vpop.f32.mrf.mxu0
      %v824 = vadd.f32 %v278, %v823
      %825 = vmatmul.f32.gmra.mxu0 %v366
      %v826 = vpop.f32.mrf.mxu0
      %v827 = vadd.f32 %v278, %v826
      %828 = vmatmul.f32.gmra.mxu0 %v369
      %v829 = vpop.f32.mrf.mxu0
      %v830 = vadd.f32 %v278, %v829
      %831 = vmatmul.f32.gmra.mxu0 %v372
      %v832 = vpop.f32.mrf.mxu0
      %v833 = vadd.f32 %v278, %v832
      %834 = vmatmul.f32.gmra.mxu0 %v375
      %v835 = vpop.f32.mrf.mxu0
      %v836 = vadd.f32 %v278, %v835
      %837 = vmatmul.f32.gmra.mxu0 %v378
      %v838 = vpop.f32.mrf.mxu0
      %v839 = vadd.f32 %v278, %v838
      %840 = vmatmul.f32.gmra.mxu0 %v381
      %v841 = vpop.f32.mrf.mxu0
      %v842 = vadd.f32 %v278, %v841
      %843 = vmatmul.f32.gmra.mxu0 %v384
      %v844 = vpop.f32.mrf.mxu0
      %v845 = vadd.f32 %v278, %v844
      %846 = vmatmul.f32.gmra.mxu0 %v387
      %v847 = vpop.f32.mrf.mxu0
      %v848 = vadd.f32 %v278, %v847
      %849 = vdwg.mxu0
      %v850 = vld [vmem:[%s3] sm:$0xf]
      %v852 = vperm.slane %v850, 0
      %v853 = vperm.slane %v850, 1
      %v854 = vperm.slane %v850, 2
      %v855 = vperm.slane %v850, 3
      %v860 = vmax.f32 %v416, %v852
      %v861 = vmax.f32 %v529, %v853
      %v862 = vmax.f32 %v642, %v854
      %v863 = vmax.f32 %v755, %v855
      %v864 = vmax.f32 %v419, %v852
      %v865 = vmax.f32 %v532, %v853
      %v866 = vmax.f32 %v645, %v854
      %v867 = vmax.f32 %v758, %v855
      %v868 = vmax.f32 %v422, %v852
      %v869 = vmax.f32 %v535, %v853
      %v870 = vmax.f32 %v648, %v854
      %v871 = vmax.f32 %v761, %v855
      %v872 = vmax.f32 %v425, %v852
      %v873 = vmax.f32 %v538, %v853
      %v874 = vmax.f32 %v651, %v854
      %v875 = vmax.f32 %v764, %v855
      %v876 = vmax.f32 %v428, %v852
      %v877 = vmax.f32 %v541, %v853
      %v878 = vmax.f32 %v654, %v854
      %v879 = vmax.f32 %v767, %v855
      %v880 = vmax.f32 %v431, %v852
      %v881 = vmax.f32 %v544, %v853
      %v882 = vmax.f32 %v657, %v854
      %v883 = vmax.f32 %v770, %v855
      %v884 = vmax.f32 %v434, %v852
      %v885 = vmax.f32 %v547, %v853
      %v886 = vmax.f32 %v660, %v854
      %v887 = vmax.f32 %v773, %v855
      %v888 = vmax.f32 %v437, %v852
      %v889 = vmax.f32 %v550, %v853
      %v890 = vmax.f32 %v663, %v854
      %v891 = vmax.f32 %v776, %v855
      %v892 = vmax.f32 %v440, %v852
      %v893 = vmax.f32 %v553, %v853
      %v894 = vmax.f32 %v666, %v854
      %v895 = vmax.f32 %v779, %v855
      %v896 = vmax.f32 %v443, %v852
      %v897 = vmax.f32 %v556, %v853
      %v898 = vmax.f32 %v669, %v854
      %v899 = vmax.f32 %v782, %v855
      %v900 = vmax.f32 %v446, %v852
      %v901 = vmax.f32 %v559, %v853
      %v902 = vmax.f32 %v672, %v854
      %v903 = vmax.f32 %v785, %v855
      %v904 = vmax.f32 %v449, %v852
      %v905 = vmax.f32 %v562, %v853
      %v906 = vmax.f32 %v675, %v854
      %v907 = vmax.f32 %v788, %v855
      %v908 = vmax.f32 %v452, %v852
      %v909 = vmax.f32 %v565, %v853
      %v910 = vmax.f32 %v678, %v854
      %v911 = vmax.f32 %v791, %v855
      %v912 = vmax.f32 %v455, %v852
      %v913 = vmax.f32 %v568, %v853
      %v914 = vmax.f32 %v681, %v854
      %v915 = vmax.f32 %v794, %v855
      %v916 = vmax.f32 %v458, %v852
      %v917 = vmax.f32 %v571, %v853
      %v918 = vmax.f32 %v684, %v854
      %v919 = vmax.f32 %v797, %v855
      %v920 = vmax.f32 %v461, %v852
      %v921 = vmax.f32 %v574, %v853
      %v922 = vmax.f32 %v687, %v854
      %v923 = vmax.f32 %v800, %v855
      %v924 = vmax.f32 %v464, %v852
      %v925 = vmax.f32 %v577, %v853
      %v926 = vmax.f32 %v690, %v854
      %v927 = vmax.f32 %v803, %v855
      %v928 = vmax.f32 %v467, %v852
      %v929 = vmax.f32 %v580, %v853
      %v930 = vmax.f32 %v693, %v854
      %v931 = vmax.f32 %v806, %v855
      %v932 = vmax.f32 %v470, %v852
      %v933 = vmax.f32 %v583, %v853
      %v934 = vmax.f32 %v696, %v854
      %v935 = vmax.f32 %v809, %v855
      %v936 = vmax.f32 %v473, %v852
      %v937 = vmax.f32 %v586, %v853
      %v938 = vmax.f32 %v699, %v854
      %v939 = vmax.f32 %v812, %v855
      %v940 = vmax.f32 %v476, %v852
      %v941 = vmax.f32 %v589, %v853
      %v942 = vmax.f32 %v702, %v854
      %v943 = vmax.f32 %v815, %v855
      %v944 = vmax.f32 %v479, %v852
      %v945 = vmax.f32 %v592, %v853
      %v946 = vmax.f32 %v705, %v854
      %v947 = vmax.f32 %v818, %v855
      %v948 = vmax.f32 %v482, %v852
      %v949 = vmax.f32 %v595, %v853
      %v950 = vmax.f32 %v708, %v854
      %v951 = vmax.f32 %v821, %v855
      %v952 = vmax.f32 %v485, %v852
      %v953 = vmax.f32 %v598, %v853
      %v954 = vmax.f32 %v711, %v854
      %v955 = vmax.f32 %v824, %v855
      %v956 = vmax.f32 %v488, %v852
      %v957 = vmax.f32 %v601, %v853
      %v958 = vmax.f32 %v714, %v854
      %v959 = vmax.f32 %v827, %v855
      %v960 = vmax.f32 %v491, %v852
      %v961 = vmax.f32 %v604, %v853
      %v962 = vmax.f32 %v717, %v854
      %v963 = vmax.f32 %v830, %v855
      %v964 = vmax.f32 %v494, %v852
      %v965 = vmax.f32 %v607, %v853
      %v966 = vmax.f32 %v720, %v854
      %v967 = vmax.f32 %v833, %v855
      %v968 = vmax.f32 %v497, %v852
      %v969 = vmax.f32 %v610, %v853
      %v970 = vmax.f32 %v723, %v854
      %v971 = vmax.f32 %v836, %v855
      %v972 = vmax.f32 %v500, %v852
      %v973 = vmax.f32 %v613, %v853
      %v974 = vmax.f32 %v726, %v854
      %v975 = vmax.f32 %v839, %v855
      %v976 = vmax.f32 %v503, %v852
      %v977 = vmax.f32 %v616, %v853
      %v978 = vmax.f32 %v729, %v854
      %v979 = vmax.f32 %v842, %v855
      %v980 = vmax.f32 %v506, %v852
      %v981 = vmax.f32 %v619, %v853
      %v982 = vmax.f32 %v732, %v854
      %v983 = vmax.f32 %v845, %v855
      %v984 = vmax.f32 %v509, %v852
      %v985 = vmax.f32 %v622, %v853
      %v986 = vmax.f32 %v735, %v854
      %v987 = vmax.f32 %v848, %v855
      %988 = vst [vmem:[%s237] sm:$0xff] %v860
      %989 = vst [vmem:[%s237 + $0x8] sm:$0xff] %v861
      %990 = vst [vmem:[%s237 + $0x10] sm:$0xff] %v862
      %991 = vst [vmem:[%s237 + $0x18] sm:$0xff] %v863
      %992 = vst [vmem:[%s237 + $0x20] sm:$0xff] %v864
      %993 = vst [vmem:[%s237 + $0x28] sm:$0xff] %v865
      %994 = vst [vmem:[%s237 + $0x30] sm:$0xff] %v866
      %995 = vst [vmem:[%s237 + $0x38] sm:$0xff] %v867
      %996 = vst [vmem:[%s237 + $0x40] sm:$0xff] %v868
      %997 = vst [vmem:[%s237 + $0x48] sm:$0xff] %v869
      %998 = vst [vmem:[%s237 + $0x50] sm:$0xff] %v870
      %999 = vst [vmem:[%s237 + $0x58] sm:$0xff] %v871
      %1000 = vst [vmem:[%s237 + $0x60] sm:$0xff] %v872
      %1001 = vst [vmem:[%s237 + $0x68] sm:$0xff] %v873
      %1002 = vst [vmem:[%s237 + $0x70] sm:$0xff] %v874
      %1003 = vst [vmem:[%s237 + $0x78] sm:$0xff] %v875
      %1004 = vst [vmem:[%s237 + $0x80] sm:$0xff] %v876
      %1005 = vst [vmem:[%s237 + $0x88] sm:$0xff] %v877
      %1006 = vst [vmem:[%s237 + $0x90] sm:$0xff] %v878
      %1007 = vst [vmem:[%s237 + $0x98] sm:$0xff] %v879
      %1008 = vst [vmem:[%s237 + $0xa0] sm:$0xff] %v880
      %1009 = vst [vmem:[%s237 + $0xa8] sm:$0xff] %v881
      %1010 = vst [vmem:[%s237 + $0xb0] sm:$0xff] %v882
      %1011 = vst [vmem:[%s237 + $0xb8] sm:$0xff] %v883
      %1012 = vst [vmem:[%s237 + $0xc0] sm:$0xff] %v884
      %1013 = vst [vmem:[%s237 + $0xc8] sm:$0xff] %v885
      %1014 = vst [vmem:[%s237 + $0xd0] sm:$0xff] %v886
      %1015 = vst [vmem:[%s237 + $0xd8] sm:$0xff] %v887
      %1016 = vst [vmem:[%s237 + $0xe0] sm:$0xff] %v888
      %1017 = vst [vmem:[%s237 + $0xe8] sm:$0xff] %v889
      %1018 = vst [vmem:[%s237 + $0xf0] sm:$0xff] %v890
      %1019 = vst [vmem:[%s237 + $0xf8] sm:$0xff] %v891
      %1020 = vst [vmem:[%s237 + $0x100] sm:$0xff] %v892
      %1021 = vst [vmem:[%s237 + $0x108] sm:$0xff] %v893
      %1022 = vst [vmem:[%s237 + $0x110] sm:$0xff] %v894
      %1023 = vst [vmem:[%s237 + $0x118] sm:$0xff] %v895
      %1024 = vst [vmem:[%s237 + $0x120] sm:$0xff] %v896
      %1025 = vst [vmem:[%s237 + $0x128] sm:$0xff] %v897
      %1026 = vst [vmem:[%s237 + $0x130] sm:$0xff] %v898
      %1027 = vst [vmem:[%s237 + $0x138] sm:$0xff] %v899
      %1028 = vst [vmem:[%s237 + $0x140] sm:$0xff] %v900
      %1029 = vst [vmem:[%s237 + $0x148] sm:$0xff] %v901
      %1030 = vst [vmem:[%s237 + $0x150] sm:$0xff] %v902
      %1031 = vst [vmem:[%s237 + $0x158] sm:$0xff] %v903
      %1032 = vst [vmem:[%s237 + $0x160] sm:$0xff] %v904
      %1033 = vst [vmem:[%s237 + $0x168] sm:$0xff] %v905
      %1034 = vst [vmem:[%s237 + $0x170] sm:$0xff] %v906
      %1035 = vst [vmem:[%s237 + $0x178] sm:$0xff] %v907
      %1036 = vst [vmem:[%s237 + $0x180] sm:$0xff] %v908
      %1037 = vst [vmem:[%s237 + $0x188] sm:$0xff] %v909
      %1038 = vst [vmem:[%s237 + $0x190] sm:$0xff] %v910
      %1039 = vst [vmem:[%s237 + $0x198] sm:$0xff] %v911
      %1040 = vst [vmem:[%s237 + $0x1a0] sm:$0xff] %v912
      %1041 = vst [vmem:[%s237 + $0x1a8] sm:$0xff] %v913
      %1042 = vst [vmem:[%s237 + $0x1b0] sm:$0xff] %v914
      %1043 = vst [vmem:[%s237 + $0x1b8] sm:$0xff] %v915
      %1044 = vst [vmem:[%s237 + $0x1c0] sm:$0xff] %v916
      %1045 = vst [vmem:[%s237 + $0x1c8] sm:$0xff] %v917
      %1046 = vst [vmem:[%s237 + $0x1d0] sm:$0xff] %v918
      %1047 = vst [vmem:[%s237 + $0x1d8] sm:$0xff] %v919
      %1048 = vst [vmem:[%s237 + $0x1e0] sm:$0xff] %v920
      %1049 = vst [vmem:[%s237 + $0x1e8] sm:$0xff] %v921
      %1050 = vst [vmem:[%s237 + $0x1f0] sm:$0xff] %v922
      %1051 = vst [vmem:[%s237 + $0x1f8] sm:$0xff] %v923
      %1052 = vst [vmem:[%s237 + $0x200] sm:$0xff] %v924
      %1053 = vst [vmem:[%s237 + $0x208] sm:$0xff] %v925
      %1054 = vst [vmem:[%s237 + $0x210] sm:$0xff] %v926
      %1055 = vst [vmem:[%s237 + $0x218] sm:$0xff] %v927
      %1056 = vst [vmem:[%s237 + $0x220] sm:$0xff] %v928
      %1057 = vst [vmem:[%s237 + $0x228] sm:$0xff] %v929
      %1058 = vst [vmem:[%s237 + $0x230] sm:$0xff] %v930
      %1059 = vst [vmem:[%s237 + $0x238] sm:$0xff] %v931
      %1060 = vst [vmem:[%s237 + $0x240] sm:$0xff] %v932
      %1061 = vst [vmem:[%s237 + $0x248] sm:$0xff] %v933
      %1062 = vst [vmem:[%s237 + $0x250] sm:$0xff] %v934
      %1063 = vst [vmem:[%s237 + $0x258] sm:$0xff] %v935
      %1064 = vst [vmem:[%s237 + $0x260] sm:$0xff] %v936
      %1065 = vst [vmem:[%s237 + $0x268] sm:$0xff] %v937
      %1066 = vst [vmem:[%s237 + $0x270] sm:$0xff] %v938
      %1067 = vst [vmem:[%s237 + $0x278] sm:$0xff] %v939
      %1068 = vst [vmem:[%s237 + $0x280] sm:$0xff] %v940
      %1069 = vst [vmem:[%s237 + $0x288] sm:$0xff] %v941
      %1070 = vst [vmem:[%s237 + $0x290] sm:$0xff] %v942
      %1071 = vst [vmem:[%s237 + $0x298] sm:$0xff] %v943
      %1072 = vst [vmem:[%s237 + $0x2a0] sm:$0xff] %v944
      %1073 = vst [vmem:[%s237 + $0x2a8] sm:$0xff] %v945
      %1074 = vst [vmem:[%s237 + $0x2b0] sm:$0xff] %v946
      %1075 = vst [vmem:[%s237 + $0x2b8] sm:$0xff] %v947
      %1076 = vst [vmem:[%s237 + $0x2c0] sm:$0xff] %v948
      %1077 = vst [vmem:[%s237 + $0x2c8] sm:$0xff] %v949
      %1078 = vst [vmem:[%s237 + $0x2d0] sm:$0xff] %v950
      %1079 = vst [vmem:[%s237 + $0x2d8] sm:$0xff] %v951
      %1080 = vst [vmem:[%s237 + $0x2e0] sm:$0xff] %v952
      %1081 = vst [vmem:[%s237 + $0x2e8] sm:$0xff] %v953
      %1082 = vst [vmem:[%s237 + $0x2f0] sm:$0xff] %v954
      %1083 = vst [vmem:[%s237 + $0x2f8] sm:$0xff] %v955
      %1084 = vst [vmem:[%s237 + $0x300] sm:$0xff] %v956
      %1085 = vst [vmem:[%s237 + $0x308] sm:$0xff] %v957
      %1086 = vst [vmem:[%s237 + $0x310] sm:$0xff] %v958
      %1087 = vst [vmem:[%s237 + $0x318] sm:$0xff] %v959
      %1088 = vst [vmem:[%s237 + $0x320] sm:$0xff] %v960
      %1089 = vst [vmem:[%s237 + $0x328] sm:$0xff] %v961
      %1090 = vst [vmem:[%s237 + $0x330] sm:$0xff] %v962
      %1091 = vst [vmem:[%s237 + $0x338] sm:$0xff] %v963
      %1092 = vst [vmem:[%s237 + $0x340] sm:$0xff] %v964
      %1093 = vst [vmem:[%s237 + $0x348] sm:$0xff] %v965
      %1094 = vst [vmem:[%s237 + $0x350] sm:$0xff] %v966
      %1095 = vst [vmem:[%s237 + $0x358] sm:$0xff] %v967
      %1096 = vst [vmem:[%s237 + $0x360] sm:$0xff] %v968
      %1097 = vst [vmem:[%s237 + $0x368] sm:$0xff] %v969
      %1098 = vst [vmem:[%s237 + $0x370] sm:$0xff] %v970
      %1099 = vst [vmem:[%s237 + $0x378] sm:$0xff] %v971
      %1100 = vst [vmem:[%s237 + $0x380] sm:$0xff] %v972
      %1101 = vst [vmem:[%s237 + $0x388] sm:$0xff] %v973
      %1102 = vst [vmem:[%s237 + $0x390] sm:$0xff] %v974
      %1103 = vst [vmem:[%s237 + $0x398] sm:$0xff] %v975
      %1104 = vst [vmem:[%s237 + $0x3a0] sm:$0xff] %v976
      %1105 = vst [vmem:[%s237 + $0x3a8] sm:$0xff] %v977
      %1106 = vst [vmem:[%s237 + $0x3b0] sm:$0xff] %v978
      %1107 = vst [vmem:[%s237 + $0x3b8] sm:$0xff] %v979
      %1108 = vst [vmem:[%s237 + $0x3c0] sm:$0xff] %v980
      %1109 = vst [vmem:[%s237 + $0x3c8] sm:$0xff] %v981
      %1110 = vst [vmem:[%s237 + $0x3d0] sm:$0xff] %v982
      %1111 = vst [vmem:[%s237 + $0x3d8] sm:$0xff] %v983
      %1112 = vst [vmem:[%s237 + $0x3e0] sm:$0xff] %v984
      %1113 = vst [vmem:[%s237 + $0x3e8] sm:$0xff] %v985
      %1114 = vst [vmem:[%s237 + $0x3f0] sm:$0xff] %v986
      %1115 = vst [vmem:[%s237 + $0x3f8] sm:$0xff] %v987
      %s1116 = smul.u32 32, %s20
      %p1117 = scmp.lt.s32.totalorder %s19, 1
      %s1118 = scalar_select %p1117, %s19, 1
      %p1119 = scmp.lt.s32.totalorder %s1116, 31
      %s1120 = scalar_select %p1119, %s1116, 31
      %s1121 = smul.addr %s1120, 4
      %s1122 = smul.addr %s1118, 128
      %s1123 = sadd.s32 %s1121, %s1122
      %s1124 = smul.addr %s1123, 8
      %s1125 = scalar_lea.vmem %s4, %s1124
      // Predicated region
      $region37: #{inception_a_forward.5} parent=35 // pred_check
        %p1126 = pneg %p138
      $region38: #{inception_a_forward.5} parent=35 // pred_check_branch
        %1128 = sbr.rel (%p1126) target = $region40
      $region39: #{inception_a_forward.5} parent=35 // pred_region
        %s1129 = smul.u32 32, %s20
      $region40: #{inception_a_forward.5} parent=35 // pred_fallthru
        _
    $region36: #{inception_a_forward.5} parent=5 // pred_fallthru
      _
    %p1130 = scmp.le.s32.totalorder 2, %s10
    // Predicated region
    $region41: #{inception_a_forward.5} parent=5 // pred_check
      %p1131 = pneg %p1130
    $region42: #{inception_a_forward.5} parent=5 // pred_check_branch
      %1133 = sbr.rel (%p1131) target = $region44
    $region43: #{inception_a_forward.5} parent=5 // pred_region
      %s1134 = ssub.s32 %s10, 2
      // Predicated region
      $region45: #{inception_a_forward.5} parent=43 // pred_check
        %p1135 = pneg %p144
      $region46: #{inception_a_forward.5} parent=43 // pred_check_branch
        %1137 = sbr.rel (%p1135) target = $region48
      $region47: #{inception_a_forward.5} parent=43 // pred_region
        %s1138 = smul.u32 32, %s22
        %p1139 = scmp.lt.s32.totalorder %s21, 1
        %s1140 = scalar_select %p1139, %s21, 1
        %p1141 = scmp.lt.s32.totalorder %s1138, 31
        %s1142 = scalar_select %p1141, %s1138, 31
        %s1143 = smul.addr %s1142, 4
        %s1144 = smul.addr %s1140, 128
        %s1145 = sadd.s32 %s1143, %s1144
        %s1146 = smul.addr %s1145, 8
        %s1147 = scalar_lea.vmem %s4, %s1146
      $region48: #{inception_a_forward.5} parent=43 // pred_fallthru
        _
    $region44: #{inception_a_forward.5} parent=5 // pred_fallthru
      _
  $region6: #{inception_a_forward.5} parent=0 // loop_footer
    %s14 = sadd.s32 1, %s10
  $region7: #{inception_a_forward.5} parent=0 // loop_footer_branch
    %9 = sbr.rel target = $region3
  $region8: #{inception_a_forward.5} parent=0 // loop_exit
    _

// kernel: inception_a_forward.7
$region0: #{inception_a_forward.7}
  #allocation0 [shape = 'u32[]', space=smem, size = 0x4, offset = 0x4, fixed_abs, tag = 'smem constant byte address 0x4 - core index']
  #allocation1 [shape = 'u32[72,128]{1,0:T(1,128)}', space=vmem, size = 0x9000, scoped, tag = 'internal scratch']
  %s0 = inlined_call_operand.vmem [shape: f32[2,16,16,512], index: 0, kind: input, shape index: {}]
  %s1 = inlined_call_operand.hbm [shape: f32[1152,128], index: 1, kind: input, shape index: {}]
  %s2 = inlined_call_operand.vmem [shape: f32[1,128], index: 2, kind: input, shape index: {}]
  %s3 = inlined_call_operand.vmem [shape: f32[2,256,128], index: 3, kind: output, shape index: {}]
  %s4 = sld [smem:[#allocation0]]
  $region87: #{inception_a_forward.7} parent=0
    _
  %s6 = ssub.s32 1, %s4
  %s7 = scalar_select 0, %s6, %s4
  $region1: #{inception_a_forward.7} parent=0
    #allocation2 [shape = 'u8[262144]{0}', space=vmem, size = 0x40000, scoped, tag = 'input window, operand 0']
    #allocation3 [shape = 'u8[589824]{0}', space=vmem, size = 0x90000, scoped, tag = 'input window, operand 1, single buffered']
    #allocation4 [shape = 's32[2]{0}', space=sflag, size = 0x8, scoped, tag = 'scoped memory for inception_a_forward.7']
    %8 = vsyncpa [#allocation4], 0
    loop: start=0, step=1, limit=4
    $region2: #{inception_a_forward.7} parent=1 // loop_pre_header
      _
    $region3: #{inception_a_forward.7} parent=1 // loop_header
      %s10 = sphi 0, %s14
      %p11 = scmp.ge.s32.totalorder %s10, 4
      %s20 = sphi 0, %s22
      %s23 = sphi 0, %s20
      %s24 = sphi 0, %s23
      %s40 = sphi 0, %s24
      %s44 = sphi 0, %s44
      %s46 = sphi 0, %s44
      %s47 = sphi 0, %s46
      %s61 = sphi 0, %s47
      %s65 = sphi 0, %s65
      %s67 = sphi 0, %s65
      %s68 = sphi 0, %s67
      %s82 = sphi 0, %s68
      %s88 = sphi 0, %s90
      %s91 = sphi 0, %s88
      %s92 = sphi 0, %s91
      %s108 = sphi 0, %s92
    $region4: #{inception_a_forward.7} parent=1 // loop_header_branch
      %13 = sbr.rel (%p11) target = $region8
    $region5: #{inception_a_forward.7} parent=1 // loop_body
      %s15 = ssub.s32 %s10, 1
      %s16 = ssub.s32 %s10, 2
      %s17 = sadd.s32 %s10, 1
      %s18 = ssub.s32 %s10, %s17
      %p19 = scmp.eq.s32.totalorder %s18, 0
      %s21 = sadd.s32 %s20, 1
      %s22 = scalar_select %p19, %s20, %s21
      %p25 = pneg %p19
      %p26 = scmp.eq.s32.totalorder %s10, 1
      %p27 = por %p25, %p26
      %p28 = scmp.ne.s32.totalorder %s20, %s23
      %p29 = scmp.eq.s32.totalorder %s10, 0
      %p30 = por %p28, %p29
      %p31 = scmp.ne.s32.totalorder %s20, %s23
      %p32 = scmp.eq.s32.totalorder %s15, 1
      %p33 = por %p31, %p32
      %p34 = scmp.ne.s32.totalorder %s23, %s24
      %p35 = scmp.eq.s32.totalorder %s15, 0
      %p36 = por %p34, %p35
      %p37 = scmp.ne.s32.totalorder %s23, %s24
      %p38 = scmp.eq.s32.totalorder %s16, 1
      %p39 = por %p37, %p38
      %p41 = scmp.ne.s32.totalorder %s24, %s40
      %p42 = scmp.eq.s32.totalorder %s16, 0
      %p43 = por %p41, %p42
      %s45 = sadd.s32 %s44, 1
      %p48 = scmp.eq.s32.totalorder %s10, 1
      %p49 = scmp.ne.s32.totalorder %s44, %s46
      %p50 = scmp.eq.s32.totalorder %s10, 0
      %p51 = por %p49, %p50
      %p52 = scmp.ne.s32.totalorder %s44, %s46
      %p53 = scmp.eq.s32.totalorder %s15, 1
      %p54 = por %p52, %p53
      %p55 = scmp.ne.s32.totalorder %s46, %s47
      %p56 = scmp.eq.s32.totalorder %s15, 0
      %p57 = por %p55, %p56
      %p58 = scmp.ne.s32.totalorder %s46, %s47
      %p59 = scmp.eq.s32.totalorder %s16, 1
      %p60 = por %p58, %p59
      %p62 = scmp.ne.s32.totalorder %s47, %s61
      %p63 = scmp.eq.s32.totalorder %s16, 0
      %p64 = por %p62, %p63
      %s66 = sadd.s32 %s65, 1
      %p69 = scmp.eq.s32.totalorder %s10, 1
      %p70 = scmp.ne.s32.totalorder %s65, %s67
      %p71 = scmp.eq.s32.totalorder %s10, 0
      %p72 = por %p70, %p71
      %p73 = scmp.ne.s32.totalorder %s65, %s67
      %p74 = scmp.eq.s32.totalorder %s15, 1
      %p75 = por %p73, %p74
      %p76 = scmp.ne.s32.totalorder %s67, %s68
      %p77 = scmp.eq.s32.totalorder %s15, 0
      %p78 = por %p76, %p77
      %p79 = scmp.ne.s32.totalorder %s67, %s68
      %p80 = scmp.eq.s32.totalorder %s16, 1
      %p81 = por %p79, %p80
      %p83 = scmp.ne.s32.totalorder %s68, %s82
      %p84 = scmp.eq.s32.totalorder %s16, 0
      %p85 = por %p83, %p84
      %s86 = ssub.s32 %s10, %s17
      %p87 = scmp.eq.s32.totalorder %s86, 0
      %s89 = sadd.s32 %s88, 1
      %s90 = scalar_select %p87, %s88, %s89
      %p93 = pneg %p87
      %p94 = scmp.eq.s32.totalorder %s10, 1
      %p95 = por %p93, %p94
      %p96 = scmp.ne.s32.totalorder %s88, %s91
      %p97 = scmp.eq.s32.totalorder %s10, 0
      %p98 = por %p96, %p97
      %p99 = scmp.ne.s32.totalorder %s88, %s91
      %p100 = scmp.eq.s32.totalorder %s15, 1
      %p101 = por %p99, %p100
      %p102 = scmp.ne.s32.totalorder %s91, %s92
      %p103 = scmp.eq.s32.totalorder %s15, 0
      %p104 = por %p102, %p103
      %p105 = scmp.ne.s32.totalorder %s91, %s92
      %p106 = scmp.eq.s32.totalorder %s16, 1
      %p107 = por %p105, %p106
      %p109 = scmp.ne.s32.totalorder %s92, %s108
      %p110 = scmp.eq.s32.totalorder %s16, 0
      %p111 = por %p109, %p110
      %p112 = scmp.le.s32.totalorder 1, %s10
      %p113 = scmp.lt.s32.totalorder %s10, 3
      %p114 = pnand %p112, %p113
      %p115 = pneg %p114
      // Predicated region
      $region9: #{inception_a_forward.7} parent=5 // pred_check
        _
      $region10: #{inception_a_forward.7} parent=5 // pred_check_branch
        %117 = sbr.rel (%p114) target = $region12
      $region11: #{inception_a_forward.7} parent=5 // pred_region
        %s118 = ssub.s32 %s10, 1
        // Predicated region
        $region13: #{inception_a_forward.7} parent=11 // pred_check
          %p119 = pneg %p57
        $region14: #{inception_a_forward.7} parent=11 // pred_check_branch
          %121 = sbr.rel (%p119) target = $region16
        $region15: #{inception_a_forward.7} parent=11 // pred_region
          %123 = vsyncadd [#allocation4], 0
          %s124 = sshll.u32 %s1, 4
          %s125 = int_to_ptr.hbm [resolvable:$true] %s124
          %s126 = sshll.u32 [#allocation3], 4
          %s127 = int_to_ptr.vmem [resolvable:$true] %s126
          %132 = dma.hbm_to_vmem [thread:$0]  %s125, 18432, %s127, [#allocation4], 128, 128, 8
        $region16: #{inception_a_forward.7} parent=11 // pred_fallthru
          _
        // Predicated region
        $region17: #{inception_a_forward.7} parent=11 // pred_check
          %p133 = pneg %p78
        $region18: #{inception_a_forward.7} parent=11 // pred_check_branch
          %135 = sbr.rel (%p133) target = $region20
        $region19: #{inception_a_forward.7} parent=11 // pred_region
          _
        $region20: #{inception_a_forward.7} parent=11 // pred_fallthru
          _
      $region12: #{inception_a_forward.7} parent=5 // pred_fallthru
        _
      %p136 = scmp.lt.s32.totalorder %s10, 2
      // Predicated region
      $region21: #{inception_a_forward.7} parent=5 // pred_check
        %p137 = pneg %p136
      $region22: #{inception_a_forward.7} parent=5 // pred_check_branch
        %139 = sbr.rel (%p137) target = $region24
      $region23: #{inception_a_forward.7} parent=5 // pred_region
        // Predicated region
        $region25: #{inception_a_forward.7} parent=23 // pred_check
          %p140 = pneg %p30
        $region26: #{inception_a_forward.7} parent=23 // pred_check_branch
          %142 = sbr.rel (%p140) target = $region28
        $region27: #{inception_a_forward.7} parent=23 // pred_region
          %s143 = sand.u32 %s20, 1
          %s144 = sand.u32 %s20, 1
          %s145 = smul.addr %s144, 256
          %s146 = scalar_lea.vmem [#allocation2], %s145
          %s147 = smul.addr %s10, 128
          %s148 = sadd.s32 2, %s147
          %s149 = smul.addr %s148, 8
          %s150 = scalar_lea.vmem %s0, %s149
          // Predicated region
          $region29: #{inception_a_forward.7} parent=27 // pred_check
            _
          $region30: #{inception_a_forward.7} parent=27 // pred_check_branch
            %152 = sbr.rel (0) target = $region32
          $region31: #{inception_a_forward.7} parent=27 // pred_region
            // Predicated region
            $region33: #{inception_a_forward.7} parent=31 // pred_check
              _
            $region34: #{inception_a_forward.7} parent=31 // pred_check_branch
              %154 = sbr.rel (0) target = $region36
            $region35: #{inception_a_forward.7} parent=31 // pred_region
              // Predicated region
              $region48: #{inception_a_forward.7} parent=35 // pred_check
                _
              $region49: #{inception_a_forward.7} parent=35 // pred_check_branch
                %232 = sbr.rel (0) target = $region51
              $region50: #{inception_a_forward.7} parent=35 // pred_region
                loop: start=0, step=1, limit=1
                $region52: #{inception_a_forward.7} parent=50 // loop_pre_header
                  _
                $region53: #{inception_a_forward.7} parent=50 // loop_header
                  %s234 = sphi 0, %s238
                  %p235 = scmp.ge.s32.totalorder %s234, 1
                  %s239 = sphi %s150, %s150
                  %s240 = sphi %s146, %s146
                $region54: #{inception_a_forward.7} parent=50 // loop_header_branch
                  %237 = sbr.rel (%p235) target = $region58
                $region55: #{inception_a_forward.7} parent=50 // loop_body
                  %v241 = vld [vmem:[%s239] sm:$0xff]
                  %242 = vst [vmem:[%s240] sm:$0xff] %v241
                  %v243 = vld [vmem:[%s239 + $0x20] sm:$0xff]
                  %244 = vst [vmem:[%s240 + $0x8] sm:$0xff] %v243
                  %v245 = vld [vmem:[%s239 + $0x40] sm:$0xff]
                  %246 = vst [vmem:[%s240 + $0x10] sm:$0xff] %v245
                  %v247 = vld [vmem:[%s239 + $0x60] sm:$0xff]
                  %248 = vst [vmem:[%s240 + $0x18] sm:$0xff] %v247
                  %v249 = vld [vmem:[%s239 + $0x80] sm:$0xff]
                  %250 = vst [vmem:[%s240 + $0x20] sm:$0xff] %v249
                  %v251 = vld [vmem:[%s239 + $0xa0] sm:$0xff]
                  %252 = vst [vmem:[%s240 + $0x28] sm:$0xff] %v251
                  %v253 = vld [vmem:[%s239 + $0xc0] sm:$0xff]
                  %254 = vst [vmem:[%s240 + $0x30] sm:$0xff] %v253
                  %v255 = vld [vmem:[%s239 + $0xe0] sm:$0xff]
                  %256 = vst [vmem:[%s240 + $0x38] sm:$0xff] %v255
                  %v257 = vld [vmem:[%s239 + $0x100] sm:$0xff]
                  %258 = vst [vmem:[%s240 + $0x40] sm:$0xff] %v257
                  %v259 = vld [vmem:[%s239 + $0x120] sm:$0xff]
                  %260 = vst [vmem:[%s240 + $0x48] sm:$0xff] %v259
                  %v261 = vld [vmem:[%s239 + $0x140] sm:$0xff]
                  %262 = vst [vmem:[%s240 + $0x50] sm:$0xff] %v261
                  %v263 = vld [vmem:[%s239 + $0x160] sm:$0xff]
                  %264 = vst [vmem:[%s240 + $0x58] sm:$0xff] %v263
                  %v265 = vld [vmem:[%s239 + $0x180] sm:$0xff]
                  %266 = vst [vmem:[%s240 + $0x60] sm:$0xff] %v265
                  %v267 = vld [vmem:[%s239 + $0x1a0] sm:$0xff]
                  %268 = vst [vmem:[%s240 + $0x68] sm:$0xff] %v267
                  %v269 = vld [vmem:[%s239 + $0x1c0] sm:$0xff]
                  %270 = vst [vmem:[%s240 + $0x70] sm:$0xff] %v269
                  %v271 = vld [vmem:[%s239 + $0x1e0] sm:$0xff]
                  %272 = vst [vmem:[%s240 + $0x78] sm:$0xff] %v271
                  %v273 = vld [vmem:[%s239 + $0x200] sm:$0xff]
                  %274 = vst [vmem:[%s240 + $0x80] sm:$0xff] %v273
                  %v275 = vld [vmem:[%s239 + $0x220] sm:$0xff]
                  %276 = vst [vmem:[%s240 + $0x88] sm:$0xff] %v275
                  %v277 = vld [vmem:[%s239 + $0x240] sm:$0xff]
                  %278 = vst [vmem:[%s240 + $0x90] sm:$0xff] %v277
                  %v279 = vld [vmem:[%s239 + $0x260] sm:$0xff]
                  %280 = vst [vmem:[%s240 + $0x98] sm:$0xff] %v279
                  %v281 = vld [vmem:[%s239 + $0x280] sm:$0xff]
                  %282 = vst [vmem:[%s240 + $0xa0] sm:$0xff] %v281
                  %v283 = vld [vmem:[%s239 + $0x2a0] sm:$0xff]
                  %284 = vst [vmem:[%s240 + $0xa8] sm:$0xff] %v283
                  %v285 = vld [vmem:[%s239 + $0x2c0] sm:$0xff]
                  %286 = vst [vmem:[%s240 + $0xb0] sm:$0xff] %v285
                  %v287 = vld [vmem:[%s239 + $0x2e0] sm:$0xff]
                  %288 = vst [vmem:[%s240 + $0xb8] sm:$0xff] %v287
                  %v289 = vld [vmem:[%s239 + $0x300] sm:$0xff]
                  %290 = vst [vmem:[%s240 + $0xc0] sm:$0xff] %v289
                  %v291 = vld [vmem:[%s239 + $0x320] sm:$0xff]
                  %292 = vst [vmem:[%s240 + $0xc8] sm:$0xff] %v291
                  %v293 = vld [vmem:[%s239 + $0x340] sm:$0xff]
                  %294 = vst [vmem:[%s240 + $0xd0] sm:$0xff] %v293
                  %v295 = vld [vmem:[%s239 + $0x360] sm:$0xff]
                  %296 = vst [vmem:[%s240 + $0xd8] sm:$0xff] %v295
                  %v297 = vld [vmem:[%s239 + $0x380] sm:$0xff]
                  %298 = vst [vmem:[%s240 + $0xe0] sm:$0xff] %v297
                  %v299 = vld [vmem:[%s239 + $0x3a0] sm:$0xff]
                  %300 = vst [vmem:[%s240 + $0xe8] sm:$0xff] %v299
                  %v301 = vld [vmem:[%s239 + $0x3c0] sm:$0xff]
                  %302 = vst [vmem:[%s240 + $0xf0] sm:$0xff] %v301
                  %v303 = vld [vmem:[%s239 + $0x3e0] sm:$0xff]
                  %304 = vst [vmem:[%s240 + $0xf8] sm:$0xff] %v303
                $region56: #{inception_a_forward.7} parent=50 // loop_footer
                  %s238 = sadd.s32 1, %s234
                $region57: #{inception_a_forward.7} parent=50 // loop_footer_branch
                  %233 = sbr.rel target = $region53
                $region58: #{inception_a_forward.7} parent=50 // loop_exit
                  _
              $region51: #{inception_a_forward.7} parent=35 // pred_fallthru
                _
              // Predicated region
              $region59: #{inception_a_forward.7} parent=35 // pred_check
                _
              $region60: #{inception_a_forward.7} parent=35 // pred_check_branch
                %306 = sbr.rel target = $region62
              $region61: #{inception_a_forward.7} parent=35 // pred_region
                _
              $region62: #{inception_a_forward.7} parent=35 // pred_fallthru
                _
            $region36: #{inception_a_forward.7} parent=31 // pred_fallthru
              _
            // Predicated region
            $region37: #{inception_a_forward.7} parent=31 // pred_check
              _
            $region38: #{inception_a_forward.7} parent=31 // pred_check_branch
              %156 = sbr.rel target = $region40
            $region39: #{inception_a_forward.7} parent=31 // pred_region
              %s158 = ssub.s32 256, 1
              loop: start=0, step=1, limit=1
              $region41: #{inception_a_forward.7} parent=39 // loop_pre_header
                _
              $region42: #{inception_a_forward.7} parent=39 // loop_header
                %s160 = sphi 0, %s164
                %p161 = scmp.ge.s32.totalorder %s160, 1
                %s165 = sphi %s150, %s150
                %s166 = sphi %s146, %s146
              $region43: #{inception_a_forward.7} parent=39 // loop_header_branch
                %163 = sbr.rel (%p161) target = $region47
              $region44: #{inception_a_forward.7} parent=39 // loop_body
                %v167 = vld [vmem:[%s165] sm:%s158]
                %168 = vst [vmem:[%s166] sm:%s158] %v167
                %v169 = vld [vmem:[%s165 + $0x20] sm:%s158]
                %170 = vst [vmem:[%s166 + $0x8] sm:%s158] %v169
                %v171 = vld [vmem:[%s165 + $0x40] sm:%s158]
                %172 = vst [vmem:[%s166 + $0x10] sm:%s158] %v171
                %v173 = vld [vmem:[%s165 + $0x60] sm:%s158]
                %174 = vst [vmem:[%s166 + $0x18] sm:%s158] %v173
                %v175 = vld [vmem:[%s165 + $0x80] sm:%s158]
                %176 = vst [vmem:[%s166 + $0x20] sm:%s158] %v175
                %v177 = vld [vmem:[%s165 + $0xa0] sm:%s158]
                %178 = vst [vmem:[%s166 + $0x28] sm:%s158] %v177
                %v179 = vld [vmem:[%s165 + $0xc0] sm:%s158]
                %180 = vst [vmem:[%s166 + $0x30] sm:%s158] %v179
                %v181 = vld [vmem:[%s165 + $0xe0] sm:%s158]
                %182 = vst [vmem:[%s166 + $0x38] sm:%s158] %v181
                %v183 = vld [vmem:[%s165 + $0x100] sm:%s158]
                %184 = vst [vmem:[%s166 + $0x40] sm:%s158] %v183
                %v185 = vld [vmem:[%s165 + $0x120] sm:%s158]
                %186 = vst [vmem:[%s166 + $0x48] sm:%s158] %v185
                %v187 = vld [vmem:[%s165 + $0x140] sm:%s158]
                %188 = vst [vmem:[%s166 + $0x50] sm:%s158] %v187
                %v189 = vld [vmem:[%s165 + $0x160] sm:%s158]
                %190 = vst [vmem:[%s166 + $0x58] sm:%s158] %v189
                %v191 = vld [vmem:[%s165 + $0x180] sm:%s158]
                %192 = vst [vmem:[%s166 + $0x60] sm:%s158] %v191
                %v193 = vld [vmem:[%s165 + $0x1a0] sm:%s158]
                %194 = vst [vmem:[%s166 + $0x68] sm:%s158] %v193
                %v195 = vld [vmem:[%s165 + $0x1c0] sm:%s158]
                %196 = vst [vmem:[%s166 + $0x70] sm:%s158] %v195
                %v197 = vld [vmem:[%s165 + $0x1e0] sm:%s158]
                %198 = vst [vmem:[%s166 + $0x78] sm:%s158] %v197
                %v199 = vld [vmem:[%s165 + $0x200] sm:%s158]
                %200 = vst [vmem:[%s166 + $0x80] sm:%s158] %v199
                %v201 = vld [vmem:[%s165 + $0x220] sm:%s158]
                %202 = vst [vmem:[%s166 + $0x88] sm:%s158] %v201
                %v203 = vld [vmem:[%s165 + $0x240] sm:%s158]
                %204 = vst [vmem:[%s166 + $0x90] sm:%s158] %v203
                %v205 = vld [vmem:[%s165 + $0x260] sm:%s158]
                %206 = vst [vmem:[%s166 + $0x98] sm:%s158] %v205
                %v207 = vld [vmem:[%s165 + $0x280] sm:%s158]
                %208 = vst [vmem:[%s166 + $0xa0] sm:%s158] %v207
                %v209 = vld [vmem:[%s165 + $0x2a0] sm:%s158]
                %210 = vst [vmem:[%s166 + $0xa8] sm:%s158] %v209
                %v211 = vld [vmem:[%s165 + $0x2c0] sm:%s158]
                %212 = vst [vmem:[%s166 + $0xb0] sm:%s158] %v211
                %v213 = vld [vmem:[%s165 + $0x2e0] sm:%s158]
                %214 = vst [vmem:[%s166 + $0xb8] sm:%s158] %v213
                %v215 = vld [vmem:[%s165 + $0x300] sm:%s158]
                %216 = vst [vmem:[%s166 + $0xc0] sm:%s158] %v215
                %v217 = vld [vmem:[%s165 + $0x320] sm:%s158]
                %218 = vst [vmem:[%s166 + $0xc8] sm:%s158] %v217
                %v219 = vld [vmem:[%s165 + $0x340] sm:%s158]
                %220 = vst [vmem:[%s166 + $0xd0] sm:%s158] %v219
                %v221 = vld [vmem:[%s165 + $0x360] sm:%s158]
                %222 = vst [vmem:[%s166 + $0xd8] sm:%s158] %v221
                %v223 = vld [vmem:[%s165 + $0x380] sm:%s158]
                %224 = vst [vmem:[%s166 + $0xe0] sm:%s158] %v223
                %v225 = vld [vmem:[%s165 + $0x3a0] sm:%s158]
                %226 = vst [vmem:[%s166 + $0xe8] sm:%s158] %v225
                %v227 = vld [vmem:[%s165 + $0x3c0] sm:%s158]
                %228 = vst [vmem:[%s166 + $0xf0] sm:%s158] %v227
                %v229 = vld [vmem:[%s165 + $0x3e0] sm:%s158]
                %230 = vst [vmem:[%s166 + $0xf8] sm:%s158] %v229
              $region45: #{inception_a_forward.7} parent=39 // loop_footer
                %s164 = sadd.s32 1, %s160
              $region46: #{inception_a_forward.7} parent=39 // loop_footer_branch
                %159 = sbr.rel target = $region42
              $region47: #{inception_a_forward.7} parent=39 // loop_exit
                _
            $region40: #{inception_a_forward.7} parent=31 // pred_fallthru
              _
          $region32: #{inception_a_forward.7} parent=27 // pred_fallthru
            _
          %307 = vnop
        $region28: #{inception_a_forward.7} parent=23 // pred_fallthru
          _
      $region24: #{inception_a_forward.7} parent=5 // pred_fallthru
        _
      %p308 = scmp.le.s32.totalorder 1, %s10
      %p309 = scmp.lt.s32.totalorder %s10, 3
      %p310 = pnand %p308, %p309
      %p311 = pneg %p310
      // Predicated region
      $region63: #{inception_a_forward.7} parent=5 // pred_check
        _
      $region64: #{inception_a_forward.7} parent=5 // pred_check_branch
        %313 = sbr.rel (%p310) target = $region66
      $region65: #{inception_a_forward.7} parent=5 // pred_region
        %s314 = ssub.s32 %s10, 1
        %s315 = sand.u32 %s23, 1
        %s316 = sand.u32 %s23, 1
        %s317 = smul.addr %s316, 256
        %s318 = scalar_lea.vmem [#allocation2], %s317
        // Predicated region
        $region67: #{inception_a_forward.7} parent=65 // pred_check
          %p319 = pneg %p36
        $region68: #{inception_a_forward.7} parent=65 // pred_check_branch
          %321 = sbr.rel (%p319) target = $region70
        $region69: #{inception_a_forward.7} parent=65 // pred_region
          _
        $region70: #{inception_a_forward.7} parent=65 // pred_fallthru
          _
        // Predicated region
        $region71: #{inception_a_forward.7} parent=65 // pred_check
          %p322 = pneg %p57
        $region72: #{inception_a_forward.7} parent=65 // pred_check_branch
          %324 = sbr.rel (%p322) target = $region74
        $region73: #{inception_a_forward.7} parent=65 // pred_region
          %326 = dma.done [#allocation4], 18432
        $region74: #{inception_a_forward.7} parent=65 // pred_fallthru
          _
        %s327 = sand.u32 %s23, 1
        %s328 = sand.u32 %s23, 1
        %s329 = smul.addr %s328, 256
        %s330 = scalar_lea.vmem [#allocation2], %s329
        %p331 = pneg %p36
        %p332 = pneg %p33
        %p333 = pneg %p57
        %p334 = pneg %p54
        %p335 = pneg %p78
        %p336 = pneg %p75
        %p337 = pneg %p104
        %p338 = pneg %p101
        %p339 = scmp.lt.s32.totalorder %s15, 1
        %s340 = scalar_select %p339, %s15, 1
        %s341 = smul.addr %s340, 32
        %s342 = smul.addr %s341, 8
        %s343 = scalar_lea.vmem %s3, %s342
        %p344 = scmp.lt.s32.totalorder %s15, 1
        %s345 = scalar_select %p344, %s15, 1
        %s346 = smul.addr %s345, 32
        %s347 = smul.addr %s346, 8
        %s348 = scalar_lea.vmem %s3, %s347
        %v349 = vld [vmem:[%s318] sm:$0xff]
        %v350 = vld [vmem:[%s318 + $0x8] sm:$0xff]
        %v351 = vld [vmem:[%s318 + $0x10] sm:$0xff]
        %v352 = vld [vmem:[%s318 + $0x18] sm:$0xff]
        %v353 = vld [vmem:[%s318 + $0x20] sm:$0xff]
        %v354 = vld [vmem:[%s318 + $0x28] sm:$0xff]
        %v355 = vld [vmem:[%s318 + $0x30] sm:$0xff]
        %v356 = vld [vmem:[%s318 + $0x38] sm:$0xff]
        %v357 = vld [vmem:[%s318 + $0x40] sm:$0xff]
        %v358 = vld [vmem:[%s318 + $0x48] sm:$0xff]
        %v359 = vld [vmem:[%s318 + $0x50] sm:$0xff]
        %v360 = vld [vmem:[%s318 + $0x58] sm:$0xff]
        %v361 = vld [vmem:[%s318 + $0x60] sm:$0xff]
        %v362 = vld [vmem:[%s318 + $0x68] sm:$0xff]
        %v363 = vld [vmem:[%s318 + $0x70] sm:$0xff]
        %v364 = vld [vmem:[%s318 + $0x78] sm:$0xff]
        %v365 = vld [vmem:[%s318 + $0x80] sm:$0xff]
        %v366 = vld [vmem:[%s318 + $0x88] sm:$0xff]
        %v367 = vld [vmem:[%s318 + $0x90] sm:$0xff]
        %v368 = vld [vmem:[%s318 + $0x98] sm:$0xff]
        %v369 = vld [vmem:[%s318 + $0xa0] sm:$0xff]
        %v370 = vld [vmem:[%s318 + $0xa8] sm:$0xff]
        %v371 = vld [vmem:[%s318 + $0xb0] sm:$0xff]
        %v372 = vld [vmem:[%s318 + $0xb8] sm:$0xff]
        %v373 = vld [vmem:[%s318 + $0xc0] sm:$0xff]
        %v374 = vld [vmem:[%s318 + $0xc8] sm:$0xff]
        %v375 = vld [vmem:[%s318 + $0xd0] sm:$0xff]
        %v376 = vld [vmem:[%s318 + $0xd8] sm:$0xff]
        %v377 = vld [vmem:[%s318 + $0xe0] sm:$0xff]
        %v378 = vld [vmem:[%s318 + $0xe8] sm:$0xff]
        %v379 = vld [vmem:[%s318 + $0xf0] sm:$0xff]
        %v380 = vld [vmem:[%s318 + $0xf8] sm:$0xff]
        %vm414 = vcmask 1040384
        %v415 = vrot.slane 0.0, 7
        %v416 = vsel %vm414, %v415, %v415
        %v417 = vrot.slane %v349, 7
        %v418 = vrot.slane %v350, 7
        %v419 = vsel %vm414, %v417, %v418
        %v420 = vrot.slane %v351, 7
        %v421 = vrot.slane %v352, 7
        %v422 = vsel %vm414, %v420, %v421
        %v423 = vrot.slane %v353, 7
        %v424 = vrot.slane %v354, 7
        %v425 = vsel %vm414, %v423, %v424
        %v426 = vrot.slane %v355, 7
        %v427 = vrot.slane %v356, 7
        %v428 = vsel %vm414, %v426, %v427
        %v429 = vrot.slane %v357, 7
        %v430 = vrot.slane %v358, 7
        %v431 = vsel %vm414, %v429, %v430
        %v432 = vrot.slane %v359, 7
        %v433 = vrot.slane %v360, 7
        %v434 = vsel %vm414, %v432, %v433
        %v435 = vrot.slane %v361, 7
        %v436 = vrot.slane %v362, 7
        %v437 = vsel %vm414, %v435, %v436
        %v438 = vrot.slane %v363, 7
        %v439 = vrot.slane %v364, 7
        %v440 = vsel %vm414, %v438, %v439
        %v441 = vrot.slane %v365, 7
        %v442 = vrot.slane %v366, 7
        %v443 = vsel %vm414, %v441, %v442
        %v444 = vrot.slane %v367, 7
        %v445 = vrot.slane %v368, 7
        %v446 = vsel %vm414, %v444, %v445
        %v447 = vrot.slane %v369, 7
        %v448 = vrot.slane %v370, 7
        %v449 = vsel %vm414, %v447, %v448
        %v450 = vrot.slane %v371, 7
        %v451 = vrot.slane %v372, 7
        %v452 = vsel %vm414, %v450, %v451
        %v453 = vrot.slane %v373, 7
        %v454 = vrot.slane %v374, 7
        %v455 = vsel %vm414, %v453, %v454
        %v456 = vrot.slane %v375, 7
        %v457 = vrot.slane %v376, 7
        %v458 = vsel %vm414, %v456, %v457
        %v459 = vrot.slane %v377, 7
        %v460 = vrot.slane %v378, 7
        %v461 = vsel %vm414, %v459, %v460
        %v462 = vrot.slane %v379, 7
        %v463 = vrot.slane %v380, 7
        %v464 = vsel %vm414, %v462, %v463
        %v515 = vsel %vm414, 0.0, %v415
        %v516 = vsel %vm414, 0.0, %v417
        %v517 = vsel %vm414, 0.0, %v420
        %v518 = vsel %vm414, 0.0, %v423
        %v519 = vsel %vm414, 0.0, %v426
        %v520 = vsel %vm414, 0.0, %v429
        %v521 = vsel %vm414, 0.0, %v432
        %v522 = vsel %vm414, 0.0, %v435
        %v523 = vsel %vm414, 0.0, %v438
        %v524 = vsel %vm414, 0.0, %v441
        %v525 = vsel %vm414, 0.0, %v444
        %v526 = vsel %vm414, 0.0, %v447
        %v527 = vsel %vm414, 0.0, %v450
        %v528 = vsel %vm414, 0.0, %v453
        %v529 = vsel %vm414, 0.0, %v456
        %v530 = vsel %vm414, 0.0, %v459
        %v531 = vsel %vm414, 0.0, %v462
        %v532 = vsel %vm414, %v415, 0.0
        %v533 = vsel %vm414, %v418, 0.0
        %v534 = vsel %vm414, %v421, 0.0
        %v535 = vsel %vm414, %v424, 0.0
        %v536 = vsel %vm414, %v427, 0.0
        %v537 = vsel %vm414, %v430, 0.0
        %v538 = vsel %vm414, %v433, 0.0
        %v539 = vsel %vm414, %v436, 0.0
        %v540 = vsel %vm414, %v439, 0.0
        %v541 = vsel %vm414, %v442, 0.0
        %v542 = vsel %vm414, %v445, 0.0
        %v543 = vsel %vm414, %v448, 0.0
        %v544 = vsel %vm414, %v451, 0.0
        %v545 = vsel %vm414, %v454, 0.0
        %v546 = vsel %vm414, %v457, 0.0
        %v547 = vsel %vm414, %v460, 0.0
        %v548 = vsel %vm414, %v463, 0.0
        %vm581 = vcmask 1046528
        %v582 = vrot.slane %v515, 1
        %v583 = vrot.slane %v416, 1
        %v584 = vsel %vm581, %v582, %v583
        %v585 = vrot.slane %v532, 1
        %v586 = vsel %vm581, %v583, %v585
        %v587 = vrot.slane %v516, 1
        %v588 = vrot.slane %v419, 1
        %v589 = vsel %vm581, %v587, %v588
        %v590 = vrot.slane %v533, 1
        %v591 = vsel %vm581, %v588, %v590
        %v592 = vrot.slane %v517, 1
        %v593 = vrot.slane %v422, 1
        %v594 = vsel %vm581, %v592, %v593
        %v595 = vrot.slane %v534, 1
        %v596 = vsel %vm581, %v593, %v595
        %v597 = vrot.slane %v518, 1
        %v598 = vrot.slane %v425, 1
        %v599 = vsel %vm581, %v597, %v598
        %v600 = vrot.slane %v535, 1
        %v601 = vsel %vm581, %v598, %v600
        %v602 = vrot.slane %v519, 1
        %v603 = vrot.slane %v428, 1
        %v604 = vsel %vm581, %v602, %v603
        %v605 = vrot.slane %v536, 1
        %v606 = vsel %vm581, %v603, %v605
        %v607 = vrot.slane %v520, 1
        %v608 = vrot.slane %v431, 1
        %v609 = vsel %vm581, %v607, %v608
        %v610 = vrot.slane %v537, 1
        %v611 = vsel %vm581, %v608, %v610
        %v612 = vrot.slane %v521, 1
        %v613 = vrot.slane %v434, 1
        %v614 = vsel %vm581, %v612, %v613
        %v615 = vrot.slane %v538, 1
        %v616 = vsel %vm581, %v613, %v615
        %v617 = vrot.slane %v522, 1
        %v618 = vrot.slane %v437, 1
        %v619 = vsel %vm581, %v617, %v618
        %v620 = vrot.slane %v539, 1
        %v621 = vsel %vm581, %v618, %v620
        %v622 = vrot.slane %v523, 1
        %v623 = vrot.slane %v440, 1
        %v624 = vsel %vm581, %v622, %v623
        %v625 = vrot.slane %v540, 1
        %v626 = vsel %vm581, %v623, %v625
        %v627 = vrot.slane %v524, 1
        %v628 = vrot.slane %v443, 1
        %v629 = vsel %vm581, %v627, %v628
        %v630 = vrot.slane %v541, 1
        %v631 = vsel %vm581, %v628, %v630
        %v632 = vrot.slane %v525, 1
        %v633 = vrot.slane %v446, 1
        %v634 = vsel %vm581, %v632, %v633
        %v635 = vrot.slane %v542, 1
        %v636 = vsel %vm581, %v633, %v635
        %v637 = vrot.slane %v526, 1
        %v638 = vrot.slane %v449, 1
        %v639 = vsel %vm581, %v637, %v638
        %v640 = vrot.slane %v543, 1
        %v641 = vsel %vm581, %v638, %v640
        %v642 = vrot.slane %v527, 1
        %v643 = vrot.slane %v452, 1
        %v644 = vsel %vm581, %v642, %v643
        %v645 = vrot.slane %v544, 1
        %v646 = vsel %vm581, %v643, %v645
        %v647 = vrot.slane %v528, 1
        %v648 = vrot.slane %v455, 1
        %v649 = vsel %vm581, %v647, %v648
        %v650 = vrot.slane %v545, 1
        %v651 = vsel %vm581, %v648, %v650
        %v652 = vrot.slane %v529, 1
        %v653 = vrot.slane %v458, 1
        %v654 = vsel %vm581, %v652, %v653
        %v655 = vrot.slane %v546, 1
        %v656 = vsel %vm581, %v653, %v655
        %v657 = vrot.slane %v530, 1
        %v658 = vrot.slane %v461, 1
        %v659 = vsel %vm581, %v657, %v658
        %v660 = vrot.slane %v547, 1
        %v661 = vsel %vm581, %v658, %v660
        %vm694 = vcmask 1045504
        %v695 = vrot.slane %v515, 2
        %v696 = vrot.slane %v416, 2
        %v697 = vsel %vm694, %v695, %v696
        %v698 = vrot.slane %v532, 2
        %v699 = vsel %vm694, %v696, %v698
        %v700 = vrot.slane %v516, 2
        %v701 = vrot.slane %v419, 2
        %v702 = vsel %vm694, %v700, %v701
        %v703 = vrot.slane %v533, 2
        %v704 = vsel %vm694, %v701, %v703
        %v705 = vrot.slane %v517, 2
        %v706 = vrot.slane %v422, 2
        %v707 = vsel %vm694, %v705, %v706
        %v708 = vrot.slane %v534, 2
        %v709 = vsel %vm694, %v706, %v708
        %v710 = vrot.slane %v518, 2
        %v711 = vrot.slane %v425, 2
        %v712 = vsel %vm694, %v710, %v711
        %v713 = vrot.slane %v535, 2
        %v714 = vsel %vm694, %v711, %v713
        %v715 = vrot.slane %v519, 2
        %v716 = vrot.slane %v428, 2
        %v717 = vsel %vm694, %v715, %v716
        %v718 = vrot.slane %v536, 2
        %v719 = vsel %vm694, %v716, %v718
        %v720 = vrot.slane %v520, 2
        %v721 = vrot.slane %v431, 2
        %v722 = vsel %vm694, %v720, %v721
        %v723 = vrot.slane %v537, 2
        %v724 = vsel %vm694, %v721, %v723
        %v725 = vrot.slane %v521, 2
        %v726 = vrot.slane %v434, 2
        %v727 = vsel %vm694, %v725, %v726
        %v728 = vrot.slane %v538, 2
        %v729 = vsel %vm694, %v726, %v728
        %v730 = vrot.slane %v522, 2
        %v731 = vrot.slane %v437, 2
        %v732 = vsel %vm694, %v730, %v731
        %v733 = vrot.slane %v539, 2
        %v734 = vsel %vm694, %v731, %v733
        %v735 = vrot.slane %v523, 2
        %v736 = vrot.slane %v440, 2
        %v737 = vsel %vm694, %v735, %v736
        %v738 = vrot.slane %v540, 2
        %v739 = vsel %vm694, %v736, %v738
        %v740 = vrot.slane %v524, 2
        %v741 = vrot.slane %v443, 2
        %v742 = vsel %vm694, %v740, %v741
        %v743 = vrot.slane %v541, 2
        %v744 = vsel %vm694, %v741, %v743
        %v745 = vrot.slane %v525, 2
        %v746 = vrot.slane %v446, 2
        %v747 = vsel %vm694, %v745, %v746
        %v748 = vrot.slane %v542, 2
        %v749 = vsel %vm694, %v746, %v748
        %v750 = vrot.slane %v526, 2
        %v751 = vrot.slane %v449, 2
        %v752 = vsel %vm694, %v750, %v751
        %v753 = vrot.slane %v543, 2
        %v754 = vsel %vm694, %v751, %v753
        %v755 = vrot.slane %v527, 2
        %v756 = vrot.slane %v452, 2
        %v757 = vsel %vm694, %v755, %v756
        %v758 = vrot.slane %v544, 2
        %v759 = vsel %vm694, %v756, %v758
        %v760 = vrot.slane %v528, 2
        %v761 = vrot.slane %v455, 2
        %v762 = vsel %vm694, %v760, %v761
        %v763 = vrot.slane %v545, 2
        %v764 = vsel %vm694, %v761, %v763
        %v765 = vrot.slane %v529, 2
        %v766 = vrot.slane %v458, 2
        %v767 = vsel %vm694, %v765, %v766
        %v768 = vrot.slane %v546, 2
        %v769 = vsel %vm694, %v766, %v768
        %v770 = vrot.slane %v530, 2
        %v771 = vrot.slane %v461, 2
        %v772 = vsel %vm694, %v770, %v771
        %v773 = vrot.slane %v547, 2
        %v774 = vsel %vm694, %v771, %v773
        %v809 = vrot.slane %v531, 1
        %v810 = vrot.slane %v464, 1
        %v811 = vsel %vm581, %v809, %v810
        %v812 = vrot.slane %v548, 1
        %v813 = vsel %vm581, %v810, %v812
        %v816 = vrot.slane %v531, 2
        %v817 = vrot.slane %v464, 2
        %v818 = vsel %vm694, %v816, %v817
        %v819 = vrot.slane %v548, 2
        %v820 = vsel %vm694, %v817, %v819
        %v823 = vld [vmem:[#allocation3] sm:$0xff]
        %v824 = vld [vmem:[#allocation3 + $0x8] sm:$0xff]
        %v825 = vld [vmem:[#allocation3 + $0x10] sm:$0xff]
        %v826 = vld [vmem:[#allocation3 + $0x18] sm:$0xff]
        %v827 = vld [vmem:[#allocation3 + $0x20] sm:$0xff]
        %v828 = vld [vmem:[#allocation3 + $0x28] sm:$0xff]
        %v829 = vld [vmem:[#allocation3 + $0x30] sm:$0xff]
        %v830 = vld [vmem:[#allocation3 + $0x38] sm:$0xff]
        %v831 = vld [vmem:[#allocation3 + $0x40] sm:$0xff]
        %v832 = vld [vmem:[#allocation3 + $0x48] sm:$0xff]
        %v833 = vld [vmem:[#allocation3 + $0x50] sm:$0xff]
        %v834 = vld [vmem:[#allocation3 + $0x58] sm:$0xff]
        %v835 = vld [vmem:[#allocation3 + $0x60] sm:$0xff]
        %v836 = vld [vmem:[#allocation3 + $0x68] sm:$0xff]
        %v837 = vld [vmem:[#allocation3 + $0x70] sm:$0xff]
        %v838 = vld [vmem:[#allocation3 + $0x78] sm:$0xff]
        %v839 = vld [vmem:[#allocation3 + $0x80] sm:$0xff]
        %v840 = vld [vmem:[#allocation3 + $0x88] sm:$0xff]
        %v841 = vld [vmem:[#allocation3 + $0x90] sm:$0xff]
        %v842 = vld [vmem:[#allocation3 + $0x98] sm:$0xff]
        %v843 = vld [vmem:[#allocation3 + $0xa0] sm:$0xff]
        %v844 = vld [vmem:[#allocation3 + $0xa8] sm:$0xff]
        %v845 = vld [vmem:[#allocation3 + $0xb0] sm:$0xff]
        %v846 = vld [vmem:[#allocation3 + $0xb8] sm:$0xff]
        %v847 = vld [vmem:[#allocation3 + $0xc0] sm:$0xff]
        %v848 = vld [vmem:[#allocation3 + $0xc8] sm:$0xff]
        %v849 = vld [vmem:[#allocation3 + $0xd0] sm:$0xff]
        %v850 = vld [vmem:[#allocation3 + $0xd8] sm:$0xff]
        %v851 = vld [vmem:[#allocation3 + $0xe0] sm:$0xff]
        %v852 = vld [vmem:[#allocation3 + $0xe8] sm:$0xff]
        %v853 = vld [vmem:[#allocation3 + $0xf0] sm:$0xff]
        %v854 = vld [vmem:[#allocation3 + $0xf8] sm:$0xff]
        %v855 = vld [vmem:[#allocation3 + $0x100] sm:$0xff]
        %v856 = vld [vmem:[#allocation3 + $0x108] sm:$0xff]
        %v857 = vld [vmem:[#allocation3 + $0x110] sm:$0xff]
        %v858 = vld [vmem:[#allocation3 + $0x118] sm:$0xff]
        %v859 = vld [vmem:[#allocation3 + $0x120] sm:$0xff]
        %v860 = vld [vmem:[#allocation3 + $0x128] sm:$0xff]
        %v861 = vld [vmem:[#allocation3 + $0x130] sm:$0xff]
        %v862 = vld [vmem:[#allocation3 + $0x138] sm:$0xff]
        %v863 = vld [vmem:[#allocation3 + $0x140] sm:$0xff]
        %v864 = vld [vmem:[#allocation3 + $0x148] sm:$0xff]
        %v865 = vld [vmem:[#allocation3 + $0x150] sm:$0xff]
        %v866 = vld [vmem:[#allocation3 + $0x158] sm:$0xff]
        %v867 = vld [vmem:[#allocation3 + $0x160] sm:$0xff]
        %v868 = vld [vmem:[#allocation3 + $0x168] sm:$0xff]
        %v869 = vld [vmem:[#allocation3 + $0x170] sm:$0xff]
        %v870 = vld [vmem:[#allocation3 + $0x178] sm:$0xff]
        %v871 = vld [vmem:[#allocation3 + $0x180] sm:$0xff]
        %v872 = vld [vmem:[#allocation3 + $0x188] sm:$0xff]
        %v873 = vld [vmem:[#allocation3 + $0x190] sm:$0xff]
        %v874 = vld [vmem:[#allocation3 + $0x198] sm:$0xff]
        %v875 = vld [vmem:[#allocation3 + $0x1a0] sm:$0xff]
        %v876 = vld [vmem:[#allocation3 + $0x1a8] sm:$0xff]
        %v877 = vld [vmem:[#allocation3 + $0x1b0] sm:$0xff]
        %v878 = vld [vmem:[#allocation3 + $0x1b8] sm:$0xff]
        %v879 = vld [vmem:[#allocation3 + $0x1c0] sm:$0xff]
        %v880 = vld [vmem:[#allocation3 + $0x1c8] sm:$0xff]
        %v881 = vld [vmem:[#allocation3 + $0x1d0] sm:$0xff]
        %v882 = vld [vmem:[#allocation3 + $0x1d8] sm:$0xff]
        %v883 = vld [vmem:[#allocation3 + $0x1e0] sm:$0xff]
        %v884 = vld [vmem:[#allocation3 + $0x1e8] sm:$0xff]
        %v885 = vld [vmem:[#allocation3 + $0x1f0] sm:$0xff]
        %v886 = vld [vmem:[#allocation3 + $0x1f8] sm:$0xff]
        %v887 = vld [vmem:[#allocation3 + $0x200] sm:$0xff]
        %v888 = vld [vmem:[#allocation3 + $0x208] sm:$0xff]
        %v889 = vld [vmem:[#allocation3 + $0x210] sm:$0xff]
        %v890 = vld [vmem:[#allocation3 + $0x218] sm:$0xff]
        %v891 = vld [vmem:[#allocation3 + $0x220] sm:$0xff]
        %v892 = vld [vmem:[#allocation3 + $0x228] sm:$0xff]
        %v893 = vld [vmem:[#allocation3 + $0x230] sm:$0xff]
        %v894 = vld [vmem:[#allocation3 + $0x238] sm:$0xff]
        %v895 = vld [vmem:[#allocation3 + $0x240] sm:$0xff]
        %v896 = vld [vmem:[#allocation3 + $0x248] sm:$0xff]
        %v897 = vld [vmem:[#allocation3 + $0x250] sm:$0xff]
        %v898 = vld [vmem:[#allocation3 + $0x258] sm:$0xff]
        %v899 = vld [vmem:[#allocation3 + $0x260] sm:$0xff]
        %v900 = vld [vmem:[#allocation3 + $0x268] sm:$0xff]
        %v901 = vld [vmem:[#allocation3 + $0x270] sm:$0xff]
        %v902 = vld [vmem:[#allocation3 + $0x278] sm:$0xff]
        %v903 = vld [vmem:[#allocation3 + $0x280] sm:$0xff]
        %v904 = vld [vmem:[#allocation3 + $0x288] sm:$0xff]
        %v905 = vld [vmem:[#allocation3 + $0x290] sm:$0xff]
        %v906 = vld [vmem:[#allocation3 + $0x298] sm:$0xff]
        %v907 = vld [vmem:[#allocation3 + $0x2a0] sm:$0xff]
        %v908 = vld [vmem:[#allocation3 + $0x2a8] sm:$0xff]
        %v909 = vld [vmem:[#allocation3 + $0x2b0] sm:$0xff]
        %v910 = vld [vmem:[#allocation3 + $0x2b8] sm:$0xff]
        %v911 = vld [vmem:[#allocation3 + $0x2c0] sm:$0xff]
        %v912 = vld [vmem:[#allocation3 + $0x2c8] sm:$0xff]
        %v913 = vld [vmem:[#allocation3 + $0x2d0] sm:$0xff]
        %v914 = vld [vmem:[#allocation3 + $0x2d8] sm:$0xff]
        %v915 = vld [vmem:[#allocation3 + $0x2e0] sm:$0xff]
        %v916 = vld [vmem:[#allocation3 + $0x2e8] sm:$0xff]
        %v917 = vld [vmem:[#allocation3 + $0x2f0] sm:$0xff]
        %v918 = vld [vmem:[#allocation3 + $0x2f8] sm:$0xff]
        %v919 = vld [vmem:[#allocation3 + $0x300] sm:$0xff]
        %v920 = vld [vmem:[#allocation3 + $0x308] sm:$0xff]
        %v921 = vld [vmem:[#allocation3 + $0x310] sm:$0xff]
        %v922 = vld [vmem:[#allocation3 + $0x318] sm:$0xff]
        %v923 = vld [vmem:[#allocation3 + $0x320] sm:$0xff]
        %v924 = vld [vmem:[#allocation3 + $0x328] sm:$0xff]
        %v925 = vld [vmem:[#allocation3 + $0x330] sm:$0xff]
        %v926 = vld [vmem:[#allocation3 + $0x338] sm:$0xff]
        %v927 = vld [vmem:[#allocation3 + $0x340] sm:$0xff]
        %v928 = vld [vmem:[#allocation3 + $0x348] sm:$0xff]
        %v929 = vld [vmem:[#allocation3 + $0x350] sm:$0xff]
        %v930 = vld [vmem:[#allocation3 + $0x358] sm:$0xff]
        %v931 = vld [vmem:[#allocation3 + $0x360] sm:$0xff]
        %v932 = vld [vmem:[#allocation3 + $0x368] sm:$0xff]
        %v933 = vld [vmem:[#allocation3 + $0x370] sm:$0xff]
        %v934 = vld [vmem:[#allocation3 + $0x378] sm:$0xff]
        %v935 = vld [vmem:[#allocation3 + $0x380] sm:$0xff]
        %v936 = vld [vmem:[#allocation3 + $0x388] sm:$0xff]
        %v937 = vld [vmem:[#allocation3 + $0x390] sm:$0xff]
        %v938 = vld [vmem:[#allocation3 + $0x398] sm:$0xff]
        %v939 = vld [vmem:[#allocation3 + $0x3a0] sm:$0xff]
        %v940 = vld [vmem:[#allocation3 + $0x3a8] sm:$0xff]
        %v941 = vld [vmem:[#allocation3 + $0x3b0] sm:$0xff]
        %v942 = vld [vmem:[#allocation3 + $0x3b8] sm:$0xff]
        %v943 = vld [vmem:[#allocation3 + $0x3c0] sm:$0xff]
        %v944 = vld [vmem:[#allocation3 + $0x3c8] sm:$0xff]
        %v945 = vld [vmem:[#allocation3 + $0x3d0] sm:$0xff]
        %v946 = vld [vmem:[#allocation3 + $0x3d8] sm:$0xff]
        %v947 = vld [vmem:[#allocation3 + $0x3e0] sm:$0xff]
        %v948 = vld [vmem:[#allocation3 + $0x3e8] sm:$0xff]
        %v949 = vld [vmem:[#allocation3 + $0x3f0] sm:$0xff]
        %v950 = vld [vmem:[#allocation3 + $0x3f8] sm:$0xff]
        %v951 = vld [vmem:[#allocation3 + $0x400] sm:$0xff]
        %v952 = vld [vmem:[#allocation3 + $0x408] sm:$0xff]
        %v953 = vld [vmem:[#allocation3 + $0x410] sm:$0xff]
        %v954 = vld [vmem:[#allocation3 + $0x418] sm:$0xff]
        %v955 = vld [vmem:[#allocation3 + $0x420] sm:$0xff]
        %v956 = vld [vmem:[#allocation3 + $0x428] sm:$0xff]
        %v957 = vld [vmem:[#allocation3 + $0x430] sm:$0xff]
        %v958 = vld [vmem:[#allocation3 + $0x438] sm:$0xff]
        %v959 = vld [vmem:[#allocation3 + $0x440] sm:$0xff]
        %v960 = vld [vmem:[#allocation3 + $0x448] sm:$0xff]
        %v961 = vld [vmem:[#allocation3 + $0x450] sm:$0xff]
        %v962 = vld [vmem:[#allocation3 + $0x458] sm:$0xff]
        %v963 = vld [vmem:[#allocation3 + $0x460] sm:$0xff]
        %v964 = vld [vmem:[#allocation3 + $0x468] sm:$0xff]
        %v965 = vld [vmem:[#allocation3 + $0x470] sm:$0xff]
        %v966 = vld [vmem:[#allocation3 + $0x478] sm:$0xff]
        %v967 = vld [vmem:[%s2] sm:$0x1]
        %v969 = vperm.slane %v967, 0
        %971 = vmatpush.msra.mxu0 %v838
        %972 = vmatpush.msra.mxu0 %v837
        %973 = vmatpush.msra.mxu0 %v836
        %974 = vmatpush.msra.mxu0 %v835
        %975 = vmatpush.msra.mxu0 %v834
        %976 = vmatpush.msra.mxu0 %v833
        %977 = vmatpush.msra.mxu0 %v832
        %978 = vmatpush.msra.mxu0 %v831
        %979 = vmatpush.msra.mxu0 %v830
        %980 = vmatpush.msra.mxu0 %v829
        %981 = vmatpush.msra.mxu0 %v828
        %982 = vmatpush.msra.mxu0 %v827
        %983 = vmatpush.msra.mxu0 %v826
        %984 = vmatpush.msra.mxu0 %v825
        %985 = vmatpush.msra.mxu0 %v824
        %986 = vmatpush.msra.mxu0 %v823
        %987 = vmatmul.f32.gmra.mxu0 %v515
        %v988 = vpop.f32.mrf.mxu0
        %v989 = vadd.f32 %v969, %v988
        %990 = vmatmul.f32.gmra.mxu0 %v416
        %v991 = vpop.f32.mrf.mxu0
        %v992 = vadd.f32 %v969, %v991
        %993 = vmatmul.f32.gmra.mxu0 %v516
        %v994 = vpop.f32.mrf.mxu0
        %v995 = vadd.f32 %v969, %v994
        %996 = vmatmul.f32.gmra.mxu0 %v419
        %v997 = vpop.f32.mrf.mxu0
        %v998 = vadd.f32 %v969, %v997
        %999 = vmatmul.f32.gmra.mxu0 %v517
        %v1000 = vpop.f32.mrf.mxu0
        %v1001 = vadd.f32 %v969, %v1000
        %1002 = vmatmul.f32.gmra.mxu0 %v422
        %v1003 = vpop.f32.mrf.mxu0
        %v1004 = vadd.f32 %v969, %v1003
        %1005 = vmatmul.f32.gmra.mxu0 %v518
        %v1006 = vpop.f32.mrf.mxu0
        %v1007 = vadd.f32 %v969, %v1006
        %1008 = vmatmul.f32.gmra.mxu0 %v425
        %v1009 = vpop.f32.mrf.mxu0
        %v1010 = vadd.f32 %v969, %v1009
        %1011 = vmatmul.f32.gmra.mxu0 %v519
        %v1012 = vpop.f32.mrf.mxu0
        %v1013 = vadd.f32 %v969, %v1012
        %1014 = vmatmul.f32.gmra.mxu0 %v428
        %v1015 = vpop.f32.mrf.mxu0
        %v1016 = vadd.f32 %v969, %v1015
        %1017 = vmatmul.f32.gmra.mxu0 %v520
        %v1018 = vpop.f32.mrf.mxu0
        %v1019 = vadd.f32 %v969, %v1018
        %1020 = vmatmul.f32.gmra.mxu0 %v431
        %v1021 = vpop.f32.mrf.mxu0
        %v1022 = vadd.f32 %v969, %v1021
        %1023 = vmatmul.f32.gmra.mxu0 %v521
        %v1024 = vpop.f32.mrf.mxu0
        %v1025 = vadd.f32 %v969, %v1024
        %1026 = vmatmul.f32.gmra.mxu0 %v434
        %v1027 = vpop.f32.mrf.mxu0
        %v1028 = vadd.f32 %v969, %v1027
        %1029 = vmatmul.f32.gmra.mxu0 %v522
        %v1030 = vpop.f32.mrf.mxu0
        %v1031 = vadd.f32 %v969, %v1030
        %1032 = vmatmul.f32.gmra.mxu0 %v437
        %v1033 = vpop.f32.mrf.mxu0
        %v1034 = vadd.f32 %v969, %v1033
        %1035 = vmatmul.f32.gmra.mxu0 %v523
        %v1036 = vpop.f32.mrf.mxu0
        %v1037 = vadd.f32 %v969, %v1036
        %1038 = vmatmul.f32.gmra.mxu0 %v440
        %v1039 = vpop.f32.mrf.mxu0
        %v1040 = vadd.f32 %v969, %v1039
        %1041 = vmatmul.f32.gmra.mxu0 %v524
        %v1042 = vpop.f32.mrf.mxu0
        %v1043 = vadd.f32 %v969, %v1042
        %1044 = vmatmul.f32.gmra.mxu0 %v443
        %v1045 = vpop.f32.mrf.mxu0
        %v1046 = vadd.f32 %v969, %v1045
        %1047 = vmatmul.f32.gmra.mxu0 %v525
        %v1048 = vpop.f32.mrf.mxu0
        %v1049 = vadd.f32 %v969, %v1048
        %1050 = vmatmul.f32.gmra.mxu0 %v446
        %v1051 = vpop.f32.mrf.mxu0
        %v1052 = vadd.f32 %v969, %v1051
        %1053 = vmatmul.f32.gmra.mxu0 %v526
        %v1054 = vpop.f32.mrf.mxu0
        %v1055 = vadd.f32 %v969, %v1054
        %1056 = vmatmul.f32.gmra.mxu0 %v449
        %v1057 = vpop.f32.mrf.mxu0
        %v1058 = vadd.f32 %v969, %v1057
        %1059 = vmatmul.f32.gmra.mxu0 %v527
        %v1060 = vpop.f32.mrf.mxu0
        %v1061 = vadd.f32 %v969, %v1060
        %1062 = vmatmul.f32.gmra.mxu0 %v452
        %v1063 = vpop.f32.mrf.mxu0
        %v1064 = vadd.f32 %v969, %v1063
        %1065 = vmatmul.f32.gmra.mxu0 %v528
        %v1066 = vpop.f32.mrf.mxu0
        %v1067 = vadd.f32 %v969, %v1066
        %1068 = vmatmul.f32.gmra.mxu0 %v455
        %v1069 = vpop.f32.mrf.mxu0
        %v1070 = vadd.f32 %v969, %v1069
        %1071 = vmatmul.f32.gmra.mxu0 %v529
        %v1072 = vpop.f32.mrf.mxu0
        %v1073 = vadd.f32 %v969, %v1072
        %1074 = vmatmul.f32.gmra.mxu0 %v458
        %v1075 = vpop.f32.mrf.mxu0
        %v1076 = vadd.f32 %v969, %v1075
        %1077 = vmatmul.f32.gmra.mxu0 %v530
        %v1078 = vpop.f32.mrf.mxu0
        %v1079 = vadd.f32 %v969, %v1078
        %1080 = vmatmul.f32.gmra.mxu0 %v461
        %v1081 = vpop.f32.mrf.mxu0
        %v1082 = vadd.f32 %v969, %v1081
        %1083 = vdwg.mxu0
        %1084 = vmatpush.msra.mxu0 %v854
        %1085 = vmatpush.msra.mxu0 %v853
        %1086 = vmatpush.msra.mxu0 %v852
        %1087 = vmatpush.msra.mxu0 %v851
        %1088 = vmatpush.msra.mxu0 %v850
        %1089 = vmatpush.msra.mxu0 %v849
        %1090 = vmatpush.msra.mxu0 %v848
        %1091 = vmatpush.msra.mxu0 %v847
        %1092 = vmatpush.msra.mxu0 %v846
        %1093 = vmatpush.msra.mxu0 %v845
        %1094 = vmatpush.msra.mxu0 %v844
        %1095 = vmatpush.msra.mxu0 %v843
        %1096 = vmatpush.msra.mxu0 %v842
        %1097 = vmatpush.msra.mxu0 %v841
        %1098 = vmatpush.msra.mxu0 %v840
        %1099 = vmatpush.msra.mxu0 %v839
        %1100 = vmatmul.f32.gmra.mxu0 %v584
        %v1101 = vpop.f32.mrf.mxu0
        %v1102 = vadd.f32 %v989, %v1101
        %1103 = vmatmul.f32.gmra.mxu0 %v586
        %v1104 = vpop.f32.mrf.mxu0
        %v1105 = vadd.f32 %v992, %v1104
        %1106 = vmatmul.f32.gmra.mxu0 %v589
        %v1107 = vpop.f32.mrf.mxu0
        %v1108 = vadd.f32 %v995, %v1107
        %1109 = vmatmul.f32.gmra.mxu0 %v591
        %v1110 = vpop.f32.mrf.mxu0
        %v1111 = vadd.f32 %v998, %v1110
        %1112 = vmatmul.f32.gmra.mxu0 %v594
        %v1113 = vpop.f32.mrf.mxu0
        %v1114 = vadd.f32 %v1001, %v1113
        %1115 = vmatmul.f32.gmra.mxu0 %v596
        %v1116 = vpop.f32.mrf.mxu0
        %v1117 = vadd.f32 %v1004, %v1116
        %1118 = vmatmul.f32.gmra.mxu0 %v599
        %v1119 = vpop.f32.mrf.mxu0
        %v1120 = vadd.f32 %v1007, %v1119
        %1121 = vmatmul.f32.gmra.mxu0 %v601
        %v1122 = vpop.f32.mrf.mxu0
        %v1123 = vadd.f32 %v1010, %v1122
        %1124 = vmatmul.f32.gmra.mxu0 %v604
        %v1125 = vpop.f32.mrf.mxu0
        %v1126 = vadd.f32 %v1013, %v1125
        %1127 = vmatmul.f32.gmra.mxu0 %v606
        %v1128 = vpop.f32.mrf.mxu0
        %v1129 = vadd.f32 %v1016, %v1128
        %1130 = vmatmul.f32.gmra.mxu0 %v609
        %v1131 = vpop.f32.mrf.mxu0
        %v1132 = vadd.f32 %v1019, %v1131
        %1133 = vmatmul.f32.gmra.mxu0 %v611
        %v1134 = vpop.f32.mrf.mxu0
        %v1135 = vadd.f32 %v1022, %v1134
        %1136 = vmatmul.f32.gmra.mxu0 %v614
        %v1137 = vpop.f32.mrf.mxu0
        %v1138 = vadd.f32 %v1025, %v1137
        %1139 = vmatmul.f32.gmra.mxu0 %v616
        %v1140 = vpop.f32.mrf.mxu0
        %v1141 = vadd.f32 %v1028, %v1140
        %1142 = vmatmul.f32.gmra.mxu0 %v619
        %v1143 = vpop.f32.mrf.mxu0
        %v1144 = vadd.f32 %v1031, %v1143
        %1145 = vmatmul.f32.gmra.mxu0 %v621
        %v1146 = vpop.f32.mrf.mxu0
        %v1147 = vadd.f32 %v1034, %v1146
        %1148 = vmatmul.f32.gmra.mxu0 %v624
        %v1149 = vpop.f32.mrf.mxu0
        %v1150 = vadd.f32 %v1037, %v1149
        %1151 = vmatmul.f32.gmra.mxu0 %v626
        %v1152 = vpop.f32.mrf.mxu0
        %v1153 = vadd.f32 %v1040, %v1152
        %1154 = vmatmul.f32.gmra.mxu0 %v629
        %v1155 = vpop.f32.mrf.mxu0
        %v1156 = vadd.f32 %v1043, %v1155
        %1157 = vmatmul.f32.gmra.mxu0 %v631
        %v1158 = vpop.f32.mrf.mxu0
        %v1159 = vadd.f32 %v1046, %v1158
        %1160 = vmatmul.f32.gmra.mxu0 %v634
        %v1161 = vpop.f32.mrf.mxu0
        %v1162 = vadd.f32 %v1049, %v1161
        %1163 = vmatmul.f32.gmra.mxu0 %v636
        %v1164 = vpop.f32.mrf.mxu0
        %v1165 = vadd.f32 %v1052, %v1164
        %1166 = vmatmul.f32.gmra.mxu0 %v639
        %v1167 = vpop.f32.mrf.mxu0
        %v1168 = vadd.f32 %v1055, %v1167
        %1169 = vmatmul.f32.gmra.mxu0 %v641
        %v1170 = vpop.f32.mrf.mxu0
        %v1171 = vadd.f32 %v1058, %v1170
        %1172 = vmatmul.f32.gmra.mxu0 %v644
        %v1173 = vpop.f32.mrf.mxu0
        %v1174 = vadd.f32 %v1061, %v1173
        %1175 = vmatmul.f32.gmra.mxu0 %v646
        %v1176 = vpop.f32.mrf.mxu0
        %v1177 = vadd.f32 %v1064, %v1176
        %1178 = vmatmul.f32.gmra.mxu0 %v649
        %v1179 = vpop.f32.mrf.mxu0
        %v1180 = vadd.f32 %v1067, %v1179
        %1181 = vmatmul.f32.gmra.mxu0 %v651
        %v1182 = vpop.f32.mrf.mxu0
        %v1183 = vadd.f32 %v1070, %v1182
        %1184 = vmatmul.f32.gmra.mxu0 %v654
        %v1185 = vpop.f32.mrf.mxu0
        %v1186 = vadd.f32 %v1073, %v1185
        %1187 = vmatmul.f32.gmra.mxu0 %v656
        %v1188 = vpop.f32.mrf.mxu0
        %v1189 = vadd.f32 %v1076, %v1188
        %1190 = vmatmul.f32.gmra.mxu0 %v659
        %v1191 = vpop.f32.mrf.mxu0
        %v1192 = vadd.f32 %v1079, %v1191
        %1193 = vmatmul.f32.gmra.mxu0 %v661
        %v1194 = vpop.f32.mrf.mxu0
        %v1195 = vadd.f32 %v1082, %v1194
        %1196 = vdwg.mxu0
        %1197 = vmatpush.msra.mxu0 %v870
        %1198 = vmatpush.msra.mxu0 %v869
        %1199 = vmatpush.msra.mxu0 %v868
        %1200 = vmatpush.msra.mxu0 %v867
        %1201 = vmatpush.msra.mxu0 %v866
        %1202 = vmatpush.msra.mxu0 %v865
        %1203 = vmatpush.msra.mxu0 %v864
        %1204 = vmatpush.msra.mxu0 %v863
        %1205 = vmatpush.msra.mxu0 %v862
        %1206 = vmatpush.msra.mxu0 %v861
        %1207 = vmatpush.msra.mxu0 %v860
        %1208 = vmatpush.msra.mxu0 %v859
        %1209 = vmatpush.msra.mxu0 %v858
        %1210 = vmatpush.msra.mxu0 %v857
        %1211 = vmatpush.msra.mxu0 %v856
        %1212 = vmatpush.msra.mxu0 %v855
        %1213 = vmatmul.f32.gmra.mxu0 %v697
        %v1214 = vpop.f32.mrf.mxu0
        %v1215 = vadd.f32 %v1102, %v1214
        %1216 = vmatmul.f32.gmra.mxu0 %v699
        %v1217 = vpop.f32.mrf.mxu0
        %v1218 = vadd.f32 %v1105, %v1217
        %1219 = vmatmul.f32.gmra.mxu0 %v702
        %v1220 = vpop.f32.mrf.mxu0
        %v1221 = vadd.f32 %v1108, %v1220
        %1222 = vmatmul.f32.gmra.mxu0 %v704
        %v1223 = vpop.f32.mrf.mxu0
        %v1224 = vadd.f32 %v1111, %v1223
        %1225 = vmatmul.f32.gmra.mxu0 %v707
        %v1226 = vpop.f32.mrf.mxu0
        %v1227 = vadd.f32 %v1114, %v1226
        %1228 = vmatmul.f32.gmra.mxu0 %v709
        %v1229 = vpop.f32.mrf.mxu0
        %v1230 = vadd.f32 %v1117, %v1229
        %1231 = vmatmul.f32.gmra.mxu0 %v712
        %v1232 = vpop.f32.mrf.mxu0
        %v1233 = vadd.f32 %v1120, %v1232
        %1234 = vmatmul.f32.gmra.mxu0 %v714
        %v1235 = vpop.f32.mrf.mxu0
        %v1236 = vadd.f32 %v1123, %v1235
        %1237 = vmatmul.f32.gmra.mxu0 %v717
        %v1238 = vpop.f32.mrf.mxu0
        %v1239 = vadd.f32 %v1126, %v1238
        %1240 = vmatmul.f32.gmra.mxu0 %v719
        %v1241 = vpop.f32.mrf.mxu0
        %v1242 = vadd.f32 %v1129, %v1241
        %1243 = vmatmul.f32.gmra.mxu0 %v722
        %v1244 = vpop.f32.mrf.mxu0
        %v1245 = vadd.f32 %v1132, %v1244
        %1246 = vmatmul.f32.gmra.mxu0 %v724
        %v1247 = vpop.f32.mrf.mxu0
        %v1248 = vadd.f32 %v1135, %v1247
        %1249 = vmatmul.f32.gmra.mxu0 %v727
        %v1250 = vpop.f32.mrf.mxu0
        %v1251 = vadd.f32 %v1138, %v1250
        %1252 = vmatmul.f32.gmra.mxu0 %v729
        %v1253 = vpop.f32.mrf.mxu0
        %v1254 = vadd.f32 %v1141, %v1253
        %1255 = vmatmul.f32.gmra.mxu0 %v732
        %v1256 = vpop.f32.mrf.mxu0
        %v1257 = vadd.f32 %v1144, %v1256
        %1258 = vmatmul.f32.gmra.mxu0 %v734
        %v1259 = vpop.f32.mrf.mxu0
        %v1260 = vadd.f32 %v1147, %v1259
        %1261 = vmatmul.f32.gmra.mxu0 %v737
        %v1262 = vpop.f32.mrf.mxu0
        %v1263 = vadd.f32 %v1150, %v1262
        %1264 = vmatmul.f32.gmra.mxu0 %v739
        %v1265 = vpop.f32.mrf.mxu0
        %v1266 = vadd.f32 %v1153, %v1265
        %1267 = vmatmul.f32.gmra.mxu0 %v742
        %v1268 = vpop.f32.mrf.mxu0
        %v1269 = vadd.f32 %v1156, %v1268
        %1270 = vmatmul.f32.gmra.mxu0 %v744
        %v1271 = vpop.f32.mrf.mxu0
        %v1272 = vadd.f32 %v1159, %v1271
        %1273 = vmatmul.f32.gmra.mxu0 %v747
        %v1274 = vpop.f32.mrf.mxu0
        %v1275 = vadd.f32 %v1162, %v1274
        %1276 = vmatmul.f32.gmra.mxu0 %v749
        %v1277 = vpop.f32.mrf.mxu0
        %v1278 = vadd.f32 %v1165, %v1277
        %1279 = vmatmul.f32.gmra.mxu0 %v752
        %v1280 = vpop.f32.mrf.mxu0
        %v1281 = vadd.f32 %v1168, %v1280
        %1282 = vmatmul.f32.gmra.mxu0 %v754
        %v1283 = vpop.f32.mrf.mxu0
        %v1284 = vadd.f32 %v1171, %v1283
        %1285 = vmatmul.f32.gmra.mxu0 %v757
        %v1286 = vpop.f32.mrf.mxu0
        %v1287 = vadd.f32 %v1174, %v1286
        %1288 = vmatmul.f32.gmra.mxu0 %v759
        %v1289 = vpop.f32.mrf.mxu0
        %v1290 = vadd.f32 %v1177, %v1289
        %1291 = vmatmul.f32.gmra.mxu0 %v762
        %v1292 = vpop.f32.mrf.mxu0
        %v1293 = vadd.f32 %v1180, %v1292
        %1294 = vmatmul.f32.gmra.mxu0 %v764
        %v1295 = vpop.f32.mrf.mxu0
        %v1296 = vadd.f32 %v1183, %v1295
        %1297 = vmatmul.f32.gmra.mxu0 %v767
        %v1298 = vpop.f32.mrf.mxu0
        %v1299 = vadd.f32 %v1186, %v1298
        %1300 = vmatmul.f32.gmra.mxu0 %v769
        %v1301 = vpop.f32.mrf.mxu0
        %v1302 = vadd.f32 %v1189, %v1301
        %1303 = vmatmul.f32.gmra.mxu0 %v772
        %v1304 = vpop.f32.mrf.mxu0
        %v1305 = vadd.f32 %v1192, %v1304
        %1306 = vmatmul.f32.gmra.mxu0 %v774
        %v1307 = vpop.f32.mrf.mxu0
        %v1308 = vadd.f32 %v1195, %v1307
        %1309 = vdwg.mxu0
        %1310 = vmatpush.msra.mxu0 %v886
        %1311 = vmatpush.msra.mxu0 %v885
        %1312 = vmatpush.msra.mxu0 %v884
        %1313 = vmatpush.msra.mxu0 %v883
        %1314 = vmatpush.msra.mxu0 %v882
        %1315 = vmatpush.msra.mxu0 %v881
        %1316 = vmatpush.msra.mxu0 %v880
        %1317 = vmatpush.msra.mxu0 %v879
        %1318 = vmatpush.msra.mxu0 %v878
        %1319 = vmatpush.msra.mxu0 %v877
        %1320 = vmatpush.msra.mxu0 %v876
        %1321 = vmatpush.msra.mxu0 %v875
        %1322 = vmatpush.msra.mxu0 %v874
        %1323 = vmatpush.msra.mxu0 %v873
        %1324 = vmatpush.msra.mxu0 %v872
        %1325 = vmatpush.msra.mxu0 %v871
        %1326 = vmatmul.f32.gmra.mxu0 %v516
        %v1327 = vpop.f32.mrf.mxu0
        %v1328 = vadd.f32 %v1215, %v1327
        %1329 = vmatmul.f32.gmra.mxu0 %v419
        %v1330 = vpop.f32.mrf.mxu0
        %v1331 = vadd.f32 %v1218, %v1330
        %1332 = vmatmul.f32.gmra.mxu0 %v517
        %v1333 = vpop.f32.mrf.mxu0
        %v1334 = vadd.f32 %v1221, %v1333
        %1335 = vmatmul.f32.gmra.mxu0 %v422
        %v1336 = vpop.f32.mrf.mxu0
        %v1337 = vadd.f32 %v1224, %v1336
        %1338 = vmatmul.f32.gmra.mxu0 %v518
        %v1339 = vpop.f32.mrf.mxu0
        %v1340 = vadd.f32 %v1227, %v1339
        %1341 = vmatmul.f32.gmra.mxu0 %v425
        %v1342 = vpop.f32.mrf.mxu0
        %v1343 = vadd.f32 %v1230, %v1342
        %1344 = vmatmul.f32.gmra.mxu0 %v519
        %v1345 = vpop.f32.mrf.mxu0
        %v1346 = vadd.f32 %v1233, %v1345
        %1347 = vmatmul.f32.gmra.mxu0 %v428
        %v1348 = vpop.f32.mrf.mxu0
        %v1349 = vadd.f32 %v1236, %v1348
        %1350 = vmatmul.f32.gmra.mxu0 %v520
        %v1351 = vpop.f32.mrf.mxu0
        %v1352 = vadd.f32 %v1239, %v1351
        %1353 = vmatmul.f32.gmra.mxu0 %v431
        %v1354 = vpop.f32.mrf.mxu0
        %v1355 = vadd.f32 %v1242, %v1354
        %1356 = vmatmul.f32.gmra.mxu0 %v521
        %v1357 = vpop.f32.mrf.mxu0
        %v1358 = vadd.f32 %v1245, %v1357
        %1359 = vmatmul.f32.gmra.mxu0 %v434
        %v1360 = vpop.f32.mrf.mxu0
        %v1361 = vadd.f32 %v1248, %v1360
        %1362 = vmatmul.f32.gmra.mxu0 %v522
        %v1363 = vpop.f32.mrf.mxu0
        %v1364 = vadd.f32 %v1251, %v1363
        %1365 = vmatmul.f32.gmra.mxu0 %v437
        %v1366 = vpop.f32.mrf.mxu0
        %v1367 = vadd.f32 %v1254, %v1366
        %1368 = vmatmul.f32.gmra.mxu0 %v523
        %v1369 = vpop.f32.mrf.mxu0
        %v1370 = vadd.f32 %v1257, %v1369
        %1371 = vmatmul.f32.gmra.mxu0 %v440
        %v1372 = vpop.f32.mrf.mxu0
        %v1373 = vadd.f32 %v1260, %v1372
        %1374 = vmatmul.f32.gmra.mxu0 %v524
        %v1375 = vpop.f32.mrf.mxu0
        %v1376 = vadd.f32 %v1263, %v1375
        %1377 = vmatmul.f32.gmra.mxu0 %v443
        %v1378 = vpop.f32.mrf.mxu0
        %v1379 = vadd.f32 %v1266, %v1378
        %1380 = vmatmul.f32.gmra.mxu0 %v525
        %v1381 = vpop.f32.mrf.mxu0
        %v1382 = vadd.f32 %v1269, %v1381
        %1383 = vmatmul.f32.gmra.mxu0 %v446
        %v1384 = vpop.f32.mrf.mxu0
        %v1385 = vadd.f32 %v1272, %v1384
        %1386 = vmatmul.f32.gmra.mxu0 %v526
        %v1387 = vpop.f32.mrf.mxu0
        %v1388 = vadd.f32 %v1275, %v1387
        %1389 = vmatmul.f32.gmra.mxu0 %v449
        %v1390 = vpop.f32.mrf.mxu0
        %v1391 = vadd.f32 %v1278, %v1390
        %1392 = vmatmul.f32.gmra.mxu0 %v527
        %v1393 = vpop.f32.mrf.mxu0
        %v1394 = vadd.f32 %v1281, %v1393
        %1395 = vmatmul.f32.gmra.mxu0 %v452
        %v1396 = vpop.f32.mrf.mxu0
        %v1397 = vadd.f32 %v1284, %v1396
        %1398 = vmatmul.f32.gmra.mxu0 %v528
        %v1399 = vpop.f32.mrf.mxu0
        %v1400 = vadd.f32 %v1287, %v1399
        %1401 = vmatmul.f32.gmra.mxu0 %v455
        %v1402 = vpop.f32.mrf.mxu0
        %v1403 = vadd.f32 %v1290, %v1402
        %1404 = vmatmul.f32.gmra.mxu0 %v529
        %v1405 = vpop.f32.mrf.mxu0
        %v1406 = vadd.f32 %v1293, %v1405
        %1407 = vmatmul.f32.gmra.mxu0 %v458
        %v1408 = vpop.f32.mrf.mxu0
        %v1409 = vadd.f32 %v1296, %v1408
        %1410 = vmatmul.f32.gmra.mxu0 %v530
        %v1411 = vpop.f32.mrf.mxu0
        %v1412 = vadd.f32 %v1299, %v1411
        %1413 = vmatmul.f32.gmra.mxu0 %v461
        %v1414 = vpop.f32.mrf.mxu0
        %v1415 = vadd.f32 %v1302, %v1414
        %1416 = vmatmul.f32.gmra.mxu0 %v531
        %v1417 = vpop.f32.mrf.mxu0
        %v1418 = vadd.f32 %v1305, %v1417
        %1419 = vmatmul.f32.gmra.mxu0 %v464
        %v1420 = vpop.f32.mrf.mxu0
        %v1421 = vadd.f32 %v1308, %v1420
        %1422 = vdwg.mxu0
        %1423 = vmatpush.msra.mxu0 %v902
        %1424 = vmatpush.msra.mxu0 %v901
        %1425 = vmatpush.msra.mxu0 %v900
        %1426 = vmatpush.msra.mxu0 %v899
        %1427 = vmatpush.msra.mxu0 %v898
        %1428 = vmatpush.msra.mxu0 %v897
        %1429 = vmatpush.msra.mxu0 %v896
        %1430 = vmatpush.msra.mxu0 %v895
        %1431 = vmatpush.msra.mxu0 %v894
        %1432 = vmatpush.msra.mxu0 %v893
        %1433 = vmatpush.msra.mxu0 %v892
        %1434 = vmatpush.msra.mxu0 %v891
        %1435 = vmatpush.msra.mxu0 %v890
        %1436 = vmatpush.msra.mxu0 %v889
        %1437 = vmatpush.msra.mxu0 %v888
        %1438 = vmatpush.msra.mxu0 %v887
        %1439 = vmatmul.f32.gmra.mxu0 %v589
        %v1440 = vpop.f32.mrf.mxu0
        %v1441 = vadd.f32 %v1328, %v1440
        %1442 = vmatmul.f32.gmra.mxu0 %v591
        %v1443 = vpop.f32.mrf.mxu0
        %v1444 = vadd.f32 %v1331, %v1443
        %1445 = vmatmul.f32.gmra.mxu0 %v594
        %v1446 = vpop.f32.mrf.mxu0
        %v1447 = vadd.f32 %v1334, %v1446
        %1448 = vmatmul.f32.gmra.mxu0 %v596
        %v1449 = vpop.f32.mrf.mxu0
        %v1450 = vadd.f32 %v1337, %v1449
        %1451 = vmatmul.f32.gmra.mxu0 %v599
        %v1452 = vpop.f32.mrf.mxu0
        %v1453 = vadd.f32 %v1340, %v1452
        %1454 = vmatmul.f32.gmra.mxu0 %v601
        %v1455 = vpop.f32.mrf.mxu0
        %v1456 = vadd.f32 %v1343, %v1455
        %1457 = vmatmul.f32.gmra.mxu0 %v604
        %v1458 = vpop.f32.mrf.mxu0
        %v1459 = vadd.f32 %v1346, %v1458
        %1460 = vmatmul.f32.gmra.mxu0 %v606
        %v1461 = vpop.f32.mrf.mxu0
        %v1462 = vadd.f32 %v1349, %v1461
        %1463 = vmatmul.f32.gmra.mxu0 %v609
        %v1464 = vpop.f32.mrf.mxu0
        %v1465 = vadd.f32 %v1352, %v1464
        %1466 = vmatmul.f32.gmra.mxu0 %v611
        %v1467 = vpop.f32.mrf.mxu0
        %v1468 = vadd.f32 %v1355, %v1467
        %1469 = vmatmul.f32.gmra.mxu0 %v614
        %v1470 = vpop.f32.mrf.mxu0
        %v1471 = vadd.f32 %v1358, %v1470
        %1472 = vmatmul.f32.gmra.mxu0 %v616
        %v1473 = vpop.f32.mrf.mxu0
        %v1474 = vadd.f32 %v1361, %v1473
        %1475 = vmatmul.f32.gmra.mxu0 %v619
        %v1476 = vpop.f32.mrf.mxu0
        %v1477 = vadd.f32 %v1364, %v1476
        %1478 = vmatmul.f32.gmra.mxu0 %v621
        %v1479 = vpop.f32.mrf.mxu0
        %v1480 = vadd.f32 %v1367, %v1479
        %1481 = vmatmul.f32.gmra.mxu0 %v624
        %v1482 = vpop.f32.mrf.mxu0
        %v1483 = vadd.f32 %v1370, %v1482
        %1484 = vmatmul.f32.gmra.mxu0 %v626
        %v1485 = vpop.f32.mrf.mxu0
        %v1486 = vadd.f32 %v1373, %v1485
        %1487 = vmatmul.f32.gmra.mxu0 %v629
        %v1488 = vpop.f32.mrf.mxu0
        %v1489 = vadd.f32 %v1376, %v1488
        %1490 = vmatmul.f32.gmra.mxu0 %v631
        %v1491 = vpop.f32.mrf.mxu0
        %v1492 = vadd.f32 %v1379, %v1491
        %1493 = vmatmul.f32.gmra.mxu0 %v634
        %v1494 = vpop.f32.mrf.mxu0
        %v1495 = vadd.f32 %v1382, %v1494
        %1496 = vmatmul.f32.gmra.mxu0 %v636
        %v1497 = vpop.f32.mrf.mxu0
        %v1498 = vadd.f32 %v1385, %v1497
        %1499 = vmatmul.f32.gmra.mxu0 %v639
        %v1500 = vpop.f32.mrf.mxu0
        %v1501 = vadd.f32 %v1388, %v1500
        %1502 = vmatmul.f32.gmra.mxu0 %v641
        %v1503 = vpop.f32.mrf.mxu0
        %v1504 = vadd.f32 %v1391, %v1503
        %1505 = vmatmul.f32.gmra.mxu0 %v644
        %v1506 = vpop.f32.mrf.mxu0
        %v1507 = vadd.f32 %v1394, %v1506
        %1508 = vmatmul.f32.gmra.mxu0 %v646
        %v1509 = vpop.f32.mrf.mxu0
        %v1510 = vadd.f32 %v1397, %v1509
        %1511 = vmatmul.f32.gmra.mxu0 %v649
        %v1512 = vpop.f32.mrf.mxu0
        %v1513 = vadd.f32 %v1400, %v1512
        %1514 = vmatmul.f32.gmra.mxu0 %v651
        %v1515 = vpop.f32.mrf.mxu0
        %v1516 = vadd.f32 %v1403, %v1515
        %1517 = vmatmul.f32.gmra.mxu0 %v654
        %v1518 = vpop.f32.mrf.mxu0
        %v1519 = vadd.f32 %v1406, %v1518
        %1520 = vmatmul.f32.gmra.mxu0 %v656
        %v1521 = vpop.f32.mrf.mxu0
        %v1522 = vadd.f32 %v1409, %v1521
        %1523 = vmatmul.f32.gmra.mxu0 %v659
        %v1524 = vpop.f32.mrf.mxu0
        %v1525 = vadd.f32 %v1412, %v1524
        %1526 = vmatmul.f32.gmra.mxu0 %v661
        %v1527 = vpop.f32.mrf.mxu0
        %v1528 = vadd.f32 %v1415, %v1527
        %1529 = vmatmul.f32.gmra.mxu0 %v811
        %v1530 = vpop.f32.mrf.mxu0
        %v1531 = vadd.f32 %v1418, %v1530
        %1532 = vmatmul.f32.gmra.mxu0 %v813
        %v1533 = vpop.f32.mrf.mxu0
        %v1534 = vadd.f32 %v1421, %v1533
        %1535 = vdwg.mxu0
        %1536 = vmatpush.msra.mxu0 %v918
        %1537 = vmatpush.msra.mxu0 %v917
        %1538 = vmatpush.msra.mxu0 %v916
        %1539 = vmatpush.msra.mxu0 %v915
        %1540 = vmatpush.msra.mxu0 %v914
        %1541 = vmatpush.msra.mxu0 %v913
        %1542 = vmatpush.msra.mxu0 %v912
        %1543 = vmatpush.msra.mxu0 %v911
        %1544 = vmatpush.msra.mxu0 %v910
        %1545 = vmatpush.msra.mxu0 %v909
        %1546 = vmatpush.msra.mxu0 %v908
        %1547 = vmatpush.msra.mxu0 %v907
        %1548 = vmatpush.msra.mxu0 %v906
        %1549 = vmatpush.msra.mxu0 %v905
        %1550 = vmatpush.msra.mxu0 %v904
        %1551 = vmatpush.msra.mxu0 %v903
        %1552 = vmatmul.f32.gmra.mxu0 %v702
        %v1553 = vpop.f32.mrf.mxu0
        %v1554 = vadd.f32 %v1441, %v1553
        %1555 = vmatmul.f32.gmra.mxu0 %v704
        %v1556 = vpop.f32.mrf.mxu0
        %v1557 = vadd.f32 %v1444, %v1556
        %1558 = vmatmul.f32.gmra.mxu0 %v707
        %v1559 = vpop.f32.mrf.mxu0
        %v1560 = vadd.f32 %v1447, %v1559
        %1561 = vmatmul.f32.gmra.mxu0 %v709
        %v1562 = vpop.f32.mrf.mxu0
        %v1563 = vadd.f32 %v1450, %v1562
        %1564 = vmatmul.f32.gmra.mxu0 %v712
        %v1565 = vpop.f32.mrf.mxu0
        %v1566 = vadd.f32 %v1453, %v1565
        %1567 = vmatmul.f32.gmra.mxu0 %v714
        %v1568 = vpop.f32.mrf.mxu0
        %v1569 = vadd.f32 %v1456, %v1568
        %1570 = vmatmul.f32.gmra.mxu0 %v717
        %v1571 = vpop.f32.mrf.mxu0
        %v1572 = vadd.f32 %v1459, %v1571
        %1573 = vmatmul.f32.gmra.mxu0 %v719
        %v1574 = vpop.f32.mrf.mxu0
        %v1575 = vadd.f32 %v1462, %v1574
        %1576 = vmatmul.f32.gmra.mxu0 %v722
        %v1577 = vpop.f32.mrf.mxu0
        %v1578 = vadd.f32 %v1465, %v1577
        %1579 = vmatmul.f32.gmra.mxu0 %v724
        %v1580 = vpop.f32.mrf.mxu0
        %v1581 = vadd.f32 %v1468, %v1580
        %1582 = vmatmul.f32.gmra.mxu0 %v727
        %v1583 = vpop.f32.mrf.mxu0
        %v1584 = vadd.f32 %v1471, %v1583
        %1585 = vmatmul.f32.gmra.mxu0 %v729
        %v1586 = vpop.f32.mrf.mxu0
        %v1587 = vadd.f32 %v1474, %v1586
        %1588 = vmatmul.f32.gmra.mxu0 %v732
        %v1589 = vpop.f32.mrf.mxu0
        %v1590 = vadd.f32 %v1477, %v1589
        %1591 = vmatmul.f32.gmra.mxu0 %v734
        %v1592 = vpop.f32.mrf.mxu0
        %v1593 = vadd.f32 %v1480, %v1592
        %1594 = vmatmul.f32.gmra.mxu0 %v737
        %v1595 = vpop.f32.mrf.mxu0
        %v1596 = vadd.f32 %v1483, %v1595
        %1597 = vmatmul.f32.gmra.mxu0 %v739
        %v1598 = vpop.f32.mrf.mxu0
        %v1599 = vadd.f32 %v1486, %v1598
        %1600 = vmatmul.f32.gmra.mxu0 %v742
        %v1601 = vpop.f32.mrf.mxu0
        %v1602 = vadd.f32 %v1489, %v1601
        %1603 = vmatmul.f32.gmra.mxu0 %v744
        %v1604 = vpop.f32.mrf.mxu0
        %v1605 = vadd.f32 %v1492, %v1604
        %1606 = vmatmul.f32.gmra.mxu0 %v747
        %v1607 = vpop.f32.mrf.mxu0
        %v1608 = vadd.f32 %v1495, %v1607
        %1609 = vmatmul.f32.gmra.mxu0 %v749
        %v1610 = vpop.f32.mrf.mxu0
        %v1611 = vadd.f32 %v1498, %v1610
        %1612 = vmatmul.f32.gmra.mxu0 %v752
        %v1613 = vpop.f32.mrf.mxu0
        %v1614 = vadd.f32 %v1501, %v1613
        %1615 = vmatmul.f32.gmra.mxu0 %v754
        %v1616 = vpop.f32.mrf.mxu0
        %v1617 = vadd.f32 %v1504, %v1616
        %1618 = vmatmul.f32.gmra.mxu0 %v757
        %v1619 = vpop.f32.mrf.mxu0
        %v1620 = vadd.f32 %v1507, %v1619
        %1621 = vmatmul.f32.gmra.mxu0 %v759
        %v1622 = vpop.f32.mrf.mxu0
        %v1623 = vadd.f32 %v1510, %v1622
        %1624 = vmatmul.f32.gmra.mxu0 %v762
        %v1625 = vpop.f32.mrf.mxu0
        %v1626 = vadd.f32 %v1513, %v1625
        %1627 = vmatmul.f32.gmra.mxu0 %v764
        %v1628 = vpop.f32.mrf.mxu0
        %v1629 = vadd.f32 %v1516, %v1628
        %1630 = vmatmul.f32.gmra.mxu0 %v767
        %v1631 = vpop.f32.mrf.mxu0
        %v1632 = vadd.f32 %v1519, %v1631
        %1633 = vmatmul.f32.gmra.mxu0 %v769
        %v1634 = vpop.f32.mrf.mxu0
        %v1635 = vadd.f32 %v1522, %v1634
        %1636 = vmatmul.f32.gmra.mxu0 %v772
        %v1637 = vpop.f32.mrf.mxu0
        %v1638 = vadd.f32 %v1525, %v1637
        %1639 = vmatmul.f32.gmra.mxu0 %v774
        %v1640 = vpop.f32.mrf.mxu0
        %v1641 = vadd.f32 %v1528, %v1640
        %1642 = vmatmul.f32.gmra.mxu0 %v818
        %v1643 = vpop.f32.mrf.mxu0
        %v1644 = vadd.f32 %v1531, %v1643
        %1645 = vmatmul.f32.gmra.mxu0 %v820
        %v1646 = vpop.f32.mrf.mxu0
        %v1647 = vadd.f32 %v1534, %v1646
        %1648 = vdwg.mxu0
        %1649 = vmatpush.msra.mxu0 %v934
        %1650 = vmatpush.msra.mxu0 %v933
        %1651 = vmatpush.msra.mxu0 %v932
        %1652 = vmatpush.msra.mxu0 %v931
        %1653 = vmatpush.msra.mxu0 %v930
        %1654 = vmatpush.msra.mxu0 %v929
        %1655 = vmatpush.msra.mxu0 %v928
        %1656 = vmatpush.msra.mxu0 %v927
        %1657 = vmatpush.msra.mxu0 %v926
        %1658 = vmatpush.msra.mxu0 %v925
        %1659 = vmatpush.msra.mxu0 %v924
        %1660 = vmatpush.msra.mxu0 %v923
        %1661 = vmatpush.msra.mxu0 %v922
        %1662 = vmatpush.msra.mxu0 %v921
        %1663 = vmatpush.msra.mxu0 %v920
        %1664 = vmatpush.msra.mxu0 %v919
        %1665 = vmatmul.f32.gmra.mxu0 %v517
        %v1666 = vpop.f32.mrf.mxu0
        %v1667 = vadd.f32 %v1554, %v1666
        %1668 = vmatmul.f32.gmra.mxu0 %v422
        %v1669 = vpop.f32.mrf.mxu0
        %v1670 = vadd.f32 %v1557, %v1669
        %1671 = vmatmul.f32.gmra.mxu0 %v518
        %v1672 = vpop.f32.mrf.mxu0
        %v1673 = vadd.f32 %v1560, %v1672
        %1674 = vmatmul.f32.gmra.mxu0 %v425
        %v1675 = vpop.f32.mrf.mxu0
        %v1676 = vadd.f32 %v1563, %v1675
        %1677 = vmatmul.f32.gmra.mxu0 %v519
        %v1678 = vpop.f32.mrf.mxu0
        %v1679 = vadd.f32 %v1566, %v1678
        %1680 = vmatmul.f32.gmra.mxu0 %v428
        %v1681 = vpop.f32.mrf.mxu0
        %v1682 = vadd.f32 %v1569, %v1681
        %1683 = vmatmul.f32.gmra.mxu0 %v520
        %v1684 = vpop.f32.mrf.mxu0
        %v1685 = vadd.f32 %v1572, %v1684
        %1686 = vmatmul.f32.gmra.mxu0 %v431
        %v1687 = vpop.f32.mrf.mxu0
        %v1688 = vadd.f32 %v1575, %v1687
        %1689 = vmatmul.f32.gmra.mxu0 %v521
        %v1690 = vpop.f32.mrf.mxu0
        %v1691 = vadd.f32 %v1578, %v1690
        %1692 = vmatmul.f32.gmra.mxu0 %v434
        %v1693 = vpop.f32.mrf.mxu0
        %v1694 = vadd.f32 %v1581, %v1693
        %1695 = vmatmul.f32.gmra.mxu0 %v522
        %v1696 = vpop.f32.mrf.mxu0
        %v1697 = vadd.f32 %v1584, %v1696
        %1698 = vmatmul.f32.gmra.mxu0 %v437
        %v1699 = vpop.f32.mrf.mxu0
        %v1700 = vadd.f32 %v1587, %v1699
        %1701 = vmatmul.f32.gmra.mxu0 %v523
        %v1702 = vpop.f32.mrf.mxu0
        %v1703 = vadd.f32 %v1590, %v1702
        %1704 = vmatmul.f32.gmra.mxu0 %v440
        %v1705 = vpop.f32.mrf.mxu0
        %v1706 = vadd.f32 %v1593, %v1705
        %1707 = vmatmul.f32.gmra.mxu0 %v524
        %v1708 = vpop.f32.mrf.mxu0
        %v1709 = vadd.f32 %v1596, %v1708
        %1710 = vmatmul.f32.gmra.mxu0 %v443
        %v1711 = vpop.f32.mrf.mxu0
        %v1712 = vadd.f32 %v1599, %v1711
        %1713 = vmatmul.f32.gmra.mxu0 %v525
        %v1714 = vpop.f32.mrf.mxu0
        %v1715 = vadd.f32 %v1602, %v1714
        %1716 = vmatmul.f32.gmra.mxu0 %v446
        %v1717 = vpop.f32.mrf.mxu0
        %v1718 = vadd.f32 %v1605, %v1717
        %1719 = vmatmul.f32.gmra.mxu0 %v526
        %v1720 = vpop.f32.mrf.mxu0
        %v1721 = vadd.f32 %v1608, %v1720
        %1722 = vmatmul.f32.gmra.mxu0 %v449
        %v1723 = vpop.f32.mrf.mxu0
        %v1724 = vadd.f32 %v1611, %v1723
        %1725 = vmatmul.f32.gmra.mxu0 %v527
        %v1726 = vpop.f32.mrf.mxu0
        %v1727 = vadd.f32 %v1614, %v1726
        %1728 = vmatmul.f32.gmra.mxu0 %v452
        %v1729 = vpop.f32.mrf.mxu0
        %v1730 = vadd.f32 %v1617, %v1729
        %1731 = vmatmul.f32.gmra.mxu0 %v528
        %v1732 = vpop.f32.mrf.mxu0
        %v1733 = vadd.f32 %v1620, %v1732
        %1734 = vmatmul.f32.gmra.mxu0 %v455
        %v1735 = vpop.f32.mrf.mxu0
        %v1736 = vadd.f32 %v1623, %v1735
        %1737 = vmatmul.f32.gmra.mxu0 %v529
        %v1738 = vpop.f32.mrf.mxu0
        %v1739 = vadd.f32 %v1626, %v1738
        %1740 = vmatmul.f32.gmra.mxu0 %v458
        %v1741 = vpop.f32.mrf.mxu0
        %v1742 = vadd.f32 %v1629, %v1741
        %1743 = vmatmul.f32.gmra.mxu0 %v530
        %v1744 = vpop.f32.mrf.mxu0
        %v1745 = vadd.f32 %v1632, %v1744
        %1746 = vmatmul.f32.gmra.mxu0 %v461
        %v1747 = vpop.f32.mrf.mxu0
        %v1748 = vadd.f32 %v1635, %v1747
        %1749 = vmatmul.f32.gmra.mxu0 %v531
        %v1750 = vpop.f32.mrf.mxu0
        %v1751 = vadd.f32 %v1638, %v1750
        %1752 = vmatmul.f32.gmra.mxu0 %v464
        %v1753 = vpop.f32.mrf.mxu0
        %v1754 = vadd.f32 %v1641, %v1753
        %1755 = vmatmul.f32.gmra.mxu0 %v515
        %v1756 = vpop.f32.mrf.mxu0
        %v1757 = vadd.f32 %v1644, %v1756
        %1758 = vmatmul.f32.gmra.mxu0 %v416
        %v1759 = vpop.f32.mrf.mxu0
        %v1760 = vadd.f32 %v1647, %v1759
        %1761 = vdwg.mxu0
        %1762 = vmatpush.msra.mxu0 %v950
        %1763 = vmatpush.msra.mxu0 %v949
        %1764 = vmatpush.msra.mxu0 %v948
        %1765 = vmatpush.msra.mxu0 %v947
        %1766 = vmatpush.msra.mxu0 %v946
        %1767 = vmatpush.msra.mxu0 %v945
        %1768 = vmatpush.msra.mxu0 %v944
        %1769 = vmatpush.msra.mxu0 %v943
        %1770 = vmatpush.msra.mxu0 %v942
        %1771 = vmatpush.msra.mxu0 %v941
        %1772 = vmatpush.msra.mxu0 %v940
        %1773 = vmatpush.msra.mxu0 %v939
        %1774 = vmatpush.msra.mxu0 %v938
        %1775 = vmatpush.msra.mxu0 %v937
        %1776 = vmatpush.msra.mxu0 %v936
        %1777 = vmatpush.msra.mxu0 %v935
        %1778 = vmatmul.f32.gmra.mxu0 %v594
        %v1779 = vpop.f32.mrf.mxu0
        %v1780 = vadd.f32 %v1667, %v1779
        %1781 = vmatmul.f32.gmra.mxu0 %v596
        %v1782 = vpop.f32.mrf.mxu0
        %v1783 = vadd.f32 %v1670, %v1782
        %1784 = vmatmul.f32.gmra.mxu0 %v599
        %v1785 = vpop.f32.mrf.mxu0
        %v1786 = vadd.f32 %v1673, %v1785
        %1787 = vmatmul.f32.gmra.mxu0 %v601
        %v1788 = vpop.f32.mrf.mxu0
        %v1789 = vadd.f32 %v1676, %v1788
        %1790 = vmatmul.f32.gmra.mxu0 %v604
        %v1791 = vpop.f32.mrf.mxu0
        %v1792 = vadd.f32 %v1679, %v1791
        %1793 = vmatmul.f32.gmra.mxu0 %v606
        %v1794 = vpop.f32.mrf.mxu0
        %v1795 = vadd.f32 %v1682, %v1794
        %1796 = vmatmul.f32.gmra.mxu0 %v609
        %v1797 = vpop.f32.mrf.mxu0
        %v1798 = vadd.f32 %v1685, %v1797
        %1799 = vmatmul.f32.gmra.mxu0 %v611
        %v1800 = vpop.f32.mrf.mxu0
        %v1801 = vadd.f32 %v1688, %v1800
        %1802 = vmatmul.f32.gmra.mxu0 %v614
        %v1803 = vpop.f32.mrf.mxu0
        %v1804 = vadd.f32 %v1691, %v1803
        %1805 = vmatmul.f32.gmra.mxu0 %v616
        %v1806 = vpop.f32.mrf.mxu0
        %v1807 = vadd.f32 %v1694, %v1806
        %1808 = vmatmul.f32.gmra.mxu0 %v619
        %v1809 = vpop.f32.mrf.mxu0
        %v1810 = vadd.f32 %v1697, %v1809
        %1811 = vmatmul.f32.gmra.mxu0 %v621
        %v1812 = vpop.f32.mrf.mxu0
        %v1813 = vadd.f32 %v1700, %v1812
        %1814 = vmatmul.f32.gmra.mxu0 %v624
        %v1815 = vpop.f32.mrf.mxu0
        %v1816 = vadd.f32 %v1703, %v1815
        %1817 = vmatmul.f32.gmra.mxu0 %v626
        %v1818 = vpop.f32.mrf.mxu0
        %v1819 = vadd.f32 %v1706, %v1818
        %1820 = vmatmul.f32.gmra.mxu0 %v629
        %v1821 = vpop.f32.mrf.mxu0
        %v1822 = vadd.f32 %v1709, %v1821
        %1823 = vmatmul.f32.gmra.mxu0 %v631
        %v1824 = vpop.f32.mrf.mxu0
        %v1825 = vadd.f32 %v1712, %v1824
        %1826 = vmatmul.f32.gmra.mxu0 %v634
        %v1827 = vpop.f32.mrf.mxu0
        %v1828 = vadd.f32 %v1715, %v1827
        %1829 = vmatmul.f32.gmra.mxu0 %v636
        %v1830 = vpop.f32.mrf.mxu0
        %v1831 = vadd.f32 %v1718, %v1830
        %1832 = vmatmul.f32.gmra.mxu0 %v639
        %v1833 = vpop.f32.mrf.mxu0
        %v1834 = vadd.f32 %v1721, %v1833
        %1835 = vmatmul.f32.gmra.mxu0 %v641
        %v1836 = vpop.f32.mrf.mxu0
        %v1837 = vadd.f32 %v1724, %v1836
        %1838 = vmatmul.f32.gmra.mxu0 %v644
        %v1839 = vpop.f32.mrf.mxu0
        %v1840 = vadd.f32 %v1727, %v1839
        %1841 = vmatmul.f32.gmra.mxu0 %v646
        %v1842 = vpop.f32.mrf.mxu0
        %v1843 = vadd.f32 %v1730, %v1842
        %1844 = vmatmul.f32.gmra.mxu0 %v649
        %v1845 = vpop.f32.mrf.mxu0
        %v1846 = vadd.f32 %v1733, %v1845
        %1847 = vmatmul.f32.gmra.mxu0 %v651
        %v1848 = vpop.f32.mrf.mxu0
        %v1849 = vadd.f32 %v1736, %v1848
        %1850 = vmatmul.f32.gmra.mxu0 %v654
        %v1851 = vpop.f32.mrf.mxu0
        %v1852 = vadd.f32 %v1739, %v1851
        %1853 = vmatmul.f32.gmra.mxu0 %v656
        %v1854 = vpop.f32.mrf.mxu0
        %v1855 = vadd.f32 %v1742, %v1854
        %1856 = vmatmul.f32.gmra.mxu0 %v659
        %v1857 = vpop.f32.mrf.mxu0
        %v1858 = vadd.f32 %v1745, %v1857
        %1859 = vmatmul.f32.gmra.mxu0 %v661
        %v1860 = vpop.f32.mrf.mxu0
        %v1861 = vadd.f32 %v1748, %v1860
        %1862 = vmatmul.f32.gmra.mxu0 %v811
        %v1863 = vpop.f32.mrf.mxu0
        %v1864 = vadd.f32 %v1751, %v1863
        %1865 = vmatmul.f32.gmra.mxu0 %v813
        %v1866 = vpop.f32.mrf.mxu0
        %v1867 = vadd.f32 %v1754, %v1866
        %1868 = vmatmul.f32.gmra.mxu0 %v584
        %v1869 = vpop.f32.mrf.mxu0
        %v1870 = vadd.f32 %v1757, %v1869
        %1871 = vmatmul.f32.gmra.mxu0 %v586
        %v1872 = vpop.f32.mrf.mxu0
        %v1873 = vadd.f32 %v1760, %v1872
        %1874 = vdwg.mxu0
        %1875 = vmatpush.msra.mxu0 %v966
        %1876 = vmatpush.msra.mxu0 %v965
        %1877 = vmatpush.msra.mxu0 %v964
        %1878 = vmatpush.msra.mxu0 %v963
        %1879 = vmatpush.msra.mxu0 %v962
        %1880 = vmatpush.msra.mxu0 %v961
        %1881 = vmatpush.msra.mxu0 %v960
        %1882 = vmatpush.msra.mxu0 %v959
        %1883 = vmatpush.msra.mxu0 %v958
        %1884 = vmatpush.msra.mxu0 %v957
        %1885 = vmatpush.msra.mxu0 %v956
        %1886 = vmatpush.msra.mxu0 %v955
        %1887 = vmatpush.msra.mxu0 %v954
        %1888 = vmatpush.msra.mxu0 %v953
        %1889 = vmatpush.msra.mxu0 %v952
        %1890 = vmatpush.msra.mxu0 %v951
        %1891 = vmatmul.f32.gmra.mxu0 %v707
        %v1892 = vpop.f32.mrf.mxu0
        %v1893 = vadd.f32 %v1780, %v1892
        %1894 = vmatmul.f32.gmra.mxu0 %v709
        %v1895 = vpop.f32.mrf.mxu0
        %v1896 = vadd.f32 %v1783, %v1895
        %1897 = vmatmul.f32.gmra.mxu0 %v712
        %v1898 = vpop.f32.mrf.mxu0
        %v1899 = vadd.f32 %v1786, %v1898
        %1900 = vmatmul.f32.gmra.mxu0 %v714
        %v1901 = vpop.f32.mrf.mxu0
        %v1902 = vadd.f32 %v1789, %v1901
        %1903 = vmatmul.f32.gmra.mxu0 %v717
        %v1904 = vpop.f32.mrf.mxu0
        %v1905 = vadd.f32 %v1792, %v1904
        %1906 = vmatmul.f32.gmra.mxu0 %v719
        %v1907 = vpop.f32.mrf.mxu0
        %v1908 = vadd.f32 %v1795, %v1907
        %1909 = vmatmul.f32.gmra.mxu0 %v722
        %v1910 = vpop.f32.mrf.mxu0
        %v1911 = vadd.f32 %v1798, %v1910
        %1912 = vmatmul.f32.gmra.mxu0 %v724
        %v1913 = vpop.f32.mrf.mxu0
        %v1914 = vadd.f32 %v1801, %v1913
        %1915 = vmatmul.f32.gmra.mxu0 %v727
        %v1916 = vpop.f32.mrf.mxu0
        %v1917 = vadd.f32 %v1804, %v1916
        %1918 = vmatmul.f32.gmra.mxu0 %v729
        %v1919 = vpop.f32.mrf.mxu0
        %v1920 = vadd.f32 %v1807, %v1919
        %1921 = vmatmul.f32.gmra.mxu0 %v732
        %v1922 = vpop.f32.mrf.mxu0
        %v1923 = vadd.f32 %v1810, %v1922
        %1924 = vmatmul.f32.gmra.mxu0 %v734
        %v1925 = vpop.f32.mrf.mxu0
        %v1926 = vadd.f32 %v1813, %v1925
        %1927 = vmatmul.f32.gmra.mxu0 %v737
        %v1928 = vpop.f32.mrf.mxu0
        %v1929 = vadd.f32 %v1816, %v1928
        %1930 = vmatmul.f32.gmra.mxu0 %v739
        %v1931 = vpop.f32.mrf.mxu0
        %v1932 = vadd.f32 %v1819, %v1931
        %1933 = vmatmul.f32.gmra.mxu0 %v742
        %v1934 = vpop.f32.mrf.mxu0
        %v1935 = vadd.f32 %v1822, %v1934
        %1936 = vmatmul.f32.gmra.mxu0 %v744
        %v1937 = vpop.f32.mrf.mxu0
        %v1938 = vadd.f32 %v1825, %v1937
        %1939 = vmatmul.f32.gmra.mxu0 %v747
        %v1940 = vpop.f32.mrf.mxu0
        %v1941 = vadd.f32 %v1828, %v1940
        %1942 = vmatmul.f32.gmra.mxu0 %v749
        %v1943 = vpop.f32.mrf.mxu0
        %v1944 = vadd.f32 %v1831, %v1943
        %1945 = vmatmul.f32.gmra.mxu0 %v752
        %v1946 = vpop.f32.mrf.mxu0
        %v1947 = vadd.f32 %v1834, %v1946
        %1948 = vmatmul.f32.gmra.mxu0 %v754
        %v1949 = vpop.f32.mrf.mxu0
        %v1950 = vadd.f32 %v1837, %v1949
        %1951 = vmatmul.f32.gmra.mxu0 %v757
        %v1952 = vpop.f32.mrf.mxu0
        %v1953 = vadd.f32 %v1840, %v1952
        %1954 = vmatmul.f32.gmra.mxu0 %v759
        %v1955 = vpop.f32.mrf.mxu0
        %v1956 = vadd.f32 %v1843, %v1955
        %1957 = vmatmul.f32.gmra.mxu0 %v762
        %v1958 = vpop.f32.mrf.mxu0
        %v1959 = vadd.f32 %v1846, %v1958
        %1960 = vmatmul.f32.gmra.mxu0 %v764
        %v1961 = vpop.f32.mrf.mxu0
        %v1962 = vadd.f32 %v1849, %v1961
        %1963 = vmatmul.f32.gmra.mxu0 %v767
        %v1964 = vpop.f32.mrf.mxu0
        %v1965 = vadd.f32 %v1852, %v1964
        %1966 = vmatmul.f32.gmra.mxu0 %v769
        %v1967 = vpop.f32.mrf.mxu0
        %v1968 = vadd.f32 %v1855, %v1967
        %1969 = vmatmul.f32.gmra.mxu0 %v772
        %v1970 = vpop.f32.mrf.mxu0
        %v1971 = vadd.f32 %v1858, %v1970
        %1972 = vmatmul.f32.gmra.mxu0 %v774
        %v1973 = vpop.f32.mrf.mxu0
        %v1974 = vadd.f32 %v1861, %v1973
        %1975 = vmatmul.f32.gmra.mxu0 %v818
        %v1976 = vpop.f32.mrf.mxu0
        %v1977 = vadd.f32 %v1864, %v1976
        %1978 = vmatmul.f32.gmra.mxu0 %v820
        %v1979 = vpop.f32.mrf.mxu0
        %v1980 = vadd.f32 %v1867, %v1979
        %1981 = vmatmul.f32.gmra.mxu0 %v697
        %v1982 = vpop.f32.mrf.mxu0
        %v1983 = vadd.f32 %v1870, %v1982
        %1984 = vmatmul.f32.gmra.mxu0 %v699
        %v1985 = vpop.f32.mrf.mxu0
        %v1986 = vadd.f32 %v1873, %v1985
        %1987 = vdwg.mxu0
        %v1988 = vmax.f32 %v1893, 0.0
        %v1989 = vmax.f32 %v1896, 0.0
        %v1990 = vmax.f32 %v1899, 0.0
        %v1991 = vmax.f32 %v1902, 0.0
        %v1992 = vmax.f32 %v1905, 0.0
        %v1993 = vmax.f32 %v1908, 0.0
        %v1994 = vmax.f32 %v1911, 0.0
        %v1995 = vmax.f32 %v1914, 0.0
        %v1996 = vmax.f32 %v1917, 0.0
        %v1997 = vmax.f32 %v1920, 0.0
        %v1998 = vmax.f32 %v1923, 0.0
        %v1999 = vmax.f32 %v1926, 0.0
        %v2000 = vmax.f32 %v1929, 0.0
        %v2001 = vmax.f32 %v1932, 0.0
        %v2002 = vmax.f32 %v1935, 0.0
        %v2003 = vmax.f32 %v1938, 0.0
        %v2004 = vmax.f32 %v1941, 0.0
        %v2005 = vmax.f32 %v1944, 0.0
        %v2006 = vmax.f32 %v1947, 0.0
        %v2007 = vmax.f32 %v1950, 0.0
        %v2008 = vmax.f32 %v1953, 0.0
        %v2009 = vmax.f32 %v1956, 0.0
        %v2010 = vmax.f32 %v1959, 0.0
        %v2011 = vmax.f32 %v1962, 0.0
        %v2012 = vmax.f32 %v1965, 0.0
        %v2013 = vmax.f32 %v1968, 0.0
        %v2014 = vmax.f32 %v1971, 0.0
        %v2015 = vmax.f32 %v1974, 0.0
        %v2016 = vmax.f32 %v1977, 0.0
        %v2017 = vmax.f32 %v1980, 0.0
        %v2018 = vmax.f32 %v1983, 0.0
        %v2019 = vmax.f32 %v1986, 0.0
        %2020 = vst [vmem:[%s348] sm:$0xff] %v1988
        %2021 = vst [vmem:[%s348 + $0x8] sm:$0xff] %v1989
        %2022 = vst [vmem:[%s348 + $0x10] sm:$0xff] %v1990
        %2023 = vst [vmem:[%s348 + $0x18] sm:$0xff] %v1991
        %2024 = vst [vmem:[%s348 + $0x20] sm:$0xff] %v1992
        %2025 = vst [vmem:[%s348 + $0x28] sm:$0xff] %v1993
        %2026 = vst [vmem:[%s348 + $0x30] sm:$0xff] %v1994
        %2027 = vst [vmem:[%s348 + $0x38] sm:$0xff] %v1995
        %2028 = vst [vmem:[%s348 + $0x40] sm:$0xff] %v1996
        %2029 = vst [vmem:[%s348 + $0x48] sm:$0xff] %v1997
        %2030 = vst [vmem:[%s348 + $0x50] sm:$0xff] %v1998
        %2031 = vst [vmem:[%s348 + $0x58] sm:$0xff] %v1999
        %2032 = vst [vmem:[%s348 + $0x60] sm:$0xff] %v2000
        %2033 = vst [vmem:[%s348 + $0x68] sm:$0xff] %v2001
        %2034 = vst [vmem:[%s348 + $0x70] sm:$0xff] %v2002
        %2035 = vst [vmem:[%s348 + $0x78] sm:$0xff] %v2003
        %2036 = vst [vmem:[%s348 + $0x80] sm:$0xff] %v2004
        %2037 = vst [vmem:[%s348 + $0x88] sm:$0xff] %v2005
        %2038 = vst [vmem:[%s348 + $0x90] sm:$0xff] %v2006
        %2039 = vst [vmem:[%s348 + $0x98] sm:$0xff] %v2007
        %2040 = vst [vmem:[%s348 + $0xa0] sm:$0xff] %v2008
        %2041 = vst [vmem:[%s348 + $0xa8] sm:$0xff] %v2009
        %2042 = vst [vmem:[%s348 + $0xb0] sm:$0xff] %v2010
        %2043 = vst [vmem:[%s348 + $0xb8] sm:$0xff] %v2011
        %2044 = vst [vmem:[%s348 + $0xc0] sm:$0xff] %v2012
        %2045 = vst [vmem:[%s348 + $0xc8] sm:$0xff] %v2013
        %2046 = vst [vmem:[%s348 + $0xd0] sm:$0xff] %v2014
        %2047 = vst [vmem:[%s348 + $0xd8] sm:$0xff] %v2015
        %2048 = vst [vmem:[%s348 + $0xe0] sm:$0xff] %v2016
        %2049 = vst [vmem:[%s348 + $0xe8] sm:$0xff] %v2017
        %2050 = vst [vmem:[%s348 + $0xf0] sm:$0xff] %v2018
        %2051 = vst [vmem:[%s348 + $0xf8] sm:$0xff] %v2019
        %p2052 = scmp.lt.s32.totalorder %s15, 1
        %s2053 = scalar_select %p2052, %s15, 1
        %s2054 = smul.addr %s2053, 32
        %s2055 = smul.addr %s2054, 8
        %s2056 = scalar_lea.vmem %s3, %s2055
        // Predicated region
        $region75: #{inception_a_forward.7} parent=65 // pred_check
          %p2057 = pneg %p101
        $region76: #{inception_a_forward.7} parent=65 // pred_check_branch
          %2059 = sbr.rel (%p2057) target = $region78
        $region77: #{inception_a_forward.7} parent=65 // pred_region
          _
        $region78: #{inception_a_forward.7} parent=65 // pred_fallthru
          _
      $region66: #{inception_a_forward.7} parent=5 // pred_fallthru
        _
      %p2060 = scmp.le.s32.totalorder 2, %s10
      // Predicated region
      $region79: #{inception_a_forward.7} parent=5 // pred_check
        %p2061 = pneg %p2060
      $region80: #{inception_a_forward.7} parent=5 // pred_check_branch
        %2063 = sbr.rel (%p2061) target = $region82
      $region81: #{inception_a_forward.7} parent=5 // pred_region
        %s2064 = ssub.s32 %s10, 2
        // Predicated region
        $region83: #{inception_a_forward.7} parent=81 // pred_check
          %p2065 = pneg %p107
        $region84: #{inception_a_forward.7} parent=81 // pred_check_branch
          %2067 = sbr.rel (%p2065) target = $region86
        $region85: #{inception_a_forward.7} parent=81 // pred_region
          %p2068 = scmp.lt.s32.totalorder %s16, 1
          %s2069 = scalar_select %p2068, %s16, 1
          %s2070 = smul.addr %s2069, 32
          %s2071 = smul.addr %s2070, 8
          %s2072 = scalar_lea.vmem %s3, %s2071
        $region86: #{inception_a_forward.7} parent=81 // pred_fallthru
          _
      $region82: #{inception_a_forward.7} parent=5 // pred_fallthru
        _
    $region6: #{inception_a_forward.7} parent=1 // loop_footer
      %s14 = sadd.s32 1, %s10
    $region7: #{inception_a_forward.7} parent=1 // loop_footer_branch
      %9 = sbr.rel target = $region3
    $region8: #{inception_a_forward.7} parent=1 // loop_exit
      _
    %2073 = vsyncpa [#allocation4], 1
    %s2074 = scalar_lea.sflag [#allocation4], 1
    %2075 = vsyncpa %s2074, 1

// kernel: inception_a_forward.8
$region0: #{inception_a_forward.8}
  #allocation0 [shape = 'u32[]', space=smem, size = 0x4, offset = 0x4, fixed_abs, tag = 'smem constant byte address 0x4 - core index']
  #allocation1 [shape = 'u32[72,128]{1,0:T(1,128)}', space=vmem, size = 0x9000, scoped, tag = 'internal scratch']
  %s0 = inlined_call_operand.vmem [shape: f32[2,16,16,128], index: 0, kind: input, shape index: {}]
  %s1 = inlined_call_operand.hbm [shape: f32[1152,128], index: 1, kind: input, shape index: {}]
  %s2 = inlined_call_operand.vmem [shape: f32[1,128], index: 2, kind: input, shape index: {}]
  %s3 = inlined_call_operand.vmem [shape: f32[2,256,128], index: 3, kind: output, shape index: {}]
  %s4 = sld [smem:[#allocation0]]
  $region49: #{inception_a_forward.8} parent=0
    _
  %s6 = ssub.s32 1, %s4
  %s7 = scalar_select 0, %s6, %s4
  $region1: #{inception_a_forward.8} parent=0
    #allocation2 [shape = 'u8[589824]{0}', space=vmem, size = 0x90000, scoped, tag = 'input window, operand 1, single buffered']
    #allocation3 [shape = 's32[2]{0}', space=sflag, size = 0x8, scoped, tag = 'scoped memory for inception_a_forward.8']
    %8 = vsyncpa [#allocation3], 0
    loop: start=0, step=1, limit=4
    $region2: #{inception_a_forward.8} parent=1 // loop_pre_header
      _
    $region3: #{inception_a_forward.8} parent=1 // loop_header
      %s10 = sphi 0, %s14
      %p11 = scmp.ge.s32.totalorder %s10, 4
      %s20 = sphi 0, %s22
      %s23 = sphi 0, %s20
      %s24 = sphi 0, %s23
      %s40 = sphi 0, %s24
      %s44 = sphi 0, %s44
      %s46 = sphi 0, %s44
      %s47 = sphi 0, %s46
      %s61 = sphi 0, %s47
      %s65 = sphi 0, %s65
      %s67 = sphi 0, %s65
      %s68 = sphi 0, %s67
      %s82 = sphi 0, %s68
      %s88 = sphi 0, %s90
      %s91 = sphi 0, %s88
      %s92 = sphi 0, %s91
      %s108 = sphi 0, %s92
    $region4: #{inception_a_forward.8} parent=1 // loop_header_branch
      %13 = sbr.rel (%p11) target = $region8
    $region5: #{inception_a_forward.8} parent=1 // loop_body
      %s15 = ssub.s32 %s10, 1
      %s16 = ssub.s32 %s10, 2
      %s17 = sadd.s32 %s10, 1
      %s18 = ssub.s32 %s10, %s17
      %p19 = scmp.eq.s32.totalorder %s18, 0
      %s21 = sadd.s32 %s20, 1
      %s22 = scalar_select %p19, %s20, %s21
      %p25 = pneg %p19
      %p26 = scmp.eq.s32.totalorder %s10, 1
      %p27 = por %p25, %p26
      %p28 = scmp.ne.s32.totalorder %s20, %s23
      %p29 = scmp.eq.s32.totalorder %s10, 0
      %p30 = por %p28, %p29
      %p31 = scmp.ne.s32.totalorder %s20, %s23
      %p32 = scmp.eq.s32.totalorder %s15, 1
      %p33 = por %p31, %p32
      %p34 = scmp.ne.s32.totalorder %s23, %s24
      %p35 = scmp.eq.s32.totalorder %s15, 0
      %p36 = por %p34, %p35
      %p37 = scmp.ne.s32.totalorder %s23, %s24
      %p38 = scmp.eq.s32.totalorder %s16, 1
      %p39 = por %p37, %p38
      %p41 = scmp.ne.s32.totalorder %s24, %s40
      %p42 = scmp.eq.s32.totalorder %s16, 0
      %p43 = por %p41, %p42
      %s45 = sadd.s32 %s44, 1
      %p48 = scmp.eq.s32.totalorder %s10, 1
      %p49 = scmp.ne.s32.totalorder %s44, %s46
      %p50 = scmp.eq.s32.totalorder %s10, 0
      %p51 = por %p49, %p50
      %p52 = scmp.ne.s32.totalorder %s44, %s46
      %p53 = scmp.eq.s32.totalorder %s15, 1
      %p54 = por %p52, %p53
      %p55 = scmp.ne.s32.totalorder %s46, %s47
      %p56 = scmp.eq.s32.totalorder %s15, 0
      %p57 = por %p55, %p56
      %p58 = scmp.ne.s32.totalorder %s46, %s47
      %p59 = scmp.eq.s32.totalorder %s16, 1
      %p60 = por %p58, %p59
      %p62 = scmp.ne.s32.totalorder %s47, %s61
      %p63 = scmp.eq.s32.totalorder %s16, 0
      %p64 = por %p62, %p63
      %s66 = sadd.s32 %s65, 1
      %p69 = scmp.eq.s32.totalorder %s10, 1
      %p70 = scmp.ne.s32.totalorder %s65, %s67
      %p71 = scmp.eq.s32.totalorder %s10, 0
      %p72 = por %p70, %p71
      %p73 = scmp.ne.s32.totalorder %s65, %s67
      %p74 = scmp.eq.s32.totalorder %s15, 1
      %p75 = por %p73, %p74
      %p76 = scmp.ne.s32.totalorder %s67, %s68
      %p77 = scmp.eq.s32.totalorder %s15, 0
      %p78 = por %p76, %p77
      %p79 = scmp.ne.s32.totalorder %s67, %s68
      %p80 = scmp.eq.s32.totalorder %s16, 1
      %p81 = por %p79, %p80
      %p83 = scmp.ne.s32.totalorder %s68, %s82
      %p84 = scmp.eq.s32.totalorder %s16, 0
      %p85 = por %p83, %p84
      %s86 = ssub.s32 %s10, %s17
      %p87 = scmp.eq.s32.totalorder %s86, 0
      %s89 = sadd.s32 %s88, 1
      %s90 = scalar_select %p87, %s88, %s89
      %p93 = pneg %p87
      %p94 = scmp.eq.s32.totalorder %s10, 1
      %p95 = por %p93, %p94
      %p96 = scmp.ne.s32.totalorder %s88, %s91
      %p97 = scmp.eq.s32.totalorder %s10, 0
      %p98 = por %p96, %p97
      %p99 = scmp.ne.s32.totalorder %s88, %s91
      %p100 = scmp.eq.s32.totalorder %s15, 1
      %p101 = por %p99, %p100
      %p102 = scmp.ne.s32.totalorder %s91, %s92
      %p103 = scmp.eq.s32.totalorder %s15, 0
      %p104 = por %p102, %p103
      %p105 = scmp.ne.s32.totalorder %s91, %s92
      %p106 = scmp.eq.s32.totalorder %s16, 1
      %p107 = por %p105, %p106
      %p109 = scmp.ne.s32.totalorder %s92, %s108
      %p110 = scmp.eq.s32.totalorder %s16, 0
      %p111 = por %p109, %p110
      %p112 = scmp.le.s32.totalorder 1, %s10
      %p113 = scmp.lt.s32.totalorder %s10, 3
      %p114 = pnand %p112, %p113
      %p115 = pneg %p114
      // Predicated region
      $region9: #{inception_a_forward.8} parent=5 // pred_check
        _
      $region10: #{inception_a_forward.8} parent=5 // pred_check_branch
        %117 = sbr.rel (%p114) target = $region12
      $region11: #{inception_a_forward.8} parent=5 // pred_region
        %s118 = ssub.s32 %s10, 1
        // Predicated region
        $region13: #{inception_a_forward.8} parent=11 // pred_check
          %p119 = pneg %p57
        $region14: #{inception_a_forward.8} parent=11 // pred_check_branch
          %121 = sbr.rel (%p119) target = $region16
        $region15: #{inception_a_forward.8} parent=11 // pred_region
          %123 = vsyncadd [#allocation3], 0
          %s124 = sshll.u32 %s1, 4
          %s125 = int_to_ptr.hbm [resolvable:$true] %s124
          %s126 = sshll.u32 [#allocation2], 4
          %s127 = int_to_ptr.vmem [resolvable:$true] %s126
          %132 = dma.hbm_to_vmem [thread:$0]  %s125, 18432, %s127, [#allocation3], 128, 128, 8
        $region16: #{inception_a_forward.8} parent=11 // pred_fallthru
          _
        // Predicated region
        $region17: #{inception_a_forward.8} parent=11 // pred_check
          %p133 = pneg %p78
        $region18: #{inception_a_forward.8} parent=11 // pred_check_branch
          %135 = sbr.rel (%p133) target = $region20
        $region19: #{inception_a_forward.8} parent=11 // pred_region
          _
        $region20: #{inception_a_forward.8} parent=11 // pred_fallthru
          _
      $region12: #{inception_a_forward.8} parent=5 // pred_fallthru
        _
      %p136 = scmp.lt.s32.totalorder %s10, 2
      // Predicated region
      $region21: #{inception_a_forward.8} parent=5 // pred_check
        %p137 = pneg %p136
      $region22: #{inception_a_forward.8} parent=5 // pred_check_branch
        %139 = sbr.rel (%p137) target = $region24
      $region23: #{inception_a_forward.8} parent=5 // pred_region
        // Predicated region
        $region25: #{inception_a_forward.8} parent=23 // pred_check
          %p140 = pneg %p30
        $region26: #{inception_a_forward.8} parent=23 // pred_check_branch
          %142 = sbr.rel (%p140) target = $region28
        $region27: #{inception_a_forward.8} parent=23 // pred_region
          %p143 = scmp.lt.s32.totalorder %s10, 1
          %s144 = scalar_select %p143, %s10, 1
          %s145 = smul.addr %s144, 32
          %s146 = smul.addr %s145, 8
          %s147 = scalar_lea.vmem %s0, %s146
        $region28: #{inception_a_forward.8} parent=23 // pred_fallthru
          _
      $region24: #{inception_a_forward.8} parent=5 // pred_fallthru
        _
      %p148 = scmp.le.s32.totalorder 1, %s10
      %p149 = scmp.lt.s32.totalorder %s10, 3
      %p150 = pnand %p148, %p149
      %p151 = pneg %p150
      // Predicated region
      $region29: #{inception_a_forward.8} parent=5 // pred_check
        _
      $region30: #{inception_a_forward.8} parent=5 // pred_check_branch
        %153 = sbr.rel (%p150) target = $region32
      $region31: #{inception_a_forward.8} parent=5 // pred_region
        %s154 = ssub.s32 %s10, 1
        // Predicated region
        $region33: #{inception_a_forward.8} parent=31 // pred_check
          %p155 = pneg %p57
        $region34: #{inception_a_forward.8} parent=31 // pred_check_branch
          %157 = sbr.rel (%p155) target = $region36
        $region35: #{inception_a_forward.8} parent=31 // pred_region
          %159 = dma.done [#allocation3], 18432
        $region36: #{inception_a_forward.8} parent=31 // pred_fallthru
          _
        %p160 = scmp.lt.s32.totalorder %s15, 1
        %s161 = scalar_select %p160, %s15, 1
        %s162 = smul.addr %s161, 32
        %s163 = smul.addr %s162, 8
        %s164 = scalar_lea.vmem %s0, %s163
        %p165 = pneg %p36
        %p166 = pneg %p33
        %p167 = pneg %p57
        %p168 = pneg %p54
        %p169 = pneg %p78
        %p170 = pneg %p75
        %p171 = pneg %p104
        %p172 = pneg %p101
        %p173 = scmp.lt.s32.totalorder %s15, 1
        %s174 = scalar_select %p173, %s15, 1
        %s175 = smul.addr %s174, 32
        %s176 = smul.addr %s175, 8
        %s177 = scalar_lea.vmem %s3, %s176
        %p178 = scmp.lt.s32.totalorder %s15, 1
        %s179 = scalar_select %p178, %s15, 1
        %s180 = smul.addr %s179, 32
        %s181 = smul.addr %s180, 8
        %s182 = scalar_lea.vmem %s0, %s181
        %p183 = scmp.lt.s32.totalorder %s15, 1
        %s184 = scalar_select %p183, %s15, 1
        %s185 = smul.addr %s184, 32
        %s186 = smul.addr %s185, 8
        %s187 = scalar_lea.vmem %s3, %s186
        %v188 = vld [vmem:[%s182] sm:$0xff]
        %v189 = vld [vmem:[%s182 + $0x8] sm:$0xff]
        %v190 = vld [vmem:[%s182 + $0x10] sm:$0xff]
        %v191 = vld [vmem:[%s182 + $0x18] sm:$0xff]
        %v192 = vld [vmem:[%s182 + $0x20] sm:$0xff]
        %v193 = vld [vmem:[%s182 + $0x28] sm:$0xff]
        %v194 = vld [vmem:[%s182 + $0x30] sm:$0xff]
        %v195 = vld [vmem:[%s182 + $0x38] sm:$0xff]
        %v196 = vld [vmem:[%s182 + $0x40] sm:$0xff]
        %v197 = vld [vmem:[%s182 + $0x48] sm:$0xff]
        %v198 = vld [vmem:[%s182 + $0x50] sm:$0xff]
        %v199 = vld [vmem:[%s182 + $0x58] sm:$0xff]
        %v200 = vld [vmem:[%s182 + $0x60] sm:$0xff]
        %v201 = vld [vmem:[%s182 + $0x68] sm:$0xff]
        %v202 = vld [vmem:[%s182 + $0x70] sm:$0xff]
        %v203 = vld [vmem:[%s182 + $0x78] sm:$0xff]
        %v204 = vld [vmem:[%s182 + $0x80] sm:$0xff]
        %v205 = vld [vmem:[%s182 + $0x88] sm:$0xff]
        %v206 = vld [vmem:[%s182 + $0x90] sm:$0xff]
        %v207 = vld [vmem:[%s182 + $0x98] sm:$0xff]
        %v208 = vld [vmem:[%s182 + $0xa0] sm:$0xff]
        %v209 = vld [vmem:[%s182 + $0xa8] sm:$0xff]
        %v210 = vld [vmem:[%s182 + $0xb0] sm:$0xff]
        %v211 = vld [vmem:[%s182 + $0xb8] sm:$0xff]
        %v212 = vld [vmem:[%s182 + $0xc0] sm:$0xff]
        %v213 = vld [vmem:[%s182 + $0xc8] sm:$0xff]
        %v214 = vld [vmem:[%s182 + $0xd0] sm:$0xff]
        %v215 = vld [vmem:[%s182 + $0xd8] sm:$0xff]
        %v216 = vld [vmem:[%s182 + $0xe0] sm:$0xff]
        %v217 = vld [vmem:[%s182 + $0xe8] sm:$0xff]
        %v218 = vld [vmem:[%s182 + $0xf0] sm:$0xff]
        %v219 = vld [vmem:[%s182 + $0xf8] sm:$0xff]
        %vm253 = vcmask 1040384
        %v254 = vrot.slane 0.0, 7
        %v255 = vsel %vm253, %v254, %v254
        %v256 = vrot.slane %v188, 7
        %v257 = vrot.slane %v189, 7
        %v258 = vsel %vm253, %v256, %v257
        %v259 = vrot.slane %v190, 7
        %v260 = vrot.slane %v191, 7
        %v261 = vsel %vm253, %v259, %v260
        %v262 = vrot.slane %v192, 7
        %v263 = vrot.slane %v193, 7
        %v264 = vsel %vm253, %v262, %v263
        %v265 = vrot.slane %v194, 7
        %v266 = vrot.slane %v195, 7
        %v267 = vsel %vm253, %v265, %v266
        %v268 = vrot.slane %v196, 7
        %v269 = vrot.slane %v197, 7
        %v270 = vsel %vm253, %v268, %v269
        %v271 = vrot.slane %v198, 7
        %v272 = vrot.slane %v199, 7
        %v273 = vsel %vm253, %v271, %v272
        %v274 = vrot.slane %v200, 7
        %v275 = vrot.slane %v201, 7
        %v276 = vsel %vm253, %v274, %v275
        %v277 = vrot.slane %v202, 7
        %v278 = vrot.slane %v203, 7
        %v279 = vsel %vm253, %v277, %v278
        %v280 = vrot.slane %v204, 7
        %v281 = vrot.slane %v205, 7
        %v282 = vsel %vm253, %v280, %v281
        %v283 = vrot.slane %v206, 7
        %v284 = vrot.slane %v207, 7
        %v285 = vsel %vm253, %v283, %v284
        %v286 = vrot.slane %v208, 7
        %v287 = vrot.slane %v209, 7
        %v288 = vsel %vm253, %v286, %v287
        %v289 = vrot.slane %v210, 7
        %v290 = vrot.slane %v211, 7
        %v291 = vsel %vm253, %v289, %v290
        %v292 = vrot.slane %v212, 7
        %v293 = vrot.slane %v213, 7
        %v294 = vsel %vm253, %v292, %v293
        %v295 = vrot.slane %v214, 7
        %v296 = vrot.slane %v215, 7
        %v297 = vsel %vm253, %v295, %v296
        %v298 = vrot.slane %v216, 7
        %v299 = vrot.slane %v217, 7
        %v300 = vsel %vm253, %v298, %v299
        %v301 = vrot.slane %v218, 7
        %v302 = vrot.slane %v219, 7
        %v303 = vsel %vm253, %v301, %v302
        %v354 = vsel %vm253, 0.0, %v254
        %v355 = vsel %vm253, 0.0, %v256
        %v356 = vsel %vm253, 0.0, %v259
        %v357 = vsel %vm253, 0.0, %v262
        %v358 = vsel %vm253, 0.0, %v265
        %v359 = vsel %vm253, 0.0, %v268
        %v360 = vsel %vm253, 0.0, %v271
        %v361 = vsel %vm253, 0.0, %v274
        %v362 = vsel %vm253, 0.0, %v277
        %v363 = vsel %vm253, 0.0, %v280
        %v364 = vsel %vm253, 0.0, %v283
        %v365 = vsel %vm253, 0.0, %v286
        %v366 = vsel %vm253, 0.0, %v289
        %v367 = vsel %vm253, 0.0, %v292
        %v368 = vsel %vm253, 0.0, %v295
        %v369 = vsel %vm253, 0.0, %v298
        %v370 = vsel %vm253, 0.0, %v301
        %v371 = vsel %vm253, %v254, 0.0
        %v372 = vsel %vm253, %v257, 0.0
        %v373 = vsel %vm253, %v260, 0.0
        %v374 = vsel %vm253, %v263, 0.0
        %v375 = vsel %vm253, %v266, 0.0
        %v376 = vsel %vm253, %v269, 0.0
        %v377 = vsel %vm253, %v272, 0.0
        %v378 = vsel %vm253, %v275, 0.0
        %v379 = vsel %vm253, %v278, 0.0
        %v380 = vsel %vm253, %v281, 0.0
        %v381 = vsel %vm253, %v284, 0.0
        %v382 = vsel %vm253, %v287, 0.0
        %v383 = vsel %vm253, %v290, 0.0
        %v384 = vsel %vm253, %v293, 0.0
        %v385 = vsel %vm253, %v296, 0.0
        %v386 = vsel %vm253, %v299, 0.0
        %v387 = vsel %vm253, %v302, 0.0
        %vm420 = vcmask 1046528
        %v421 = vrot.slane %v354, 1
        %v422 = vrot.slane %v255, 1
        %v423 = vsel %vm420, %v421, %v422
        %v424 = vrot.slane %v371, 1
        %v425 = vsel %vm420, %v422, %v424
        %v426 = vrot.slane %v355, 1
        %v427 = vrot.slane %v258, 1
        %v428 = vsel %vm420, %v426, %v427
        %v429 = vrot.slane %v372, 1
        %v430 = vsel %vm420, %v427, %v429
        %v431 = vrot.slane %v356, 1
        %v432 = vrot.slane %v261, 1
        %v433 = vsel %vm420, %v431, %v432
        %v434 = vrot.slane %v373, 1
        %v435 = vsel %vm420, %v432, %v434
        %v436 = vrot.slane %v357, 1
        %v437 = vrot.slane %v264, 1
        %v438 = vsel %vm420, %v436, %v437
        %v439 = vrot.slane %v374, 1
        %v440 = vsel %vm420, %v437, %v439
        %v441 = vrot.slane %v358, 1
        %v442 = vrot.slane %v267, 1
        %v443 = vsel %vm420, %v441, %v442
        %v444 = vrot.slane %v375, 1
        %v445 = vsel %vm420, %v442, %v444
        %v446 = vrot.slane %v359, 1
        %v447 = vrot.slane %v270, 1
        %v448 = vsel %vm420, %v446, %v447
        %v449 = vrot.slane %v376, 1
        %v450 = vsel %vm420, %v447, %v449
        %v451 = vrot.slane %v360, 1
        %v452 = vrot.slane %v273, 1
        %v453 = vsel %vm420, %v451, %v452
        %v454 = vrot.slane %v377, 1
        %v455 = vsel %vm420, %v452, %v454
        %v456 = vrot.slane %v361, 1
        %v457 = vrot.slane %v276, 1
        %v458 = vsel %vm420, %v456, %v457
        %v459 = vrot.slane %v378, 1
        %v460 = vsel %vm420, %v457, %v459
        %v461 = vrot.slane %v362, 1
        %v462 = vrot.slane %v279, 1
        %v463 = vsel %vm420, %v461, %v462
        %v464 = vrot.slane %v379, 1
        %v465 = vsel %vm420, %v462, %v464
        %v466 = vrot.slane %v363, 1
        %v467 = vrot.slane %v282, 1
        %v468 = vsel %vm420, %v466, %v467
        %v469 = vrot.slane %v380, 1
        %v470 = vsel %vm420, %v467, %v469
        %v471 = vrot.slane %v364, 1
        %v472 = vrot.slane %v285, 1
        %v473 = vsel %vm420, %v471, %v472
        %v474 = vrot.slane %v381, 1
        %v475 = vsel %vm420, %v472, %v474
        %v476 = vrot.slane %v365, 1
        %v477 = vrot.slane %v288, 1
        %v478 = vsel %vm420, %v476, %v477
        %v479 = vrot.slane %v382, 1
        %v480 = vsel %vm420, %v477, %v479
        %v481 = vrot.slane %v366, 1
        %v482 = vrot.slane %v291, 1
        %v483 = vsel %vm420, %v481, %v482
        %v484 = vrot.slane %v383, 1
        %v485 = vsel %vm420, %v482, %v484
        %v486 = vrot.slane %v367, 1
        %v487 = vrot.slane %v294, 1
        %v488 = vsel %vm420, %v486, %v487
        %v489 = vrot.slane %v384, 1
        %v490 = vsel %vm420, %v487, %v489
        %v491 = vrot.slane %v368, 1
        %v492 = vrot.slane %v297, 1
        %v493 = vsel %vm420, %v491, %v492
        %v494 = vrot.slane %v385, 1
        %v495 = vsel %vm420, %v492, %v494
        %v496 = vrot.slane %v369, 1
        %v497 = vrot.slane %v300, 1
        %v498 = vsel %vm420, %v496, %v497
        %v499 = vrot.slane %v386, 1
        %v500 = vsel %vm420, %v497, %v499
        %vm533 = vcmask 1045504
        %v534 = vrot.slane %v354, 2
        %v535 = vrot.slane %v255, 2
        %v536 = vsel %vm533, %v534, %v535
        %v537 = vrot.slane %v371, 2
        %v538 = vsel %vm533, %v535, %v537
        %v539 = vrot.slane %v355, 2
        %v540 = vrot.slane %v258, 2
        %v541 = vsel %vm533, %v539, %v540
        %v542 = vrot.slane %v372, 2
        %v543 = vsel %vm533, %v540, %v542
        %v544 = vrot.slane %v356, 2
        %v545 = vrot.slane %v261, 2
        %v546 = vsel %vm533, %v544, %v545
        %v547 = vrot.slane %v373, 2
        %v548 = vsel %vm533, %v545, %v547
        %v549 = vrot.slane %v357, 2
        %v550 = vrot.slane %v264, 2
        %v551 = vsel %vm533, %v549, %v550
        %v552 = vrot.slane %v374, 2
        %v553 = vsel %vm533, %v550, %v552
        %v554 = vrot.slane %v358, 2
        %v555 = vrot.slane %v267, 2
        %v556 = vsel %vm533, %v554, %v555
        %v557 = vrot.slane %v375, 2
        %v558 = vsel %vm533, %v555, %v557
        %v559 = vrot.slane %v359, 2
        %v560 = vrot.slane %v270, 2
        %v561 = vsel %vm533, %v559, %v560
        %v562 = vrot.slane %v376, 2
        %v563 = vsel %vm533, %v560, %v562
        %v564 = vrot.slane %v360, 2
        %v565 = vrot.slane %v273, 2
        %v566 = vsel %vm533, %v564, %v565
        %v567 = vrot.slane %v377, 2
        %v568 = vsel %vm533, %v565, %v567
        %v569 = vrot.slane %v361, 2
        %v570 = vrot.slane %v276, 2
        %v571 = vsel %vm533, %v569, %v570
        %v572 = vrot.slane %v378, 2
        %v573 = vsel %vm533, %v570, %v572
        %v574 = vrot.slane %v362, 2
        %v575 = vrot.slane %v279, 2
        %v576 = vsel %vm533, %v574, %v575
        %v577 = vrot.slane %v379, 2
        %v578 = vsel %vm533, %v575, %v577
        %v579 = vrot.slane %v363, 2
        %v580 = vrot.slane %v282, 2
        %v581 = vsel %vm533, %v579, %v580
        %v582 = vrot.slane %v380, 2
        %v583 = vsel %vm533, %v580, %v582
        %v584 = vrot.slane %v364, 2
        %v585 = vrot.slane %v285, 2
        %v586 = vsel %vm533, %v584, %v585
        %v587 = vrot.slane %v381, 2
        %v588 = vsel %vm533, %v585, %v587
        %v589 = vrot.slane %v365, 2
        %v590 = vrot.slane %v288, 2
        %v591 = vsel %vm533, %v589, %v590
        %v592 = vrot.slane %v382, 2
        %v593 = vsel %vm533, %v590, %v592
        %v594 = vrot.slane %v366, 2
        %v595 = vrot.slane %v291, 2
        %v596 = vsel %vm533, %v594, %v595
        %v597 = vrot.slane %v383, 2
        %v598 = vsel %vm533, %v595, %v597
        %v599 = vrot.slane %v367, 2
        %v600 = vrot.slane %v294, 2
        %v601 = vsel %vm533, %v599, %v600
        %v602 = vrot.slane %v384, 2
        %v603 = vsel %vm533, %v600, %v602
        %v604 = vrot.slane %v368, 2
        %v605 = vrot.slane %v297, 2
        %v606 = vsel %vm533, %v604, %v605
        %v607 = vrot.slane %v385, 2
        %v608 = vsel %vm533, %v605, %v607
        %v609 = vrot.slane %v369, 2
        %v610 = vrot.slane %v300, 2
        %v611 = vsel %vm533, %v609, %v610
        %v612 = vrot.slane %v386, 2
        %v613 = vsel %vm533, %v610, %v612
        %v648 = vrot.slane %v370, 1
        %v649 = vrot.slane %v303, 1
        %v650 = vsel %vm420, %v648, %v649
        %v651 = vrot.slane %v387, 1
        %v652 = vsel %vm420, %v649, %v651
        %v655 = vrot.slane %v370, 2
        %v656 = vrot.slane %v303, 2
        %v657 = vsel %vm533, %v655, %v656
        %v658 = vrot.slane %v387, 2
        %v659 = vsel %vm533, %v656, %v658
        %v662 = vld [vmem:[#allocation2] sm:$0xff]
        %v663 = vld [vmem:[#allocation2 + $0x8] sm:$0xff]
        %v664 = vld [vmem:[#allocation2 + $0x10] sm:$0xff]
        %v665 = vld [vmem:[#allocation2 + $0x18] sm:$0xff]
        %v666 = vld [vmem:[#allocation2 + $0x20] sm:$0xff]
        %v667 = vld [vmem:[#allocation2 + $0x28] sm:$0xff]
        %v668 = vld [vmem:[#allocation2 + $0x30] sm:$0xff]
        %v669 = vld [vmem:[#allocation2 + $0x38] sm:$0xff]
        %v670 = vld [vmem:[#allocation2 + $0x40] sm:$0xff]
        %v671 = vld [vmem:[#allocation2 + $0x48] sm:$0xff]
        %v672 = vld [vmem:[#allocation2 + $0x50] sm:$0xff]
        %v673 = vld [vmem:[#allocation2 + $0x58] sm:$0xff]
        %v674 = vld [vmem:[#allocation2 + $0x60] sm:$0xff]
        %v675 = vld [vmem:[#allocation2 + $0x68] sm:$0xff]
        %v676 = vld [vmem:[#allocation2 + $0x70] sm:$0xff]
        %v677 = vld [vmem:[#allocation2 + $0x78] sm:$0xff]
        %v678 = vld [vmem:[#allocation2 + $0x80] sm:$0xff]
        %v679 = vld [vmem:[#allocation2 + $0x88] sm:$0xff]
        %v680 = vld [vmem:[#allocation2 + $0x90] sm:$0xff]
        %v681 = vld [vmem:[#allocation2 + $0x98] sm:$0xff]
        %v682 = vld [vmem:[#allocation2 + $0xa0] sm:$0xff]
        %v683 = vld [vmem:[#allocation2 + $0xa8] sm:$0xff]
        %v684 = vld [vmem:[#allocation2 + $0xb0] sm:$0xff]
        %v685 = vld [vmem:[#allocation2 + $0xb8] sm:$0xff]
        %v686 = vld [vmem:[#allocation2 + $0xc0] sm:$0xff]
        %v687 = vld [vmem:[#allocation2 + $0xc8] sm:$0xff]
        %v688 = vld [vmem:[#allocation2 + $0xd0] sm:$0xff]
        %v689 = vld [vmem:[#allocation2 + $0xd8] sm:$0xff]
        %v690 = vld [vmem:[#allocation2 + $0xe0] sm:$0xff]
        %v691 = vld [vmem:[#allocation2 + $0xe8] sm:$0xff]
        %v692 = vld [vmem:[#allocation2 + $0xf0] sm:$0xff]
        %v693 = vld [vmem:[#allocation2 + $0xf8] sm:$0xff]
        %v694 = vld [vmem:[#allocation2 + $0x100] sm:$0xff]
        %v695 = vld [vmem:[#allocation2 + $0x108] sm:$0xff]
        %v696 = vld [vmem:[#allocation2 + $0x110] sm:$0xff]
        %v697 = vld [vmem:[#allocation2 + $0x118] sm:$0xff]
        %v698 = vld [vmem:[#allocation2 + $0x120] sm:$0xff]
        %v699 = vld [vmem:[#allocation2 + $0x128] sm:$0xff]
        %v700 = vld [vmem:[#allocation2 + $0x130] sm:$0xff]
        %v701 = vld [vmem:[#allocation2 + $0x138] sm:$0xff]
        %v702 = vld [vmem:[#allocation2 + $0x140] sm:$0xff]
        %v703 = vld [vmem:[#allocation2 + $0x148] sm:$0xff]
        %v704 = vld [vmem:[#allocation2 + $0x150] sm:$0xff]
        %v705 = vld [vmem:[#allocation2 + $0x158] sm:$0xff]
        %v706 = vld [vmem:[#allocation2 + $0x160] sm:$0xff]
        %v707 = vld [vmem:[#allocation2 + $0x168] sm:$0xff]
        %v708 = vld [vmem:[#allocation2 + $0x170] sm:$0xff]
        %v709 = vld [vmem:[#allocation2 + $0x178] sm:$0xff]
        %v710 = vld [vmem:[#allocation2 + $0x180] sm:$0xff]
        %v711 = vld [vmem:[#allocation2 + $0x188] sm:$0xff]
        %v712 = vld [vmem:[#allocation2 + $0x190] sm:$0xff]
        %v713 = vld [vmem:[#allocation2 + $0x198] sm:$0xff]
        %v714 = vld [vmem:[#allocation2 + $0x1a0] sm:$0xff]
        %v715 = vld [vmem:[#allocation2 + $0x1a8] sm:$0xff]
        %v716 = vld [vmem:[#allocation2 + $0x1b0] sm:$0xff]
        %v717 = vld [vmem:[#allocation2 + $0x1b8] sm:$0xff]
        %v718 = vld [vmem:[#allocation2 + $0x1c0] sm:$0xff]
        %v719 = vld [vmem:[#allocation2 + $0x1c8] sm:$0xff]
        %v720 = vld [vmem:[#allocation2 + $0x1d0] sm:$0xff]
        %v721 = vld [vmem:[#allocation2 + $0x1d8] sm:$0xff]
        %v722 = vld [vmem:[#allocation2 + $0x1e0] sm:$0xff]
        %v723 = vld [vmem:[#allocation2 + $0x1e8] sm:$0xff]
        %v724 = vld [vmem:[#allocation2 + $0x1f0] sm:$0xff]
        %v725 = vld [vmem:[#allocation2 + $0x1f8] sm:$0xff]
        %v726 = vld [vmem:[#allocation2 + $0x200] sm:$0xff]
        %v727 = vld [vmem:[#allocation2 + $0x208] sm:$0xff]
        %v728 = vld [vmem:[#allocation2 + $0x210] sm:$0xff]
        %v729 = vld [vmem:[#allocation2 + $0x218] sm:$0xff]
        %v730 = vld [vmem:[#allocation2 + $0x220] sm:$0xff]
        %v731 = vld [vmem:[#allocation2 + $0x228] sm:$0xff]
        %v732 = vld [vmem:[#allocation2 + $0x230] sm:$0xff]
        %v733 = vld [vmem:[#allocation2 + $0x238] sm:$0xff]
        %v734 = vld [vmem:[#allocation2 + $0x240] sm:$0xff]
        %v735 = vld [vmem:[#allocation2 + $0x248] sm:$0xff]
        %v736 = vld [vmem:[#allocation2 + $0x250] sm:$0xff]
        %v737 = vld [vmem:[#allocation2 + $0x258] sm:$0xff]
        %v738 = vld [vmem:[#allocation2 + $0x260] sm:$0xff]
        %v739 = vld [vmem:[#allocation2 + $0x268] sm:$0xff]
        %v740 = vld [vmem:[#allocation2 + $0x270] sm:$0xff]
        %v741 = vld [vmem:[#allocation2 + $0x278] sm:$0xff]
        %v742 = vld [vmem:[#allocation2 + $0x280] sm:$0xff]
        %v743 = vld [vmem:[#allocation2 + $0x288] sm:$0xff]
        %v744 = vld [vmem:[#allocation2 + $0x290] sm:$0xff]
        %v745 = vld [vmem:[#allocation2 + $0x298] sm:$0xff]
        %v746 = vld [vmem:[#allocation2 + $0x2a0] sm:$0xff]
        %v747 = vld [vmem:[#allocation2 + $0x2a8] sm:$0xff]
        %v748 = vld [vmem:[#allocation2 + $0x2b0] sm:$0xff]
        %v749 = vld [vmem:[#allocation2 + $0x2b8] sm:$0xff]
        %v750 = vld [vmem:[#allocation2 + $0x2c0] sm:$0xff]
        %v751 = vld [vmem:[#allocation2 + $0x2c8] sm:$0xff]
        %v752 = vld [vmem:[#allocation2 + $0x2d0] sm:$0xff]
        %v753 = vld [vmem:[#allocation2 + $0x2d8] sm:$0xff]
        %v754 = vld [vmem:[#allocation2 + $0x2e0] sm:$0xff]
        %v755 = vld [vmem:[#allocation2 + $0x2e8] sm:$0xff]
        %v756 = vld [vmem:[#allocation2 + $0x2f0] sm:$0xff]
        %v757 = vld [vmem:[#allocation2 + $0x2f8] sm:$0xff]
        %v758 = vld [vmem:[#allocation2 + $0x300] sm:$0xff]
        %v759 = vld [vmem:[#allocation2 + $0x308] sm:$0xff]
        %v760 = vld [vmem:[#allocation2 + $0x310] sm:$0xff]
        %v761 = vld [vmem:[#allocation2 + $0x318] sm:$0xff]
        %v762 = vld [vmem:[#allocation2 + $0x320] sm:$0xff]
        %v763 = vld [vmem:[#allocation2 + $0x328] sm:$0xff]
        %v764 = vld [vmem:[#allocation2 + $0x330] sm:$0xff]
        %v765 = vld [vmem:[#allocation2 + $0x338] sm:$0xff]
        %v766 = vld [vmem:[#allocation2 + $0x340] sm:$0xff]
        %v767 = vld [vmem:[#allocation2 + $0x348] sm:$0xff]
        %v768 = vld [vmem:[#allocation2 + $0x350] sm:$0xff]
        %v769 = vld [vmem:[#allocation2 + $0x358] sm:$0xff]
        %v770 = vld [vmem:[#allocation2 + $0x360] sm:$0xff]
        %v771 = vld [vmem:[#allocation2 + $0x368] sm:$0xff]
        %v772 = vld [vmem:[#allocation2 + $0x370] sm:$0xff]
        %v773 = vld [vmem:[#allocation2 + $0x378] sm:$0xff]
        %v774 = vld [vmem:[#allocation2 + $0x380] sm:$0xff]
        %v775 = vld [vmem:[#allocation2 + $0x388] sm:$0xff]
        %v776 = vld [vmem:[#allocation2 + $0x390] sm:$0xff]
        %v777 = vld [vmem:[#allocation2 + $0x398] sm:$0xff]
        %v778 = vld [vmem:[#allocation2 + $0x3a0] sm:$0xff]
        %v779 = vld [vmem:[#allocation2 + $0x3a8] sm:$0xff]
        %v780 = vld [vmem:[#allocation2 + $0x3b0] sm:$0xff]
        %v781 = vld [vmem:[#allocation2 + $0x3b8] sm:$0xff]
        %v782 = vld [vmem:[#allocation2 + $0x3c0] sm:$0xff]
        %v783 = vld [vmem:[#allocation2 + $0x3c8] sm:$0xff]
        %v784 = vld [vmem:[#allocation2 + $0x3d0] sm:$0xff]
        %v785 = vld [vmem:[#allocation2 + $0x3d8] sm:$0xff]
        %v786 = vld [vmem:[#allocation2 + $0x3e0] sm:$0xff]
        %v787 = vld [vmem:[#allocation2 + $0x3e8] sm:$0xff]
        %v788 = vld [vmem:[#allocation2 + $0x3f0] sm:$0xff]
        %v789 = vld [vmem:[#allocation2 + $0x3f8] sm:$0xff]
        %v790 = vld [vmem:[#allocation2 + $0x400] sm:$0xff]
        %v791 = vld [vmem:[#allocation2 + $0x408] sm:$0xff]
        %v792 = vld [vmem:[#allocation2 + $0x410] sm:$0xff]
        %v793 = vld [vmem:[#allocation2 + $0x418] sm:$0xff]
        %v794 = vld [vmem:[#allocation2 + $0x420] sm:$0xff]
        %v795 = vld [vmem:[#allocation2 + $0x428] sm:$0xff]
        %v796 = vld [vmem:[#allocation2 + $0x430] sm:$0xff]
        %v797 = vld [vmem:[#allocation2 + $0x438] sm:$0xff]
        %v798 = vld [vmem:[#allocation2 + $0x440] sm:$0xff]
        %v799 = vld [vmem:[#allocation2 + $0x448] sm:$0xff]
        %v800 = vld [vmem:[#allocation2 + $0x450] sm:$0xff]
        %v801 = vld [vmem:[#allocation2 + $0x458] sm:$0xff]
        %v802 = vld [vmem:[#allocation2 + $0x460] sm:$0xff]
        %v803 = vld [vmem:[#allocation2 + $0x468] sm:$0xff]
        %v804 = vld [vmem:[#allocation2 + $0x470] sm:$0xff]
        %v805 = vld [vmem:[#allocation2 + $0x478] sm:$0xff]
        %v806 = vld [vmem:[%s2] sm:$0x1]
        %v808 = vperm.slane %v806, 0
        %810 = vmatpush.msra.mxu0 %v677
        %811 = vmatpush.msra.mxu0 %v676
        %812 = vmatpush.msra.mxu0 %v675
        %813 = vmatpush.msra.mxu0 %v674
        %814 = vmatpush.msra.mxu0 %v673
        %815 = vmatpush.msra.mxu0 %v672
        %816 = vmatpush.msra.mxu0 %v671
        %817 = vmatpush.msra.mxu0 %v670
        %818 = vmatpush.msra.mxu0 %v669
        %819 = vmatpush.msra.mxu0 %v668
        %820 = vmatpush.msra.mxu0 %v667
        %821 = vmatpush.msra.mxu0 %v666
        %822 = vmatpush.msra.mxu0 %v665
        %823 = vmatpush.msra.mxu0 %v664
        %824 = vmatpush.msra.mxu0 %v663
        %825 = vmatpush.msra.mxu0 %v662
        %826 = vmatmul.f32.gmra.mxu0 %v354
        %v827 = vpop.f32.mrf.mxu0
        %v828 = vadd.f32 %v808, %v827
        %829 = vmatmul.f32.gmra.mxu0 %v255
        %v830 = vpop.f32.mrf.mxu0
        %v831 = vadd.f32 %v808, %v830
        %832 = vmatmul.f32.gmra.mxu0 %v355
        %v833 = vpop.f32.mrf.mxu0
        %v834 = vadd.f32 %v808, %v833
        %835 = vmatmul.f32.gmra.mxu0 %v258
        %v836 = vpop.f32.mrf.mxu0
        %v837 = vadd.f32 %v808, %v836
        %838 = vmatmul.f32.gmra.mxu0 %v356
        %v839 = vpop.f32.mrf.mxu0
        %v840 = vadd.f32 %v808, %v839
        %841 = vmatmul.f32.gmra.mxu0 %v261
        %v842 = vpop.f32.mrf.mxu0
        %v843 = vadd.f32 %v808, %v842
        %844 = vmatmul.f32.gmra.mxu0 %v357
        %v845 = vpop.f32.mrf.mxu0
        %v846 = vadd.f32 %v808, %v845
        %847 = vmatmul.f32.gmra.mxu0 %v264
        %v848 = vpop.f32.mrf.mxu0
        %v849 = vadd.f32 %v808, %v848
        %850 = vmatmul.f32.gmra.mxu0 %v358
        %v851 = vpop.f32.mrf.mxu0
        %v852 = vadd.f32 %v808, %v851
        %853 = vmatmul.f32.gmra.mxu0 %v267
        %v854 = vpop.f32.mrf.mxu0
        %v855 = vadd.f32 %v808, %v854
        %856 = vmatmul.f32.gmra.mxu0 %v359
        %v857 = vpop.f32.mrf.mxu0
        %v858 = vadd.f32 %v808, %v857
        %859 = vmatmul.f32.gmra.mxu0 %v270
        %v860 = vpop.f32.mrf.mxu0
        %v861 = vadd.f32 %v808, %v860
        %862 = vmatmul.f32.gmra.mxu0 %v360
        %v863 = vpop.f32.mrf.mxu0
        %v864 = vadd.f32 %v808, %v863
        %865 = vmatmul.f32.gmra.mxu0 %v273
        %v866 = vpop.f32.mrf.mxu0
        %v867 = vadd.f32 %v808, %v866
        %868 = vmatmul.f32.gmra.mxu0 %v361
        %v869 = vpop.f32.mrf.mxu0
        %v870 = vadd.f32 %v808, %v869
        %871 = vmatmul.f32.gmra.mxu0 %v276
        %v872 = vpop.f32.mrf.mxu0
        %v873 = vadd.f32 %v808, %v872
        %874 = vmatmul.f32.gmra.mxu0 %v362
        %v875 = vpop.f32.mrf.mxu0
        %v876 = vadd.f32 %v808, %v875
        %877 = vmatmul.f32.gmra.mxu0 %v279
        %v878 = vpop.f32.mrf.mxu0
        %v879 = vadd.f32 %v808, %v878
        %880 = vmatmul.f32.gmra.mxu0 %v363
        %v881 = vpop.f32.mrf.mxu0
        %v882 = vadd.f32 %v808, %v881
        %883 = vmatmul.f32.gmra.mxu0 %v282
        %v884 = vpop.f32.mrf.mxu0
        %v885 = vadd.f32 %v808, %v884
        %886 = vmatmul.f32.gmra.mxu0 %v364
        %v887 = vpop.f32.mrf.mxu0
        %v888 = vadd.f32 %v808, %v887
        %889 = vmatmul.f32.gmra.mxu0 %v285
        %v890 = vpop.f32.mrf.mxu0
        %v891 = vadd.f32 %v808, %v890
        %892 = vmatmul.f32.gmra.mxu0 %v365
        %v893 = vpop.f32.mrf.mxu0
        %v894 = vadd.f32 %v808, %v893
        %895 = vmatmul.f32.gmra.mxu0 %v288
        %v896 = vpop.f32.mrf.mxu0
        %v897 = vadd.f32 %v808, %v896
        %898 = vmatmul.f32.gmra.mxu0 %v366
        %v899 = vpop.f32.mrf.mxu0
        %v900 = vadd.f32 %v808, %v899
        %901 = vmatmul.f32.gmra.mxu0 %v291
        %v902 = vpop.f32.mrf.mxu0
        %v903 = vadd.f32 %v808, %v902
        %904 = vmatmul.f32.gmra.mxu0 %v367
        %v905 = vpop.f32.mrf.mxu0
        %v906 = vadd.f32 %v808, %v905
        %907 = vmatmul.f32.gmra.mxu0 %v294
        %v908 = vpop.f32.mrf.mxu0
        %v909 = vadd.f32 %v808, %v908
        %910 = vmatmul.f32.gmra.mxu0 %v368
        %v911 = vpop.f32.mrf.mxu0
        %v912 = vadd.f32 %v808, %v911
        %913 = vmatmul.f32.gmra.mxu0 %v297
        %v914 = vpop.f32.mrf.mxu0
        %v915 = vadd.f32 %v808, %v914
        %916 = vmatmul.f32.gmra.mxu0 %v369
        %v917 = vpop.f32.mrf.mxu0
        %v918 = vadd.f32 %v808, %v917
        %919 = vmatmul.f32.gmra.mxu0 %v300
        %v920 = vpop.f32.mrf.mxu0
        %v921 = vadd.f32 %v808, %v920
        %922 = vdwg.mxu0
        %923 = vmatpush.msra.mxu0 %v693
        %924 = vmatpush.msra.mxu0 %v692
        %925 = vmatpush.msra.mxu0 %v691
        %926 = vmatpush.msra.mxu0 %v690
        %927 = vmatpush.msra.mxu0 %v689
        %928 = vmatpush.msra.mxu0 %v688
        %929 = vmatpush.msra.mxu0 %v687
        %930 = vmatpush.msra.mxu0 %v686
        %931 = vmatpush.msra.mxu0 %v685
        %932 = vmatpush.msra.mxu0 %v684
        %933 = vmatpush.msra.mxu0 %v683
        %934 = vmatpush.msra.mxu0 %v682
        %935 = vmatpush.msra.mxu0 %v681
        %936 = vmatpush.msra.mxu0 %v680
        %937 = vmatpush.msra.mxu0 %v679
        %938 = vmatpush.msra.mxu0 %v678
        %939 = vmatmul.f32.gmra.mxu0 %v423
        %v940 = vpop.f32.mrf.mxu0
        %v941 = vadd.f32 %v828, %v940
        %942 = vmatmul.f32.gmra.mxu0 %v425
        %v943 = vpop.f32.mrf.mxu0
        %v944 = vadd.f32 %v831, %v943
        %945 = vmatmul.f32.gmra.mxu0 %v428
        %v946 = vpop.f32.mrf.mxu0
        %v947 = vadd.f32 %v834, %v946
        %948 = vmatmul.f32.gmra.mxu0 %v430
        %v949 = vpop.f32.mrf.mxu0
        %v950 = vadd.f32 %v837, %v949
        %951 = vmatmul.f32.gmra.mxu0 %v433
        %v952 = vpop.f32.mrf.mxu0
        %v953 = vadd.f32 %v840, %v952
        %954 = vmatmul.f32.gmra.mxu0 %v435
        %v955 = vpop.f32.mrf.mxu0
        %v956 = vadd.f32 %v843, %v955
        %957 = vmatmul.f32.gmra.mxu0 %v438
        %v958 = vpop.f32.mrf.mxu0
        %v959 = vadd.f32 %v846, %v958
        %960 = vmatmul.f32.gmra.mxu0 %v440
        %v961 = vpop.f32.mrf.mxu0
        %v962 = vadd.f32 %v849, %v961
        %963 = vmatmul.f32.gmra.mxu0 %v443
        %v964 = vpop.f32.mrf.mxu0
        %v965 = vadd.f32 %v852, %v964
        %966 = vmatmul.f32.gmra.mxu0 %v445
        %v967 = vpop.f32.mrf.mxu0
        %v968 = vadd.f32 %v855, %v967
        %969 = vmatmul.f32.gmra.mxu0 %v448
        %v970 = vpop.f32.mrf.mxu0
        %v971 = vadd.f32 %v858, %v970
        %972 = vmatmul.f32.gmra.mxu0 %v450
        %v973 = vpop.f32.mrf.mxu0
        %v974 = vadd.f32 %v861, %v973
        %975 = vmatmul.f32.gmra.mxu0 %v453
        %v976 = vpop.f32.mrf.mxu0
        %v977 = vadd.f32 %v864, %v976
        %978 = vmatmul.f32.gmra.mxu0 %v455
        %v979 = vpop.f32.mrf.mxu0
        %v980 = vadd.f32 %v867, %v979
        %981 = vmatmul.f32.gmra.mxu0 %v458
        %v982 = vpop.f32.mrf.mxu0
        %v983 = vadd.f32 %v870, %v982
        %984 = vmatmul.f32.gmra.mxu0 %v460
        %v985 = vpop.f32.mrf.mxu0
        %v986 = vadd.f32 %v873, %v985
        %987 = vmatmul.f32.gmra.mxu0 %v463
        %v988 = vpop.f32.mrf.mxu0
        %v989 = vadd.f32 %v876, %v988
        %990 = vmatmul.f32.gmra.mxu0 %v465
        %v991 = vpop.f32.mrf.mxu0
        %v992 = vadd.f32 %v879, %v991
        %993 = vmatmul.f32.gmra.mxu0 %v468
        %v994 = vpop.f32.mrf.mxu0
        %v995 = vadd.f32 %v882, %v994
        %996 = vmatmul.f32.gmra.mxu0 %v470
        %v997 = vpop.f32.mrf.mxu0
        %v998 = vadd.f32 %v885, %v997
        %999 = vmatmul.f32.gmra.mxu0 %v473
        %v1000 = vpop.f32.mrf.mxu0
        %v1001 = vadd.f32 %v888, %v1000
        %1002 = vmatmul.f32.gmra.mxu0 %v475
        %v1003 = vpop.f32.mrf.mxu0
        %v1004 = vadd.f32 %v891, %v1003
        %1005 = vmatmul.f32.gmra.mxu0 %v478
        %v1006 = vpop.f32.mrf.mxu0
        %v1007 = vadd.f32 %v894, %v1006
        %1008 = vmatmul.f32.gmra.mxu0 %v480
        %v1009 = vpop.f32.mrf.mxu0
        %v1010 = vadd.f32 %v897, %v1009
        %1011 = vmatmul.f32.gmra.mxu0 %v483
        %v1012 = vpop.f32.mrf.mxu0
        %v1013 = vadd.f32 %v900, %v1012
        %1014 = vmatmul.f32.gmra.mxu0 %v485
        %v1015 = vpop.f32.mrf.mxu0
        %v1016 = vadd.f32 %v903, %v1015
        %1017 = vmatmul.f32.gmra.mxu0 %v488
        %v1018 = vpop.f32.mrf.mxu0
        %v1019 = vadd.f32 %v906, %v1018
        %1020 = vmatmul.f32.gmra.mxu0 %v490
        %v1021 = vpop.f32.mrf.mxu0
        %v1022 = vadd.f32 %v909, %v1021
        %1023 = vmatmul.f32.gmra.mxu0 %v493
        %v1024 = vpop.f32.mrf.mxu0
        %v1025 = vadd.f32 %v912, %v1024
        %1026 = vmatmul.f32.gmra.mxu0 %v495
        %v1027 = vpop.f32.mrf.mxu0
        %v1028 = vadd.f32 %v915, %v1027
        %1029 = vmatmul.f32.gmra.mxu0 %v498
        %v1030 = vpop.f32.mrf.mxu0
        %v1031 = vadd.f32 %v918, %v1030
        %1032 = vmatmul.f32.gmra.mxu0 %v500
        %v1033 = vpop.f32.mrf.mxu0
        %v1034 = vadd.f32 %v921, %v1033
        %1035 = vdwg.mxu0
        %1036 = vmatpush.msra.mxu0 %v709
        %1037 = vmatpush.msra.mxu0 %v708
        %1038 = vmatpush.msra.mxu0 %v707
        %1039 = vmatpush.msra.mxu0 %v706
        %1040 = vmatpush.msra.mxu0 %v705
        %1041 = vmatpush.msra.mxu0 %v704
        %1042 = vmatpush.msra.mxu0 %v703
        %1043 = vmatpush.msra.mxu0 %v702
        %1044 = vmatpush.msra.mxu0 %v701
        %1045 = vmatpush.msra.mxu0 %v700
        %1046 = vmatpush.msra.mxu0 %v699
        %1047 = vmatpush.msra.mxu0 %v698
        %1048 = vmatpush.msra.mxu0 %v697
        %1049 = vmatpush.msra.mxu0 %v696
        %1050 = vmatpush.msra.mxu0 %v695
        %1051 = vmatpush.msra.mxu0 %v694
        %1052 = vmatmul.f32.gmra.mxu0 %v536
        %v1053 = vpop.f32.mrf.mxu0
        %v1054 = vadd.f32 %v941, %v1053
        %1055 = vmatmul.f32.gmra.mxu0 %v538
        %v1056 = vpop.f32.mrf.mxu0
        %v1057 = vadd.f32 %v944, %v1056
        %1058 = vmatmul.f32.gmra.mxu0 %v541
        %v1059 = vpop.f32.mrf.mxu0
        %v1060 = vadd.f32 %v947, %v1059
        %1061 = vmatmul.f32.gmra.mxu0 %v543
        %v1062 = vpop.f32.mrf.mxu0
        %v1063 = vadd.f32 %v950, %v1062
        %1064 = vmatmul.f32.gmra.mxu0 %v546
        %v1065 = vpop.f32.mrf.mxu0
        %v1066 = vadd.f32 %v953, %v1065
        %1067 = vmatmul.f32.gmra.mxu0 %v548
        %v1068 = vpop.f32.mrf.mxu0
        %v1069 = vadd.f32 %v956, %v1068
        %1070 = vmatmul.f32.gmra.mxu0 %v551
        %v1071 = vpop.f32.mrf.mxu0
        %v1072 = vadd.f32 %v959, %v1071
        %1073 = vmatmul.f32.gmra.mxu0 %v553
        %v1074 = vpop.f32.mrf.mxu0
        %v1075 = vadd.f32 %v962, %v1074
        %1076 = vmatmul.f32.gmra.mxu0 %v556
        %v1077 = vpop.f32.mrf.mxu0
        %v1078 = vadd.f32 %v965, %v1077
        %1079 = vmatmul.f32.gmra.mxu0 %v558
        %v1080 = vpop.f32.mrf.mxu0
        %v1081 = vadd.f32 %v968, %v1080
        %1082 = vmatmul.f32.gmra.mxu0 %v561
        %v1083 = vpop.f32.mrf.mxu0
        %v1084 = vadd.f32 %v971, %v1083
        %1085 = vmatmul.f32.gmra.mxu0 %v563
        %v1086 = vpop.f32.mrf.mxu0
        %v1087 = vadd.f32 %v974, %v1086
        %1088 = vmatmul.f32.gmra.mxu0 %v566
        %v1089 = vpop.f32.mrf.mxu0
        %v1090 = vadd.f32 %v977, %v1089
        %1091 = vmatmul.f32.gmra.mxu0 %v568
        %v1092 = vpop.f32.mrf.mxu0
        %v1093 = vadd.f32 %v980, %v1092
        %1094 = vmatmul.f32.gmra.mxu0 %v571
        %v1095 = vpop.f32.mrf.mxu0
        %v1096 = vadd.f32 %v983, %v1095
        %1097 = vmatmul.f32.gmra.mxu0 %v573
        %v1098 = vpop.f32.mrf.mxu0
        %v1099 = vadd.f32 %v986, %v1098
        %1100 = vmatmul.f32.gmra.mxu0 %v576
        %v1101 = vpop.f32.mrf.mxu0
        %v1102 = vadd.f32 %v989, %v1101
        %1103 = vmatmul.f32.gmra.mxu0 %v578
        %v1104 = vpop.f32.mrf.mxu0
        %v1105 = vadd.f32 %v992, %v1104
        %1106 = vmatmul.f32.gmra.mxu0 %v581
        %v1107 = vpop.f32.mrf.mxu0
        %v1108 = vadd.f32 %v995, %v1107
        %1109 = vmatmul.f32.gmra.mxu0 %v583
        %v1110 = vpop.f32.mrf.mxu0
        %v1111 = vadd.f32 %v998, %v1110
        %1112 = vmatmul.f32.gmra.mxu0 %v586
        %v1113 = vpop.f32.mrf.mxu0
        %v1114 = vadd.f32 %v1001, %v1113
        %1115 = vmatmul.f32.gmra.mxu0 %v588
        %v1116 = vpop.f32.mrf.mxu0
        %v1117 = vadd.f32 %v1004, %v1116
        %1118 = vmatmul.f32.gmra.mxu0 %v591
        %v1119 = vpop.f32.mrf.mxu0
        %v1120 = vadd.f32 %v1007, %v1119
        %1121 = vmatmul.f32.gmra.mxu0 %v593
        %v1122 = vpop.f32.mrf.mxu0
        %v1123 = vadd.f32 %v1010, %v1122
        %1124 = vmatmul.f32.gmra.mxu0 %v596
        %v1125 = vpop.f32.mrf.mxu0
        %v1126 = vadd.f32 %v1013, %v1125
        %1127 = vmatmul.f32.gmra.mxu0 %v598
        %v1128 = vpop.f32.mrf.mxu0
        %v1129 = vadd.f32 %v1016, %v1128
        %1130 = vmatmul.f32.gmra.mxu0 %v601
        %v1131 = vpop.f32.mrf.mxu0
        %v1132 = vadd.f32 %v1019, %v1131
        %1133 = vmatmul.f32.gmra.mxu0 %v603
        %v1134 = vpop.f32.mrf.mxu0
        %v1135 = vadd.f32 %v1022, %v1134
        %1136 = vmatmul.f32.gmra.mxu0 %v606
        %v1137 = vpop.f32.mrf.mxu0
        %v1138 = vadd.f32 %v1025, %v1137
        %1139 = vmatmul.f32.gmra.mxu0 %v608
        %v1140 = vpop.f32.mrf.mxu0
        %v1141 = vadd.f32 %v1028, %v1140
        %1142 = vmatmul.f32.gmra.mxu0 %v611
        %v1143 = vpop.f32.mrf.mxu0
        %v1144 = vadd.f32 %v1031, %v1143
        %1145 = vmatmul.f32.gmra.mxu0 %v613
        %v1146 = vpop.f32.mrf.mxu0
        %v1147 = vadd.f32 %v1034, %v1146
        %1148 = vdwg.mxu0
        %1149 = vmatpush.msra.mxu0 %v725
        %1150 = vmatpush.msra.mxu0 %v724
        %1151 = vmatpush.msra.mxu0 %v723
        %1152 = vmatpush.msra.mxu0 %v722
        %1153 = vmatpush.msra.mxu0 %v721
        %1154 = vmatpush.msra.mxu0 %v720
        %1155 = vmatpush.msra.mxu0 %v719
        %1156 = vmatpush.msra.mxu0 %v718
        %1157 = vmatpush.msra.mxu0 %v717
        %1158 = vmatpush.msra.mxu0 %v716
        %1159 = vmatpush.msra.mxu0 %v715
        %1160 = vmatpush.msra.mxu0 %v714
        %1161 = vmatpush.msra.mxu0 %v713
        %1162 = vmatpush.msra.mxu0 %v712
        %1163 = vmatpush.msra.mxu0 %v711
        %1164 = vmatpush.msra.mxu0 %v710
        %1165 = vmatmul.f32.gmra.mxu0 %v355
        %v1166 = vpop.f32.mrf.mxu0
        %v1167 = vadd.f32 %v1054, %v1166
        %1168 = vmatmul.f32.gmra.mxu0 %v258
        %v1169 = vpop.f32.mrf.mxu0
        %v1170 = vadd.f32 %v1057, %v1169
        %1171 = vmatmul.f32.gmra.mxu0 %v356
        %v1172 = vpop.f32.mrf.mxu0
        %v1173 = vadd.f32 %v1060, %v1172
        %1174 = vmatmul.f32.gmra.mxu0 %v261
        %v1175 = vpop.f32.mrf.mxu0
        %v1176 = vadd.f32 %v1063, %v1175
        %1177 = vmatmul.f32.gmra.mxu0 %v357
        %v1178 = vpop.f32.mrf.mxu0
        %v1179 = vadd.f32 %v1066, %v1178
        %1180 = vmatmul.f32.gmra.mxu0 %v264
        %v1181 = vpop.f32.mrf.mxu0
        %v1182 = vadd.f32 %v1069, %v1181
        %1183 = vmatmul.f32.gmra.mxu0 %v358
        %v1184 = vpop.f32.mrf.mxu0
        %v1185 = vadd.f32 %v1072, %v1184
        %1186 = vmatmul.f32.gmra.mxu0 %v267
        %v1187 = vpop.f32.mrf.mxu0
        %v1188 = vadd.f32 %v1075, %v1187
        %1189 = vmatmul.f32.gmra.mxu0 %v359
        %v1190 = vpop.f32.mrf.mxu0
        %v1191 = vadd.f32 %v1078, %v1190
        %1192 = vmatmul.f32.gmra.mxu0 %v270
        %v1193 = vpop.f32.mrf.mxu0
        %v1194 = vadd.f32 %v1081, %v1193
        %1195 = vmatmul.f32.gmra.mxu0 %v360
        %v1196 = vpop.f32.mrf.mxu0
        %v1197 = vadd.f32 %v1084, %v1196
        %1198 = vmatmul.f32.gmra.mxu0 %v273
        %v1199 = vpop.f32.mrf.mxu0
        %v1200 = vadd.f32 %v1087, %v1199
        %1201 = vmatmul.f32.gmra.mxu0 %v361
        %v1202 = vpop.f32.mrf.mxu0
        %v1203 = vadd.f32 %v1090, %v1202
        %1204 = vmatmul.f32.gmra.mxu0 %v276
        %v1205 = vpop.f32.mrf.mxu0
        %v1206 = vadd.f32 %v1093, %v1205
        %1207 = vmatmul.f32.gmra.mxu0 %v362
        %v1208 = vpop.f32.mrf.mxu0
        %v1209 = vadd.f32 %v1096, %v1208
        %1210 = vmatmul.f32.gmra.mxu0 %v279
        %v1211 = vpop.f32.mrf.mxu0
        %v1212 = vadd.f32 %v1099, %v1211
        %1213 = vmatmul.f32.gmra.mxu0 %v363
        %v1214 = vpop.f32.mrf.mxu0
        %v1215 = vadd.f32 %v1102, %v1214
        %1216 = vmatmul.f32.gmra.mxu0 %v282
        %v1217 = vpop.f32.mrf.mxu0
        %v1218 = vadd.f32 %v1105, %v1217
        %1219 = vmatmul.f32.gmra.mxu0 %v364
        %v1220 = vpop.f32.mrf.mxu0
        %v1221 = vadd.f32 %v1108, %v1220
        %1222 = vmatmul.f32.gmra.mxu0 %v285
        %v1223 = vpop.f32.mrf.mxu0
        %v1224 = vadd.f32 %v1111, %v1223
        %1225 = vmatmul.f32.gmra.mxu0 %v365
        %v1226 = vpop.f32.mrf.mxu0
        %v1227 = vadd.f32 %v1114, %v1226
        %1228 = vmatmul.f32.gmra.mxu0 %v288
        %v1229 = vpop.f32.mrf.mxu0
        %v1230 = vadd.f32 %v1117, %v1229
        %1231 = vmatmul.f32.gmra.mxu0 %v366
        %v1232 = vpop.f32.mrf.mxu0
        %v1233 = vadd.f32 %v1120, %v1232
        %1234 = vmatmul.f32.gmra.mxu0 %v291
        %v1235 = vpop.f32.mrf.mxu0
        %v1236 = vadd.f32 %v1123, %v1235
        %1237 = vmatmul.f32.gmra.mxu0 %v367
        %v1238 = vpop.f32.mrf.mxu0
        %v1239 = vadd.f32 %v1126, %v1238
        %1240 = vmatmul.f32.gmra.mxu0 %v294
        %v1241 = vpop.f32.mrf.mxu0
        %v1242 = vadd.f32 %v1129, %v1241
        %1243 = vmatmul.f32.gmra.mxu0 %v368
        %v1244 = vpop.f32.mrf.mxu0
        %v1245 = vadd.f32 %v1132, %v1244
        %1246 = vmatmul.f32.gmra.mxu0 %v297
        %v1247 = vpop.f32.mrf.mxu0
        %v1248 = vadd.f32 %v1135, %v1247
        %1249 = vmatmul.f32.gmra.mxu0 %v369
        %v1250 = vpop.f32.mrf.mxu0
        %v1251 = vadd.f32 %v1138, %v1250
        %1252 = vmatmul.f32.gmra.mxu0 %v300
        %v1253 = vpop.f32.mrf.mxu0
        %v1254 = vadd.f32 %v1141, %v1253
        %1255 = vmatmul.f32.gmra.mxu0 %v370
        %v1256 = vpop.f32.mrf.mxu0
        %v1257 = vadd.f32 %v1144, %v1256
        %1258 = vmatmul.f32.gmra.mxu0 %v303
        %v1259 = vpop.f32.mrf.mxu0
        %v1260 = vadd.f32 %v1147, %v1259
        %1261 = vdwg.mxu0
        %1262 = vmatpush.msra.mxu0 %v741
        %1263 = vmatpush.msra.mxu0 %v740
        %1264 = vmatpush.msra.mxu0 %v739
        %1265 = vmatpush.msra.mxu0 %v738
        %1266 = vmatpush.msra.mxu0 %v737
        %1267 = vmatpush.msra.mxu0 %v736
        %1268 = vmatpush.msra.mxu0 %v735
        %1269 = vmatpush.msra.mxu0 %v734
        %1270 = vmatpush.msra.mxu0 %v733
        %1271 = vmatpush.msra.mxu0 %v732
        %1272 = vmatpush.msra.mxu0 %v731
        %1273 = vmatpush.msra.mxu0 %v730
        %1274 = vmatpush.msra.mxu0 %v729
        %1275 = vmatpush.msra.mxu0 %v728
        %1276 = vmatpush.msra.mxu0 %v727
        %1277 = vmatpush.msra.mxu0 %v726
        %1278 = vmatmul.f32.gmra.mxu0 %v428
        %v1279 = vpop.f32.mrf.mxu0
        %v1280 = vadd.f32 %v1167, %v1279
        %1281 = vmatmul.f32.gmra.mxu0 %v430
        %v1282 = vpop.f32.mrf.mxu0
        %v1283 = vadd.f32 %v1170, %v1282
        %1284 = vmatmul.f32.gmra.mxu0 %v433
        %v1285 = vpop.f32.mrf.mxu0
        %v1286 = vadd.f32 %v1173, %v1285
        %1287 = vmatmul.f32.gmra.mxu0 %v435
        %v1288 = vpop.f32.mrf.mxu0
        %v1289 = vadd.f32 %v1176, %v1288
        %1290 = vmatmul.f32.gmra.mxu0 %v438
        %v1291 = vpop.f32.mrf.mxu0
        %v1292 = vadd.f32 %v1179, %v1291
        %1293 = vmatmul.f32.gmra.mxu0 %v440
        %v1294 = vpop.f32.mrf.mxu0
        %v1295 = vadd.f32 %v1182, %v1294
        %1296 = vmatmul.f32.gmra.mxu0 %v443
        %v1297 = vpop.f32.mrf.mxu0
        %v1298 = vadd.f32 %v1185, %v1297
        %1299 = vmatmul.f32.gmra.mxu0 %v445
        %v1300 = vpop.f32.mrf.mxu0
        %v1301 = vadd.f32 %v1188, %v1300
        %1302 = vmatmul.f32.gmra.mxu0 %v448
        %v1303 = vpop.f32.mrf.mxu0
        %v1304 = vadd.f32 %v1191, %v1303
        %1305 = vmatmul.f32.gmra.mxu0 %v450
        %v1306 = vpop.f32.mrf.mxu0
        %v1307 = vadd.f32 %v1194, %v1306
        %1308 = vmatmul.f32.gmra.mxu0 %v453
        %v1309 = vpop.f32.mrf.mxu0
        %v1310 = vadd.f32 %v1197, %v1309
        %1311 = vmatmul.f32.gmra.mxu0 %v455
        %v1312 = vpop.f32.mrf.mxu0
        %v1313 = vadd.f32 %v1200, %v1312
        %1314 = vmatmul.f32.gmra.mxu0 %v458
        %v1315 = vpop.f32.mrf.mxu0
        %v1316 = vadd.f32 %v1203, %v1315
        %1317 = vmatmul.f32.gmra.mxu0 %v460
        %v1318 = vpop.f32.mrf.mxu0
        %v1319 = vadd.f32 %v1206, %v1318
        %1320 = vmatmul.f32.gmra.mxu0 %v463
        %v1321 = vpop.f32.mrf.mxu0
        %v1322 = vadd.f32 %v1209, %v1321
        %1323 = vmatmul.f32.gmra.mxu0 %v465
        %v1324 = vpop.f32.mrf.mxu0
        %v1325 = vadd.f32 %v1212, %v1324
        %1326 = vmatmul.f32.gmra.mxu0 %v468
        %v1327 = vpop.f32.mrf.mxu0
        %v1328 = vadd.f32 %v1215, %v1327
        %1329 = vmatmul.f32.gmra.mxu0 %v470
        %v1330 = vpop.f32.mrf.mxu0
        %v1331 = vadd.f32 %v1218, %v1330
        %1332 = vmatmul.f32.gmra.mxu0 %v473
        %v1333 = vpop.f32.mrf.mxu0
        %v1334 = vadd.f32 %v1221, %v1333
        %1335 = vmatmul.f32.gmra.mxu0 %v475
        %v1336 = vpop.f32.mrf.mxu0
        %v1337 = vadd.f32 %v1224, %v1336
        %1338 = vmatmul.f32.gmra.mxu0 %v478
        %v1339 = vpop.f32.mrf.mxu0
        %v1340 = vadd.f32 %v1227, %v1339
        %1341 = vmatmul.f32.gmra.mxu0 %v480
        %v1342 = vpop.f32.mrf.mxu0
        %v1343 = vadd.f32 %v1230, %v1342
        %1344 = vmatmul.f32.gmra.mxu0 %v483
        %v1345 = vpop.f32.mrf.mxu0
        %v1346 = vadd.f32 %v1233, %v1345
        %1347 = vmatmul.f32.gmra.mxu0 %v485
        %v1348 = vpop.f32.mrf.mxu0
        %v1349 = vadd.f32 %v1236, %v1348
        %1350 = vmatmul.f32.gmra.mxu0 %v488
        %v1351 = vpop.f32.mrf.mxu0
        %v1352 = vadd.f32 %v1239, %v1351
        %1353 = vmatmul.f32.gmra.mxu0 %v490
        %v1354 = vpop.f32.mrf.mxu0
        %v1355 = vadd.f32 %v1242, %v1354
        %1356 = vmatmul.f32.gmra.mxu0 %v493
        %v1357 = vpop.f32.mrf.mxu0
        %v1358 = vadd.f32 %v1245, %v1357
        %1359 = vmatmul.f32.gmra.mxu0 %v495
        %v1360 = vpop.f32.mrf.mxu0
        %v1361 = vadd.f32 %v1248, %v1360
        %1362 = vmatmul.f32.gmra.mxu0 %v498
        %v1363 = vpop.f32.mrf.mxu0
        %v1364 = vadd.f32 %v1251, %v1363
        %1365 = vmatmul.f32.gmra.mxu0 %v500
        %v1366 = vpop.f32.mrf.mxu0
        %v1367 = vadd.f32 %v1254, %v1366
        %1368 = vmatmul.f32.gmra.mxu0 %v650
        %v1369 = vpop.f32.mrf.mxu0
        %v1370 = vadd.f32 %v1257, %v1369
        %1371 = vmatmul.f32.gmra.mxu0 %v652
        %v1372 = vpop.f32.mrf.mxu0
        %v1373 = vadd.f32 %v1260, %v1372
        %1374 = vdwg.mxu0
        %1375 = vmatpush.msra.mxu0 %v757
        %1376 = vmatpush.msra.mxu0 %v756
        %1377 = vmatpush.msra.mxu0 %v755
        %1378 = vmatpush.msra.mxu0 %v754
        %1379 = vmatpush.msra.mxu0 %v753
        %1380 = vmatpush.msra.mxu0 %v752
        %1381 = vmatpush.msra.mxu0 %v751
        %1382 = vmatpush.msra.mxu0 %v750
        %1383 = vmatpush.msra.mxu0 %v749
        %1384 = vmatpush.msra.mxu0 %v748
        %1385 = vmatpush.msra.mxu0 %v747
        %1386 = vmatpush.msra.mxu0 %v746
        %1387 = vmatpush.msra.mxu0 %v745
        %1388 = vmatpush.msra.mxu0 %v744
        %1389 = vmatpush.msra.mxu0 %v743
        %1390 = vmatpush.msra.mxu0 %v742
        %1391 = vmatmul.f32.gmra.mxu0 %v541
        %v1392 = vpop.f32.mrf.mxu0
        %v1393 = vadd.f32 %v1280, %v1392
        %1394 = vmatmul.f32.gmra.mxu0 %v543
        %v1395 = vpop.f32.mrf.mxu0
        %v1396 = vadd.f32 %v1283, %v1395
        %1397 = vmatmul.f32.gmra.mxu0 %v546
        %v1398 = vpop.f32.mrf.mxu0
        %v1399 = vadd.f32 %v1286, %v1398
        %1400 = vmatmul.f32.gmra.mxu0 %v548
        %v1401 = vpop.f32.mrf.mxu0
        %v1402 = vadd.f32 %v1289, %v1401
        %1403 = vmatmul.f32.gmra.mxu0 %v551
        %v1404 = vpop.f32.mrf.mxu0
        %v1405 = vadd.f32 %v1292, %v1404
        %1406 = vmatmul.f32.gmra.mxu0 %v553
        %v1407 = vpop.f32.mrf.mxu0
        %v1408 = vadd.f32 %v1295, %v1407
        %1409 = vmatmul.f32.gmra.mxu0 %v556
        %v1410 = vpop.f32.mrf.mxu0
        %v1411 = vadd.f32 %v1298, %v1410
        %1412 = vmatmul.f32.gmra.mxu0 %v558
        %v1413 = vpop.f32.mrf.mxu0
        %v1414 = vadd.f32 %v1301, %v1413
        %1415 = vmatmul.f32.gmra.mxu0 %v561
        %v1416 = vpop.f32.mrf.mxu0
        %v1417 = vadd.f32 %v1304, %v1416
        %1418 = vmatmul.f32.gmra.mxu0 %v563
        %v1419 = vpop.f32.mrf.mxu0
        %v1420 = vadd.f32 %v1307, %v1419
        %1421 = vmatmul.f32.gmra.mxu0 %v566
        %v1422 = vpop.f32.mrf.mxu0
        %v1423 = vadd.f32 %v1310, %v1422
        %1424 = vmatmul.f32.gmra.mxu0 %v568
        %v1425 = vpop.f32.mrf.mxu0
        %v1426 = vadd.f32 %v1313, %v1425
        %1427 = vmatmul.f32.gmra.mxu0 %v571
        %v1428 = vpop.f32.mrf.mxu0
        %v1429 = vadd.f32 %v1316, %v1428
        %1430 = vmatmul.f32.gmra.mxu0 %v573
        %v1431 = vpop.f32.mrf.mxu0
        %v1432 = vadd.f32 %v1319, %v1431
        %1433 = vmatmul.f32.gmra.mxu0 %v576
        %v1434 = vpop.f32.mrf.mxu0
        %v1435 = vadd.f32 %v1322, %v1434
        %1436 = vmatmul.f32.gmra.mxu0 %v578
        %v1437 = vpop.f32.mrf.mxu0
        %v1438 = vadd.f32 %v1325, %v1437
        %1439 = vmatmul.f32.gmra.mxu0 %v581
        %v1440 = vpop.f32.mrf.mxu0
        %v1441 = vadd.f32 %v1328, %v1440
        %1442 = vmatmul.f32.gmra.mxu0 %v583
        %v1443 = vpop.f32.mrf.mxu0
        %v1444 = vadd.f32 %v1331, %v1443
        %1445 = vmatmul.f32.gmra.mxu0 %v586
        %v1446 = vpop.f32.mrf.mxu0
        %v1447 = vadd.f32 %v1334, %v1446
        %1448 = vmatmul.f32.gmra.mxu0 %v588
        %v1449 = vpop.f32.mrf.mxu0
        %v1450 = vadd.f32 %v1337, %v1449
        %1451 = vmatmul.f32.gmra.mxu0 %v591
        %v1452 = vpop.f32.mrf.mxu0
        %v1453 = vadd.f32 %v1340, %v1452
        %1454 = vmatmul.f32.gmra.mxu0 %v593
        %v1455 = vpop.f32.mrf.mxu0
        %v1456 = vadd.f32 %v1343, %v1455
        %1457 = vmatmul.f32.gmra.mxu0 %v596
        %v1458 = vpop.f32.mrf.mxu0
        %v1459 = vadd.f32 %v1346, %v1458
        %1460 = vmatmul.f32.gmra.mxu0 %v598
        %v1461 = vpop.f32.mrf.mxu0
        %v1462 = vadd.f32 %v1349, %v1461
        %1463 = vmatmul.f32.gmra.mxu0 %v601
        %v1464 = vpop.f32.mrf.mxu0
        %v1465 = vadd.f32 %v1352, %v1464
        %1466 = vmatmul.f32.gmra.mxu0 %v603
        %v1467 = vpop.f32.mrf.mxu0
        %v1468 = vadd.f32 %v1355, %v1467
        %1469 = vmatmul.f32.gmra.mxu0 %v606
        %v1470 = vpop.f32.mrf.mxu0
        %v1471 = vadd.f32 %v1358, %v1470
        %1472 = vmatmul.f32.gmra.mxu0 %v608
        %v1473 = vpop.f32.mrf.mxu0
        %v1474 = vadd.f32 %v1361, %v1473
        %1475 = vmatmul.f32.gmra.mxu0 %v611
        %v1476 = vpop.f32.mrf.mxu0
        %v1477 = vadd.f32 %v1364, %v1476
        %1478 = vmatmul.f32.gmra.mxu0 %v613
        %v1479 = vpop.f32.mrf.mxu0
        %v1480 = vadd.f32 %v1367, %v1479
        %1481 = vmatmul.f32.gmra.mxu0 %v657
        %v1482 = vpop.f32.mrf.mxu0
        %v1483 = vadd.f32 %v1370, %v1482
        %1484 = vmatmul.f32.gmra.mxu0 %v659
        %v1485 = vpop.f32.mrf.mxu0
        %v1486 = vadd.f32 %v1373, %v1485
        %1487 = vdwg.mxu0
        %1488 = vmatpush.msra.mxu0 %v773
        %1489 = vmatpush.msra.mxu0 %v772
        %1490 = vmatpush.msra.mxu0 %v771
        %1491 = vmatpush.msra.mxu0 %v770
        %1492 = vmatpush.msra.mxu0 %v769
        %1493 = vmatpush.msra.mxu0 %v768
        %1494 = vmatpush.msra.mxu0 %v767
        %1495 = vmatpush.msra.mxu0 %v766
        %1496 = vmatpush.msra.mxu0 %v765
        %1497 = vmatpush.msra.mxu0 %v764
        %1498 = vmatpush.msra.mxu0 %v763
        %1499 = vmatpush.msra.mxu0 %v762
        %1500 = vmatpush.msra.mxu0 %v761
        %1501 = vmatpush.msra.mxu0 %v760
        %1502 = vmatpush.msra.mxu0 %v759
        %1503 = vmatpush.msra.mxu0 %v758
        %1504 = vmatmul.f32.gmra.mxu0 %v356
        %v1505 = vpop.f32.mrf.mxu0
        %v1506 = vadd.f32 %v1393, %v1505
        %1507 = vmatmul.f32.gmra.mxu0 %v261
        %v1508 = vpop.f32.mrf.mxu0
        %v1509 = vadd.f32 %v1396, %v1508
        %1510 = vmatmul.f32.gmra.mxu0 %v357
        %v1511 = vpop.f32.mrf.mxu0
        %v1512 = vadd.f32 %v1399, %v1511
        %1513 = vmatmul.f32.gmra.mxu0 %v264
        %v1514 = vpop.f32.mrf.mxu0
        %v1515 = vadd.f32 %v1402, %v1514
        %1516 = vmatmul.f32.gmra.mxu0 %v358
        %v1517 = vpop.f32.mrf.mxu0
        %v1518 = vadd.f32 %v1405, %v1517
        %1519 = vmatmul.f32.gmra.mxu0 %v267
        %v1520 = vpop.f32.mrf.mxu0
        %v1521 = vadd.f32 %v1408, %v1520
        %1522 = vmatmul.f32.gmra.mxu0 %v359
        %v1523 = vpop.f32.mrf.mxu0
        %v1524 = vadd.f32 %v1411, %v1523
        %1525 = vmatmul.f32.gmra.mxu0 %v270
        %v1526 = vpop.f32.mrf.mxu0
        %v1527 = vadd.f32 %v1414, %v1526
        %1528 = vmatmul.f32.gmra.mxu0 %v360
        %v1529 = vpop.f32.mrf.mxu0
        %v1530 = vadd.f32 %v1417, %v1529
        %1531 = vmatmul.f32.gmra.mxu0 %v273
        %v1532 = vpop.f32.mrf.mxu0
        %v1533 = vadd.f32 %v1420, %v1532
        %1534 = vmatmul.f32.gmra.mxu0 %v361
        %v1535 = vpop.f32.mrf.mxu0
        %v1536 = vadd.f32 %v1423, %v1535
        %1537 = vmatmul.f32.gmra.mxu0 %v276
        %v1538 = vpop.f32.mrf.mxu0
        %v1539 = vadd.f32 %v1426, %v1538
        %1540 = vmatmul.f32.gmra.mxu0 %v362
        %v1541 = vpop.f32.mrf.mxu0
        %v1542 = vadd.f32 %v1429, %v1541
        %1543 = vmatmul.f32.gmra.mxu0 %v279
        %v1544 = vpop.f32.mrf.mxu0
        %v1545 = vadd.f32 %v1432, %v1544
        %1546 = vmatmul.f32.gmra.mxu0 %v363
        %v1547 = vpop.f32.mrf.mxu0
        %v1548 = vadd.f32 %v1435, %v1547
        %1549 = vmatmul.f32.gmra.mxu0 %v282
        %v1550 = vpop.f32.mrf.mxu0
        %v1551 = vadd.f32 %v1438, %v1550
        %1552 = vmatmul.f32.gmra.mxu0 %v364
        %v1553 = vpop.f32.mrf.mxu0
        %v1554 = vadd.f32 %v1441, %v1553
        %1555 = vmatmul.f32.gmra.mxu0 %v285
        %v1556 = vpop.f32.mrf.mxu0
        %v1557 = vadd.f32 %v1444, %v1556
        %1558 = vmatmul.f32.gmra.mxu0 %v365
        %v1559 = vpop.f32.mrf.mxu0
        %v1560 = vadd.f32 %v1447, %v1559
        %1561 = vmatmul.f32.gmra.mxu0 %v288
        %v1562 = vpop.f32.mrf.mxu0
        %v1563 = vadd.f32 %v1450, %v1562
        %1564 = vmatmul.f32.gmra.mxu0 %v366
        %v1565 = vpop.f32.mrf.mxu0
        %v1566 = vadd.f32 %v1453, %v1565
        %1567 = vmatmul.f32.gmra.mxu0 %v291
        %v1568 = vpop.f32.mrf.mxu0
        %v1569 = vadd.f32 %v1456, %v1568
        %1570 = vmatmul.f32.gmra.mxu0 %v367
        %v1571 = vpop.f32.mrf.mxu0
        %v1572 = vadd.f32 %v1459, %v1571
        %1573 = vmatmul.f32.gmra.mxu0 %v294
        %v1574 = vpop.f32.mrf.mxu0
        %v1575 = vadd.f32 %v1462, %v1574
        %1576 = vmatmul.f32.gmra.mxu0 %v368
        %v1577 = vpop.f32.mrf.mxu0
        %v1578 = vadd.f32 %v1465, %v1577
        %1579 = vmatmul.f32.gmra.mxu0 %v297
        %v1580 = vpop.f32.mrf.mxu0
        %v1581 = vadd.f32 %v1468, %v1580
        %1582 = vmatmul.f32.gmra.mxu0 %v369
        %v1583 = vpop.f32.mrf.mxu0
        %v1584 = vadd.f32 %v1471, %v1583
        %1585 = vmatmul.f32.gmra.mxu0 %v300
        %v1586 = vpop.f32.mrf.mxu0
        %v1587 = vadd.f32 %v1474, %v1586
        %1588 = vmatmul.f32.gmra.mxu0 %v370
        %v1589 = vpop.f32.mrf.mxu0
        %v1590 = vadd.f32 %v1477, %v1589
        %1591 = vmatmul.f32.gmra.mxu0 %v303
        %v1592 = vpop.f32.mrf.mxu0
        %v1593 = vadd.f32 %v1480, %v1592
        %1594 = vmatmul.f32.gmra.mxu0 %v354
        %v1595 = vpop.f32.mrf.mxu0
        %v1596 = vadd.f32 %v1483, %v1595
        %1597 = vmatmul.f32.gmra.mxu0 %v255
        %v1598 = vpop.f32.mrf.mxu0
        %v1599 = vadd.f32 %v1486, %v1598
        %1600 = vdwg.mxu0
        %1601 = vmatpush.msra.mxu0 %v789
        %1602 = vmatpush.msra.mxu0 %v788
        %1603 = vmatpush.msra.mxu0 %v787
        %1604 = vmatpush.msra.mxu0 %v786
        %1605 = vmatpush.msra.mxu0 %v785
        %1606 = vmatpush.msra.mxu0 %v784
        %1607 = vmatpush.msra.mxu0 %v783
        %1608 = vmatpush.msra.mxu0 %v782
        %1609 = vmatpush.msra.mxu0 %v781
        %1610 = vmatpush.msra.mxu0 %v780
        %1611 = vmatpush.msra.mxu0 %v779
        %1612 = vmatpush.msra.mxu0 %v778
        %1613 = vmatpush.msra.mxu0 %v777
        %1614 = vmatpush.msra.mxu0 %v776
        %1615 = vmatpush.msra.mxu0 %v775
        %1616 = vmatpush.msra.mxu0 %v774
        %1617 = vmatmul.f32.gmra.mxu0 %v433
        %v1618 = vpop.f32.mrf.mxu0
        %v1619 = vadd.f32 %v1506, %v1618
        %1620 = vmatmul.f32.gmra.mxu0 %v435
        %v1621 = vpop.f32.mrf.mxu0
        %v1622 = vadd.f32 %v1509, %v1621
        %1623 = vmatmul.f32.gmra.mxu0 %v438
        %v1624 = vpop.f32.mrf.mxu0
        %v1625 = vadd.f32 %v1512, %v1624
        %1626 = vmatmul.f32.gmra.mxu0 %v440
        %v1627 = vpop.f32.mrf.mxu0
        %v1628 = vadd.f32 %v1515, %v1627
        %1629 = vmatmul.f32.gmra.mxu0 %v443
        %v1630 = vpop.f32.mrf.mxu0
        %v1631 = vadd.f32 %v1518, %v1630
        %1632 = vmatmul.f32.gmra.mxu0 %v445
        %v1633 = vpop.f32.mrf.mxu0
        %v1634 = vadd.f32 %v1521, %v1633
        %1635 = vmatmul.f32.gmra.mxu0 %v448
        %v1636 = vpop.f32.mrf.mxu0
        %v1637 = vadd.f32 %v1524, %v1636
        %1638 = vmatmul.f32.gmra.mxu0 %v450
        %v1639 = vpop.f32.mrf.mxu0
        %v1640 = vadd.f32 %v1527, %v1639
        %1641 = vmatmul.f32.gmra.mxu0 %v453
        %v1642 = vpop.f32.mrf.mxu0
        %v1643 = vadd.f32 %v1530, %v1642
        %1644 = vmatmul.f32.gmra.mxu0 %v455
        %v1645 = vpop.f32.mrf.mxu0
        %v1646 = vadd.f32 %v1533, %v1645
        %1647 = vmatmul.f32.gmra.mxu0 %v458
        %v1648 = vpop.f32.mrf.mxu0
        %v1649 = vadd.f32 %v1536, %v1648
        %1650 = vmatmul.f32.gmra.mxu0 %v460
        %v1651 = vpop.f32.mrf.mxu0
        %v1652 = vadd.f32 %v1539, %v1651
        %1653 = vmatmul.f32.gmra.mxu0 %v463
        %v1654 = vpop.f32.mrf.mxu0
        %v1655 = vadd.f32 %v1542, %v1654
        %1656 = vmatmul.f32.gmra.mxu0 %v465
        %v1657 = vpop.f32.mrf.mxu0
        %v1658 = vadd.f32 %v1545, %v1657
        %1659 = vmatmul.f32.gmra.mxu0 %v468
        %v1660 = vpop.f32.mrf.mxu0
        %v1661 = vadd.f32 %v1548, %v1660
        %1662 = vmatmul.f32.gmra.mxu0 %v470
        %v1663 = vpop.f32.mrf.mxu0
        %v1664 = vadd.f32 %v1551, %v1663
        %1665 = vmatmul.f32.gmra.mxu0 %v473
        %v1666 = vpop.f32.mrf.mxu0
        %v1667 = vadd.f32 %v1554, %v1666
        %1668 = vmatmul.f32.gmra.mxu0 %v475
        %v1669 = vpop.f32.mrf.mxu0
        %v1670 = vadd.f32 %v1557, %v1669
        %1671 = vmatmul.f32.gmra.mxu0 %v478
        %v1672 = vpop.f32.mrf.mxu0
        %v1673 = vadd.f32 %v1560, %v1672
        %1674 = vmatmul.f32.gmra.mxu0 %v480
        %v1675 = vpop.f32.mrf.mxu0
        %v1676 = vadd.f32 %v1563, %v1675
        %1677 = vmatmul.f32.gmra.mxu0 %v483
        %v1678 = vpop.f32.mrf.mxu0
        %v1679 = vadd.f32 %v1566, %v1678
        %1680 = vmatmul.f32.gmra.mxu0 %v485
        %v1681 = vpop.f32.mrf.mxu0
        %v1682 = vadd.f32 %v1569, %v1681
        %1683 = vmatmul.f32.gmra.mxu0 %v488
        %v1684 = vpop.f32.mrf.mxu0
        %v1685 = vadd.f32 %v1572, %v1684
        %1686 = vmatmul.f32.gmra.mxu0 %v490
        %v1687 = vpop.f32.mrf.mxu0
        %v1688 = vadd.f32 %v1575, %v1687
        %1689 = vmatmul.f32.gmra.mxu0 %v493
        %v1690 = vpop.f32.mrf.mxu0
        %v1691 = vadd.f32 %v1578, %v1690
        %1692 = vmatmul.f32.gmra.mxu0 %v495
        %v1693 = vpop.f32.mrf.mxu0
        %v1694 = vadd.f32 %v1581, %v1693
        %1695 = vmatmul.f32.gmra.mxu0 %v498
        %v1696 = vpop.f32.mrf.mxu0
        %v1697 = vadd.f32 %v1584, %v1696
        %1698 = vmatmul.f32.gmra.mxu0 %v500
        %v1699 = vpop.f32.mrf.mxu0
        %v1700 = vadd.f32 %v1587, %v1699
        %1701 = vmatmul.f32.gmra.mxu0 %v650
        %v1702 = vpop.f32.mrf.mxu0
        %v1703 = vadd.f32 %v1590, %v1702
        %1704 = vmatmul.f32.gmra.mxu0 %v652
        %v1705 = vpop.f32.mrf.mxu0
        %v1706 = vadd.f32 %v1593, %v1705
        %1707 = vmatmul.f32.gmra.mxu0 %v423
        %v1708 = vpop.f32.mrf.mxu0
        %v1709 = vadd.f32 %v1596, %v1708
        %1710 = vmatmul.f32.gmra.mxu0 %v425
        %v1711 = vpop.f32.mrf.mxu0
        %v1712 = vadd.f32 %v1599, %v1711
        %1713 = vdwg.mxu0
        %1714 = vmatpush.msra.mxu0 %v805
        %1715 = vmatpush.msra.mxu0 %v804
        %1716 = vmatpush.msra.mxu0 %v803
        %1717 = vmatpush.msra.mxu0 %v802
        %1718 = vmatpush.msra.mxu0 %v801
        %1719 = vmatpush.msra.mxu0 %v800
        %1720 = vmatpush.msra.mxu0 %v799
        %1721 = vmatpush.msra.mxu0 %v798
        %1722 = vmatpush.msra.mxu0 %v797
        %1723 = vmatpush.msra.mxu0 %v796
        %1724 = vmatpush.msra.mxu0 %v795
        %1725 = vmatpush.msra.mxu0 %v794
        %1726 = vmatpush.msra.mxu0 %v793
        %1727 = vmatpush.msra.mxu0 %v792
        %1728 = vmatpush.msra.mxu0 %v791
        %1729 = vmatpush.msra.mxu0 %v790
        %1730 = vmatmul.f32.gmra.mxu0 %v546
        %v1731 = vpop.f32.mrf.mxu0
        %v1732 = vadd.f32 %v1619, %v1731
        %1733 = vmatmul.f32.gmra.mxu0 %v548
        %v1734 = vpop.f32.mrf.mxu0
        %v1735 = vadd.f32 %v1622, %v1734
        %1736 = vmatmul.f32.gmra.mxu0 %v551
        %v1737 = vpop.f32.mrf.mxu0
        %v1738 = vadd.f32 %v1625, %v1737
        %1739 = vmatmul.f32.gmra.mxu0 %v553
        %v1740 = vpop.f32.mrf.mxu0
        %v1741 = vadd.f32 %v1628, %v1740
        %1742 = vmatmul.f32.gmra.mxu0 %v556
        %v1743 = vpop.f32.mrf.mxu0
        %v1744 = vadd.f32 %v1631, %v1743
        %1745 = vmatmul.f32.gmra.mxu0 %v558
        %v1746 = vpop.f32.mrf.mxu0
        %v1747 = vadd.f32 %v1634, %v1746
        %1748 = vmatmul.f32.gmra.mxu0 %v561
        %v1749 = vpop.f32.mrf.mxu0
        %v1750 = vadd.f32 %v1637, %v1749
        %1751 = vmatmul.f32.gmra.mxu0 %v563
        %v1752 = vpop.f32.mrf.mxu0
        %v1753 = vadd.f32 %v1640, %v1752
        %1754 = vmatmul.f32.gmra.mxu0 %v566
        %v1755 = vpop.f32.mrf.mxu0
        %v1756 = vadd.f32 %v1643, %v1755
        %1757 = vmatmul.f32.gmra.mxu0 %v568
        %v1758 = vpop.f32.mrf.mxu0
        %v1759 = vadd.f32 %v1646, %v1758
        %1760 = vmatmul.f32.gmra.mxu0 %v571
        %v1761 = vpop.f32.mrf.mxu0
        %v1762 = vadd.f32 %v1649, %v1761
        %1763 = vmatmul.f32.gmra.mxu0 %v573
        %v1764 = vpop.f32.mrf.mxu0
        %v1765 = vadd.f32 %v1652, %v1764
        %1766 = vmatmul.f32.gmra.mxu0 %v576
        %v1767 = vpop.f32.mrf.mxu0
        %v1768 = vadd.f32 %v1655, %v1767
        %1769 = vmatmul.f32.gmra.mxu0 %v578
        %v1770 = vpop.f32.mrf.mxu0
        %v1771 = vadd.f32 %v1658, %v1770
        %1772 = vmatmul.f32.gmra.mxu0 %v581
        %v1773 = vpop.f32.mrf.mxu0
        %v1774 = vadd.f32 %v1661, %v1773
        %1775 = vmatmul.f32.gmra.mxu0 %v583
        %v1776 = vpop.f32.mrf.mxu0
        %v1777 = vadd.f32 %v1664, %v1776
        %1778 = vmatmul.f32.gmra.mxu0 %v586
        %v1779 = vpop.f32.mrf.mxu0
        %v1780 = vadd.f32 %v1667, %v1779
        %1781 = vmatmul.f32.gmra.mxu0 %v588
        %v1782 = vpop.f32.mrf.mxu0
        %v1783 = vadd.f32 %v1670, %v1782
        %1784 = vmatmul.f32.gmra.mxu0 %v591
        %v1785 = vpop.f32.mrf.mxu0
        %v1786 = vadd.f32 %v1673, %v1785
        %1787 = vmatmul.f32.gmra.mxu0 %v593
        %v1788 = vpop.f32.mrf.mxu0
        %v1789 = vadd.f32 %v1676, %v1788
        %1790 = vmatmul.f32.gmra.mxu0 %v596
        %v1791 = vpop.f32.mrf.mxu0
        %v1792 = vadd.f32 %v1679, %v1791
        %1793 = vmatmul.f32.gmra.mxu0 %v598
        %v1794 = vpop.f32.mrf.mxu0
        %v1795 = vadd.f32 %v1682, %v1794
        %1796 = vmatmul.f32.gmra.mxu0 %v601
        %v1797 = vpop.f32.mrf.mxu0
        %v1798 = vadd.f32 %v1685, %v1797
        %1799 = vmatmul.f32.gmra.mxu0 %v603
        %v1800 = vpop.f32.mrf.mxu0
        %v1801 = vadd.f32 %v1688, %v1800
        %1802 = vmatmul.f32.gmra.mxu0 %v606
        %v1803 = vpop.f32.mrf.mxu0
        %v1804 = vadd.f32 %v1691, %v1803
        %1805 = vmatmul.f32.gmra.mxu0 %v608
        %v1806 = vpop.f32.mrf.mxu0
        %v1807 = vadd.f32 %v1694, %v1806
        %1808 = vmatmul.f32.gmra.mxu0 %v611
        %v1809 = vpop.f32.mrf.mxu0
        %v1810 = vadd.f32 %v1697, %v1809
        %1811 = vmatmul.f32.gmra.mxu0 %v613
        %v1812 = vpop.f32.mrf.mxu0
        %v1813 = vadd.f32 %v1700, %v1812
        %1814 = vmatmul.f32.gmra.mxu0 %v657
        %v1815 = vpop.f32.mrf.mxu0
        %v1816 = vadd.f32 %v1703, %v1815
        %1817 = vmatmul.f32.gmra.mxu0 %v659
        %v1818 = vpop.f32.mrf.mxu0
        %v1819 = vadd.f32 %v1706, %v1818
        %1820 = vmatmul.f32.gmra.mxu0 %v536
        %v1821 = vpop.f32.mrf.mxu0
        %v1822 = vadd.f32 %v1709, %v1821
        %1823 = vmatmul.f32.gmra.mxu0 %v538
        %v1824 = vpop.f32.mrf.mxu0
        %v1825 = vadd.f32 %v1712, %v1824
        %1826 = vdwg.mxu0
        %v1827 = vmax.f32 %v1732, 0.0
        %v1828 = vmax.f32 %v1735, 0.0
        %v1829 = vmax.f32 %v1738, 0.0
        %v1830 = vmax.f32 %v1741, 0.0
        %v1831 = vmax.f32 %v1744, 0.0
        %v1832 = vmax.f32 %v1747, 0.0
        %v1833 = vmax.f32 %v1750, 0.0
        %v1834 = vmax.f32 %v1753, 0.0
        %v1835 = vmax.f32 %v1756, 0.0
        %v1836 = vmax.f32 %v1759, 0.0
        %v1837 = vmax.f32 %v1762, 0.0
        %v1838 = vmax.f32 %v1765, 0.0
        %v1839 = vmax.f32 %v1768, 0.0
        %v1840 = vmax.f32 %v1771, 0.0
        %v1841 = vmax.f32 %v1774, 0.0
        %v1842 = vmax.f32 %v1777, 0.0
        %v1843 = vmax.f32 %v1780, 0.0
        %v1844 = vmax.f32 %v1783, 0.0
        %v1845 = vmax.f32 %v1786, 0.0
        %v1846 = vmax.f32 %v1789, 0.0
        %v1847 = vmax.f32 %v1792, 0.0
        %v1848 = vmax.f32 %v1795, 0.0
        %v1849 = vmax.f32 %v1798, 0.0
        %v1850 = vmax.f32 %v1801, 0.0
        %v1851 = vmax.f32 %v1804, 0.0
        %v1852 = vmax.f32 %v1807, 0.0
        %v1853 = vmax.f32 %v1810, 0.0
        %v1854 = vmax.f32 %v1813, 0.0
        %v1855 = vmax.f32 %v1816, 0.0
        %v1856 = vmax.f32 %v1819, 0.0
        %v1857 = vmax.f32 %v1822, 0.0
        %v1858 = vmax.f32 %v1825, 0.0
        %1859 = vst [vmem:[%s187] sm:$0xff] %v1827
        %1860 = vst [vmem:[%s187 + $0x8] sm:$0xff] %v1828
        %1861 = vst [vmem:[%s187 + $0x10] sm:$0xff] %v1829
        %1862 = vst [vmem:[%s187 + $0x18] sm:$0xff] %v1830
        %1863 = vst [vmem:[%s187 + $0x20] sm:$0xff] %v1831
        %1864 = vst [vmem:[%s187 + $0x28] sm:$0xff] %v1832
        %1865 = vst [vmem:[%s187 + $0x30] sm:$0xff] %v1833
        %1866 = vst [vmem:[%s187 + $0x38] sm:$0xff] %v1834
        %1867 = vst [vmem:[%s187 + $0x40] sm:$0xff] %v1835
        %1868 = vst [vmem:[%s187 + $0x48] sm:$0xff] %v1836
        %1869 = vst [vmem:[%s187 + $0x50] sm:$0xff] %v1837
        %1870 = vst [vmem:[%s187 + $0x58] sm:$0xff] %v1838
        %1871 = vst [vmem:[%s187 + $0x60] sm:$0xff] %v1839
        %1872 = vst [vmem:[%s187 + $0x68] sm:$0xff] %v1840
        %1873 = vst [vmem:[%s187 + $0x70] sm:$0xff] %v1841
        %1874 = vst [vmem:[%s187 + $0x78] sm:$0xff] %v1842
        %1875 = vst [vmem:[%s187 + $0x80] sm:$0xff] %v1843
        %1876 = vst [vmem:[%s187 + $0x88] sm:$0xff] %v1844
        %1877 = vst [vmem:[%s187 + $0x90] sm:$0xff] %v1845
        %1878 = vst [vmem:[%s187 + $0x98] sm:$0xff] %v1846
        %1879 = vst [vmem:[%s187 + $0xa0] sm:$0xff] %v1847
        %1880 = vst [vmem:[%s187 + $0xa8] sm:$0xff] %v1848
        %1881 = vst [vmem:[%s187 + $0xb0] sm:$0xff] %v1849
        %1882 = vst [vmem:[%s187 + $0xb8] sm:$0xff] %v1850
        %1883 = vst [vmem:[%s187 + $0xc0] sm:$0xff] %v1851
        %1884 = vst [vmem:[%s187 + $0xc8] sm:$0xff] %v1852
        %1885 = vst [vmem:[%s187 + $0xd0] sm:$0xff] %v1853
        %1886 = vst [vmem:[%s187 + $0xd8] sm:$0xff] %v1854
        %1887 = vst [vmem:[%s187 + $0xe0] sm:$0xff] %v1855
        %1888 = vst [vmem:[%s187 + $0xe8] sm:$0xff] %v1856
        %1889 = vst [vmem:[%s187 + $0xf0] sm:$0xff] %v1857
        %1890 = vst [vmem:[%s187 + $0xf8] sm:$0xff] %v1858
        %p1891 = scmp.lt.s32.totalorder %s15, 1
        %s1892 = scalar_select %p1891, %s15, 1
        %s1893 = smul.addr %s1892, 32
        %s1894 = smul.addr %s1893, 8
        %s1895 = scalar_lea.vmem %s3, %s1894
        // Predicated region
        $region37: #{inception_a_forward.8} parent=31 // pred_check
          %p1896 = pneg %p101
        $region38: #{inception_a_forward.8} parent=31 // pred_check_branch
          %1898 = sbr.rel (%p1896) target = $region40
        $region39: #{inception_a_forward.8} parent=31 // pred_region
          _
        $region40: #{inception_a_forward.8} parent=31 // pred_fallthru
          _
      $region32: #{inception_a_forward.8} parent=5 // pred_fallthru
        _
      %p1899 = scmp.le.s32.totalorder 2, %s10
      // Predicated region
      $region41: #{inception_a_forward.8} parent=5 // pred_check
        %p1900 = pneg %p1899
      $region42: #{inception_a_forward.8} parent=5 // pred_check_branch
        %1902 = sbr.rel (%p1900) target = $region44
      $region43: #{inception_a_forward.8} parent=5 // pred_region
        %s1903 = ssub.s32 %s10, 2
        // Predicated region
        $region45: #{inception_a_forward.8} parent=43 // pred_check
          %p1904 = pneg %p107
        $region46: #{inception_a_forward.8} parent=43 // pred_check_branch
          %1906 = sbr.rel (%p1904) target = $region48
        $region47: #{inception_a_forward.8} parent=43 // pred_region
          %p1907 = scmp.lt.s32.totalorder %s16, 1
          %s1908 = scalar_select %p1907, %s16, 1
          %s1909 = smul.addr %s1908, 32
          %s1910 = smul.addr %s1909, 8
          %s1911 = scalar_lea.vmem %s3, %s1910
        $region48: #{inception_a_forward.8} parent=43 // pred_fallthru
          _
      $region44: #{inception_a_forward.8} parent=5 // pred_fallthru
        _
    $region6: #{inception_a_forward.8} parent=1 // loop_footer
      %s14 = sadd.s32 1, %s10
    $region7: #{inception_a_forward.8} parent=1 // loop_footer_branch
      %9 = sbr.rel target = $region3
    $region8: #{inception_a_forward.8} parent=1 // loop_exit
      _
    %1912 = vsyncpa [#allocation3], 1
    %s1913 = scalar_lea.sflag [#allocation3], 1
    %1914 = vsyncpa %s1913, 1

// kernel: inception_a_forward.6
$region0: #{inception_a_forward.6}
  #allocation0 [shape = 'u32[]', space=smem, size = 0x4, offset = 0x4, fixed_abs, tag = 'smem constant byte address 0x4 - core index']
  #allocation1 [shape = 'u32[72,128]{1,0:T(1,128)}', space=vmem, size = 0x9000, scoped, tag = 'internal scratch']
  %s0 = inlined_call_operand.vmem [shape: f32[2,16,16,512], index: 0, kind: input, shape index: {}]
  %s1 = inlined_call_operand.hbm [shape: f32[1152,128], index: 1, kind: input, shape index: {}]
  %s2 = inlined_call_operand.vmem [shape: f32[1,128], index: 2, kind: input, shape index: {}]
  %s3 = inlined_call_operand.vmem [shape: f32[2,256,128], index: 3, kind: output, shape index: {}]
  %s4 = sld [smem:[#allocation0]]
  $region87: #{inception_a_forward.6} parent=0
    _
  %s6 = ssub.s32 1, %s4
  %s7 = scalar_select 0, %s6, %s4
  $region1: #{inception_a_forward.6} parent=0
    #allocation2 [shape = 'u8[262144]{0}', space=vmem, size = 0x40000, scoped, tag = 'input window, operand 0']
    #allocation3 [shape = 'u8[589824]{0}', space=vmem, size = 0x90000, scoped, tag = 'input window, operand 1, single buffered']
    #allocation4 [shape = 's32[2]{0}', space=sflag, size = 0x8, scoped, tag = 'scoped memory for inception_a_forward.6']
    %8 = vsyncpa [#allocation4], 0
    loop: start=0, step=1, limit=4
    $region2: #{inception_a_forward.6} parent=1 // loop_pre_header
      _
    $region3: #{inception_a_forward.6} parent=1 // loop_header
      %s10 = sphi 0, %s14
      %p11 = scmp.ge.s32.totalorder %s10, 4
      %s20 = sphi 0, %s22
      %s23 = sphi 0, %s20
      %s24 = sphi 0, %s23
      %s40 = sphi 0, %s24
      %s44 = sphi 0, %s44
      %s46 = sphi 0, %s44
      %s47 = sphi 0, %s46
      %s61 = sphi 0, %s47
      %s65 = sphi 0, %s65
      %s67 = sphi 0, %s65
      %s68 = sphi 0, %s67
      %s82 = sphi 0, %s68
      %s88 = sphi 0, %s90
      %s91 = sphi 0, %s88
      %s92 = sphi 0, %s91
      %s108 = sphi 0, %s92
    $region4: #{inception_a_forward.6} parent=1 // loop_header_branch
      %13 = sbr.rel (%p11) target = $region8
    $region5: #{inception_a_forward.6} parent=1 // loop_body
      %s15 = ssub.s32 %s10, 1
      %s16 = ssub.s32 %s10, 2
      %s17 = sadd.s32 %s10, 1
      %s18 = ssub.s32 %s10, %s17
      %p19 = scmp.eq.s32.totalorder %s18, 0
      %s21 = sadd.s32 %s20, 1
      %s22 = scalar_select %p19, %s20, %s21
      %p25 = pneg %p19
      %p26 = scmp.eq.s32.totalorder %s10, 1
      %p27 = por %p25, %p26
      %p28 = scmp.ne.s32.totalorder %s20, %s23
      %p29 = scmp.eq.s32.totalorder %s10, 0
      %p30 = por %p28, %p29
      %p31 = scmp.ne.s32.totalorder %s20, %s23
      %p32 = scmp.eq.s32.totalorder %s15, 1
      %p33 = por %p31, %p32
      %p34 = scmp.ne.s32.totalorder %s23, %s24
      %p35 = scmp.eq.s32.totalorder %s15, 0
      %p36 = por %p34, %p35
      %p37 = scmp.ne.s32.totalorder %s23, %s24
      %p38 = scmp.eq.s32.totalorder %s16, 1
      %p39 = por %p37, %p38
      %p41 = scmp.ne.s32.totalorder %s24, %s40
      %p42 = scmp.eq.s32.totalorder %s16, 0
      %p43 = por %p41, %p42
      %s45 = sadd.s32 %s44, 1
      %p48 = scmp.eq.s32.totalorder %s10, 1
      %p49 = scmp.ne.s32.totalorder %s44, %s46
      %p50 = scmp.eq.s32.totalorder %s10, 0
      %p51 = por %p49, %p50
      %p52 = scmp.ne.s32.totalorder %s44, %s46
      %p53 = scmp.eq.s32.totalorder %s15, 1
      %p54 = por %p52, %p53
      %p55 = scmp.ne.s32.totalorder %s46, %s47
      %p56 = scmp.eq.s32.totalorder %s15, 0
      %p57 = por %p55, %p56
      %p58 = scmp.ne.s32.totalorder %s46, %s47
      %p59 = scmp.eq.s32.totalorder %s16, 1
      %p60 = por %p58, %p59
      %p62 = scmp.ne.s32.totalorder %s47, %s61
      %p63 = scmp.eq.s32.totalorder %s16, 0
      %p64 = por %p62, %p63
      %s66 = sadd.s32 %s65, 1
      %p69 = scmp.eq.s32.totalorder %s10, 1
      %p70 = scmp.ne.s32.totalorder %s65, %s67
      %p71 = scmp.eq.s32.totalorder %s10, 0
      %p72 = por %p70, %p71
      %p73 = scmp.ne.s32.totalorder %s65, %s67
      %p74 = scmp.eq.s32.totalorder %s15, 1
      %p75 = por %p73, %p74
      %p76 = scmp.ne.s32.totalorder %s67, %s68
      %p77 = scmp.eq.s32.totalorder %s15, 0
      %p78 = por %p76, %p77
      %p79 = scmp.ne.s32.totalorder %s67, %s68
      %p80 = scmp.eq.s32.totalorder %s16, 1
      %p81 = por %p79, %p80
      %p83 = scmp.ne.s32.totalorder %s68, %s82
      %p84 = scmp.eq.s32.totalorder %s16, 0
      %p85 = por %p83, %p84
      %s86 = ssub.s32 %s10, %s17
      %p87 = scmp.eq.s32.totalorder %s86, 0
      %s89 = sadd.s32 %s88, 1
      %s90 = scalar_select %p87, %s88, %s89
      %p93 = pneg %p87
      %p94 = scmp.eq.s32.totalorder %s10, 1
      %p95 = por %p93, %p94
      %p96 = scmp.ne.s32.totalorder %s88, %s91
      %p97 = scmp.eq.s32.totalorder %s10, 0
      %p98 = por %p96, %p97
      %p99 = scmp.ne.s32.totalorder %s88, %s91
      %p100 = scmp.eq.s32.totalorder %s15, 1
      %p101 = por %p99, %p100
      %p102 = scmp.ne.s32.totalorder %s91, %s92
      %p103 = scmp.eq.s32.totalorder %s15, 0
      %p104 = por %p102, %p103
      %p105 = scmp.ne.s32.totalorder %s91, %s92
      %p106 = scmp.eq.s32.totalorder %s16, 1
      %p107 = por %p105, %p106
      %p109 = scmp.ne.s32.totalorder %s92, %s108
      %p110 = scmp.eq.s32.totalorder %s16, 0
      %p111 = por %p109, %p110
      %p112 = scmp.le.s32.totalorder 1, %s10
      %p113 = scmp.lt.s32.totalorder %s10, 3
      %p114 = pnand %p112, %p113
      %p115 = pneg %p114
      // Predicated region
      $region9: #{inception_a_forward.6} parent=5 // pred_check
        _
      $region10: #{inception_a_forward.6} parent=5 // pred_check_branch
        %117 = sbr.rel (%p114) target = $region12
      $region11: #{inception_a_forward.6} parent=5 // pred_region
        %s118 = ssub.s32 %s10, 1
        // Predicated region
        $region13: #{inception_a_forward.6} parent=11 // pred_check
          %p119 = pneg %p57
        $region14: #{inception_a_forward.6} parent=11 // pred_check_branch
          %121 = sbr.rel (%p119) target = $region16
        $region15: #{inception_a_forward.6} parent=11 // pred_region
          %123 = vsyncadd [#allocation4], 0
          %s124 = sshll.u32 %s1, 4
          %s125 = int_to_ptr.hbm [resolvable:$true] %s124
          %s126 = sshll.u32 [#allocation3], 4
          %s127 = int_to_ptr.vmem [resolvable:$true] %s126
          %132 = dma.hbm_to_vmem [thread:$0]  %s125, 18432, %s127, [#allocation4], 128, 128, 8
        $region16: #{inception_a_forward.6} parent=11 // pred_fallthru
          _
        // Predicated region
        $region17: #{inception_a_forward.6} parent=11 // pred_check
          %p133 = pneg %p78
        $region18: #{inception_a_forward.6} parent=11 // pred_check_branch
          %135 = sbr.rel (%p133) target = $region20
        $region19: #{inception_a_forward.6} parent=11 // pred_region
          _
        $region20: #{inception_a_forward.6} parent=11 // pred_fallthru
          _
      $region12: #{inception_a_forward.6} parent=5 // pred_fallthru
        _
      %p136 = scmp.lt.s32.totalorder %s10, 2
      // Predicated region
      $region21: #{inception_a_forward.6} parent=5 // pred_check
        %p137 = pneg %p136
      $region22: #{inception_a_forward.6} parent=5 // pred_check_branch
        %139 = sbr.rel (%p137) target = $region24
      $region23: #{inception_a_forward.6} parent=5 // pred_region
        // Predicated region
        $region25: #{inception_a_forward.6} parent=23 // pred_check
          %p140 = pneg %p30
        $region26: #{inception_a_forward.6} parent=23 // pred_check_branch
          %142 = sbr.rel (%p140) target = $region28
        $region27: #{inception_a_forward.6} parent=23 // pred_region
          %s143 = sand.u32 %s20, 1
          %s144 = sand.u32 %s20, 1
          %s145 = smul.addr %s144, 256
          %s146 = scalar_lea.vmem [#allocation2], %s145
          %s147 = smul.addr %s10, 128
          %s148 = sadd.s32 1, %s147
          %s149 = smul.addr %s148, 8
          %s150 = scalar_lea.vmem %s0, %s149
          // Predicated region
          $region29: #{inception_a_forward.6} parent=27 // pred_check
            _
          $region30: #{inception_a_forward.6} parent=27 // pred_check_branch
            %152 = sbr.rel (0) target = $region32
          $region31: #{inception_a_forward.6} parent=27 // pred_region
            // Predicated region
            $region33: #{inception_a_forward.6} parent=31 // pred_check
              _
            $region34: #{inception_a_forward.6} parent=31 // pred_check_branch
              %154 = sbr.rel (0) target = $region36
            $region35: #{inception_a_forward.6} parent=31 // pred_region
              // Predicated region
              $region48: #{inception_a_forward.6} parent=35 // pred_check
                _
              $region49: #{inception_a_forward.6} parent=35 // pred_check_branch
                %232 = sbr.rel (0) target = $region51
              $region50: #{inception_a_forward.6} parent=35 // pred_region
                loop: start=0, step=1, limit=1
                $region52: #{inception_a_forward.6} parent=50 // loop_pre_header
                  _
                $region53: #{inception_a_forward.6} parent=50 // loop_header
                  %s234 = sphi 0, %s238
                  %p235 = scmp.ge.s32.totalorder %s234, 1
                  %s239 = sphi %s150, %s150
                  %s240 = sphi %s146, %s146
                $region54: #{inception_a_forward.6} parent=50 // loop_header_branch
                  %237 = sbr.rel (%p235) target = $region58
                $region55: #{inception_a_forward.6} parent=50 // loop_body
                  %v241 = vld [vmem:[%s239] sm:$0xff]
                  %242 = vst [vmem:[%s240] sm:$0xff] %v241
                  %v243 = vld [vmem:[%s239 + $0x20] sm:$0xff]
                  %244 = vst [vmem:[%s240 + $0x8] sm:$0xff] %v243
                  %v245 = vld [vmem:[%s239 + $0x40] sm:$0xff]
                  %246 = vst [vmem:[%s240 + $0x10] sm:$0xff] %v245
                  %v247 = vld [vmem:[%s239 + $0x60] sm:$0xff]
                  %248 = vst [vmem:[%s240 + $0x18] sm:$0xff] %v247
                  %v249 = vld [vmem:[%s239 + $0x80] sm:$0xff]
                  %250 = vst [vmem:[%s240 + $0x20] sm:$0xff] %v249
                  %v251 = vld [vmem:[%s239 + $0xa0] sm:$0xff]
                  %252 = vst [vmem:[%s240 + $0x28] sm:$0xff] %v251
                  %v253 = vld [vmem:[%s239 + $0xc0] sm:$0xff]
                  %254 = vst [vmem:[%s240 + $0x30] sm:$0xff] %v253
                  %v255 = vld [vmem:[%s239 + $0xe0] sm:$0xff]
                  %256 = vst [vmem:[%s240 + $0x38] sm:$0xff] %v255
                  %v257 = vld [vmem:[%s239 + $0x100] sm:$0xff]
                  %258 = vst [vmem:[%s240 + $0x40] sm:$0xff] %v257
                  %v259 = vld [vmem:[%s239 + $0x120] sm:$0xff]
                  %260 = vst [vmem:[%s240 + $0x48] sm:$0xff] %v259
                  %v261 = vld [vmem:[%s239 + $0x140] sm:$0xff]
                  %262 = vst [vmem:[%s240 + $0x50] sm:$0xff] %v261
                  %v263 = vld [vmem:[%s239 + $0x160] sm:$0xff]
                  %264 = vst [vmem:[%s240 + $0x58] sm:$0xff] %v263
                  %v265 = vld [vmem:[%s239 + $0x180] sm:$0xff]
                  %266 = vst [vmem:[%s240 + $0x60] sm:$0xff] %v265
                  %v267 = vld [vmem:[%s239 + $0x1a0] sm:$0xff]
                  %268 = vst [vmem:[%s240 + $0x68] sm:$0xff] %v267
                  %v269 = vld [vmem:[%s239 + $0x1c0] sm:$0xff]
                  %270 = vst [vmem:[%s240 + $0x70] sm:$0xff] %v269
                  %v271 = vld [vmem:[%s239 + $0x1e0] sm:$0xff]
                  %272 = vst [vmem:[%s240 + $0x78] sm:$0xff] %v271
                  %v273 = vld [vmem:[%s239 + $0x200] sm:$0xff]
                  %274 = vst [vmem:[%s240 + $0x80] sm:$0xff] %v273
                  %v275 = vld [vmem:[%s239 + $0x220] sm:$0xff]
                  %276 = vst [vmem:[%s240 + $0x88] sm:$0xff] %v275
                  %v277 = vld [vmem:[%s239 + $0x240] sm:$0xff]
                  %278 = vst [vmem:[%s240 + $0x90] sm:$0xff] %v277
                  %v279 = vld [vmem:[%s239 + $0x260] sm:$0xff]
                  %280 = vst [vmem:[%s240 + $0x98] sm:$0xff] %v279
                  %v281 = vld [vmem:[%s239 + $0x280] sm:$0xff]
                  %282 = vst [vmem:[%s240 + $0xa0] sm:$0xff] %v281
                  %v283 = vld [vmem:[%s239 + $0x2a0] sm:$0xff]
                  %284 = vst [vmem:[%s240 + $0xa8] sm:$0xff] %v283
                  %v285 = vld [vmem:[%s239 + $0x2c0] sm:$0xff]
                  %286 = vst [vmem:[%s240 + $0xb0] sm:$0xff] %v285
                  %v287 = vld [vmem:[%s239 + $0x2e0] sm:$0xff]
                  %288 = vst [vmem:[%s240 + $0xb8] sm:$0xff] %v287
                  %v289 = vld [vmem:[%s239 + $0x300] sm:$0xff]
                  %290 = vst [vmem:[%s240 + $0xc0] sm:$0xff] %v289
                  %v291 = vld [vmem:[%s239 + $0x320] sm:$0xff]
                  %292 = vst [vmem:[%s240 + $0xc8] sm:$0xff] %v291
                  %v293 = vld [vmem:[%s239 + $0x340] sm:$0xff]
                  %294 = vst [vmem:[%s240 + $0xd0] sm:$0xff] %v293
                  %v295 = vld [vmem:[%s239 + $0x360] sm:$0xff]
                  %296 = vst [vmem:[%s240 + $0xd8] sm:$0xff] %v295
                  %v297 = vld [vmem:[%s239 + $0x380] sm:$0xff]
                  %298 = vst [vmem:[%s240 + $0xe0] sm:$0xff] %v297
                  %v299 = vld [vmem:[%s239 + $0x3a0] sm:$0xff]
                  %300 = vst [vmem:[%s240 + $0xe8] sm:$0xff] %v299
                  %v301 = vld [vmem:[%s239 + $0x3c0] sm:$0xff]
                  %302 = vst [vmem:[%s240 + $0xf0] sm:$0xff] %v301
                  %v303 = vld [vmem:[%s239 + $0x3e0] sm:$0xff]
                  %304 = vst [vmem:[%s240 + $0xf8] sm:$0xff] %v303
                $region56: #{inception_a_forward.6} parent=50 // loop_footer
                  %s238 = sadd.s32 1, %s234
                $region57: #{inception_a_forward.6} parent=50 // loop_footer_branch
                  %233 = sbr.rel target = $region53
                $region58: #{inception_a_forward.6} parent=50 // loop_exit
                  _
              $region51: #{inception_a_forward.6} parent=35 // pred_fallthru
                _
              // Predicated region
              $region59: #{inception_a_forward.6} parent=35 // pred_check
                _
              $region60: #{inception_a_forward.6} parent=35 // pred_check_branch
                %306 = sbr.rel target = $region62
              $region61: #{inception_a_forward.6} parent=35 // pred_region
                _
              $region62: #{inception_a_forward.6} parent=35 // pred_fallthru
                _
            $region36: #{inception_a_forward.6} parent=31 // pred_fallthru
              _
            // Predicated region
            $region37: #{inception_a_forward.6} parent=31 // pred_check
              _
            $region38: #{inception_a_forward.6} parent=31 // pred_check_branch
              %156 = sbr.rel target = $region40
            $region39: #{inception_a_forward.6} parent=31 // pred_region
              %s158 = ssub.s32 256, 1
              loop: start=0, step=1, limit=1
              $region41: #{inception_a_forward.6} parent=39 // loop_pre_header
                _
              $region42: #{inception_a_forward.6} parent=39 // loop_header
                %s160 = sphi 0, %s164
                %p161 = scmp.ge.s32.totalorder %s160, 1
                %s165 = sphi %s150, %s150
                %s166 = sphi %s146, %s146
              $region43: #{inception_a_forward.6} parent=39 // loop_header_branch
                %163 = sbr.rel (%p161) target = $region47
              $region44: #{inception_a_forward.6} parent=39 // loop_body
                %v167 = vld [vmem:[%s165] sm:%s158]
                %168 = vst [vmem:[%s166] sm:%s158] %v167
                %v169 = vld [vmem:[%s165 + $0x20] sm:%s158]
                %170 = vst [vmem:[%s166 + $0x8] sm:%s158] %v169
                %v171 = vld [vmem:[%s165 + $0x40] sm:%s158]
                %172 = vst [vmem:[%s166 + $0x10] sm:%s158] %v171
                %v173 = vld [vmem:[%s165 + $0x60] sm:%s158]
                %174 = vst [vmem:[%s166 + $0x18] sm:%s158] %v173
                %v175 = vld [vmem:[%s165 + $0x80] sm:%s158]
                %176 = vst [vmem:[%s166 + $0x20] sm:%s158] %v175
                %v177 = vld [vmem:[%s165 + $0xa0] sm:%s158]
                %178 = vst [vmem:[%s166 + $0x28] sm:%s158] %v177
                %v179 = vld [vmem:[%s165 + $0xc0] sm:%s158]
                %180 = vst [vmem:[%s166 + $0x30] sm:%s158] %v179
                %v181 = vld [vmem:[%s165 + $0xe0] sm:%s158]
                %182 = vst [vmem:[%s166 + $0x38] sm:%s158] %v181
                %v183 = vld [vmem:[%s165 + $0x100] sm:%s158]
                %184 = vst [vmem:[%s166 + $0x40] sm:%s158] %v183
                %v185 = vld [vmem:[%s165 + $0x120] sm:%s158]
                %186 = vst [vmem:[%s166 + $0x48] sm:%s158] %v185
                %v187 = vld [vmem:[%s165 + $0x140] sm:%s158]
                %188 = vst [vmem:[%s166 + $0x50] sm:%s158] %v187
                %v189 = vld [vmem:[%s165 + $0x160] sm:%s158]
                %190 = vst [vmem:[%s166 + $0x58] sm:%s158] %v189
                %v191 = vld [vmem:[%s165 + $0x180] sm:%s158]
                %192 = vst [vmem:[%s166 + $0x60] sm:%s158] %v191
                %v193 = vld [vmem:[%s165 + $0x1a0] sm:%s158]
                %194 = vst [vmem:[%s166 + $0x68] sm:%s158] %v193
                %v195 = vld [vmem:[%s165 + $0x1c0] sm:%s158]
                %196 = vst [vmem:[%s166 + $0x70] sm:%s158] %v195
                %v197 = vld [vmem:[%s165 + $0x1e0] sm:%s158]
                %198 = vst [vmem:[%s166 + $0x78] sm:%s158] %v197
                %v199 = vld [vmem:[%s165 + $0x200] sm:%s158]
                %200 = vst [vmem:[%s166 + $0x80] sm:%s158] %v199
                %v201 = vld [vmem:[%s165 + $0x220] sm:%s158]
                %202 = vst [vmem:[%s166 + $0x88] sm:%s158] %v201
                %v203 = vld [vmem:[%s165 + $0x240] sm:%s158]
                %204 = vst [vmem:[%s166 + $0x90] sm:%s158] %v203
                %v205 = vld [vmem:[%s165 + $0x260] sm:%s158]
                %206 = vst [vmem:[%s166 + $0x98] sm:%s158] %v205
                %v207 = vld [vmem:[%s165 + $0x280] sm:%s158]
                %208 = vst [vmem:[%s166 + $0xa0] sm:%s158] %v207
                %v209 = vld [vmem:[%s165 + $0x2a0] sm:%s158]
                %210 = vst [vmem:[%s166 + $0xa8] sm:%s158] %v209
                %v211 = vld [vmem:[%s165 + $0x2c0] sm:%s158]
                %212 = vst [vmem:[%s166 + $0xb0] sm:%s158] %v211
                %v213 = vld [vmem:[%s165 + $0x2e0] sm:%s158]
                %214 = vst [vmem:[%s166 + $0xb8] sm:%s158] %v213
                %v215 = vld [vmem:[%s165 + $0x300] sm:%s158]
                %216 = vst [vmem:[%s166 + $0xc0] sm:%s158] %v215
                %v217 = vld [vmem:[%s165 + $0x320] sm:%s158]
                %218 = vst [vmem:[%s166 + $0xc8] sm:%s158] %v217
                %v219 = vld [vmem:[%s165 + $0x340] sm:%s158]
                %220 = vst [vmem:[%s166 + $0xd0] sm:%s158] %v219
                %v221 = vld [vmem:[%s165 + $0x360] sm:%s158]
                %222 = vst [vmem:[%s166 + $0xd8] sm:%s158] %v221
                %v223 = vld [vmem:[%s165 + $0x380] sm:%s158]
                %224 = vst [vmem:[%s166 + $0xe0] sm:%s158] %v223
                %v225 = vld [vmem:[%s165 + $0x3a0] sm:%s158]
                %226 = vst [vmem:[%s166 + $0xe8] sm:%s158] %v225
                %v227 = vld [vmem:[%s165 + $0x3c0] sm:%s158]
                %228 = vst [vmem:[%s166 + $0xf0] sm:%s158] %v227
                %v229 = vld [vmem:[%s165 + $0x3e0] sm:%s158]
                %230 = vst [vmem:[%s166 + $0xf8] sm:%s158] %v229
              $region45: #{inception_a_forward.6} parent=39 // loop_footer
                %s164 = sadd.s32 1, %s160
              $region46: #{inception_a_forward.6} parent=39 // loop_footer_branch
                %159 = sbr.rel target = $region42
              $region47: #{inception_a_forward.6} parent=39 // loop_exit
                _
            $region40: #{inception_a_forward.6} parent=31 // pred_fallthru
              _
          $region32: #{inception_a_forward.6} parent=27 // pred_fallthru
            _
          %307 = vnop
        $region28: #{inception_a_forward.6} parent=23 // pred_fallthru
          _
      $region24: #{inception_a_forward.6} parent=5 // pred_fallthru
        _
      %p308 = scmp.le.s32.totalorder 1, %s10
      %p309 = scmp.lt.s32.totalorder %s10, 3
      %p310 = pnand %p308, %p309
      %p311 = pneg %p310
      // Predicated region
      $region63: #{inception_a_forward.6} parent=5 // pred_check
        _
      $region64: #{inception_a_forward.6} parent=5 // pred_check_branch
        %313 = sbr.rel (%p310) target = $region66
      $region65: #{inception_a_forward.6} parent=5 // pred_region
        %s314 = ssub.s32 %s10, 1
        %s315 = sand.u32 %s23, 1
        %s316 = sand.u32 %s23, 1
        %s317 = smul.addr %s316, 256
        %s318 = scalar_lea.vmem [#allocation2], %s317
        // Predicated region
        $region67: #{inception_a_forward.6} parent=65 // pred_check
          %p319 = pneg %p36
        $region68: #{inception_a_forward.6} parent=65 // pred_check_branch
          %321 = sbr.rel (%p319) target = $region70
        $region69: #{inception_a_forward.6} parent=65 // pred_region
          _
        $region70: #{inception_a_forward.6} parent=65 // pred_fallthru
          _
        // Predicated region
        $region71: #{inception_a_forward.6} parent=65 // pred_check
          %p322 = pneg %p57
        $region72: #{inception_a_forward.6} parent=65 // pred_check_branch
          %324 = sbr.rel (%p322) target = $region74
        $region73: #{inception_a_forward.6} parent=65 // pred_region
          %326 = dma.done [#allocation4], 18432
        $region74: #{inception_a_forward.6} parent=65 // pred_fallthru
          _
        %s327 = sand.u32 %s23, 1
        %s328 = sand.u32 %s23, 1
        %s329 = smul.addr %s328, 256
        %s330 = scalar_lea.vmem [#allocation2], %s329
        %p331 = pneg %p36
        %p332 = pneg %p33
        %p333 = pneg %p57
        %p334 = pneg %p54
        %p335 = pneg %p78
        %p336 = pneg %p75
        %p337 = pneg %p104
        %p338 = pneg %p101
        %p339 = scmp.lt.s32.totalorder %s15, 1
        %s340 = scalar_select %p339, %s15, 1
        %s341 = smul.addr %s340, 32
        %s342 = smul.addr %s341, 8
        %s343 = scalar_lea.vmem %s3, %s342
        %p344 = scmp.lt.s32.totalorder %s15, 1
        %s345 = scalar_select %p344, %s15, 1
        %s346 = smul.addr %s345, 32
        %s347 = smul.addr %s346, 8
        %s348 = scalar_lea.vmem %s3, %s347
        %v349 = vld [vmem:[%s318] sm:$0xff]
        %v350 = vld [vmem:[%s318 + $0x8] sm:$0xff]
        %v351 = vld [vmem:[%s318 + $0x10] sm:$0xff]
        %v352 = vld [vmem:[%s318 + $0x18] sm:$0xff]
        %v353 = vld [vmem:[%s318 + $0x20] sm:$0xff]
        %v354 = vld [vmem:[%s318 + $0x28] sm:$0xff]
        %v355 = vld [vmem:[%s318 + $0x30] sm:$0xff]
        %v356 = vld [vmem:[%s318 + $0x38] sm:$0xff]
        %v357 = vld [vmem:[%s318 + $0x40] sm:$0xff]
        %v358 = vld [vmem:[%s318 + $0x48] sm:$0xff]
        %v359 = vld [vmem:[%s318 + $0x50] sm:$0xff]
        %v360 = vld [vmem:[%s318 + $0x58] sm:$0xff]
        %v361 = vld [vmem:[%s318 + $0x60] sm:$0xff]
        %v362 = vld [vmem:[%s318 + $0x68] sm:$0xff]
        %v363 = vld [vmem:[%s318 + $0x70] sm:$0xff]
        %v364 = vld [vmem:[%s318 + $0x78] sm:$0xff]
        %v365 = vld [vmem:[%s318 + $0x80] sm:$0xff]
        %v366 = vld [vmem:[%s318 + $0x88] sm:$0xff]
        %v367 = vld [vmem:[%s318 + $0x90] sm:$0xff]
        %v368 = vld [vmem:[%s318 + $0x98] sm:$0xff]
        %v369 = vld [vmem:[%s318 + $0xa0] sm:$0xff]
        %v370 = vld [vmem:[%s318 + $0xa8] sm:$0xff]
        %v371 = vld [vmem:[%s318 + $0xb0] sm:$0xff]
        %v372 = vld [vmem:[%s318 + $0xb8] sm:$0xff]
        %v373 = vld [vmem:[%s318 + $0xc0] sm:$0xff]
        %v374 = vld [vmem:[%s318 + $0xc8] sm:$0xff]
        %v375 = vld [vmem:[%s318 + $0xd0] sm:$0xff]
        %v376 = vld [vmem:[%s318 + $0xd8] sm:$0xff]
        %v377 = vld [vmem:[%s318 + $0xe0] sm:$0xff]
        %v378 = vld [vmem:[%s318 + $0xe8] sm:$0xff]
        %v379 = vld [vmem:[%s318 + $0xf0] sm:$0xff]
        %v380 = vld [vmem:[%s318 + $0xf8] sm:$0xff]
        %vm414 = vcmask 1040384
        %v415 = vrot.slane 0.0, 7
        %v416 = vsel %vm414, %v415, %v415
        %v417 = vrot.slane %v349, 7
        %v418 = vrot.slane %v350, 7
        %v419 = vsel %vm414, %v417, %v418
        %v420 = vrot.slane %v351, 7
        %v421 = vrot.slane %v352, 7
        %v422 = vsel %vm414, %v420, %v421
        %v423 = vrot.slane %v353, 7
        %v424 = vrot.slane %v354, 7
        %v425 = vsel %vm414, %v423, %v424
        %v426 = vrot.slane %v355, 7
        %v427 = vrot.slane %v356, 7
        %v428 = vsel %vm414, %v426, %v427
        %v429 = vrot.slane %v357, 7
        %v430 = vrot.slane %v358, 7
        %v431 = vsel %vm414, %v429, %v430
        %v432 = vrot.slane %v359, 7
        %v433 = vrot.slane %v360, 7
        %v434 = vsel %vm414, %v432, %v433
        %v435 = vrot.slane %v361, 7
        %v436 = vrot.slane %v362, 7
        %v437 = vsel %vm414, %v435, %v436
        %v438 = vrot.slane %v363, 7
        %v439 = vrot.slane %v364, 7
        %v440 = vsel %vm414, %v438, %v439
        %v441 = vrot.slane %v365, 7
        %v442 = vrot.slane %v366, 7
        %v443 = vsel %vm414, %v441, %v442
        %v444 = vrot.slane %v367, 7
        %v445 = vrot.slane %v368, 7
        %v446 = vsel %vm414, %v444, %v445
        %v447 = vrot.slane %v369, 7
        %v448 = vrot.slane %v370, 7
        %v449 = vsel %vm414, %v447, %v448
        %v450 = vrot.slane %v371, 7
        %v451 = vrot.slane %v372, 7
        %v452 = vsel %vm414, %v450, %v451
        %v453 = vrot.slane %v373, 7
        %v454 = vrot.slane %v374, 7
        %v455 = vsel %vm414, %v453, %v454
        %v456 = vrot.slane %v375, 7
        %v457 = vrot.slane %v376, 7
        %v458 = vsel %vm414, %v456, %v457
        %v459 = vrot.slane %v377, 7
        %v460 = vrot.slane %v378, 7
        %v461 = vsel %vm414, %v459, %v460
        %v462 = vrot.slane %v379, 7
        %v463 = vrot.slane %v380, 7
        %v464 = vsel %vm414, %v462, %v463
        %v515 = vsel %vm414, 0.0, %v415
        %v516 = vsel %vm414, 0.0, %v417
        %v517 = vsel %vm414, 0.0, %v420
        %v518 = vsel %vm414, 0.0, %v423
        %v519 = vsel %vm414, 0.0, %v426
        %v520 = vsel %vm414, 0.0, %v429
        %v521 = vsel %vm414, 0.0, %v432
        %v522 = vsel %vm414, 0.0, %v435
        %v523 = vsel %vm414, 0.0, %v438
        %v524 = vsel %vm414, 0.0, %v441
        %v525 = vsel %vm414, 0.0, %v444
        %v526 = vsel %vm414, 0.0, %v447
        %v527 = vsel %vm414, 0.0, %v450
        %v528 = vsel %vm414, 0.0, %v453
        %v529 = vsel %vm414, 0.0, %v456
        %v530 = vsel %vm414, 0.0, %v459
        %v531 = vsel %vm414, 0.0, %v462
        %v532 = vsel %vm414, %v415, 0.0
        %v533 = vsel %vm414, %v418, 0.0
        %v534 = vsel %vm414, %v421, 0.0
        %v535 = vsel %vm414, %v424, 0.0
        %v536 = vsel %vm414, %v427, 0.0
        %v537 = vsel %vm414, %v430, 0.0
        %v538 = vsel %vm414, %v433, 0.0
        %v539 = vsel %vm414, %v436, 0.0
        %v540 = vsel %vm414, %v439, 0.0
        %v541 = vsel %vm414, %v442, 0.0
        %v542 = vsel %vm414, %v445, 0.0
        %v543 = vsel %vm414, %v448, 0.0
        %v544 = vsel %vm414, %v451, 0.0
        %v545 = vsel %vm414, %v454, 0.0
        %v546 = vsel %vm414, %v457, 0.0
        %v547 = vsel %vm414, %v460, 0.0
        %v548 = vsel %vm414, %v463, 0.0
        %vm581 = vcmask 1046528
        %v582 = vrot.slane %v515, 1
        %v583 = vrot.slane %v416, 1
        %v584 = vsel %vm581, %v582, %v583
        %v585 = vrot.slane %v532, 1
        %v586 = vsel %vm581, %v583, %v585
        %v587 = vrot.slane %v516, 1
        %v588 = vrot.slane %v419, 1
        %v589 = vsel %vm581, %v587, %v588
        %v590 = vrot.slane %v533, 1
        %v591 = vsel %vm581, %v588, %v590
        %v592 = vrot.slane %v517, 1
        %v593 = vrot.slane %v422, 1
        %v594 = vsel %vm581, %v592, %v593
        %v595 = vrot.slane %v534, 1
        %v596 = vsel %vm581, %v593, %v595
        %v597 = vrot.slane %v518, 1
        %v598 = vrot.slane %v425, 1
        %v599 = vsel %vm581, %v597, %v598
        %v600 = vrot.slane %v535, 1
        %v601 = vsel %vm581, %v598, %v600
        %v602 = vrot.slane %v519, 1
        %v603 = vrot.slane %v428, 1
        %v604 = vsel %vm581, %v602, %v603
        %v605 = vrot.slane %v536, 1
        %v606 = vsel %vm581, %v603, %v605
        %v607 = vrot.slane %v520, 1
        %v608 = vrot.slane %v431, 1
        %v609 = vsel %vm581, %v607, %v608
        %v610 = vrot.slane %v537, 1
        %v611 = vsel %vm581, %v608, %v610
        %v612 = vrot.slane %v521, 1
        %v613 = vrot.slane %v434, 1
        %v614 = vsel %vm581, %v612, %v613
        %v615 = vrot.slane %v538, 1
        %v616 = vsel %vm581, %v613, %v615
        %v617 = vrot.slane %v522, 1
        %v618 = vrot.slane %v437, 1
        %v619 = vsel %vm581, %v617, %v618
        %v620 = vrot.slane %v539, 1
        %v621 = vsel %vm581, %v618, %v620
        %v622 = vrot.slane %v523, 1
        %v623 = vrot.slane %v440, 1
        %v624 = vsel %vm581, %v622, %v623
        %v625 = vrot.slane %v540, 1
        %v626 = vsel %vm581, %v623, %v625
        %v627 = vrot.slane %v524, 1
        %v628 = vrot.slane %v443, 1
        %v629 = vsel %vm581, %v627, %v628
        %v630 = vrot.slane %v541, 1
        %v631 = vsel %vm581, %v628, %v630
        %v632 = vrot.slane %v525, 1
        %v633 = vrot.slane %v446, 1
        %v634 = vsel %vm581, %v632, %v633
        %v635 = vrot.slane %v542, 1
        %v636 = vsel %vm581, %v633, %v635
        %v637 = vrot.slane %v526, 1
        %v638 = vrot.slane %v449, 1
        %v639 = vsel %vm581, %v637, %v638
        %v640 = vrot.slane %v543, 1
        %v641 = vsel %vm581, %v638, %v640
        %v642 = vrot.slane %v527, 1
        %v643 = vrot.slane %v452, 1
        %v644 = vsel %vm581, %v642, %v643
        %v645 = vrot.slane %v544, 1
        %v646 = vsel %vm581, %v643, %v645
        %v647 = vrot.slane %v528, 1
        %v648 = vrot.slane %v455, 1
        %v649 = vsel %vm581, %v647, %v648
        %v650 = vrot.slane %v545, 1
        %v651 = vsel %vm581, %v648, %v650
        %v652 = vrot.slane %v529, 1
        %v653 = vrot.slane %v458, 1
        %v654 = vsel %vm581, %v652, %v653
        %v655 = vrot.slane %v546, 1
        %v656 = vsel %vm581, %v653, %v655
        %v657 = vrot.slane %v530, 1
        %v658 = vrot.slane %v461, 1
        %v659 = vsel %vm581, %v657, %v658
        %v660 = vrot.slane %v547, 1
        %v661 = vsel %vm581, %v658, %v660
        %vm694 = vcmask 1045504
        %v695 = vrot.slane %v515, 2
        %v696 = vrot.slane %v416, 2
        %v697 = vsel %vm694, %v695, %v696
        %v698 = vrot.slane %v532, 2
        %v699 = vsel %vm694, %v696, %v698
        %v700 = vrot.slane %v516, 2
        %v701 = vrot.slane %v419, 2
        %v702 = vsel %vm694, %v700, %v701
        %v703 = vrot.slane %v533, 2
        %v704 = vsel %vm694, %v701, %v703
        %v705 = vrot.slane %v517, 2
        %v706 = vrot.slane %v422, 2
        %v707 = vsel %vm694, %v705, %v706
        %v708 = vrot.slane %v534, 2
        %v709 = vsel %vm694, %v706, %v708
        %v710 = vrot.slane %v518, 2
        %v711 = vrot.slane %v425, 2
        %v712 = vsel %vm694, %v710, %v711
        %v713 = vrot.slane %v535, 2
        %v714 = vsel %vm694, %v711, %v713
        %v715 = vrot.slane %v519, 2
        %v716 = vrot.slane %v428, 2
        %v717 = vsel %vm694, %v715, %v716
        %v718 = vrot.slane %v536, 2
        %v719 = vsel %vm694, %v716, %v718
        %v720 = vrot.slane %v520, 2
        %v721 = vrot.slane %v431, 2
        %v722 = vsel %vm694, %v720, %v721
        %v723 = vrot.slane %v537, 2
        %v724 = vsel %vm694, %v721, %v723
        %v725 = vrot.slane %v521, 2
        %v726 = vrot.slane %v434, 2
        %v727 = vsel %vm694, %v725, %v726
        %v728 = vrot.slane %v538, 2
        %v729 = vsel %vm694, %v726, %v728
        %v730 = vrot.slane %v522, 2
        %v731 = vrot.slane %v437, 2
        %v732 = vsel %vm694, %v730, %v731
        %v733 = vrot.slane %v539, 2
        %v734 = vsel %vm694, %v731, %v733
        %v735 = vrot.slane %v523, 2
        %v736 = vrot.slane %v440, 2
        %v737 = vsel %vm694, %v735, %v736
        %v738 = vrot.slane %v540, 2
        %v739 = vsel %vm694, %v736, %v738
        %v740 = vrot.slane %v524, 2
        %v741 = vrot.slane %v443, 2
        %v742 = vsel %vm694, %v740, %v741
        %v743 = vrot.slane %v541, 2
        %v744 = vsel %vm694, %v741, %v743
        %v745 = vrot.slane %v525, 2
        %v746 = vrot.slane %v446, 2
        %v747 = vsel %vm694, %v745, %v746
        %v748 = vrot.slane %v542, 2
        %v749 = vsel %vm694, %v746, %v748
        %v750 = vrot.slane %v526, 2
        %v751 = vrot.slane %v449, 2
        %v752 = vsel %vm694, %v750, %v751
        %v753 = vrot.slane %v543, 2
        %v754 = vsel %vm694, %v751, %v753
        %v755 = vrot.slane %v527, 2
        %v756 = vrot.slane %v452, 2
        %v757 = vsel %vm694, %v755, %v756
        %v758 = vrot.slane %v544, 2
        %v759 = vsel %vm694, %v756, %v758
        %v760 = vrot.slane %v528, 2
        %v761 = vrot.slane %v455, 2
        %v762 = vsel %vm694, %v760, %v761
        %v763 = vrot.slane %v545, 2
        %v764 = vsel %vm694, %v761, %v763
        %v765 = vrot.slane %v529, 2
        %v766 = vrot.slane %v458, 2
        %v767 = vsel %vm694, %v765, %v766
        %v768 = vrot.slane %v546, 2
        %v769 = vsel %vm694, %v766, %v768
        %v770 = vrot.slane %v530, 2
        %v771 = vrot.slane %v461, 2
        %v772 = vsel %vm694, %v770, %v771
        %v773 = vrot.slane %v547, 2
        %v774 = vsel %vm694, %v771, %v773
        %v809 = vrot.slane %v531, 1
        %v810 = vrot.slane %v464, 1
        %v811 = vsel %vm581, %v809, %v810
        %v812 = vrot.slane %v548, 1
        %v813 = vsel %vm581, %v810, %v812
        %v816 = vrot.slane %v531, 2
        %v817 = vrot.slane %v464, 2
        %v818 = vsel %vm694, %v816, %v817
        %v819 = vrot.slane %v548, 2
        %v820 = vsel %vm694, %v817, %v819
        %v823 = vld [vmem:[#allocation3] sm:$0xff]
        %v824 = vld [vmem:[#allocation3 + $0x8] sm:$0xff]
        %v825 = vld [vmem:[#allocation3 + $0x10] sm:$0xff]
        %v826 = vld [vmem:[#allocation3 + $0x18] sm:$0xff]
        %v827 = vld [vmem:[#allocation3 + $0x20] sm:$0xff]
        %v828 = vld [vmem:[#allocation3 + $0x28] sm:$0xff]
        %v829 = vld [vmem:[#allocation3 + $0x30] sm:$0xff]
        %v830 = vld [vmem:[#allocation3 + $0x38] sm:$0xff]
        %v831 = vld [vmem:[#allocation3 + $0x40] sm:$0xff]
        %v832 = vld [vmem:[#allocation3 + $0x48] sm:$0xff]
        %v833 = vld [vmem:[#allocation3 + $0x50] sm:$0xff]
        %v834 = vld [vmem:[#allocation3 + $0x58] sm:$0xff]
        %v835 = vld [vmem:[#allocation3 + $0x60] sm:$0xff]
        %v836 = vld [vmem:[#allocation3 + $0x68] sm:$0xff]
        %v837 = vld [vmem:[#allocation3 + $0x70] sm:$0xff]
        %v838 = vld [vmem:[#allocation3 + $0x78] sm:$0xff]
        %v839 = vld [vmem:[#allocation3 + $0x80] sm:$0xff]
        %v840 = vld [vmem:[#allocation3 + $0x88] sm:$0xff]
        %v841 = vld [vmem:[#allocation3 + $0x90] sm:$0xff]
        %v842 = vld [vmem:[#allocation3 + $0x98] sm:$0xff]
        %v843 = vld [vmem:[#allocation3 + $0xa0] sm:$0xff]
        %v844 = vld [vmem:[#allocation3 + $0xa8] sm:$0xff]
        %v845 = vld [vmem:[#allocation3 + $0xb0] sm:$0xff]
        %v846 = vld [vmem:[#allocation3 + $0xb8] sm:$0xff]
        %v847 = vld [vmem:[#allocation3 + $0xc0] sm:$0xff]
        %v848 = vld [vmem:[#allocation3 + $0xc8] sm:$0xff]
        %v849 = vld [vmem:[#allocation3 + $0xd0] sm:$0xff]
        %v850 = vld [vmem:[#allocation3 + $0xd8] sm:$0xff]
        %v851 = vld [vmem:[#allocation3 + $0xe0] sm:$0xff]
        %v852 = vld [vmem:[#allocation3 + $0xe8] sm:$0xff]
        %v853 = vld [vmem:[#allocation3 + $0xf0] sm:$0xff]
        %v854 = vld [vmem:[#allocation3 + $0xf8] sm:$0xff]
        %v855 = vld [vmem:[#allocation3 + $0x100] sm:$0xff]
        %v856 = vld [vmem:[#allocation3 + $0x108] sm:$0xff]
        %v857 = vld [vmem:[#allocation3 + $0x110] sm:$0xff]
        %v858 = vld [vmem:[#allocation3 + $0x118] sm:$0xff]
        %v859 = vld [vmem:[#allocation3 + $0x120] sm:$0xff]
        %v860 = vld [vmem:[#allocation3 + $0x128] sm:$0xff]
        %v861 = vld [vmem:[#allocation3 + $0x130] sm:$0xff]
        %v862 = vld [vmem:[#allocation3 + $0x138] sm:$0xff]
        %v863 = vld [vmem:[#allocation3 + $0x140] sm:$0xff]
        %v864 = vld [vmem:[#allocation3 + $0x148] sm:$0xff]
        %v865 = vld [vmem:[#allocation3 + $0x150] sm:$0xff]
        %v866 = vld [vmem:[#allocation3 + $0x158] sm:$0xff]
        %v867 = vld [vmem:[#allocation3 + $0x160] sm:$0xff]
        %v868 = vld [vmem:[#allocation3 + $0x168] sm:$0xff]
        %v869 = vld [vmem:[#allocation3 + $0x170] sm:$0xff]
        %v870 = vld [vmem:[#allocation3 + $0x178] sm:$0xff]
        %v871 = vld [vmem:[#allocation3 + $0x180] sm:$0xff]
        %v872 = vld [vmem:[#allocation3 + $0x188] sm:$0xff]
        %v873 = vld [vmem:[#allocation3 + $0x190] sm:$0xff]
        %v874 = vld [vmem:[#allocation3 + $0x198] sm:$0xff]
        %v875 = vld [vmem:[#allocation3 + $0x1a0] sm:$0xff]
        %v876 = vld [vmem:[#allocation3 + $0x1a8] sm:$0xff]
        %v877 = vld [vmem:[#allocation3 + $0x1b0] sm:$0xff]
        %v878 = vld [vmem:[#allocation3 + $0x1b8] sm:$0xff]
        %v879 = vld [vmem:[#allocation3 + $0x1c0] sm:$0xff]
        %v880 = vld [vmem:[#allocation3 + $0x1c8] sm:$0xff]
        %v881 = vld [vmem:[#allocation3 + $0x1d0] sm:$0xff]
        %v882 = vld [vmem:[#allocation3 + $0x1d8] sm:$0xff]
        %v883 = vld [vmem:[#allocation3 + $0x1e0] sm:$0xff]
        %v884 = vld [vmem:[#allocation3 + $0x1e8] sm:$0xff]
        %v885 = vld [vmem:[#allocation3 + $0x1f0] sm:$0xff]
        %v886 = vld [vmem:[#allocation3 + $0x1f8] sm:$0xff]
        %v887 = vld [vmem:[#allocation3 + $0x200] sm:$0xff]
        %v888 = vld [vmem:[#allocation3 + $0x208] sm:$0xff]
        %v889 = vld [vmem:[#allocation3 + $0x210] sm:$0xff]
        %v890 = vld [vmem:[#allocation3 + $0x218] sm:$0xff]
        %v891 = vld [vmem:[#allocation3 + $0x220] sm:$0xff]
        %v892 = vld [vmem:[#allocation3 + $0x228] sm:$0xff]
        %v893 = vld [vmem:[#allocation3 + $0x230] sm:$0xff]
        %v894 = vld [vmem:[#allocation3 + $0x238] sm:$0xff]
        %v895 = vld [vmem:[#allocation3 + $0x240] sm:$0xff]
        %v896 = vld [vmem:[#allocation3 + $0x248] sm:$0xff]
        %v897 = vld [vmem:[#allocation3 + $0x250] sm:$0xff]
        %v898 = vld [vmem:[#allocation3 + $0x258] sm:$0xff]
        %v899 = vld [vmem:[#allocation3 + $0x260] sm:$0xff]
        %v900 = vld [vmem:[#allocation3 + $0x268] sm:$0xff]
        %v901 = vld [vmem:[#allocation3 + $0x270] sm:$0xff]
        %v902 = vld [vmem:[#allocation3 + $0x278] sm:$0xff]
        %v903 = vld [vmem:[#allocation3 + $0x280] sm:$0xff]
        %v904 = vld [vmem:[#allocation3 + $0x288] sm:$0xff]
        %v905 = vld [vmem:[#allocation3 + $0x290] sm:$0xff]
        %v906 = vld [vmem:[#allocation3 + $0x298] sm:$0xff]
        %v907 = vld [vmem:[#allocation3 + $0x2a0] sm:$0xff]
        %v908 = vld [vmem:[#allocation3 + $0x2a8] sm:$0xff]
        %v909 = vld [vmem:[#allocation3 + $0x2b0] sm:$0xff]
        %v910 = vld [vmem:[#allocation3 + $0x2b8] sm:$0xff]
        %v911 = vld [vmem:[#allocation3 + $0x2c0] sm:$0xff]
        %v912 = vld [vmem:[#allocation3 + $0x2c8] sm:$0xff]
        %v913 = vld [vmem:[#allocation3 + $0x2d0] sm:$0xff]
        %v914 = vld [vmem:[#allocation3 + $0x2d8] sm:$0xff]
        %v915 = vld [vmem:[#allocation3 + $0x2e0] sm:$0xff]
        %v916 = vld [vmem:[#allocation3 + $0x2e8] sm:$0xff]
        %v917 = vld [vmem:[#allocation3 + $0x2f0] sm:$0xff]
        %v918 = vld [vmem:[#allocation3 + $0x2f8] sm:$0xff]
        %v919 = vld [vmem:[#allocation3 + $0x300] sm:$0xff]
        %v920 = vld [vmem:[#allocation3 + $0x308] sm:$0xff]
        %v921 = vld [vmem:[#allocation3 + $0x310] sm:$0xff]
        %v922 = vld [vmem:[#allocation3 + $0x318] sm:$0xff]
        %v923 = vld [vmem:[#allocation3 + $0x320] sm:$0xff]
        %v924 = vld [vmem:[#allocation3 + $0x328] sm:$0xff]
        %v925 = vld [vmem:[#allocation3 + $0x330] sm:$0xff]
        %v926 = vld [vmem:[#allocation3 + $0x338] sm:$0xff]
        %v927 = vld [vmem:[#allocation3 + $0x340] sm:$0xff]
        %v928 = vld [vmem:[#allocation3 + $0x348] sm:$0xff]
        %v929 = vld [vmem:[#allocation3 + $0x350] sm:$0xff]
        %v930 = vld [vmem:[#allocation3 + $0x358] sm:$0xff]
        %v931 = vld [vmem:[#allocation3 + $0x360] sm:$0xff]
        %v932 = vld [vmem:[#allocation3 + $0x368] sm:$0xff]
        %v933 = vld [vmem:[#allocation3 + $0x370] sm:$0xff]
        %v934 = vld [vmem:[#allocation3 + $0x378] sm:$0xff]
        %v935 = vld [vmem:[#allocation3 + $0x380] sm:$0xff]
        %v936 = vld [vmem:[#allocation3 + $0x388] sm:$0xff]
        %v937 = vld [vmem:[#allocation3 + $0x390] sm:$0xff]
        %v938 = vld [vmem:[#allocation3 + $0x398] sm:$0xff]
        %v939 = vld [vmem:[#allocation3 + $0x3a0] sm:$0xff]
        %v940 = vld [vmem:[#allocation3 + $0x3a8] sm:$0xff]
        %v941 = vld [vmem:[#allocation3 + $0x3b0] sm:$0xff]
        %v942 = vld [vmem:[#allocation3 + $0x3b8] sm:$0xff]
        %v943 = vld [vmem:[#allocation3 + $0x3c0] sm:$0xff]
        %v944 = vld [vmem:[#allocation3 + $0x3c8] sm:$0xff]
        %v945 = vld [vmem:[#allocation3 + $0x3d0] sm:$0xff]
        %v946 = vld [vmem:[#allocation3 + $0x3d8] sm:$0xff]
        %v947 = vld [vmem:[#allocation3 + $0x3e0] sm:$0xff]
        %v948 = vld [vmem:[#allocation3 + $0x3e8] sm:$0xff]
        %v949 = vld [vmem:[#allocation3 + $0x3f0] sm:$0xff]
        %v950 = vld [vmem:[#allocation3 + $0x3f8] sm:$0xff]
        %v951 = vld [vmem:[#allocation3 + $0x400] sm:$0xff]
        %v952 = vld [vmem:[#allocation3 + $0x408] sm:$0xff]
        %v953 = vld [vmem:[#allocation3 + $0x410] sm:$0xff]
        %v954 = vld [vmem:[#allocation3 + $0x418] sm:$0xff]
        %v955 = vld [vmem:[#allocation3 + $0x420] sm:$0xff]
        %v956 = vld [vmem:[#allocation3 + $0x428] sm:$0xff]
        %v957 = vld [vmem:[#allocation3 + $0x430] sm:$0xff]
        %v958 = vld [vmem:[#allocation3 + $0x438] sm:$0xff]
        %v959 = vld [vmem:[#allocation3 + $0x440] sm:$0xff]
        %v960 = vld [vmem:[#allocation3 + $0x448] sm:$0xff]
        %v961 = vld [vmem:[#allocation3 + $0x450] sm:$0xff]
        %v962 = vld [vmem:[#allocation3 + $0x458] sm:$0xff]
        %v963 = vld [vmem:[#allocation3 + $0x460] sm:$0xff]
        %v964 = vld [vmem:[#allocation3 + $0x468] sm:$0xff]
        %v965 = vld [vmem:[#allocation3 + $0x470] sm:$0xff]
        %v966 = vld [vmem:[#allocation3 + $0x478] sm:$0xff]
        %v967 = vld [vmem:[%s2] sm:$0x1]
        %v969 = vperm.slane %v967, 0
        %971 = vmatpush.msra.mxu0 %v838
        %972 = vmatpush.msra.mxu0 %v837
        %973 = vmatpush.msra.mxu0 %v836
        %974 = vmatpush.msra.mxu0 %v835
        %975 = vmatpush.msra.mxu0 %v834
        %976 = vmatpush.msra.mxu0 %v833
        %977 = vmatpush.msra.mxu0 %v832
        %978 = vmatpush.msra.mxu0 %v831
        %979 = vmatpush.msra.mxu0 %v830
        %980 = vmatpush.msra.mxu0 %v829
        %981 = vmatpush.msra.mxu0 %v828
        %982 = vmatpush.msra.mxu0 %v827
        %983 = vmatpush.msra.mxu0 %v826
        %984 = vmatpush.msra.mxu0 %v825
        %985 = vmatpush.msra.mxu0 %v824
        %986 = vmatpush.msra.mxu0 %v823
        %987 = vmatmul.f32.gmra.mxu0 %v515
        %v988 = vpop.f32.mrf.mxu0
        %v989 = vadd.f32 %v969, %v988
        %990 = vmatmul.f32.gmra.mxu0 %v416
        %v991 = vpop.f32.mrf.mxu0
        %v992 = vadd.f32 %v969, %v991
        %993 = vmatmul.f32.gmra.mxu0 %v516
        %v994 = vpop.f32.mrf.mxu0
        %v995 = vadd.f32 %v969, %v994
        %996 = vmatmul.f32.gmra.mxu0 %v419
        %v997 = vpop.f32.mrf.mxu0
        %v998 = vadd.f32 %v969, %v997
        %999 = vmatmul.f32.gmra.mxu0 %v517
        %v1000 = vpop.f32.mrf.mxu0
        %v1001 = vadd.f32 %v969, %v1000
        %1002 = vmatmul.f32.gmra.mxu0 %v422
        %v1003 = vpop.f32.mrf.mxu0
        %v1004 = vadd.f32 %v969, %v1003
        %1005 = vmatmul.f32.gmra.mxu0 %v518
        %v1006 = vpop.f32.mrf.mxu0
        %v1007 = vadd.f32 %v969, %v1006
        %1008 = vmatmul.f32.gmra.mxu0 %v425
        %v1009 = vpop.f32.mrf.mxu0
        %v1010 = vadd.f32 %v969, %v1009
        %1011 = vmatmul.f32.gmra.mxu0 %v519
        %v1012 = vpop.f32.mrf.mxu0
        %v1013 = vadd.f32 %v969, %v1012
        %1014 = vmatmul.f32.gmra.mxu0 %v428
        %v1015 = vpop.f32.mrf.mxu0
        %v1016 = vadd.f32 %v969, %v1015
        %1017 = vmatmul.f32.gmra.mxu0 %v520
        %v1018 = vpop.f32.mrf.mxu0
        %v1019 = vadd.f32 %v969, %v1018
        %1020 = vmatmul.f32.gmra.mxu0 %v431
        %v1021 = vpop.f32.mrf.mxu0
        %v1022 = vadd.f32 %v969, %v1021
        %1023 = vmatmul.f32.gmra.mxu0 %v521
        %v1024 = vpop.f32.mrf.mxu0
        %v1025 = vadd.f32 %v969, %v1024
        %1026 = vmatmul.f32.gmra.mxu0 %v434
        %v1027 = vpop.f32.mrf.mxu0
        %v1028 = vadd.f32 %v969, %v1027
        %1029 = vmatmul.f32.gmra.mxu0 %v522
        %v1030 = vpop.f32.mrf.mxu0
        %v1031 = vadd.f32 %v969, %v1030
        %1032 = vmatmul.f32.gmra.mxu0 %v437
        %v1033 = vpop.f32.mrf.mxu0
        %v1034 = vadd.f32 %v969, %v1033
        %1035 = vmatmul.f32.gmra.mxu0 %v523
        %v1036 = vpop.f32.mrf.mxu0
        %v1037 = vadd.f32 %v969, %v1036
        %1038 = vmatmul.f32.gmra.mxu0 %v440
        %v1039 = vpop.f32.mrf.mxu0
        %v1040 = vadd.f32 %v969, %v1039
        %1041 = vmatmul.f32.gmra.mxu0 %v524
        %v1042 = vpop.f32.mrf.mxu0
        %v1043 = vadd.f32 %v969, %v1042
        %1044 = vmatmul.f32.gmra.mxu0 %v443
        %v1045 = vpop.f32.mrf.mxu0
        %v1046 = vadd.f32 %v969, %v1045
        %1047 = vmatmul.f32.gmra.mxu0 %v525
        %v1048 = vpop.f32.mrf.mxu0
        %v1049 = vadd.f32 %v969, %v1048
        %1050 = vmatmul.f32.gmra.mxu0 %v446
        %v1051 = vpop.f32.mrf.mxu0
        %v1052 = vadd.f32 %v969, %v1051
        %1053 = vmatmul.f32.gmra.mxu0 %v526
        %v1054 = vpop.f32.mrf.mxu0
        %v1055 = vadd.f32 %v969, %v1054
        %1056 = vmatmul.f32.gmra.mxu0 %v449
        %v1057 = vpop.f32.mrf.mxu0
        %v1058 = vadd.f32 %v969, %v1057
        %1059 = vmatmul.f32.gmra.mxu0 %v527
        %v1060 = vpop.f32.mrf.mxu0
        %v1061 = vadd.f32 %v969, %v1060
        %1062 = vmatmul.f32.gmra.mxu0 %v452
        %v1063 = vpop.f32.mrf.mxu0
        %v1064 = vadd.f32 %v969, %v1063
        %1065 = vmatmul.f32.gmra.mxu0 %v528
        %v1066 = vpop.f32.mrf.mxu0
        %v1067 = vadd.f32 %v969, %v1066
        %1068 = vmatmul.f32.gmra.mxu0 %v455
        %v1069 = vpop.f32.mrf.mxu0
        %v1070 = vadd.f32 %v969, %v1069
        %1071 = vmatmul.f32.gmra.mxu0 %v529
        %v1072 = vpop.f32.mrf.mxu0
        %v1073 = vadd.f32 %v969, %v1072
        %1074 = vmatmul.f32.gmra.mxu0 %v458
        %v1075 = vpop.f32.mrf.mxu0
        %v1076 = vadd.f32 %v969, %v1075
        %1077 = vmatmul.f32.gmra.mxu0 %v530
        %v1078 = vpop.f32.mrf.mxu0
        %v1079 = vadd.f32 %v969, %v1078
        %1080 = vmatmul.f32.gmra.mxu0 %v461
        %v1081 = vpop.f32.mrf.mxu0
        %v1082 = vadd.f32 %v969, %v1081
        %1083 = vdwg.mxu0
        %1084 = vmatpush.msra.mxu0 %v854
        %1085 = vmatpush.msra.mxu0 %v853
        %1086 = vmatpush.msra.mxu0 %v852
        %1087 = vmatpush.msra.mxu0 %v851
        %1088 = vmatpush.msra.mxu0 %v850
        %1089 = vmatpush.msra.mxu0 %v849
        %1090 = vmatpush.msra.mxu0 %v848
        %1091 = vmatpush.msra.mxu0 %v847
        %1092 = vmatpush.msra.mxu0 %v846
        %1093 = vmatpush.msra.mxu0 %v845
        %1094 = vmatpush.msra.mxu0 %v844
        %1095 = vmatpush.msra.mxu0 %v843
        %1096 = vmatpush.msra.mxu0 %v842
        %1097 = vmatpush.msra.mxu0 %v841
        %1098 = vmatpush.msra.mxu0 %v840
        %1099 = vmatpush.msra.mxu0 %v839
        %1100 = vmatmul.f32.gmra.mxu0 %v584
        %v1101 = vpop.f32.mrf.mxu0
        %v1102 = vadd.f32 %v989, %v1101
        %1103 = vmatmul.f32.gmra.mxu0 %v586
        %v1104 = vpop.f32.mrf.mxu0
        %v1105 = vadd.f32 %v992, %v1104
        %1106 = vmatmul.f32.gmra.mxu0 %v589
        %v1107 = vpop.f32.mrf.mxu0
        %v1108 = vadd.f32 %v995, %v1107
        %1109 = vmatmul.f32.gmra.mxu0 %v591
        %v1110 = vpop.f32.mrf.mxu0
        %v1111 = vadd.f32 %v998, %v1110
        %1112 = vmatmul.f32.gmra.mxu0 %v594
        %v1113 = vpop.f32.mrf.mxu0
        %v1114 = vadd.f32 %v1001, %v1113
        %1115 = vmatmul.f32.gmra.mxu0 %v596
        %v1116 = vpop.f32.mrf.mxu0
        %v1117 = vadd.f32 %v1004, %v1116
        %1118 = vmatmul.f32.gmra.mxu0 %v599
        %v1119 = vpop.f32.mrf.mxu0
        %v1120 = vadd.f32 %v1007, %v1119
        %1121 = vmatmul.f32.gmra.mxu0 %v601
        %v1122 = vpop.f32.mrf.mxu0
        %v1123 = vadd.f32 %v1010, %v1122
        %1124 = vmatmul.f32.gmra.mxu0 %v604
        %v1125 = vpop.f32.mrf.mxu0
        %v1126 = vadd.f32 %v1013, %v1125
        %1127 = vmatmul.f32.gmra.mxu0 %v606
        %v1128 = vpop.f32.mrf.mxu0
        %v1129 = vadd.f32 %v1016, %v1128
        %1130 = vmatmul.f32.gmra.mxu0 %v609
        %v1131 = vpop.f32.mrf.mxu0
        %v1132 = vadd.f32 %v1019, %v1131
        %1133 = vmatmul.f32.gmra.mxu0 %v611
        %v1134 = vpop.f32.mrf.mxu0
        %v1135 = vadd.f32 %v1022, %v1134
        %1136 = vmatmul.f32.gmra.mxu0 %v614
        %v1137 = vpop.f32.mrf.mxu0
        %v1138 = vadd.f32 %v1025, %v1137
        %1139 = vmatmul.f32.gmra.mxu0 %v616
        %v1140 = vpop.f32.mrf.mxu0
        %v1141 = vadd.f32 %v1028, %v1140
        %1142 = vmatmul.f32.gmra.mxu0 %v619
        %v1143 = vpop.f32.mrf.mxu0
        %v1144 = vadd.f32 %v1031, %v1143
        %1145 = vmatmul.f32.gmra.mxu0 %v621
        %v1146 = vpop.f32.mrf.mxu0
        %v1147 = vadd.f32 %v1034, %v1146
        %1148 = vmatmul.f32.gmra.mxu0 %v624
        %v1149 = vpop.f32.mrf.mxu0
        %v1150 = vadd.f32 %v1037, %v1149
        %1151 = vmatmul.f32.gmra.mxu0 %v626
        %v1152 = vpop.f32.mrf.mxu0
        %v1153 = vadd.f32 %v1040, %v1152
        %1154 = vmatmul.f32.gmra.mxu0 %v629
        %v1155 = vpop.f32.mrf.mxu0
        %v1156 = vadd.f32 %v1043, %v1155
        %1157 = vmatmul.f32.gmra.mxu0 %v631
        %v1158 = vpop.f32.mrf.mxu0
        %v1159 = vadd.f32 %v1046, %v1158
        %1160 = vmatmul.f32.gmra.mxu0 %v634
        %v1161 = vpop.f32.mrf.mxu0
        %v1162 = vadd.f32 %v1049, %v1161
        %1163 = vmatmul.f32.gmra.mxu0 %v636
        %v1164 = vpop.f32.mrf.mxu0
        %v1165 = vadd.f32 %v1052, %v1164
        %1166 = vmatmul.f32.gmra.mxu0 %v639
        %v1167 = vpop.f32.mrf.mxu0
        %v1168 = vadd.f32 %v1055, %v1167
        %1169 = vmatmul.f32.gmra.mxu0 %v641
        %v1170 = vpop.f32.mrf.mxu0
        %v1171 = vadd.f32 %v1058, %v1170
        %1172 = vmatmul.f32.gmra.mxu0 %v644
        %v1173 = vpop.f32.mrf.mxu0
        %v1174 = vadd.f32 %v1061, %v1173
        %1175 = vmatmul.f32.gmra.mxu0 %v646
        %v1176 = vpop.f32.mrf.mxu0
        %v1177 = vadd.f32 %v1064, %v1176
        %1178 = vmatmul.f32.gmra.mxu0 %v649
        %v1179 = vpop.f32.mrf.mxu0
        %v1180 = vadd.f32 %v1067, %v1179
        %1181 = vmatmul.f32.gmra.mxu0 %v651
        %v1182 = vpop.f32.mrf.mxu0
        %v1183 = vadd.f32 %v1070, %v1182
        %1184 = vmatmul.f32.gmra.mxu0 %v654
        %v1185 = vpop.f32.mrf.mxu0
        %v1186 = vadd.f32 %v1073, %v1185
        %1187 = vmatmul.f32.gmra.mxu0 %v656
        %v1188 = vpop.f32.mrf.mxu0
        %v1189 = vadd.f32 %v1076, %v1188
        %1190 = vmatmul.f32.gmra.mxu0 %v659
        %v1191 = vpop.f32.mrf.mxu0
        %v1192 = vadd.f32 %v1079, %v1191
        %1193 = vmatmul.f32.gmra.mxu0 %v661
        %v1194 = vpop.f32.mrf.mxu0
        %v1195 = vadd.f32 %v1082, %v1194
        %1196 = vdwg.mxu0
        %1197 = vmatpush.msra.mxu0 %v870
        %1198 = vmatpush.msra.mxu0 %v869
        %1199 = vmatpush.msra.mxu0 %v868
        %1200 = vmatpush.msra.mxu0 %v867
        %1201 = vmatpush.msra.mxu0 %v866
        %1202 = vmatpush.msra.mxu0 %v865
        %1203 = vmatpush.msra.mxu0 %v864
        %1204 = vmatpush.msra.mxu0 %v863
        %1205 = vmatpush.msra.mxu0 %v862
        %1206 = vmatpush.msra.mxu0 %v861
        %1207 = vmatpush.msra.mxu0 %v860
        %1208 = vmatpush.msra.mxu0 %v859
        %1209 = vmatpush.msra.mxu0 %v858
        %1210 = vmatpush.msra.mxu0 %v857
        %1211 = vmatpush.msra.mxu0 %v856
        %1212 = vmatpush.msra.mxu0 %v855
        %1213 = vmatmul.f32.gmra.mxu0 %v697
        %v1214 = vpop.f32.mrf.mxu0
        %v1215 = vadd.f32 %v1102, %v1214
        %1216 = vmatmul.f32.gmra.mxu0 %v699
        %v1217 = vpop.f32.mrf.mxu0
        %v1218 = vadd.f32 %v1105, %v1217
        %1219 = vmatmul.f32.gmra.mxu0 %v702
        %v1220 = vpop.f32.mrf.mxu0
        %v1221 = vadd.f32 %v1108, %v1220
        %1222 = vmatmul.f32.gmra.mxu0 %v704
        %v1223 = vpop.f32.mrf.mxu0
        %v1224 = vadd.f32 %v1111, %v1223
        %1225 = vmatmul.f32.gmra.mxu0 %v707
        %v1226 = vpop.f32.mrf.mxu0
        %v1227 = vadd.f32 %v1114, %v1226
        %1228 = vmatmul.f32.gmra.mxu0 %v709
        %v1229 = vpop.f32.mrf.mxu0
        %v1230 = vadd.f32 %v1117, %v1229
        %1231 = vmatmul.f32.gmra.mxu0 %v712
        %v1232 = vpop.f32.mrf.mxu0
        %v1233 = vadd.f32 %v1120, %v1232
        %1234 = vmatmul.f32.gmra.mxu0 %v714
        %v1235 = vpop.f32.mrf.mxu0
        %v1236 = vadd.f32 %v1123, %v1235
        %1237 = vmatmul.f32.gmra.mxu0 %v717
        %v1238 = vpop.f32.mrf.mxu0
        %v1239 = vadd.f32 %v1126, %v1238
        %1240 = vmatmul.f32.gmra.mxu0 %v719
        %v1241 = vpop.f32.mrf.mxu0
        %v1242 = vadd.f32 %v1129, %v1241
        %1243 = vmatmul.f32.gmra.mxu0 %v722
        %v1244 = vpop.f32.mrf.mxu0
        %v1245 = vadd.f32 %v1132, %v1244
        %1246 = vmatmul.f32.gmra.mxu0 %v724
        %v1247 = vpop.f32.mrf.mxu0
        %v1248 = vadd.f32 %v1135, %v1247
        %1249 = vmatmul.f32.gmra.mxu0 %v727
        %v1250 = vpop.f32.mrf.mxu0
        %v1251 = vadd.f32 %v1138, %v1250
        %1252 = vmatmul.f32.gmra.mxu0 %v729
        %v1253 = vpop.f32.mrf.mxu0
        %v1254 = vadd.f32 %v1141, %v1253
        %1255 = vmatmul.f32.gmra.mxu0 %v732
        %v1256 = vpop.f32.mrf.mxu0
        %v1257 = vadd.f32 %v1144, %v1256
        %1258 = vmatmul.f32.gmra.mxu0 %v734
        %v1259 = vpop.f32.mrf.mxu0
        %v1260 = vadd.f32 %v1147, %v1259
        %1261 = vmatmul.f32.gmra.mxu0 %v737
        %v1262 = vpop.f32.mrf.mxu0
        %v1263 = vadd.f32 %v1150, %v1262
        %1264 = vmatmul.f32.gmra.mxu0 %v739
        %v1265 = vpop.f32.mrf.mxu0
        %v1266 = vadd.f32 %v1153, %v1265
        %1267 = vmatmul.f32.gmra.mxu0 %v742
        %v1268 = vpop.f32.mrf.mxu0
        %v1269 = vadd.f32 %v1156, %v1268
        %1270 = vmatmul.f32.gmra.mxu0 %v744
        %v1271 = vpop.f32.mrf.mxu0
        %v1272 = vadd.f32 %v1159, %v1271
        %1273 = vmatmul.f32.gmra.mxu0 %v747
        %v1274 = vpop.f32.mrf.mxu0
        %v1275 = vadd.f32 %v1162, %v1274
        %1276 = vmatmul.f32.gmra.mxu0 %v749
        %v1277 = vpop.f32.mrf.mxu0
        %v1278 = vadd.f32 %v1165, %v1277
        %1279 = vmatmul.f32.gmra.mxu0 %v752
        %v1280 = vpop.f32.mrf.mxu0
        %v1281 = vadd.f32 %v1168, %v1280
        %1282 = vmatmul.f32.gmra.mxu0 %v754
        %v1283 = vpop.f32.mrf.mxu0
        %v1284 = vadd.f32 %v1171, %v1283
        %1285 = vmatmul.f32.gmra.mxu0 %v757
        %v1286 = vpop.f32.mrf.mxu0
        %v1287 = vadd.f32 %v1174, %v1286
        %1288 = vmatmul.f32.gmra.mxu0 %v759
        %v1289 = vpop.f32.mrf.mxu0
        %v1290 = vadd.f32 %v1177, %v1289
        %1291 = vmatmul.f32.gmra.mxu0 %v762
        %v1292 = vpop.f32.mrf.mxu0
        %v1293 = vadd.f32 %v1180, %v1292
        %1294 = vmatmul.f32.gmra.mxu0 %v764
        %v1295 = vpop.f32.mrf.mxu0
        %v1296 = vadd.f32 %v1183, %v1295
        %1297 = vmatmul.f32.gmra.mxu0 %v767
        %v1298 = vpop.f32.mrf.mxu0
        %v1299 = vadd.f32 %v1186, %v1298
        %1300 = vmatmul.f32.gmra.mxu0 %v769
        %v1301 = vpop.f32.mrf.mxu0
        %v1302 = vadd.f32 %v1189, %v1301
        %1303 = vmatmul.f32.gmra.mxu0 %v772
        %v1304 = vpop.f32.mrf.mxu0
        %v1305 = vadd.f32 %v1192, %v1304
        %1306 = vmatmul.f32.gmra.mxu0 %v774
        %v1307 = vpop.f32.mrf.mxu0
        %v1308 = vadd.f32 %v1195, %v1307
        %1309 = vdwg.mxu0
        %1310 = vmatpush.msra.mxu0 %v886
        %1311 = vmatpush.msra.mxu0 %v885
        %1312 = vmatpush.msra.mxu0 %v884
        %1313 = vmatpush.msra.mxu0 %v883
        %1314 = vmatpush.msra.mxu0 %v882
        %1315 = vmatpush.msra.mxu0 %v881
        %1316 = vmatpush.msra.mxu0 %v880
        %1317 = vmatpush.msra.mxu0 %v879
        %1318 = vmatpush.msra.mxu0 %v878
        %1319 = vmatpush.msra.mxu0 %v877
        %1320 = vmatpush.msra.mxu0 %v876
        %1321 = vmatpush.msra.mxu0 %v875
        %1322 = vmatpush.msra.mxu0 %v874
        %1323 = vmatpush.msra.mxu0 %v873
        %1324 = vmatpush.msra.mxu0 %v872
        %1325 = vmatpush.msra.mxu0 %v871
        %1326 = vmatmul.f32.gmra.mxu0 %v516
        %v1327 = vpop.f32.mrf.mxu0
        %v1328 = vadd.f32 %v1215, %v1327
        %1329 = vmatmul.f32.gmra.mxu0 %v419
        %v1330 = vpop.f32.mrf.mxu0
        %v1331 = vadd.f32 %v1218, %v1330
        %1332 = vmatmul.f32.gmra.mxu0 %v517
        %v1333 = vpop.f32.mrf.mxu0
        %v1334 = vadd.f32 %v1221, %v1333
        %1335 = vmatmul.f32.gmra.mxu0 %v422
        %v1336 = vpop.f32.mrf.mxu0
        %v1337 = vadd.f32 %v1224, %v1336
        %1338 = vmatmul.f32.gmra.mxu0 %v518
        %v1339 = vpop.f32.mrf.mxu0
        %v1340 = vadd.f32 %v1227, %v1339
        %1341 = vmatmul.f32.gmra.mxu0 %v425
        %v1342 = vpop.f32.mrf.mxu0
        %v1343 = vadd.f32 %v1230, %v1342
        %1344 = vmatmul.f32.gmra.mxu0 %v519
        %v1345 = vpop.f32.mrf.mxu0
        %v1346 = vadd.f32 %v1233, %v1345
        %1347 = vmatmul.f32.gmra.mxu0 %v428
        %v1348 = vpop.f32.mrf.mxu0
        %v1349 = vadd.f32 %v1236, %v1348
        %1350 = vmatmul.f32.gmra.mxu0 %v520
        %v1351 = vpop.f32.mrf.mxu0
        %v1352 = vadd.f32 %v1239, %v1351
        %1353 = vmatmul.f32.gmra.mxu0 %v431
        %v1354 = vpop.f32.mrf.mxu0
        %v1355 = vadd.f32 %v1242, %v1354
        %1356 = vmatmul.f32.gmra.mxu0 %v521
        %v1357 = vpop.f32.mrf.mxu0
        %v1358 = vadd.f32 %v1245, %v1357
        %1359 = vmatmul.f32.gmra.mxu0 %v434
        %v1360 = vpop.f32.mrf.mxu0
        %v1361 = vadd.f32 %v1248, %v1360
        %1362 = vmatmul.f32.gmra.mxu0 %v522
        %v1363 = vpop.f32.mrf.mxu0
        %v1364 = vadd.f32 %v1251, %v1363
        %1365 = vmatmul.f32.gmra.mxu0 %v437
        %v1366 = vpop.f32.mrf.mxu0
        %v1367 = vadd.f32 %v1254, %v1366
        %1368 = vmatmul.f32.gmra.mxu0 %v523
        %v1369 = vpop.f32.mrf.mxu0
        %v1370 = vadd.f32 %v1257, %v1369
        %1371 = vmatmul.f32.gmra.mxu0 %v440
        %v1372 = vpop.f32.mrf.mxu0
        %v1373 = vadd.f32 %v1260, %v1372
        %1374 = vmatmul.f32.gmra.mxu0 %v524
        %v1375 = vpop.f32.mrf.mxu0
        %v1376 = vadd.f32 %v1263, %v1375
        %1377 = vmatmul.f32.gmra.mxu0 %v443
        %v1378 = vpop.f32.mrf.mxu0
        %v1379 = vadd.f32 %v1266, %v1378
        %1380 = vmatmul.f32.gmra.mxu0 %v525
        %v1381 = vpop.f32.mrf.mxu0
        %v1382 = vadd.f32 %v1269, %v1381
        %1383 = vmatmul.f32.gmra.mxu0 %v446
        %v1384 = vpop.f32.mrf.mxu0
        %v1385 = vadd.f32 %v1272, %v1384
        %1386 = vmatmul.f32.gmra.mxu0 %v526
        %v1387 = vpop.f32.mrf.mxu0
        %v1388 = vadd.f32 %v1275, %v1387
        %1389 = vmatmul.f32.gmra.mxu0 %v449
        %v1390 = vpop.f32.mrf.mxu0
        %v1391 = vadd.f32 %v1278, %v1390
        %1392 = vmatmul.f32.gmra.mxu0 %v527
        %v1393 = vpop.f32.mrf.mxu0
        %v1394 = vadd.f32 %v1281, %v1393
        %1395 = vmatmul.f32.gmra.mxu0 %v452
        %v1396 = vpop.f32.mrf.mxu0
        %v1397 = vadd.f32 %v1284, %v1396
        %1398 = vmatmul.f32.gmra.mxu0 %v528
        %v1399 = vpop.f32.mrf.mxu0
        %v1400 = vadd.f32 %v1287, %v1399
        %1401 = vmatmul.f32.gmra.mxu0 %v455
        %v1402 = vpop.f32.mrf.mxu0
        %v1403 = vadd.f32 %v1290, %v1402
        %1404 = vmatmul.f32.gmra.mxu0 %v529
        %v1405 = vpop.f32.mrf.mxu0
        %v1406 = vadd.f32 %v1293, %v1405
        %1407 = vmatmul.f32.gmra.mxu0 %v458
        %v1408 = vpop.f32.mrf.mxu0
        %v1409 = vadd.f32 %v1296, %v1408
        %1410 = vmatmul.f32.gmra.mxu0 %v530
        %v1411 = vpop.f32.mrf.mxu0
        %v1412 = vadd.f32 %v1299, %v1411
        %1413 = vmatmul.f32.gmra.mxu0 %v461
        %v1414 = vpop.f32.mrf.mxu0
        %v1415 = vadd.f32 %v1302, %v1414
        %1416 = vmatmul.f32.gmra.mxu0 %v531
        %v1417 = vpop.f32.mrf.mxu0
        %v1418 = vadd.f32 %v1305, %v1417
        %1419 = vmatmul.f32.gmra.mxu0 %v464
        %v1420 = vpop.f32.mrf.mxu0
        %v1421 = vadd.f32 %v1308, %v1420
        %1422 = vdwg.mxu0
        %1423 = vmatpush.msra.mxu0 %v902
        %1424 = vmatpush.msra.mxu0 %v901
        %1425 = vmatpush.msra.mxu0 %v900
        %1426 = vmatpush.msra.mxu0 %v899
        %1427 = vmatpush.msra.mxu0 %v898
        %1428 = vmatpush.msra.mxu0 %v897
        %1429 = vmatpush.msra.mxu0 %v896
        %1430 = vmatpush.msra.mxu0 %v895
        %1431 = vmatpush.msra.mxu0 %v894
        %1432 = vmatpush.msra.mxu0 %v893
        %1433 = vmatpush.msra.mxu0 %v892
        %1434 = vmatpush.msra.mxu0 %v891
        %1435 = vmatpush.msra.mxu0 %v890
        %1436 = vmatpush.msra.mxu0 %v889
        %1437 = vmatpush.msra.mxu0 %v888
        %1438 = vmatpush.msra.mxu0 %v887
        %1439 = vmatmul.f32.gmra.mxu0 %v589
        %v1440 = vpop.f32.mrf.mxu0
        %v1441 = vadd.f32 %v1328, %v1440
        %1442 = vmatmul.f32.gmra.mxu0 %v591
        %v1443 = vpop.f32.mrf.mxu0
        %v1444 = vadd.f32 %v1331, %v1443
        %1445 = vmatmul.f32.gmra.mxu0 %v594
        %v1446 = vpop.f32.mrf.mxu0
        %v1447 = vadd.f32 %v1334, %v1446
        %1448 = vmatmul.f32.gmra.mxu0 %v596
        %v1449 = vpop.f32.mrf.mxu0
        %v1450 = vadd.f32 %v1337, %v1449
        %1451 = vmatmul.f32.gmra.mxu0 %v599
        %v1452 = vpop.f32.mrf.mxu0
        %v1453 = vadd.f32 %v1340, %v1452
        %1454 = vmatmul.f32.gmra.mxu0 %v601
        %v1455 = vpop.f32.mrf.mxu0
        %v1456 = vadd.f32 %v1343, %v1455
        %1457 = vmatmul.f32.gmra.mxu0 %v604
        %v1458 = vpop.f32.mrf.mxu0
        %v1459 = vadd.f32 %v1346, %v1458
        %1460 = vmatmul.f32.gmra.mxu0 %v606
        %v1461 = vpop.f32.mrf.mxu0
        %v1462 = vadd.f32 %v1349, %v1461
        %1463 = vmatmul.f32.gmra.mxu0 %v609
        %v1464 = vpop.f32.mrf.mxu0
        %v1465 = vadd.f32 %v1352, %v1464
        %1466 = vmatmul.f32.gmra.mxu0 %v611
        %v1467 = vpop.f32.mrf.mxu0
        %v1468 = vadd.f32 %v1355, %v1467
        %1469 = vmatmul.f32.gmra.mxu0 %v614
        %v1470 = vpop.f32.mrf.mxu0
        %v1471 = vadd.f32 %v1358, %v1470
        %1472 = vmatmul.f32.gmra.mxu0 %v616
        %v1473 = vpop.f32.mrf.mxu0
        %v1474 = vadd.f32 %v1361, %v1473
        %1475 = vmatmul.f32.gmra.mxu0 %v619
        %v1476 = vpop.f32.mrf.mxu0
        %v1477 = vadd.f32 %v1364, %v1476
        %1478 = vmatmul.f32.gmra.mxu0 %v621
        %v1479 = vpop.f32.mrf.mxu0
        %v1480 = vadd.f32 %v1367, %v1479
        %1481 = vmatmul.f32.gmra.mxu0 %v624
        %v1482 = vpop.f32.mrf.mxu0
        %v1483 = vadd.f32 %v1370, %v1482
        %1484 = vmatmul.f32.gmra.mxu0 %v626
        %v1485 = vpop.f32.mrf.mxu0
        %v1486 = vadd.f32 %v1373, %v1485
        %1487 = vmatmul.f32.gmra.mxu0 %v629
        %v1488 = vpop.f32.mrf.mxu0
        %v1489 = vadd.f32 %v1376, %v1488
        %1490 = vmatmul.f32.gmra.mxu0 %v631
        %v1491 = vpop.f32.mrf.mxu0
        %v1492 = vadd.f32 %v1379, %v1491
        %1493 = vmatmul.f32.gmra.mxu0 %v634
        %v1494 = vpop.f32.mrf.mxu0
        %v1495 = vadd.f32 %v1382, %v1494
        %1496 = vmatmul.f32.gmra.mxu0 %v636
        %v1497 = vpop.f32.mrf.mxu0
        %v1498 = vadd.f32 %v1385, %v1497
        %1499 = vmatmul.f32.gmra.mxu0 %v639
        %v1500 = vpop.f32.mrf.mxu0
        %v1501 = vadd.f32 %v1388, %v1500
        %1502 = vmatmul.f32.gmra.mxu0 %v641
        %v1503 = vpop.f32.mrf.mxu0
        %v1504 = vadd.f32 %v1391, %v1503
        %1505 = vmatmul.f32.gmra.mxu0 %v644
        %v1506 = vpop.f32.mrf.mxu0
        %v1507 = vadd.f32 %v1394, %v1506
        %1508 = vmatmul.f32.gmra.mxu0 %v646
        %v1509 = vpop.f32.mrf.mxu0
        %v1510 = vadd.f32 %v1397, %v1509
        %1511 = vmatmul.f32.gmra.mxu0 %v649
        %v1512 = vpop.f32.mrf.mxu0
        %v1513 = vadd.f32 %v1400, %v1512
        %1514 = vmatmul.f32.gmra.mxu0 %v651
        %v1515 = vpop.f32.mrf.mxu0
        %v1516 = vadd.f32 %v1403, %v1515
        %1517 = vmatmul.f32.gmra.mxu0 %v654
        %v1518 = vpop.f32.mrf.mxu0
        %v1519 = vadd.f32 %v1406, %v1518
        %1520 = vmatmul.f32.gmra.mxu0 %v656
        %v1521 = vpop.f32.mrf.mxu0
        %v1522 = vadd.f32 %v1409, %v1521
        %1523 = vmatmul.f32.gmra.mxu0 %v659
        %v1524 = vpop.f32.mrf.mxu0
        %v1525 = vadd.f32 %v1412, %v1524
        %1526 = vmatmul.f32.gmra.mxu0 %v661
        %v1527 = vpop.f32.mrf.mxu0
        %v1528 = vadd.f32 %v1415, %v1527
        %1529 = vmatmul.f32.gmra.mxu0 %v811
        %v1530 = vpop.f32.mrf.mxu0
        %v1531 = vadd.f32 %v1418, %v1530
        %1532 = vmatmul.f32.gmra.mxu0 %v813
        %v1533 = vpop.f32.mrf.mxu0
        %v1534 = vadd.f32 %v1421, %v1533
        %1535 = vdwg.mxu0
        %1536 = vmatpush.msra.mxu0 %v918
        %1537 = vmatpush.msra.mxu0 %v917
        %1538 = vmatpush.msra.mxu0 %v916
        %1539 = vmatpush.msra.mxu0 %v915
        %1540 = vmatpush.msra.mxu0 %v914
        %1541 = vmatpush.msra.mxu0 %v913
        %1542 = vmatpush.msra.mxu0 %v912
        %1543 = vmatpush.msra.mxu0 %v911
        %1544 = vmatpush.msra.mxu0 %v910
        %1545 = vmatpush.msra.mxu0 %v909
        %1546 = vmatpush.msra.mxu0 %v908
        %1547 = vmatpush.msra.mxu0 %v907
        %1548 = vmatpush.msra.mxu0 %v906
        %1549 = vmatpush.msra.mxu0 %v905
        %1550 = vmatpush.msra.mxu0 %v904
        %1551 = vmatpush.msra.mxu0 %v903
        %1552 = vmatmul.f32.gmra.mxu0 %v702
        %v1553 = vpop.f32.mrf.mxu0
        %v1554 = vadd.f32 %v1441, %v1553
        %1555 = vmatmul.f32.gmra.mxu0 %v704
        %v1556 = vpop.f32.mrf.mxu0
        %v1557 = vadd.f32 %v1444, %v1556
        %1558 = vmatmul.f32.gmra.mxu0 %v707
        %v1559 = vpop.f32.mrf.mxu0
        %v1560 = vadd.f32 %v1447, %v1559
        %1561 = vmatmul.f32.gmra.mxu0 %v709
        %v1562 = vpop.f32.mrf.mxu0
        %v1563 = vadd.f32 %v1450, %v1562
        %1564 = vmatmul.f32.gmra.mxu0 %v712
        %v1565 = vpop.f32.mrf.mxu0
        %v1566 = vadd.f32 %v1453, %v1565
        %1567 = vmatmul.f32.gmra.mxu0 %v714
        %v1568 = vpop.f32.mrf.mxu0
        %v1569 = vadd.f32 %v1456, %v1568
        %1570 = vmatmul.f32.gmra.mxu0 %v717
        %v1571 = vpop.f32.mrf.mxu0
        %v1572 = vadd.f32 %v1459, %v1571
        %1573 = vmatmul.f32.gmra.mxu0 %v719
        %v1574 = vpop.f32.mrf.mxu0
        %v1575 = vadd.f32 %v1462, %v1574
        %1576 = vmatmul.f32.gmra.mxu0 %v722
        %v1577 = vpop.f32.mrf.mxu0
        %v1578 = vadd.f32 %v1465, %v1577
        %1579 = vmatmul.f32.gmra.mxu0 %v724
        %v1580 = vpop.f32.mrf.mxu0
        %v1581 = vadd.f32 %v1468, %v1580
        %1582 = vmatmul.f32.gmra.mxu0 %v727
        %v1583 = vpop.f32.mrf.mxu0
        %v1584 = vadd.f32 %v1471, %v1583
        %1585 = vmatmul.f32.gmra.mxu0 %v729
        %v1586 = vpop.f32.mrf.mxu0
        %v1587 = vadd.f32 %v1474, %v1586
        %1588 = vmatmul.f32.gmra.mxu0 %v732
        %v1589 = vpop.f32.mrf.mxu0
        %v1590 = vadd.f32 %v1477, %v1589
        %1591 = vmatmul.f32.gmra.mxu0 %v734
        %v1592 = vpop.f32.mrf.mxu0
        %v1593 = vadd.f32 %v1480, %v1592
        %1594 = vmatmul.f32.gmra.mxu0 %v737
        %v1595 = vpop.f32.mrf.mxu0
        %v1596 = vadd.f32 %v1483, %v1595
        %1597 = vmatmul.f32.gmra.mxu0 %v739
        %v1598 = vpop.f32.mrf.mxu0
        %v1599 = vadd.f32 %v1486, %v1598
        %1600 = vmatmul.f32.gmra.mxu0 %v742
        %v1601 = vpop.f32.mrf.mxu0
        %v1602 = vadd.f32 %v1489, %v1601
        %1603 = vmatmul.f32.gmra.mxu0 %v744
        %v1604 = vpop.f32.mrf.mxu0
        %v1605 = vadd.f32 %v1492, %v1604
        %1606 = vmatmul.f32.gmra.mxu0 %v747
        %v1607 = vpop.f32.mrf.mxu0
        %v1608 = vadd.f32 %v1495, %v1607
        %1609 = vmatmul.f32.gmra.mxu0 %v749
        %v1610 = vpop.f32.mrf.mxu0
        %v1611 = vadd.f32 %v1498, %v1610
        %1612 = vmatmul.f32.gmra.mxu0 %v752
        %v1613 = vpop.f32.mrf.mxu0
        %v1614 = vadd.f32 %v1501, %v1613
        %1615 = vmatmul.f32.gmra.mxu0 %v754
        %v1616 = vpop.f32.mrf.mxu0
        %v1617 = vadd.f32 %v1504, %v1616
        %1618 = vmatmul.f32.gmra.mxu0 %v757
        %v1619 = vpop.f32.mrf.mxu0
        %v1620 = vadd.f32 %v1507, %v1619
        %1621 = vmatmul.f32.gmra.mxu0 %v759
        %v1622 = vpop.f32.mrf.mxu0
        %v1623 = vadd.f32 %v1510, %v1622
        %1624 = vmatmul.f32.gmra.mxu0 %v762
        %v1625 = vpop.f32.mrf.mxu0
        %v1626 = vadd.f32 %v1513, %v1625
        %1627 = vmatmul.f32.gmra.mxu0 %v764
        %v1628 = vpop.f32.mrf.mxu0
        %v1629 = vadd.f32 %v1516, %v1628
        %1630 = vmatmul.f32.gmra.mxu0 %v767
        %v1631 = vpop.f32.mrf.mxu0
        %v1632 = vadd.f32 %v1519, %v1631
        %1633 = vmatmul.f32.gmra.mxu0 %v769
        %v1634 = vpop.f32.mrf.mxu0
        %v1635 = vadd.f32 %v1522, %v1634
        %1636 = vmatmul.f32.gmra.mxu0 %v772
        %v1637 = vpop.f32.mrf.mxu0
        %v1638 = vadd.f32 %v1525, %v1637
        %1639 = vmatmul.f32.gmra.mxu0 %v774
        %v1640 = vpop.f32.mrf.mxu0
        %v1641 = vadd.f32 %v1528, %v1640
        %1642 = vmatmul.f32.gmra.mxu0 %v818
        %v1643 = vpop.f32.mrf.mxu0
        %v1644 = vadd.f32 %v1531, %v1643
        %1645 = vmatmul.f32.gmra.mxu0 %v820
        %v1646 = vpop.f32.mrf.mxu0
        %v1647 = vadd.f32 %v1534, %v1646
        %1648 = vdwg.mxu0
        %1649 = vmatpush.msra.mxu0 %v934
        %1650 = vmatpush.msra.mxu0 %v933
        %1651 = vmatpush.msra.mxu0 %v932
        %1652 = vmatpush.msra.mxu0 %v931
        %1653 = vmatpush.msra.mxu0 %v930
        %1654 = vmatpush.msra.mxu0 %v929
        %1655 = vmatpush.msra.mxu0 %v928
        %1656 = vmatpush.msra.mxu0 %v927
        %1657 = vmatpush.msra.mxu0 %v926
        %1658 = vmatpush.msra.mxu0 %v925
        %1659 = vmatpush.msra.mxu0 %v924
        %1660 = vmatpush.msra.mxu0 %v923
        %1661 = vmatpush.msra.mxu0 %v922
        %1662 = vmatpush.msra.mxu0 %v921
        %1663 = vmatpush.msra.mxu0 %v920
        %1664 = vmatpush.msra.mxu0 %v919
        %1665 = vmatmul.f32.gmra.mxu0 %v517
        %v1666 = vpop.f32.mrf.mxu0
        %v1667 = vadd.f32 %v1554, %v1666
        %1668 = vmatmul.f32.gmra.mxu0 %v422
        %v1669 = vpop.f32.mrf.mxu0
        %v1670 = vadd.f32 %v1557, %v1669
        %1671 = vmatmul.f32.gmra.mxu0 %v518
        %v1672 = vpop.f32.mrf.mxu0
        %v1673 = vadd.f32 %v1560, %v1672
        %1674 = vmatmul.f32.gmra.mxu0 %v425
        %v1675 = vpop.f32.mrf.mxu0
        %v1676 = vadd.f32 %v1563, %v1675
        %1677 = vmatmul.f32.gmra.mxu0 %v519
        %v1678 = vpop.f32.mrf.mxu0
        %v1679 = vadd.f32 %v1566, %v1678
        %1680 = vmatmul.f32.gmra.mxu0 %v428
        %v1681 = vpop.f32.mrf.mxu0
        %v1682 = vadd.f32 %v1569, %v1681
        %1683 = vmatmul.f32.gmra.mxu0 %v520
        %v1684 = vpop.f32.mrf.mxu0
        %v1685 = vadd.f32 %v1572, %v1684
        %1686 = vmatmul.f32.gmra.mxu0 %v431
        %v1687 = vpop.f32.mrf.mxu0
        %v1688 = vadd.f32 %v1575, %v1687
        %1689 = vmatmul.f32.gmra.mxu0 %v521
        %v1690 = vpop.f32.mrf.mxu0
        %v1691 = vadd.f32 %v1578, %v1690
        %1692 = vmatmul.f32.gmra.mxu0 %v434
        %v1693 = vpop.f32.mrf.mxu0
        %v1694 = vadd.f32 %v1581, %v1693
        %1695 = vmatmul.f32.gmra.mxu0 %v522
        %v1696 = vpop.f32.mrf.mxu0
        %v1697 = vadd.f32 %v1584, %v1696
        %1698 = vmatmul.f32.gmra.mxu0 %v437
        %v1699 = vpop.f32.mrf.mxu0
        %v1700 = vadd.f32 %v1587, %v1699
        %1701 = vmatmul.f32.gmra.mxu0 %v523
        %v1702 = vpop.f32.mrf.mxu0
        %v1703 = vadd.f32 %v1590, %v1702
        %1704 = vmatmul.f32.gmra.mxu0 %v440
        %v1705 = vpop.f32.mrf.mxu0
        %v1706 = vadd.f32 %v1593, %v1705
        %1707 = vmatmul.f32.gmra.mxu0 %v524
        %v1708 = vpop.f32.mrf.mxu0
        %v1709 = vadd.f32 %v1596, %v1708
        %1710 = vmatmul.f32.gmra.mxu0 %v443
        %v1711 = vpop.f32.mrf.mxu0
        %v1712 = vadd.f32 %v1599, %v1711
        %1713 = vmatmul.f32.gmra.mxu0 %v525
        %v1714 = vpop.f32.mrf.mxu0
        %v1715 = vadd.f32 %v1602, %v1714
        %1716 = vmatmul.f32.gmra.mxu0 %v446
        %v1717 = vpop.f32.mrf.mxu0
        %v1718 = vadd.f32 %v1605, %v1717
        %1719 = vmatmul.f32.gmra.mxu0 %v526
        %v1720 = vpop.f32.mrf.mxu0
        %v1721 = vadd.f32 %v1608, %v1720
        %1722 = vmatmul.f32.gmra.mxu0 %v449
        %v1723 = vpop.f32.mrf.mxu0
        %v1724 = vadd.f32 %v1611, %v1723
        %1725 = vmatmul.f32.gmra.mxu0 %v527
        %v1726 = vpop.f32.mrf.mxu0
        %v1727 = vadd.f32 %v1614, %v1726
        %1728 = vmatmul.f32.gmra.mxu0 %v452
        %v1729 = vpop.f32.mrf.mxu0
        %v1730 = vadd.f32 %v1617, %v1729
        %1731 = vmatmul.f32.gmra.mxu0 %v528
        %v1732 = vpop.f32.mrf.mxu0
        %v1733 = vadd.f32 %v1620, %v1732
        %1734 = vmatmul.f32.gmra.mxu0 %v455
        %v1735 = vpop.f32.mrf.mxu0
        %v1736 = vadd.f32 %v1623, %v1735
        %1737 = vmatmul.f32.gmra.mxu0 %v529
        %v1738 = vpop.f32.mrf.mxu0
        %v1739 = vadd.f32 %v1626, %v1738
        %1740 = vmatmul.f32.gmra.mxu0 %v458
        %v1741 = vpop.f32.mrf.mxu0
        %v1742 = vadd.f32 %v1629, %v1741
        %1743 = vmatmul.f32.gmra.mxu0 %v530
        %v1744 = vpop.f32.mrf.mxu0
        %v1745 = vadd.f32 %v1632, %v1744
        %1746 = vmatmul.f32.gmra.mxu0 %v461
        %v1747 = vpop.f32.mrf.mxu0
        %v1748 = vadd.f32 %v1635, %v1747
        %1749 = vmatmul.f32.gmra.mxu0 %v531
        %v1750 = vpop.f32.mrf.mxu0
        %v1751 = vadd.f32 %v1638, %v1750
        %1752 = vmatmul.f32.gmra.mxu0 %v464
        %v1753 = vpop.f32.mrf.mxu0
        %v1754 = vadd.f32 %v1641, %v1753
        %1755 = vmatmul.f32.gmra.mxu0 %v515
        %v1756 = vpop.f32.mrf.mxu0
        %v1757 = vadd.f32 %v1644, %v1756
        %1758 = vmatmul.f32.gmra.mxu0 %v416
        %v1759 = vpop.f32.mrf.mxu0
        %v1760 = vadd.f32 %v1647, %v1759
        %1761 = vdwg.mxu0
        %1762 = vmatpush.msra.mxu0 %v950
        %1763 = vmatpush.msra.mxu0 %v949
        %1764 = vmatpush.msra.mxu0 %v948
        %1765 = vmatpush.msra.mxu0 %v947
        %1766 = vmatpush.msra.mxu0 %v946
        %1767 = vmatpush.msra.mxu0 %v945
        %1768 = vmatpush.msra.mxu0 %v944
        %1769 = vmatpush.msra.mxu0 %v943
        %1770 = vmatpush.msra.mxu0 %v942
        %1771 = vmatpush.msra.mxu0 %v941
        %1772 = vmatpush.msra.mxu0 %v940
        %1773 = vmatpush.msra.mxu0 %v939
        %1774 = vmatpush.msra.mxu0 %v938
        %1775 = vmatpush.msra.mxu0 %v937
        %1776 = vmatpush.msra.mxu0 %v936
        %1777 = vmatpush.msra.mxu0 %v935
        %1778 = vmatmul.f32.gmra.mxu0 %v594
        %v1779 = vpop.f32.mrf.mxu0
        %v1780 = vadd.f32 %v1667, %v1779
        %1781 = vmatmul.f32.gmra.mxu0 %v596
        %v1782 = vpop.f32.mrf.mxu0
        %v1783 = vadd.f32 %v1670, %v1782
        %1784 = vmatmul.f32.gmra.mxu0 %v599
        %v1785 = vpop.f32.mrf.mxu0
        %v1786 = vadd.f32 %v1673, %v1785
        %1787 = vmatmul.f32.gmra.mxu0 %v601
        %v1788 = vpop.f32.mrf.mxu0
        %v1789 = vadd.f32 %v1676, %v1788
        %1790 = vmatmul.f32.gmra.mxu0 %v604
        %v1791 = vpop.f32.mrf.mxu0
        %v1792 = vadd.f32 %v1679, %v1791
        %1793 = vmatmul.f32.gmra.mxu0 %v606
        %v1794 = vpop.f32.mrf.mxu0
        %v1795 = vadd.f32 %v1682, %v1794
        %1796 = vmatmul.f32.gmra.mxu0 %v609
        %v1797 = vpop.f32.mrf.mxu0
        %v1798 = vadd.f32 %v1685, %v1797
        %1799 = vmatmul.f32.gmra.mxu0 %v611
        %v1800 = vpop.f32.mrf.mxu0
        %v1801 = vadd.f32 %v1688, %v1800
        %1802 = vmatmul.f32.gmra.mxu0 %v614
        %v1803 = vpop.f32.mrf.mxu0
        %v1804 = vadd.f32 %v1691, %v1803
        %1805 = vmatmul.f32.gmra.mxu0 %v616
        %v1806 = vpop.f32.mrf.mxu0
        %v1807 = vadd.f32 %v1694, %v1806
        %1808 = vmatmul.f32.gmra.mxu0 %v619
        %v1809 = vpop.f32.mrf.mxu0
        %v1810 = vadd.f32 %v1697, %v1809
        %1811 = vmatmul.f32.gmra.mxu0 %v621
        %v1812 = vpop.f32.mrf.mxu0
        %v1813 = vadd.f32 %v1700, %v1812
        %1814 = vmatmul.f32.gmra.mxu0 %v624
        %v1815 = vpop.f32.mrf.mxu0
        %v1816 = vadd.f32 %v1703, %v1815
        %1817 = vmatmul.f32.gmra.mxu0 %v626
        %v1818 = vpop.f32.mrf.mxu0
        %v1819 = vadd.f32 %v1706, %v1818
        %1820 = vmatmul.f32.gmra.mxu0 %v629
        %v1821 = vpop.f32.mrf.mxu0
        %v1822 = vadd.f32 %v1709, %v1821
        %1823 = vmatmul.f32.gmra.mxu0 %v631
        %v1824 = vpop.f32.mrf.mxu0
        %v1825 = vadd.f32 %v1712, %v1824
        %1826 = vmatmul.f32.gmra.mxu0 %v634
        %v1827 = vpop.f32.mrf.mxu0
        %v1828 = vadd.f32 %v1715, %v1827
        %1829 = vmatmul.f32.gmra.mxu0 %v636
        %v1830 = vpop.f32.mrf.mxu0
        %v1831 = vadd.f32 %v1718, %v1830
        %1832 = vmatmul.f32.gmra.mxu0 %v639
        %v1833 = vpop.f32.mrf.mxu0
        %v1834 = vadd.f32 %v1721, %v1833
        %1835 = vmatmul.f32.gmra.mxu0 %v641
        %v1836 = vpop.f32.mrf.mxu0
        %v1837 = vadd.f32 %v1724, %v1836
        %1838 = vmatmul.f32.gmra.mxu0 %v644
        %v1839 = vpop.f32.mrf.mxu0
        %v1840 = vadd.f32 %v1727, %v1839
        %1841 = vmatmul.f32.gmra.mxu0 %v646
        %v1842 = vpop.f32.mrf.mxu0
        %v1843 = vadd.f32 %v1730, %v1842
        %1844 = vmatmul.f32.gmra.mxu0 %v649
        %v1845 = vpop.f32.mrf.mxu0
        %v1846 = vadd.f32 %v1733, %v1845
        %1847 = vmatmul.f32.gmra.mxu0 %v651
        %v1848 = vpop.f32.mrf.mxu0
        %v1849 = vadd.f32 %v1736, %v1848
        %1850 = vmatmul.f32.gmra.mxu0 %v654
        %v1851 = vpop.f32.mrf.mxu0
        %v1852 = vadd.f32 %v1739, %v1851
        %1853 = vmatmul.f32.gmra.mxu0 %v656
        %v1854 = vpop.f32.mrf.mxu0
        %v1855 = vadd.f32 %v1742, %v1854
        %1856 = vmatmul.f32.gmra.mxu0 %v659
        %v1857 = vpop.f32.mrf.mxu0
        %v1858 = vadd.f32 %v1745, %v1857
        %1859 = vmatmul.f32.gmra.mxu0 %v661
        %v1860 = vpop.f32.mrf.mxu0
        %v1861 = vadd.f32 %v1748, %v1860
        %1862 = vmatmul.f32.gmra.mxu0 %v811
        %v1863 = vpop.f32.mrf.mxu0
        %v1864 = vadd.f32 %v1751, %v1863
        %1865 = vmatmul.f32.gmra.mxu0 %v813
        %v1866 = vpop.f32.mrf.mxu0
        %v1867 = vadd.f32 %v1754, %v1866
        %1868 = vmatmul.f32.gmra.mxu0 %v584
        %v1869 = vpop.f32.mrf.mxu0
        %v1870 = vadd.f32 %v1757, %v1869
        %1871 = vmatmul.f32.gmra.mxu0 %v586
        %v1872 = vpop.f32.mrf.mxu0
        %v1873 = vadd.f32 %v1760, %v1872
        %1874 = vdwg.mxu0
        %1875 = vmatpush.msra.mxu0 %v966
        %1876 = vmatpush.msra.mxu0 %v965
        %1877 = vmatpush.msra.mxu0 %v964
        %1878 = vmatpush.msra.mxu0 %v963
        %1879 = vmatpush.msra.mxu0 %v962
        %1880 = vmatpush.msra.mxu0 %v961
        %1881 = vmatpush.msra.mxu0 %v960
        %1882 = vmatpush.msra.mxu0 %v959
        %1883 = vmatpush.msra.mxu0 %v958
        %1884 = vmatpush.msra.mxu0 %v957
        %1885 = vmatpush.msra.mxu0 %v956
        %1886 = vmatpush.msra.mxu0 %v955
        %1887 = vmatpush.msra.mxu0 %v954
        %1888 = vmatpush.msra.mxu0 %v953
        %1889 = vmatpush.msra.mxu0 %v952
        %1890 = vmatpush.msra.mxu0 %v951
        %1891 = vmatmul.f32.gmra.mxu0 %v707
        %v1892 = vpop.f32.mrf.mxu0
        %v1893 = vadd.f32 %v1780, %v1892
        %1894 = vmatmul.f32.gmra.mxu0 %v709
        %v1895 = vpop.f32.mrf.mxu0
        %v1896 = vadd.f32 %v1783, %v1895
        %1897 = vmatmul.f32.gmra.mxu0 %v712
        %v1898 = vpop.f32.mrf.mxu0
        %v1899 = vadd.f32 %v1786, %v1898
        %1900 = vmatmul.f32.gmra.mxu0 %v714
        %v1901 = vpop.f32.mrf.mxu0
        %v1902 = vadd.f32 %v1789, %v1901
        %1903 = vmatmul.f32.gmra.mxu0 %v717
        %v1904 = vpop.f32.mrf.mxu0
        %v1905 = vadd.f32 %v1792, %v1904
        %1906 = vmatmul.f32.gmra.mxu0 %v719
        %v1907 = vpop.f32.mrf.mxu0
        %v1908 = vadd.f32 %v1795, %v1907
        %1909 = vmatmul.f32.gmra.mxu0 %v722
        %v1910 = vpop.f32.mrf.mxu0
        %v1911 = vadd.f32 %v1798, %v1910
        %1912 = vmatmul.f32.gmra.mxu0 %v724
        %v1913 = vpop.f32.mrf.mxu0
        %v1914 = vadd.f32 %v1801, %v1913
        %1915 = vmatmul.f32.gmra.mxu0 %v727
        %v1916 = vpop.f32.mrf.mxu0
        %v1917 = vadd.f32 %v1804, %v1916
        %1918 = vmatmul.f32.gmra.mxu0 %v729
        %v1919 = vpop.f32.mrf.mxu0
        %v1920 = vadd.f32 %v1807, %v1919
        %1921 = vmatmul.f32.gmra.mxu0 %v732
        %v1922 = vpop.f32.mrf.mxu0
        %v1923 = vadd.f32 %v1810, %v1922
        %1924 = vmatmul.f32.gmra.mxu0 %v734
        %v1925 = vpop.f32.mrf.mxu0
        %v1926 = vadd.f32 %v1813, %v1925
        %1927 = vmatmul.f32.gmra.mxu0 %v737
        %v1928 = vpop.f32.mrf.mxu0
        %v1929 = vadd.f32 %v1816, %v1928
        %1930 = vmatmul.f32.gmra.mxu0 %v739
        %v1931 = vpop.f32.mrf.mxu0
        %v1932 = vadd.f32 %v1819, %v1931
        %1933 = vmatmul.f32.gmra.mxu0 %v742
        %v1934 = vpop.f32.mrf.mxu0
        %v1935 = vadd.f32 %v1822, %v1934
        %1936 = vmatmul.f32.gmra.mxu0 %v744
        %v1937 = vpop.f32.mrf.mxu0
        %v1938 = vadd.f32 %v1825, %v1937
        %1939 = vmatmul.f32.gmra.mxu0 %v747
        %v1940 = vpop.f32.mrf.mxu0
        %v1941 = vadd.f32 %v1828, %v1940
        %1942 = vmatmul.f32.gmra.mxu0 %v749
        %v1943 = vpop.f32.mrf.mxu0
        %v1944 = vadd.f32 %v1831, %v1943
        %1945 = vmatmul.f32.gmra.mxu0 %v752
        %v1946 = vpop.f32.mrf.mxu0
        %v1947 = vadd.f32 %v1834, %v1946
        %1948 = vmatmul.f32.gmra.mxu0 %v754
        %v1949 = vpop.f32.mrf.mxu0
        %v1950 = vadd.f32 %v1837, %v1949
        %1951 = vmatmul.f32.gmra.mxu0 %v757
        %v1952 = vpop.f32.mrf.mxu0
        %v1953 = vadd.f32 %v1840, %v1952
        %1954 = vmatmul.f32.gmra.mxu0 %v759
        %v1955 = vpop.f32.mrf.mxu0
        %v1956 = vadd.f32 %v1843, %v1955
        %1957 = vmatmul.f32.gmra.mxu0 %v762
        %v1958 = vpop.f32.mrf.mxu0
        %v1959 = vadd.f32 %v1846, %v1958
        %1960 = vmatmul.f32.gmra.mxu0 %v764
        %v1961 = vpop.f32.mrf.mxu0
        %v1962 = vadd.f32 %v1849, %v1961
        %1963 = vmatmul.f32.gmra.mxu0 %v767
        %v1964 = vpop.f32.mrf.mxu0
        %v1965 = vadd.f32 %v1852, %v1964
        %1966 = vmatmul.f32.gmra.mxu0 %v769
        %v1967 = vpop.f32.mrf.mxu0
        %v1968 = vadd.f32 %v1855, %v1967
        %1969 = vmatmul.f32.gmra.mxu0 %v772
        %v1970 = vpop.f32.mrf.mxu0
        %v1971 = vadd.f32 %v1858, %v1970
        %1972 = vmatmul.f32.gmra.mxu0 %v774
        %v1973 = vpop.f32.mrf.mxu0
        %v1974 = vadd.f32 %v1861, %v1973
        %1975 = vmatmul.f32.gmra.mxu0 %v818
        %v1976 = vpop.f32.mrf.mxu0
        %v1977 = vadd.f32 %v1864, %v1976
        %1978 = vmatmul.f32.gmra.mxu0 %v820
        %v1979 = vpop.f32.mrf.mxu0
        %v1980 = vadd.f32 %v1867, %v1979
        %1981 = vmatmul.f32.gmra.mxu0 %v697
        %v1982 = vpop.f32.mrf.mxu0
        %v1983 = vadd.f32 %v1870, %v1982
        %1984 = vmatmul.f32.gmra.mxu0 %v699
        %v1985 = vpop.f32.mrf.mxu0
        %v1986 = vadd.f32 %v1873, %v1985
        %1987 = vdwg.mxu0
        %v1988 = vmax.f32 %v1893, 0.0
        %v1989 = vmax.f32 %v1896, 0.0
        %v1990 = vmax.f32 %v1899, 0.0
        %v1991 = vmax.f32 %v1902, 0.0
        %v1992 = vmax.f32 %v1905, 0.0
        %v1993 = vmax.f32 %v1908, 0.0
        %v1994 = vmax.f32 %v1911, 0.0
        %v1995 = vmax.f32 %v1914, 0.0
        %v1996 = vmax.f32 %v1917, 0.0
        %v1997 = vmax.f32 %v1920, 0.0
        %v1998 = vmax.f32 %v1923, 0.0
        %v1999 = vmax.f32 %v1926, 0.0
        %v2000 = vmax.f32 %v1929, 0.0
        %v2001 = vmax.f32 %v1932, 0.0
        %v2002 = vmax.f32 %v1935, 0.0
        %v2003 = vmax.f32 %v1938, 0.0
        %v2004 = vmax.f32 %v1941, 0.0
        %v2005 = vmax.f32 %v1944, 0.0
        %v2006 = vmax.f32 %v1947, 0.0
        %v2007 = vmax.f32 %v1950, 0.0
        %v2008 = vmax.f32 %v1953, 0.0
        %v2009 = vmax.f32 %v1956, 0.0
        %v2010 = vmax.f32 %v1959, 0.0
        %v2011 = vmax.f32 %v1962, 0.0
        %v2012 = vmax.f32 %v1965, 0.0
        %v2013 = vmax.f32 %v1968, 0.0
        %v2014 = vmax.f32 %v1971, 0.0
        %v2015 = vmax.f32 %v1974, 0.0
        %v2016 = vmax.f32 %v1977, 0.0
        %v2017 = vmax.f32 %v1980, 0.0
        %v2018 = vmax.f32 %v1983, 0.0
        %v2019 = vmax.f32 %v1986, 0.0
        %2020 = vst [vmem:[%s348] sm:$0xff] %v1988
        %2021 = vst [vmem:[%s348 + $0x8] sm:$0xff] %v1989
        %2022 = vst [vmem:[%s348 + $0x10] sm:$0xff] %v1990
        %2023 = vst [vmem:[%s348 + $0x18] sm:$0xff] %v1991
        %2024 = vst [vmem:[%s348 + $0x20] sm:$0xff] %v1992
        %2025 = vst [vmem:[%s348 + $0x28] sm:$0xff] %v1993
        %2026 = vst [vmem:[%s348 + $0x30] sm:$0xff] %v1994
        %2027 = vst [vmem:[%s348 + $0x38] sm:$0xff] %v1995
        %2028 = vst [vmem:[%s348 + $0x40] sm:$0xff] %v1996
        %2029 = vst [vmem:[%s348 + $0x48] sm:$0xff] %v1997
        %2030 = vst [vmem:[%s348 + $0x50] sm:$0xff] %v1998
        %2031 = vst [vmem:[%s348 + $0x58] sm:$0xff] %v1999
        %2032 = vst [vmem:[%s348 + $0x60] sm:$0xff] %v2000
        %2033 = vst [vmem:[%s348 + $0x68] sm:$0xff] %v2001
        %2034 = vst [vmem:[%s348 + $0x70] sm:$0xff] %v2002
        %2035 = vst [vmem:[%s348 + $0x78] sm:$0xff] %v2003
        %2036 = vst [vmem:[%s348 + $0x80] sm:$0xff] %v2004
        %2037 = vst [vmem:[%s348 + $0x88] sm:$0xff] %v2005
        %2038 = vst [vmem:[%s348 + $0x90] sm:$0xff] %v2006
        %2039 = vst [vmem:[%s348 + $0x98] sm:$0xff] %v2007
        %2040 = vst [vmem:[%s348 + $0xa0] sm:$0xff] %v2008
        %2041 = vst [vmem:[%s348 + $0xa8] sm:$0xff] %v2009
        %2042 = vst [vmem:[%s348 + $0xb0] sm:$0xff] %v2010
        %2043 = vst [vmem:[%s348 + $0xb8] sm:$0xff] %v2011
        %2044 = vst [vmem:[%s348 + $0xc0] sm:$0xff] %v2012
        %2045 = vst [vmem:[%s348 + $0xc8] sm:$0xff] %v2013
        %2046 = vst [vmem:[%s348 + $0xd0] sm:$0xff] %v2014
        %2047 = vst [vmem:[%s348 + $0xd8] sm:$0xff] %v2015
        %2048 = vst [vmem:[%s348 + $0xe0] sm:$0xff] %v2016
        %2049 = vst [vmem:[%s348 + $0xe8] sm:$0xff] %v2017
        %2050 = vst [vmem:[%s348 + $0xf0] sm:$0xff] %v2018
        %2051 = vst [vmem:[%s348 + $0xf8] sm:$0xff] %v2019
        %p2052 = scmp.lt.s32.totalorder %s15, 1
        %s2053 = scalar_select %p2052, %s15, 1
        %s2054 = smul.addr %s2053, 32
        %s2055 = smul.addr %s2054, 8
        %s2056 = scalar_lea.vmem %s3, %s2055
        // Predicated region
        $region75: #{inception_a_forward.6} parent=65 // pred_check
          %p2057 = pneg %p101
        $region76: #{inception_a_forward.6} parent=65 // pred_check_branch
          %2059 = sbr.rel (%p2057) target = $region78
        $region77: #{inception_a_forward.6} parent=65 // pred_region
          _
        $region78: #{inception_a_forward.6} parent=65 // pred_fallthru
          _
      $region66: #{inception_a_forward.6} parent=5 // pred_fallthru
        _
      %p2060 = scmp.le.s32.totalorder 2, %s10
      // Predicated region
      $region79: #{inception_a_forward.6} parent=5 // pred_check
        %p2061 = pneg %p2060
      $region80: #{inception_a_forward.6} parent=5 // pred_check_branch
        %2063 = sbr.rel (%p2061) target = $region82
      $region81: #{inception_a_forward.6} parent=5 // pred_region
        %s2064 = ssub.s32 %s10, 2
        // Predicated region
        $region83: #{inception_a_forward.6} parent=81 // pred_check
          %p2065 = pneg %p107
        $region84: #{inception_a_forward.6} parent=81 // pred_check_branch
          %2067 = sbr.rel (%p2065) target = $region86
        $region85: #{inception_a_forward.6} parent=81 // pred_region
          %p2068 = scmp.lt.s32.totalorder %s16, 1
          %s2069 = scalar_select %p2068, %s16, 1
          %s2070 = smul.addr %s2069, 32
          %s2071 = smul.addr %s2070, 8
          %s2072 = scalar_lea.vmem %s3, %s2071
        $region86: #{inception_a_forward.6} parent=81 // pred_fallthru
          _
      $region82: #{inception_a_forward.6} parent=5 // pred_fallthru
        _
    $region6: #{inception_a_forward.6} parent=1 // loop_footer
      %s14 = sadd.s32 1, %s10
    $region7: #{inception_a_forward.6} parent=1 // loop_footer_branch
      %9 = sbr.rel target = $region3
    $region8: #{inception_a_forward.6} parent=1 // loop_exit
      _
    %2073 = vsyncpa [#allocation4], 1
    %s2074 = scalar_lea.sflag [#allocation4], 1
    %2075 = vsyncpa %s2074, 1

</llo_original>
